<compile_context>
chip_gen: v6e
topology: v6e:2x2x1
jax: 0.10.0
libtpu: 0.0.40
codegen_flags: <defaults>
</compile_context>

<pallas_src>
import functools

import jax
import jax.numpy as jnp
from jax.experimental import pallas as pl
from jax.experimental.pallas import tpu as pltpu


# -----------------------------------------------------------------------------
# Fused conv1 -> pool -> conv2 -> pool kernel (one batch tile per grid step)
# -----------------------------------------------------------------------------
def _conv_block_kernel(p1_ref, w1_ref, b1_ref, w2_ref, b2_ref, o_ref,
                       h1pad_ref, p2_ref, wscr1_ref, wscr2_ref, *, Bt):
    """p1_ref:    (Bt, 32, 32, 32) bf16  conv1 im2col patches (27 real + 5 zero)
       w1_ref:    (32, 32)         bf16  tap-packed conv1 weights
       b1_ref:    (1, 32)          f32
       w2_ref:    (288, 64)        bf16  tap-packed conv2 weights
       b2_ref:    (1, 64)          f32
       o_ref:     (Bt, 8, 8, 64)   bf16  pooled conv2 output (NHWC)
       h1pad_ref: (Bt, 18, 18, 32) f32   zero-haloed pooled conv1 activation
       p2_ref:    (Bt*256, 288)    bf16  conv2 im2col scratch
       wscr1_ref: (Bt*512, 32)     f32   W-pool scratch (conv1)
       wscr2_ref: (Bt*128, 64)     f32   W-pool scratch (conv2)
    """
    # ---- conv1: one tap-packed MXU dot over every pixel of the batch tile ----
    lhs1 = p1_ref[...].reshape(Bt * 32 * 32, 32)
    z1 = jnp.dot(lhs1, w1_ref[...], preferred_element_type=jnp.float32)  # (Bt*1024, 32)

    # 2x2 maxpool, H direction (leading dim -> layout-trivial reshape + max)
    z1 = z1.reshape(Bt * 16, 2, 32, 32)
    z1 = jnp.maximum(z1[:, 0, :, :], z1[:, 1, :, :])                     # (Bt*16, 32, 32)

    # 2x2 maxpool, W direction (stride-2 sublane reads from a small scratch)
    wscr1_ref[...] = z1.reshape(Bt * 16 * 32, 32)
    h1 = jnp.maximum(wscr1_ref[pl.ds(0, Bt * 16 * 16, 2), :],
                     wscr1_ref[pl.ds(1, Bt * 16 * 16, 2), :])            # (Bt*256, 32)

    # bias + ReLU after the pool (per-channel bias commutes with max; ReLU monotone)
    h1 = jnp.maximum(h1 + b1_ref[...], 0.0)                              # f32

    # ---- build the zero-haloed conv2 input in VMEM (pad=1 handled in-kernel) ----
    h1pad_ref[:, pl.ds(0, 1), :, :] = jnp.zeros((Bt, 1, 18, 32), jnp.float32)
    h1pad_ref[:, pl.ds(17, 1), :, :] = jnp.zeros((Bt, 1, 18, 32), jnp.float32)
    h1pad_ref[:, :, pl.ds(0, 1), :] = jnp.zeros((Bt, 18, 1, 32), jnp.float32)
    h1pad_ref[:, :, pl.ds(17, 1), :] = jnp.zeros((Bt, 18, 1, 32), jnp.float32)
    h1pad_ref[:, pl.ds(1, 16), pl.ds(1, 16), :] = h1.reshape(Bt, 16, 16, 32)

    # ---- conv2 im2col: pack the 9 taps into the contraction dim (K = 9*32) ----
    for dy in range(3):
        for dx in range(3):
            t = dy * 3 + dx
            tap = h1pad_ref[:, pl.ds(dy, 16), pl.ds(dx, 16), :]          # (Bt,16,16,32) f32
            p2_ref[:, pl.ds(32 * t, 32)] = (
                tap.astype(jnp.bfloat16).reshape(Bt * 256, 32))

    # ---- conv2: one tap-packed MXU dot ----
    z2 = jnp.dot(p2_ref[...], w2_ref[...], preferred_element_type=jnp.float32)  # (Bt*256, 64)

    # 2x2 maxpool (same scheme as conv1)
    z2 = z2.reshape(Bt * 8, 2, 16, 64)
    z2 = jnp.maximum(z2[:, 0, :, :], z2[:, 1, :, :])                     # (Bt*8, 16, 64)
    wscr2_ref[...] = z2.reshape(Bt * 8 * 16, 64)
    h2 = jnp.maximum(wscr2_ref[pl.ds(0, Bt * 8 * 8, 2), :],
                     wscr2_ref[pl.ds(1, Bt * 8 * 8, 2), :])              # (Bt*64, 64)
    h2 = jnp.maximum(h2 + b2_ref[...], 0.0)

    o_ref[...] = h2.reshape(Bt, 8, 8, 64).astype(o_ref.dtype)


def conv_block(p1, w1, b1, w2, b2, *, bt=8):
    """p1: (B, 32, 32, 32) bf16 conv1 im2col patches -> (B, 8, 8, 64) bf16."""
    B = p1.shape[0]
    bt = min(bt, B)
    kernel = functools.partial(_conv_block_kernel, Bt=bt)
    return pl.pallas_call(
        kernel,
        out_shape=jax.ShapeDtypeStruct((B, 8, 8, 64), jnp.bfloat16),
        grid_spec=pltpu.PrefetchScalarGridSpec(
            num_scalar_prefetch=0,
            grid=(pl.cdiv(B, bt),),
            in_specs=[
                pl.BlockSpec((bt, 32, 32, 32), lambda i: (i, 0, 0, 0)),
                pl.BlockSpec((32, 32), lambda i: (0, 0)),
                pl.BlockSpec((1, 32), lambda i: (0, 0)),
                pl.BlockSpec((288, 64), lambda i: (0, 0)),
                pl.BlockSpec((1, 64), lambda i: (0, 0)),
            ],
            out_specs=pl.BlockSpec((bt, 8, 8, 64), lambda i: (i, 0, 0, 0)),
            scratch_shapes=[
                pltpu.VMEM((bt, 18, 18, 32), jnp.float32),   # h1 + halo
                pltpu.VMEM((bt * 256, 288), jnp.bfloat16),   # conv2 im2col
                pltpu.VMEM((bt * 512, 32), jnp.float32),     # conv1 W-pool scratch
                pltpu.VMEM((bt * 128, 64), jnp.float32),     # conv2 W-pool scratch
            ],
        ),
        compiler_params=pltpu.CompilerParams(
            dimension_semantics=("parallel",),
            vmem_limit_bytes=32 * 1024 * 1024),
    )(p1, w1, b1, w2, b2)


# -----------------------------------------------------------------------------
# Fused fc1 + ReLU + fc2 kernel
# -----------------------------------------------------------------------------
def _mlp_kernel(x_ref, w1_ref, b1_ref, w2_ref, b2_ref, o_ref):
    # x: (tm, 4096) bf16, w1: (4096, 128) bf16, w2: (128, 128) f32 (N padded 10->128)
    h = jnp.dot(x_ref[...], w1_ref[...], preferred_element_type=jnp.float32)
    h = jnp.maximum(h + b1_ref[...], 0.0)                   # fc1 activation stays f32
    z = jnp.dot(h, w2_ref[...], preferred_element_type=jnp.float32)
    o_ref[...] = (z + b2_ref[...]).astype(o_ref.dtype)


def mlp_head(x, w1, b1, w2, b2, *, tm=256):
    M, K = x.shape
    N = w2.shape[1]
    tm = min(tm, M)
    return pl.pallas_call(
        _mlp_kernel,
        out_shape=jax.ShapeDtypeStruct((M, N), jnp.float32),
        grid_spec=pltpu.PrefetchScalarGridSpec(
            num_scalar_prefetch=0,
            grid=(pl.cdiv(M, tm),),
            in_specs=[
                pl.BlockSpec((tm, K), lambda i: (i, 0)),
                pl.BlockSpec((K, 128), lambda i: (0, 0)),
                pl.BlockSpec((1, 128), lambda i: (0, 0)),
                pl.BlockSpec((128, N), lambda i: (0, 0)),
                pl.BlockSpec((1, N), lambda i: (0, 0)),
            ],
            out_specs=pl.BlockSpec((tm, N), lambda i: (i, 0)),
        ),
        compiler_params=pltpu.CompilerParams(
            dimension_semantics=("parallel",),
            vmem_limit_bytes=32 * 1024 * 1024),
    )(x, w1, b1, w2, b2)


# -----------------------------------------------------------------------------
# Parameters
# -----------------------------------------------------------------------------
def init_params(key):
    """Deterministic params with the exact PyTorch module shapes / init style."""
    ks = jax.random.split(key, 8)

    def u(k, shape, fan_in):
        bound = 1.0 / jnp.sqrt(jnp.float32(fan_in))
        return jax.random.uniform(k, shape, jnp.float32, -bound, bound)

    return {
        "conv1_w": u(ks[0], (32, 3, 3, 3), 3 * 3 * 3),
        "conv1_b": u(ks[1], (32,), 3 * 3 * 3),
        "conv2_w": u(ks[2], (64, 32, 3, 3), 32 * 3 * 3),
        "conv2_b": u(ks[3], (64,), 32 * 3 * 3),
        "fc1_w": u(ks[4], (128, 64 * 8 * 8), 64 * 8 * 8),
        "fc1_b": u(ks[5], (128,), 64 * 8 * 8),
        "fc2_w": u(ks[6], (10, 128), 128),
        "fc2_b": u(ks[7], (10,), 128),
    }


def prepare_params(p):
    """One-time conversion of PyTorch-layout params to the kernel layout."""
    # conv1: (O,I,3,3) -> tap-packed rows (ky,kx,cin) = 27, padded to 32
    w1 = jnp.transpose(p["conv1_w"], (2, 3, 1, 0)).reshape(27, 32)
    w1 = jnp.pad(w1, ((0, 5), (0, 0))).astype(jnp.bfloat16)
    # conv2: (O,I,3,3) -> tap-packed rows (ky,kx,cin) = 288
    w2 = jnp.transpose(p["conv2_w"], (2, 3, 1, 0)).reshape(288, 64).astype(jnp.bfloat16)
    # fc1: columns are NCHW (c,h,w) order in PyTorch -> reorder rows to NHWC (h,w,c)
    fw1 = p["fc1_w"].reshape(128, 64, 8, 8)
    fw1 = jnp.transpose(fw1, (2, 3, 1, 0)).reshape(4096, 128).astype(jnp.bfloat16)
    # fc2: (10,128) -> (128, 10) padded to (128, 128) for a lane-dense output
    fw2 = jnp.pad(p["fc2_w"].T, ((0, 0), (0, 118))).astype(jnp.float32)
    fb2 = jnp.pad(p["fc2_b"], (0, 118)).reshape(1, 128).astype(jnp.float32)
    return {
        "conv1_w": w1,                                             # (32, 32)
        "conv1_b": p["conv1_b"].reshape(1, 32).astype(jnp.float32),
        "conv2_w": w2,                                             # (288, 64)
        "conv2_b": p["conv2_b"].reshape(1, 64).astype(jnp.float32),
        "fc1_w": fw1,                                              # (4096, 128)
        "fc1_b": p["fc1_b"].reshape(1, 128).astype(jnp.float32),
        "fc2_w": fw2,                                              # (128, 128)
        "fc2_b": fb2,                                              # (1, 128)
    }


# -----------------------------------------------------------------------------
# Forward pass (matches PyTorch Net.forward)
# -----------------------------------------------------------------------------
@jax.jit
def net_forward(kp, x_nchw):
    """x_nchw: (B, 3, 32, 32) f32 -> logits (B, 10) f32."""
    B = x_nchw.shape[0]
    x = jnp.transpose(x_nchw, (0, 2, 3, 1)).astype(jnp.bfloat16)       # NCHW -> NHWC
    xp = jnp.pad(x, ((0, 0), (1, 1), (1, 1), (0, 0)))                  # conv1 halo
    # conv1 im2col pre-built in XLA (Cin=3 is tiny): (B, 32, 32, 27) -> pad K to 32
    taps = [xp[:, dy:dy + 32, dx:dx + 32, :]
            for dy in range(3) for dx in range(3)]
    p1 = jnp.concatenate(taps, axis=-1)
    p1 = jnp.pad(p1, ((0, 0), (0, 0), (0, 0), (0, 5)))                 # (B, 32, 32, 32)

    h2 = conv_block(p1, kp["conv1_w"], kp["conv1_b"],
                    kp["conv2_w"], kp["conv2_b"])                      # (B, 8, 8, 64)
    flat = h2.reshape(B, 64 * 8 * 8)                                   # (h, w, c) order
    logits = mlp_head(flat, kp["fc1_w"], kp["fc1_b"],
                      kp["fc2_w"], kp["fc2_b"])                        # (B, 128)
    return logits[:, :10]


if __name__ == "__main__":
    key = jax.random.PRNGKey(0)
    pkey, xkey = jax.random.split(key)
    params = init_params(pkey)
    kparams = prepare_params(params)   # one-time layout conversion (outside jit)
    # Spatial size must be 32x32 so the flatten matches fc1's 64*8*8 input.
    x = jax.random.normal(xkey, (2, 3, 32, 32), jnp.float32)
    out = net_forward(kparams, x)
    jax.block_until_ready(out)
    assert out.shape == (2, 10)
    print("KERNEL_OK")
</pallas_src>

<mosaic_0001>
module attributes {stable_mosaic.version = 11 : i64} {
  func.func @_conv_block_kernel(%arg0: i32, %arg1: memref<2x32x32x32xbf16, #tpu.memory_space<vmem>>, %arg2: memref<32x32xbf16, #tpu.memory_space<vmem>>, %arg3: memref<1x32xf32, #tpu.memory_space<vmem>>, %arg4: memref<288x64xbf16, #tpu.memory_space<vmem>>, %arg5: memref<1x64xf32, #tpu.memory_space<vmem>>, %arg6: memref<2x8x8x64xbf16, #tpu.memory_space<vmem>>, %arg7: memref<2x18x18x32xf32, #tpu.memory_space<vmem>>, %arg8: memref<512x288xbf16, #tpu.memory_space<vmem>>, %arg9: memref<1024x32xf32, #tpu.memory_space<vmem>>, %arg10: memref<256x64xf32, #tpu.memory_space<vmem>>) attributes {dimension_semantics = [#tpu.dimension_semantics<parallel>], iteration_bounds = array<i64: 1>, scalar_prefetch = 0 : i64, scratch_operands = 4 : i64, tpu.core_type = #tpu.core_type<tc>, window_params = [{transform_indices = @transform_0, window_bounds = array<i64: 2, 32, 32, 32>}, {pipeline_mode = #tpu.pipeline_mode<synchronous>, transform_indices = @transform_1, window_bounds = array<i64: 32, 32>}, {pipeline_mode = #tpu.pipeline_mode<synchronous>, transform_indices = @transform_2, window_bounds = array<i64: 1, 32>}, {pipeline_mode = #tpu.pipeline_mode<synchronous>, transform_indices = @transform_3, window_bounds = array<i64: 288, 64>}, {pipeline_mode = #tpu.pipeline_mode<synchronous>, transform_indices = @transform_4, window_bounds = array<i64: 1, 64>}, {transform_indices = @transform_5, window_bounds = array<i64: 2, 8, 8, 64>}]} {
    %c0 = arith.constant 0 : index
    %c0_0 = arith.constant 0 : index
    %c0_1 = arith.constant 0 : index
    %c0_2 = arith.constant 0 : index
    %0 = vector.load %arg1[%c0, %c0_0, %c0_1, %c0_2] : memref<2x32x32x32xbf16, #tpu.memory_space<vmem>>, vector<2x32x32x32xbf16>
    %1 = vector.shape_cast %0 : vector<2x32x32x32xbf16> to vector<2048x32xbf16>
    %c0_3 = arith.constant 0 : index
    %c0_4 = arith.constant 0 : index
    %2 = vector.load %arg2[%c0_3, %c0_4] : memref<32x32xbf16, #tpu.memory_space<vmem>>, vector<32x32xbf16>
    %cst = arith.constant dense<0.000000e+00> : vector<2048x32xf32>
    %3 = tpu.matmul %1, %2, %cst {dimension_numbers = #tpu.dot_dimension_numbers<[1], [0], [0], [1], [0, 0, 1, 1], [], []>} : vector<2048x32xbf16>, vector<32x32xbf16>, vector<2048x32xf32> -> vector<2048x32xf32>
    %4 = vector.shape_cast %3 : vector<2048x32xf32> to vector<32x2x32x32xf32>
    %5 = vector.extract_strided_slice %4 {offsets = [0, 0, 0, 0], sizes = [32, 1, 32, 32], strides = [1, 1, 1, 1]} : vector<32x2x32x32xf32> to vector<32x1x32x32xf32>
    %6 = vector.shape_cast %5 : vector<32x1x32x32xf32> to vector<32x32x32xf32>
    %7 = vector.extract_strided_slice %4 {offsets = [0, 1, 0, 0], sizes = [32, 1, 32, 32], strides = [1, 1, 1, 1]} : vector<32x2x32x32xf32> to vector<32x1x32x32xf32>
    %8 = vector.shape_cast %7 : vector<32x1x32x32xf32> to vector<32x32x32xf32>
    %9 = arith.maximumf %6, %8 : vector<32x32x32xf32>
    %10 = vector.shape_cast %9 : vector<32x32x32xf32> to vector<1024x32xf32>
    %c0_5 = arith.constant 0 : index
    %c0_6 = arith.constant 0 : index
    %11 = vector.load %arg9[%c0_5, %c0_6] : memref<1024x32xf32, #tpu.memory_space<vmem>>, vector<1024x32xf32>
    tpu.vector_store %arg9[%c0_5, %c0_6], %10 {strides = array<i32>} : memref<1024x32xf32, #tpu.memory_space<vmem>>, vector<1024x32xf32>,
    %c0_7 = arith.constant 0 : index
    %c0_8 = arith.constant 0 : index
    %12 = tpu.strided_load %arg9[%c0_7, %c0_8] {strides = array<i32: 2, 1>} : memref<1024x32xf32, #tpu.memory_space<vmem>>, vector<512x32xf32>
    %c1 = arith.constant 1 : index
    %c0_9 = arith.constant 0 : index
    %13 = tpu.strided_load %arg9[%c1, %c0_9] {strides = array<i32: 2, 1>} : memref<1024x32xf32, #tpu.memory_space<vmem>>, vector<512x32xf32>
    %14 = arith.maximumf %12, %13 : vector<512x32xf32>
    %c0_10 = arith.constant 0 : index
    %c0_11 = arith.constant 0 : index
    %15 = vector.load %arg3[%c0_10, %c0_11] : memref<1x32xf32, #tpu.memory_space<vmem>>, vector<1x32xf32>
    %16 = vector.broadcast %15 : vector<1x32xf32> to vector<512x32xf32>
    %17 = arith.addf %14, %16 : vector<512x32xf32>
    %cst_12 = arith.constant 0.000000e+00 : f32
    %18 = vector.broadcast %cst_12 : f32 to vector<512x32xf32>
    %19 = arith.maximumf %17, %18 : vector<512x32xf32>
    %cst_13 = arith.constant 0.000000e+00 : f32
    %20 = vector.broadcast %cst_13 : f32 to vector<2x1x18x32xf32>
    %c0_14 = arith.constant 0 : index
    %c0_15 = arith.constant 0 : index
    %c0_16 = arith.constant 0 : index
    %c0_17 = arith.constant 0 : index
    %21 = vector.load %arg7[%c0_14, %c0_15, %c0_16, %c0_17] : memref<2x18x18x32xf32, #tpu.memory_space<vmem>>, vector<2x1x18x32xf32>
    tpu.vector_store %arg7[%c0_14, %c0_15, %c0_16, %c0_17], %20 {strides = array<i32>} : memref<2x18x18x32xf32, #tpu.memory_space<vmem>>, vector<2x1x18x32xf32>,
    %cst_18 = arith.constant 0.000000e+00 : f32
    %22 = vector.broadcast %cst_18 : f32 to vector<2x1x18x32xf32>
    %c0_19 = arith.constant 0 : index
    %c17 = arith.constant 17 : index
    %c0_20 = arith.constant 0 : index
    %c0_21 = arith.constant 0 : index
    %23 = vector.load %arg7[%c0_19, %c17, %c0_20, %c0_21] : memref<2x18x18x32xf32, #tpu.memory_space<vmem>>, vector<2x1x18x32xf32>
    tpu.vector_store %arg7[%c0_19, %c17, %c0_20, %c0_21], %22 {strides = array<i32>} : memref<2x18x18x32xf32, #tpu.memory_space<vmem>>, vector<2x1x18x32xf32>,
    %cst_22 = arith.constant 0.000000e+00 : f32
    %24 = vector.broadcast %cst_22 : f32 to vector<2x18x1x32xf32>
    %c0_23 = arith.constant 0 : index
    %c0_24 = arith.constant 0 : index
    %c0_25 = arith.constant 0 : index
    %c0_26 = arith.constant 0 : index
    %25 = vector.load %arg7[%c0_23, %c0_24, %c0_25, %c0_26] : memref<2x18x18x32xf32, #tpu.memory_space<vmem>>, vector<2x18x1x32xf32>
    tpu.vector_store %arg7[%c0_23, %c0_24, %c0_25, %c0_26], %24 {strides = array<i32>} : memref<2x18x18x32xf32, #tpu.memory_space<vmem>>, vector<2x18x1x32xf32>,
    %cst_27 = arith.constant 0.000000e+00 : f32
    %26 = vector.broadcast %cst_27 : f32 to vector<2x18x1x32xf32>
    %c0_28 = arith.constant 0 : index
    %c0_29 = arith.constant 0 : index
    %c17_30 = arith.constant 17 : index
    %c0_31 = arith.constant 0 : index
    %27 = vector.load %arg7[%c0_28, %c0_29, %c17_30, %c0_31] : memref<2x18x18x32xf32, #tpu.memory_space<vmem>>, vector<2x18x1x32xf32>
    tpu.vector_store %arg7[%c0_28, %c0_29, %c17_30, %c0_31], %26 {strides = array<i32>} : memref<2x18x18x32xf32, #tpu.memory_space<vmem>>, vector<2x18x1x32xf32>,
    %28 = vector.shape_cast %19 : vector<512x32xf32> to vector<2x16x16x32xf32>
    %c0_32 = arith.constant 0 : index
    %c1_33 = arith.constant 1 : index
    %c1_34 = arith.constant 1 : index
    %c0_35 = arith.constant 0 : index
    %29 = vector.load %arg7[%c0_32, %c1_33, %c1_34, %c0_35] : memref<2x18x18x32xf32, #tpu.memory_space<vmem>>, vector<2x16x16x32xf32>
    tpu.vector_store %arg7[%c0_32, %c1_33, %c1_34, %c0_35], %28 {strides = array<i32>} : memref<2x18x18x32xf32, #tpu.memory_space<vmem>>, vector<2x16x16x32xf32>,
    %c0_36 = arith.constant 0 : index
    %c0_37 = arith.constant 0 : index
    %c0_38 = arith.constant 0 : index
    %c0_39 = arith.constant 0 : index
    %30 = vector.load %arg7[%c0_36, %c0_37, %c0_38, %c0_39] : memref<2x18x18x32xf32, #tpu.memory_space<vmem>>, vector<2x16x16x32xf32>
    %31 = arith.truncf %30 : vector<2x16x16x32xf32> to vector<2x16x16x32xbf16>
    %32 = vector.shape_cast %31 : vector<2x16x16x32xbf16> to vector<512x32xbf16>
    %c0_40 = arith.constant 0 : index
    %c0_41 = arith.constant 0 : index
    %33 = vector.load %arg8[%c0_40, %c0_41] : memref<512x288xbf16, #tpu.memory_space<vmem>>, vector<512x32xbf16>
    tpu.vector_store %arg8[%c0_40, %c0_41], %32 {strides = array<i32>} : memref<512x288xbf16, #tpu.memory_space<vmem>>, vector<512x32xbf16>,
    %c0_42 = arith.constant 0 : index
    %c0_43 = arith.constant 0 : index
    %c1_44 = arith.constant 1 : index
    %c0_45 = arith.constant 0 : index
    %34 = vector.load %arg7[%c0_42, %c0_43, %c1_44, %c0_45] : memref<2x18x18x32xf32, #tpu.memory_space<vmem>>, vector<2x16x16x32xf32>
    %35 = arith.truncf %34 : vector<2x16x16x32xf32> to vector<2x16x16x32xbf16>
    %36 = vector.shape_cast %35 : vector<2x16x16x32xbf16> to vector<512x32xbf16>
    %c0_46 = arith.constant 0 : index
    %c32 = arith.constant 32 : index
    %37 = vector.load %arg8[%c0_46, %c32] : memref<512x288xbf16, #tpu.memory_space<vmem>>, vector<512x32xbf16>
    tpu.vector_store %arg8[%c0_46, %c32], %36 {strides = array<i32>} : memref<512x288xbf16, #tpu.memory_space<vmem>>, vector<512x32xbf16>,
    %c0_47 = arith.constant 0 : index
    %c0_48 = arith.constant 0 : index
    %c2 = arith.constant 2 : index
    %c0_49 = arith.constant 0 : index
    %38 = vector.load %arg7[%c0_47, %c0_48, %c2, %c0_49] : memref<2x18x18x32xf32, #tpu.memory_space<vmem>>, vector<2x16x16x32xf32>
    %39 = arith.truncf %38 : vector<2x16x16x32xf32> to vector<2x16x16x32xbf16>
    %40 = vector.shape_cast %39 : vector<2x16x16x32xbf16> to vector<512x32xbf16>
    %c0_50 = arith.constant 0 : index
    %c64 = arith.constant 64 : index
    %41 = vector.load %arg8[%c0_50, %c64] : memref<512x288xbf16, #tpu.memory_space<vmem>>, vector<512x32xbf16>
    tpu.vector_store %arg8[%c0_50, %c64], %40 {strides = array<i32>} : memref<512x288xbf16, #tpu.memory_space<vmem>>, vector<512x32xbf16>,
    %c0_51 = arith.constant 0 : index
    %c1_52 = arith.constant 1 : index
    %c0_53 = arith.constant 0 : index
    %c0_54 = arith.constant 0 : index
    %42 = vector.load %arg7[%c0_51, %c1_52, %c0_53, %c0_54] : memref<2x18x18x32xf32, #tpu.memory_space<vmem>>, vector<2x16x16x32xf32>
    %43 = arith.truncf %42 : vector<2x16x16x32xf32> to vector<2x16x16x32xbf16>
    %44 = vector.shape_cast %43 : vector<2x16x16x32xbf16> to vector<512x32xbf16>
    %c0_55 = arith.constant 0 : index
    %c96 = arith.constant 96 : index
    %45 = vector.load %arg8[%c0_55, %c96] : memref<512x288xbf16, #tpu.memory_space<vmem>>, vector<512x32xbf16>
    tpu.vector_store %arg8[%c0_55, %c96], %44 {strides = array<i32>} : memref<512x288xbf16, #tpu.memory_space<vmem>>, vector<512x32xbf16>,
    %c0_56 = arith.constant 0 : index
    %c1_57 = arith.constant 1 : index
    %c1_58 = arith.constant 1 : index
    %c0_59 = arith.constant 0 : index
    %46 = vector.load %arg7[%c0_56, %c1_57, %c1_58, %c0_59] : memref<2x18x18x32xf32, #tpu.memory_space<vmem>>, vector<2x16x16x32xf32>
    %47 = arith.truncf %46 : vector<2x16x16x32xf32> to vector<2x16x16x32xbf16>
    %48 = vector.shape_cast %47 : vector<2x16x16x32xbf16> to vector<512x32xbf16>
    %c0_60 = arith.constant 0 : index
    %c128 = arith.constant 128 : index
    %49 = vector.load %arg8[%c0_60, %c128] : memref<512x288xbf16, #tpu.memory_space<vmem>>, vector<512x32xbf16>
    tpu.vector_store %arg8[%c0_60, %c128], %48 {strides = array<i32>} : memref<512x288xbf16, #tpu.memory_space<vmem>>, vector<512x32xbf16>,
    %c0_61 = arith.constant 0 : index
    %c1_62 = arith.constant 1 : index
    %c2_63 = arith.constant 2 : index
    %c0_64 = arith.constant 0 : index
    %50 = vector.load %arg7[%c0_61, %c1_62, %c2_63, %c0_64] : memref<2x18x18x32xf32, #tpu.memory_space<vmem>>, vector<2x16x16x32xf32>
    %51 = arith.truncf %50 : vector<2x16x16x32xf32> to vector<2x16x16x32xbf16>
    %52 = vector.shape_cast %51 : vector<2x16x16x32xbf16> to vector<512x32xbf16>
    %c0_65 = arith.constant 0 : index
    %c160 = arith.constant 160 : index
    %53 = vector.load %arg8[%c0_65, %c160] : memref<512x288xbf16, #tpu.memory_space<vmem>>, vector<512x32xbf16>
    tpu.vector_store %arg8[%c0_65, %c160], %52 {strides = array<i32>} : memref<512x288xbf16, #tpu.memory_space<vmem>>, vector<512x32xbf16>,
    %c0_66 = arith.constant 0 : index
    %c2_67 = arith.constant 2 : index
    %c0_68 = arith.constant 0 : index
    %c0_69 = arith.constant 0 : index
    %54 = vector.load %arg7[%c0_66, %c2_67, %c0_68, %c0_69] : memref<2x18x18x32xf32, #tpu.memory_space<vmem>>, vector<2x16x16x32xf32>
    %55 = arith.truncf %54 : vector<2x16x16x32xf32> to vector<2x16x16x32xbf16>
    %56 = vector.shape_cast %55 : vector<2x16x16x32xbf16> to vector<512x32xbf16>
    %c0_70 = arith.constant 0 : index
    %c192 = arith.constant 192 : index
    %57 = vector.load %arg8[%c0_70, %c192] : memref<512x288xbf16, #tpu.memory_space<vmem>>, vector<512x32xbf16>
    tpu.vector_store %arg8[%c0_70, %c192], %56 {strides = array<i32>} : memref<512x288xbf16, #tpu.memory_space<vmem>>, vector<512x32xbf16>,
    %c0_71 = arith.constant 0 : index
    %c2_72 = arith.constant 2 : index
    %c1_73 = arith.constant 1 : index
    %c0_74 = arith.constant 0 : index
    %58 = vector.load %arg7[%c0_71, %c2_72, %c1_73, %c0_74] : memref<2x18x18x32xf32, #tpu.memory_space<vmem>>, vector<2x16x16x32xf32>
    %59 = arith.truncf %58 : vector<2x16x16x32xf32> to vector<2x16x16x32xbf16>
    %60 = vector.shape_cast %59 : vector<2x16x16x32xbf16> to vector<512x32xbf16>
    %c0_75 = arith.constant 0 : index
    %c224 = arith.constant 224 : index
    %61 = vector.load %arg8[%c0_75, %c224] : memref<512x288xbf16, #tpu.memory_space<vmem>>, vector<512x32xbf16>
    tpu.vector_store %arg8[%c0_75, %c224], %60 {strides = array<i32>} : memref<512x288xbf16, #tpu.memory_space<vmem>>, vector<512x32xbf16>,
    %c0_76 = arith.constant 0 : index
    %c2_77 = arith.constant 2 : index
    %c2_78 = arith.constant 2 : index
    %c0_79 = arith.constant 0 : index
    %62 = vector.load %arg7[%c0_76, %c2_77, %c2_78, %c0_79] : memref<2x18x18x32xf32, #tpu.memory_space<vmem>>, vector<2x16x16x32xf32>
    %63 = arith.truncf %62 : vector<2x16x16x32xf32> to vector<2x16x16x32xbf16>
    %64 = vector.shape_cast %63 : vector<2x16x16x32xbf16> to vector<512x32xbf16>
    %c0_80 = arith.constant 0 : index
    %c256 = arith.constant 256 : index
    %65 = vector.load %arg8[%c0_80, %c256] : memref<512x288xbf16, #tpu.memory_space<vmem>>, vector<512x32xbf16>
    tpu.vector_store %arg8[%c0_80, %c256], %64 {strides = array<i32>} : memref<512x288xbf16, #tpu.memory_space<vmem>>, vector<512x32xbf16>,
    %c0_81 = arith.constant 0 : index
    %c0_82 = arith.constant 0 : index
    %66 = vector.load %arg8[%c0_81, %c0_82] : memref<512x288xbf16, #tpu.memory_space<vmem>>, vector<512x288xbf16>
    %c0_83 = arith.constant 0 : index
    %c0_84 = arith.constant 0 : index
    %67 = vector.load %arg4[%c0_83, %c0_84] : memref<288x64xbf16, #tpu.memory_space<vmem>>, vector<288x64xbf16>
    %cst_85 = arith.constant dense<0.000000e+00> : vector<512x64xf32>
    %68 = tpu.matmul %66, %67, %cst_85 {dimension_numbers = #tpu.dot_dimension_numbers<[1], [0], [0], [1], [0, 0, 1, 1], [], []>} : vector<512x288xbf16>, vector<288x64xbf16>, vector<512x64xf32> -> vector<512x64xf32>
    %69 = vector.shape_cast %68 : vector<512x64xf32> to vector<16x2x16x64xf32>
    %70 = vector.extract_strided_slice %69 {offsets = [0, 0, 0, 0], sizes = [16, 1, 16, 64], strides = [1, 1, 1, 1]} : vector<16x2x16x64xf32> to vector<16x1x16x64xf32>
    %71 = vector.shape_cast %70 : vector<16x1x16x64xf32> to vector<16x16x64xf32>
    %72 = vector.extract_strided_slice %69 {offsets = [0, 1, 0, 0], sizes = [16, 1, 16, 64], strides = [1, 1, 1, 1]} : vector<16x2x16x64xf32> to vector<16x1x16x64xf32>
    %73 = vector.shape_cast %72 : vector<16x1x16x64xf32> to vector<16x16x64xf32>
    %74 = arith.maximumf %71, %73 : vector<16x16x64xf32>
    %75 = vector.shape_cast %74 : vector<16x16x64xf32> to vector<256x64xf32>
    %c0_86 = arith.constant 0 : index
    %c0_87 = arith.constant 0 : index
    %76 = vector.load %arg10[%c0_86, %c0_87] : memref<256x64xf32, #tpu.memory_space<vmem>>, vector<256x64xf32>
    tpu.vector_store %arg10[%c0_86, %c0_87], %75 {strides = array<i32>} : memref<256x64xf32, #tpu.memory_space<vmem>>, vector<256x64xf32>,
    %c0_88 = arith.constant 0 : index
    %c0_89 = arith.constant 0 : index
    %77 = tpu.strided_load %arg10[%c0_88, %c0_89] {strides = array<i32: 2, 1>} : memref<256x64xf32, #tpu.memory_space<vmem>>, vector<128x64xf32>
    %c1_90 = arith.constant 1 : index
    %c0_91 = arith.constant 0 : index
    %78 = tpu.strided_load %arg10[%c1_90, %c0_91] {strides = array<i32: 2, 1>} : memref<256x64xf32, #tpu.memory_space<vmem>>, vector<128x64xf32>
    %79 = arith.maximumf %77, %78 : vector<128x64xf32>
    %c0_92 = arith.constant 0 : index
    %c0_93 = arith.constant 0 : index
    %80 = vector.load %arg5[%c0_92, %c0_93] : memref<1x64xf32, #tpu.memory_space<vmem>>, vector<1x64xf32>
    %81 = vector.broadcast %80 : vector<1x64xf32> to vector<128x64xf32>
    %82 = arith.addf %79, %81 : vector<128x64xf32>
    %cst_94 = arith.constant 0.000000e+00 : f32
    %83 = vector.broadcast %cst_94 : f32 to vector<128x64xf32>
    %84 = arith.maximumf %82, %83 : vector<128x64xf32>
    %85 = vector.shape_cast %84 : vector<128x64xf32> to vector<2x8x8x64xf32>
    %86 = arith.truncf %85 : vector<2x8x8x64xf32> to vector<2x8x8x64xbf16>
    %c0_95 = arith.constant 0 : index
    %c0_96 = arith.constant 0 : index
    %c0_97 = arith.constant 0 : index
    %c0_98 = arith.constant 0 : index
    %87 = vector.load %arg6[%c0_95, %c0_96, %c0_97, %c0_98] : memref<2x8x8x64xbf16, #tpu.memory_space<vmem>>, vector<2x8x8x64xbf16>
    tpu.vector_store %arg6[%c0_95, %c0_96, %c0_97, %c0_98], %86 {strides = array<i32>} : memref<2x8x8x64xbf16, #tpu.memory_space<vmem>>, vector<2x8x8x64xbf16>,
    return
  }
  func.func @transform_0(%arg0: i32) -> (i32, i32, i32, i32) {
    %c0_i32 = arith.constant 0 : i32
    %c0_i32_0 = arith.constant 0 : i32
    %c0_i32_1 = arith.constant 0 : i32
    %c0_i32_2 = arith.constant 0 : i32
    return %arg0, %c0_i32, %c0_i32_0, %c0_i32_1 : i32, i32, i32, i32
  }
  func.func @transform_1(%arg0: i32) -> (i32, i32) {
    %c0_i32 = arith.constant 0 : i32
    %c0_i32_0 = arith.constant 0 : i32
    %c0_i32_1 = arith.constant 0 : i32
    return %c0_i32, %c0_i32_0 : i32, i32
  }
  func.func @transform_2(%arg0: i32) -> (i32, i32) {
    %c0_i32 = arith.constant 0 : i32
    %c0_i32_0 = arith.constant 0 : i32
    %c0_i32_1 = arith.constant 0 : i32
    return %c0_i32, %c0_i32_0 : i32, i32
  }
  func.func @transform_3(%arg0: i32) -> (i32, i32) {
    %c0_i32 = arith.constant 0 : i32
    %c0_i32_0 = arith.constant 0 : i32
    %c0_i32_1 = arith.constant 0 : i32
    return %c0_i32, %c0_i32_0 : i32, i32
  }
  func.func @transform_4(%arg0: i32) -> (i32, i32) {
    %c0_i32 = arith.constant 0 : i32
    %c0_i32_0 = arith.constant 0 : i32
    %c0_i32_1 = arith.constant 0 : i32
    return %c0_i32, %c0_i32_0 : i32, i32
  }
  func.func @transform_5(%arg0: i32) -> (i32, i32, i32, i32) {
    %c0_i32 = arith.constant 0 : i32
    %c0_i32_0 = arith.constant 0 : i32
    %c0_i32_1 = arith.constant 0 : i32
    %c0_i32_2 = arith.constant 0 : i32
    return %arg0, %c0_i32, %c0_i32_0, %c0_i32_1 : i32, i32, i32, i32
  }
}

module attributes {stable_mosaic.version = 11 : i64} {
  func.func @_mlp_kernel(%arg0: i32, %arg1: memref<2x4096xbf16, #tpu.memory_space<vmem>>, %arg2: memref<4096x128xbf16, #tpu.memory_space<vmem>>, %arg3: memref<1x128xf32, #tpu.memory_space<vmem>>, %arg4: memref<128x128xf32, #tpu.memory_space<vmem>>, %arg5: memref<1x128xf32, #tpu.memory_space<vmem>>, %arg6: memref<2x128xf32, #tpu.memory_space<vmem>>) attributes {dimension_semantics = [#tpu.dimension_semantics<parallel>], iteration_bounds = array<i64: 1>, scalar_prefetch = 0 : i64, scratch_operands = 0 : i64, tpu.core_type = #tpu.core_type<tc>, window_params = [{transform_indices = @transform_0, window_bounds = array<i64: 2, 4096>}, {pipeline_mode = #tpu.pipeline_mode<synchronous>, transform_indices = @transform_1, window_bounds = array<i64: 4096, 128>}, {pipeline_mode = #tpu.pipeline_mode<synchronous>, transform_indices = @transform_2, window_bounds = array<i64: 1, 128>}, {pipeline_mode = #tpu.pipeline_mode<synchronous>, transform_indices = @transform_3, window_bounds = array<i64: 128, 128>}, {pipeline_mode = #tpu.pipeline_mode<synchronous>, transform_indices = @transform_4, window_bounds = array<i64: 1, 128>}, {transform_indices = @transform_5, window_bounds = array<i64: 2, 128>}]} {
    %c0 = arith.constant 0 : index
    %c0_0 = arith.constant 0 : index
    %0 = vector.load %arg1[%c0, %c0_0] : memref<2x4096xbf16, #tpu.memory_space<vmem>>, vector<2x4096xbf16>
    %c0_1 = arith.constant 0 : index
    %c0_2 = arith.constant 0 : index
    %1 = vector.load %arg2[%c0_1, %c0_2] : memref<4096x128xbf16, #tpu.memory_space<vmem>>, vector<4096x128xbf16>
    %cst = arith.constant dense<0.000000e+00> : vector<2x128xf32>
    %2 = tpu.matmul %0, %1, %cst {dimension_numbers = #tpu.dot_dimension_numbers<[1], [0], [0], [1], [0, 0, 1, 1], [], []>} : vector<2x4096xbf16>, vector<4096x128xbf16>, vector<2x128xf32> -> vector<2x128xf32>
    %c0_3 = arith.constant 0 : index
    %c0_4 = arith.constant 0 : index
    %3 = vector.load %arg3[%c0_3, %c0_4] : memref<1x128xf32, #tpu.memory_space<vmem>>, vector<1x128xf32>
    %4 = vector.broadcast %3 : vector<1x128xf32> to vector<2x128xf32>
    %5 = arith.addf %2, %4 : vector<2x128xf32>
    %cst_5 = arith.constant 0.000000e+00 : f32
    %6 = vector.broadcast %cst_5 : f32 to vector<2x128xf32>
    %7 = arith.maximumf %5, %6 : vector<2x128xf32>
    %c0_6 = arith.constant 0 : index
    %c0_7 = arith.constant 0 : index
    %8 = vector.load %arg4[%c0_6, %c0_7] : memref<128x128xf32, #tpu.memory_space<vmem>>, vector<128x128xf32>
    %cst_8 = arith.constant dense<0.000000e+00> : vector<2x128xf32>
    %9 = tpu.matmul %7, %8, %cst_8 {dimension_numbers = #tpu.dot_dimension_numbers<[1], [0], [0], [1], [0, 0, 1, 1], [], []>} : vector<2x128xf32>, vector<128x128xf32>, vector<2x128xf32> -> vector<2x128xf32>
    %c0_9 = arith.constant 0 : index
    %c0_10 = arith.constant 0 : index
    %10 = vector.load %arg5[%c0_9, %c0_10] : memref<1x128xf32, #tpu.memory_space<vmem>>, vector<1x128xf32>
    %11 = vector.broadcast %10 : vector<1x128xf32> to vector<2x128xf32>
    %12 = arith.addf %9, %11 : vector<2x128xf32>
    %c0_11 = arith.constant 0 : index
    %c0_12 = arith.constant 0 : index
    %13 = vector.load %arg6[%c0_11, %c0_12] : memref<2x128xf32, #tpu.memory_space<vmem>>, vector<2x128xf32>
    tpu.vector_store %arg6[%c0_11, %c0_12], %12 {strides = array<i32>} : memref<2x128xf32, #tpu.memory_space<vmem>>, vector<2x128xf32>,
    return
  }
  func.func @transform_0(%arg0: i32) -> (i32, i32) {
    %c0_i32 = arith.constant 0 : i32
    %c0_i32_0 = arith.constant 0 : i32
    return %arg0, %c0_i32 : i32, i32
  }
  func.func @transform_1(%arg0: i32) -> (i32, i32) {
    %c0_i32 = arith.constant 0 : i32
    %c0_i32_0 = arith.constant 0 : i32
    %c0_i32_1 = arith.constant 0 : i32
    return %c0_i32, %c0_i32_0 : i32, i32
  }
  func.func @transform_2(%arg0: i32) -> (i32, i32) {
    %c0_i32 = arith.constant 0 : i32
    %c0_i32_0 = arith.constant 0 : i32
    %c0_i32_1 = arith.constant 0 : i32
    return %c0_i32, %c0_i32_0 : i32, i32
  }
  func.func @transform_3(%arg0: i32) -> (i32, i32) {
    %c0_i32 = arith.constant 0 : i32
    %c0_i32_0 = arith.constant 0 : i32
    %c0_i32_1 = arith.constant 0 : i32
    return %c0_i32, %c0_i32_0 : i32, i32
  }
  func.func @transform_4(%arg0: i32) -> (i32, i32) {
    %c0_i32 = arith.constant 0 : i32
    %c0_i32_0 = arith.constant 0 : i32
    %c0_i32_1 = arith.constant 0 : i32
    return %c0_i32, %c0_i32_0 : i32, i32
  }
  func.func @transform_5(%arg0: i32) -> (i32, i32) {
    %c0_i32 = arith.constant 0 : i32
    %c0_i32_0 = arith.constant 0 : i32
    return %arg0, %c0_i32 : i32, i32
  }
}

</mosaic_0001>

<llo_original>
// kernel: net_forward.3
$region0: #{net_forward.3}
  #allocation0 [shape = 'u32[]', space=smem, size = 0x4, offset = 0x4, fixed_abs, tag = 'smem constant byte address 0x4 - core index']
  #allocation1 [shape = 'u32[144,128]{1,0:T(1,128)}', space=vmem, size = 0x12000, scoped, tag = 'internal scratch']
  %s0 = inlined_call_operand.vmem [shape: bf16[2,4096], index: 0, kind: input, shape index: {}]
  %s1 = inlined_call_operand.vmem [shape: bf16[4096,128], index: 1, kind: input, shape index: {}]
  %s2 = inlined_call_operand.vmem [shape: f32[1,128], index: 2, kind: input, shape index: {}]
  %s3 = inlined_call_operand.vmem [shape: f32[128,128], index: 3, kind: input, shape index: {}]
  %s4 = inlined_call_operand.vmem [shape: f32[1,128], index: 4, kind: input, shape index: {}]
  %s5 = inlined_call_operand.hbm [shape: f32[2,128], index: 5, kind: output, shape index: {}]
  %s6 = sld [smem:[#allocation0]]
  $region30: #{net_forward.3} parent=0
    _
  %s8 = ssub.s32 1, %s6
  %s9 = scalar_select 0, %s8, %s6
  $region1: #{net_forward.3} parent=0
    #allocation2 [shape = 'u8[1024]{0}', space=vmem, size = 0x400, scoped, tag = 'output window, operand 0, single buffered']
    #allocation3 [shape = 's32[1]{0}', space=sflag, size = 0x4, scoped, tag = 'scoped memory for net_forward.3']
    %10 = vsyncpa [#allocation3], 0
    // Predicated region
    $region2: #{net_forward.3} parent=1 // pred_check
      _
    $region3: #{net_forward.3} parent=1 // pred_check_branch
      %12 = sbr.rel (0) target = $region5
    $region4: #{net_forward.3} parent=1 // pred_region
      _
    $region5: #{net_forward.3} parent=1 // pred_fallthru
      _
    // Predicated region
    $region6: #{net_forward.3} parent=1 // pred_check
      _
    $region7: #{net_forward.3} parent=1 // pred_check_branch
      %14 = sbr.rel (0) target = $region9
    $region8: #{net_forward.3} parent=1 // pred_region
      _
    $region9: #{net_forward.3} parent=1 // pred_fallthru
      _
    // Predicated region
    $region10: #{net_forward.3} parent=1 // pred_check
      _
    $region11: #{net_forward.3} parent=1 // pred_check_branch
      %16 = sbr.rel (0) target = $region13
    $region12: #{net_forward.3} parent=1 // pred_region
      _
    $region13: #{net_forward.3} parent=1 // pred_fallthru
      _
    // Predicated region
    $region14: #{net_forward.3} parent=1 // pred_check
      _
    $region15: #{net_forward.3} parent=1 // pred_check_branch
      %18 = sbr.rel (0) target = $region17
    $region16: #{net_forward.3} parent=1 // pred_region
      _
    $region17: #{net_forward.3} parent=1 // pred_fallthru
      _
    // Predicated region
    $region18: #{net_forward.3} parent=1 // pred_check
      _
    $region19: #{net_forward.3} parent=1 // pred_check_branch
      %20 = sbr.rel (0) target = $region21
    $region20: #{net_forward.3} parent=1 // pred_region
      _
    $region21: #{net_forward.3} parent=1 // pred_fallthru
      _
    %v22 = vld [vmem:[%s0] sm:$0xff]
    %v23 = vld [vmem:[%s0 + $0x8] sm:$0xff]
    %v24 = vld [vmem:[%s0 + $0x10] sm:$0xff]
    %v25 = vld [vmem:[%s0 + $0x18] sm:$0xff]
    %v26 = vld [vmem:[%s1] sm:$0xf]
    %v27 = vld [vmem:[%s1 + $0x4] sm:$0xf]
    %v28 = vld [vmem:[%s1 + $0x8] sm:$0xf]
    %v29 = vld [vmem:[%s1 + $0xc] sm:$0xf]
    %v30 = vld [vmem:[%s1 + $0x10] sm:$0xf]
    %v31 = vld [vmem:[%s1 + $0x14] sm:$0xf]
    %v32 = vld [vmem:[%s1 + $0x18] sm:$0xf]
    %v33 = vld [vmem:[%s1 + $0x1c] sm:$0xf]
    %v34 = vld [vmem:[%s1 + $0x20] sm:$0xf]
    %v35 = vld [vmem:[%s1 + $0x24] sm:$0xf]
    %v36 = vld [vmem:[%s1 + $0x28] sm:$0xf]
    %v37 = vld [vmem:[%s1 + $0x2c] sm:$0xf]
    %v38 = vld [vmem:[%s1 + $0x30] sm:$0xf]
    %v39 = vld [vmem:[%s1 + $0x34] sm:$0xf]
    %v40 = vld [vmem:[%s1 + $0x38] sm:$0xf]
    %v41 = vld [vmem:[%s1 + $0x3c] sm:$0xf]
    %v42 = vld [vmem:[%s1 + $0x40] sm:$0xf]
    %v43 = vld [vmem:[%s1 + $0x44] sm:$0xf]
    %v44 = vld [vmem:[%s1 + $0x48] sm:$0xf]
    %v45 = vld [vmem:[%s1 + $0x4c] sm:$0xf]
    %v46 = vld [vmem:[%s1 + $0x50] sm:$0xf]
    %v47 = vld [vmem:[%s1 + $0x54] sm:$0xf]
    %v48 = vld [vmem:[%s1 + $0x58] sm:$0xf]
    %v49 = vld [vmem:[%s1 + $0x5c] sm:$0xf]
    %v50 = vld [vmem:[%s1 + $0x60] sm:$0xf]
    %v51 = vld [vmem:[%s1 + $0x64] sm:$0xf]
    %v52 = vld [vmem:[%s1 + $0x68] sm:$0xf]
    %v53 = vld [vmem:[%s1 + $0x6c] sm:$0xf]
    %v54 = vld [vmem:[%s1 + $0x70] sm:$0xf]
    %v55 = vld [vmem:[%s1 + $0x74] sm:$0xf]
    %v56 = vld [vmem:[%s1 + $0x78] sm:$0xf]
    %v57 = vld [vmem:[%s1 + $0x7c] sm:$0xf]
    %v58 = vld [vmem:[%s1 + $0x80] sm:$0xf]
    %v59 = vld [vmem:[%s1 + $0x84] sm:$0xf]
    %v60 = vld [vmem:[%s1 + $0x88] sm:$0xf]
    %v61 = vld [vmem:[%s1 + $0x8c] sm:$0xf]
    %v62 = vld [vmem:[%s1 + $0x90] sm:$0xf]
    %v63 = vld [vmem:[%s1 + $0x94] sm:$0xf]
    %v64 = vld [vmem:[%s1 + $0x98] sm:$0xf]
    %v65 = vld [vmem:[%s1 + $0x9c] sm:$0xf]
    %v66 = vld [vmem:[%s1 + $0xa0] sm:$0xf]
    %v67 = vld [vmem:[%s1 + $0xa4] sm:$0xf]
    %v68 = vld [vmem:[%s1 + $0xa8] sm:$0xf]
    %v69 = vld [vmem:[%s1 + $0xac] sm:$0xf]
    %v70 = vld [vmem:[%s1 + $0xb0] sm:$0xf]
    %v71 = vld [vmem:[%s1 + $0xb4] sm:$0xf]
    %v72 = vld [vmem:[%s1 + $0xb8] sm:$0xf]
    %v73 = vld [vmem:[%s1 + $0xbc] sm:$0xf]
    %v74 = vld [vmem:[%s1 + $0xc0] sm:$0xf]
    %v75 = vld [vmem:[%s1 + $0xc4] sm:$0xf]
    %v76 = vld [vmem:[%s1 + $0xc8] sm:$0xf]
    %v77 = vld [vmem:[%s1 + $0xcc] sm:$0xf]
    %v78 = vld [vmem:[%s1 + $0xd0] sm:$0xf]
    %v79 = vld [vmem:[%s1 + $0xd4] sm:$0xf]
    %v80 = vld [vmem:[%s1 + $0xd8] sm:$0xf]
    %v81 = vld [vmem:[%s1 + $0xdc] sm:$0xf]
    %v82 = vld [vmem:[%s1 + $0xe0] sm:$0xf]
    %v83 = vld [vmem:[%s1 + $0xe4] sm:$0xf]
    %v84 = vld [vmem:[%s1 + $0xe8] sm:$0xf]
    %v85 = vld [vmem:[%s1 + $0xec] sm:$0xf]
    %v86 = vld [vmem:[%s1 + $0xf0] sm:$0xf]
    %v87 = vld [vmem:[%s1 + $0xf4] sm:$0xf]
    %v88 = vld [vmem:[%s1 + $0xf8] sm:$0xf]
    %v89 = vld [vmem:[%s1 + $0xfc] sm:$0xf]
    %v90 = vld [vmem:[%s1 + $0x100] sm:$0xf]
    %v91 = vld [vmem:[%s1 + $0x104] sm:$0xf]
    %v92 = vld [vmem:[%s1 + $0x108] sm:$0xf]
    %v93 = vld [vmem:[%s1 + $0x10c] sm:$0xf]
    %v94 = vld [vmem:[%s1 + $0x110] sm:$0xf]
    %v95 = vld [vmem:[%s1 + $0x114] sm:$0xf]
    %v96 = vld [vmem:[%s1 + $0x118] sm:$0xf]
    %v97 = vld [vmem:[%s1 + $0x11c] sm:$0xf]
    %v98 = vld [vmem:[%s1 + $0x120] sm:$0xf]
    %v99 = vld [vmem:[%s1 + $0x124] sm:$0xf]
    %v100 = vld [vmem:[%s1 + $0x128] sm:$0xf]
    %v101 = vld [vmem:[%s1 + $0x12c] sm:$0xf]
    %v102 = vld [vmem:[%s1 + $0x130] sm:$0xf]
    %v103 = vld [vmem:[%s1 + $0x134] sm:$0xf]
    %v104 = vld [vmem:[%s1 + $0x138] sm:$0xf]
    %v105 = vld [vmem:[%s1 + $0x13c] sm:$0xf]
    %v106 = vld [vmem:[%s1 + $0x140] sm:$0xf]
    %v107 = vld [vmem:[%s1 + $0x144] sm:$0xf]
    %v108 = vld [vmem:[%s1 + $0x148] sm:$0xf]
    %v109 = vld [vmem:[%s1 + $0x14c] sm:$0xf]
    %v110 = vld [vmem:[%s1 + $0x150] sm:$0xf]
    %v111 = vld [vmem:[%s1 + $0x154] sm:$0xf]
    %v112 = vld [vmem:[%s1 + $0x158] sm:$0xf]
    %v113 = vld [vmem:[%s1 + $0x15c] sm:$0xf]
    %v114 = vld [vmem:[%s1 + $0x160] sm:$0xf]
    %v115 = vld [vmem:[%s1 + $0x164] sm:$0xf]
    %v116 = vld [vmem:[%s1 + $0x168] sm:$0xf]
    %v117 = vld [vmem:[%s1 + $0x16c] sm:$0xf]
    %v118 = vld [vmem:[%s1 + $0x170] sm:$0xf]
    %v119 = vld [vmem:[%s1 + $0x174] sm:$0xf]
    %v120 = vld [vmem:[%s1 + $0x178] sm:$0xf]
    %v121 = vld [vmem:[%s1 + $0x17c] sm:$0xf]
    %v122 = vld [vmem:[%s1 + $0x180] sm:$0xf]
    %v123 = vld [vmem:[%s1 + $0x184] sm:$0xf]
    %v124 = vld [vmem:[%s1 + $0x188] sm:$0xf]
    %v125 = vld [vmem:[%s1 + $0x18c] sm:$0xf]
    %v126 = vld [vmem:[%s1 + $0x190] sm:$0xf]
    %v127 = vld [vmem:[%s1 + $0x194] sm:$0xf]
    %v128 = vld [vmem:[%s1 + $0x198] sm:$0xf]
    %v129 = vld [vmem:[%s1 + $0x19c] sm:$0xf]
    %v130 = vld [vmem:[%s1 + $0x1a0] sm:$0xf]
    %v131 = vld [vmem:[%s1 + $0x1a4] sm:$0xf]
    %v132 = vld [vmem:[%s1 + $0x1a8] sm:$0xf]
    %v133 = vld [vmem:[%s1 + $0x1ac] sm:$0xf]
    %v134 = vld [vmem:[%s1 + $0x1b0] sm:$0xf]
    %v135 = vld [vmem:[%s1 + $0x1b4] sm:$0xf]
    %v136 = vld [vmem:[%s1 + $0x1b8] sm:$0xf]
    %v137 = vld [vmem:[%s1 + $0x1bc] sm:$0xf]
    %v138 = vld [vmem:[%s1 + $0x1c0] sm:$0xf]
    %v139 = vld [vmem:[%s1 + $0x1c4] sm:$0xf]
    %v140 = vld [vmem:[%s1 + $0x1c8] sm:$0xf]
    %v141 = vld [vmem:[%s1 + $0x1cc] sm:$0xf]
    %v142 = vld [vmem:[%s1 + $0x1d0] sm:$0xf]
    %v143 = vld [vmem:[%s1 + $0x1d4] sm:$0xf]
    %v144 = vld [vmem:[%s1 + $0x1d8] sm:$0xf]
    %v145 = vld [vmem:[%s1 + $0x1dc] sm:$0xf]
    %v146 = vld [vmem:[%s1 + $0x1e0] sm:$0xf]
    %v147 = vld [vmem:[%s1 + $0x1e4] sm:$0xf]
    %v148 = vld [vmem:[%s1 + $0x1e8] sm:$0xf]
    %v149 = vld [vmem:[%s1 + $0x1ec] sm:$0xf]
    %v150 = vld [vmem:[%s1 + $0x1f0] sm:$0xf]
    %v151 = vld [vmem:[%s1 + $0x1f4] sm:$0xf]
    %v152 = vld [vmem:[%s1 + $0x1f8] sm:$0xf]
    %v153 = vld [vmem:[%s1 + $0x1fc] sm:$0xf]
    %v154 = vld [vmem:[%s1 + $0x200] sm:$0xf]
    %v155 = vld [vmem:[%s1 + $0x204] sm:$0xf]
    %v156 = vld [vmem:[%s1 + $0x208] sm:$0xf]
    %v157 = vld [vmem:[%s1 + $0x20c] sm:$0xf]
    %v158 = vld [vmem:[%s1 + $0x210] sm:$0xf]
    %v159 = vld [vmem:[%s1 + $0x214] sm:$0xf]
    %v160 = vld [vmem:[%s1 + $0x218] sm:$0xf]
    %v161 = vld [vmem:[%s1 + $0x21c] sm:$0xf]
    %v162 = vld [vmem:[%s1 + $0x220] sm:$0xf]
    %v163 = vld [vmem:[%s1 + $0x224] sm:$0xf]
    %v164 = vld [vmem:[%s1 + $0x228] sm:$0xf]
    %v165 = vld [vmem:[%s1 + $0x22c] sm:$0xf]
    %v166 = vld [vmem:[%s1 + $0x230] sm:$0xf]
    %v167 = vld [vmem:[%s1 + $0x234] sm:$0xf]
    %v168 = vld [vmem:[%s1 + $0x238] sm:$0xf]
    %v169 = vld [vmem:[%s1 + $0x23c] sm:$0xf]
    %v170 = vld [vmem:[%s1 + $0x240] sm:$0xf]
    %v171 = vld [vmem:[%s1 + $0x244] sm:$0xf]
    %v172 = vld [vmem:[%s1 + $0x248] sm:$0xf]
    %v173 = vld [vmem:[%s1 + $0x24c] sm:$0xf]
    %v174 = vld [vmem:[%s1 + $0x250] sm:$0xf]
    %v175 = vld [vmem:[%s1 + $0x254] sm:$0xf]
    %v176 = vld [vmem:[%s1 + $0x258] sm:$0xf]
    %v177 = vld [vmem:[%s1 + $0x25c] sm:$0xf]
    %v178 = vld [vmem:[%s1 + $0x260] sm:$0xf]
    %v179 = vld [vmem:[%s1 + $0x264] sm:$0xf]
    %v180 = vld [vmem:[%s1 + $0x268] sm:$0xf]
    %v181 = vld [vmem:[%s1 + $0x26c] sm:$0xf]
    %v182 = vld [vmem:[%s1 + $0x270] sm:$0xf]
    %v183 = vld [vmem:[%s1 + $0x274] sm:$0xf]
    %v184 = vld [vmem:[%s1 + $0x278] sm:$0xf]
    %v185 = vld [vmem:[%s1 + $0x27c] sm:$0xf]
    %v186 = vld [vmem:[%s1 + $0x280] sm:$0xf]
    %v187 = vld [vmem:[%s1 + $0x284] sm:$0xf]
    %v188 = vld [vmem:[%s1 + $0x288] sm:$0xf]
    %v189 = vld [vmem:[%s1 + $0x28c] sm:$0xf]
    %v190 = vld [vmem:[%s1 + $0x290] sm:$0xf]
    %v191 = vld [vmem:[%s1 + $0x294] sm:$0xf]
    %v192 = vld [vmem:[%s1 + $0x298] sm:$0xf]
    %v193 = vld [vmem:[%s1 + $0x29c] sm:$0xf]
    %v194 = vld [vmem:[%s1 + $0x2a0] sm:$0xf]
    %v195 = vld [vmem:[%s1 + $0x2a4] sm:$0xf]
    %v196 = vld [vmem:[%s1 + $0x2a8] sm:$0xf]
    %v197 = vld [vmem:[%s1 + $0x2ac] sm:$0xf]
    %v198 = vld [vmem:[%s1 + $0x2b0] sm:$0xf]
    %v199 = vld [vmem:[%s1 + $0x2b4] sm:$0xf]
    %v200 = vld [vmem:[%s1 + $0x2b8] sm:$0xf]
    %v201 = vld [vmem:[%s1 + $0x2bc] sm:$0xf]
    %v202 = vld [vmem:[%s1 + $0x2c0] sm:$0xf]
    %v203 = vld [vmem:[%s1 + $0x2c4] sm:$0xf]
    %v204 = vld [vmem:[%s1 + $0x2c8] sm:$0xf]
    %v205 = vld [vmem:[%s1 + $0x2cc] sm:$0xf]
    %v206 = vld [vmem:[%s1 + $0x2d0] sm:$0xf]
    %v207 = vld [vmem:[%s1 + $0x2d4] sm:$0xf]
    %v208 = vld [vmem:[%s1 + $0x2d8] sm:$0xf]
    %v209 = vld [vmem:[%s1 + $0x2dc] sm:$0xf]
    %v210 = vld [vmem:[%s1 + $0x2e0] sm:$0xf]
    %v211 = vld [vmem:[%s1 + $0x2e4] sm:$0xf]
    %v212 = vld [vmem:[%s1 + $0x2e8] sm:$0xf]
    %v213 = vld [vmem:[%s1 + $0x2ec] sm:$0xf]
    %v214 = vld [vmem:[%s1 + $0x2f0] sm:$0xf]
    %v215 = vld [vmem:[%s1 + $0x2f4] sm:$0xf]
    %v216 = vld [vmem:[%s1 + $0x2f8] sm:$0xf]
    %v217 = vld [vmem:[%s1 + $0x2fc] sm:$0xf]
    %v218 = vld [vmem:[%s1 + $0x300] sm:$0xf]
    %v219 = vld [vmem:[%s1 + $0x304] sm:$0xf]
    %v220 = vld [vmem:[%s1 + $0x308] sm:$0xf]
    %v221 = vld [vmem:[%s1 + $0x30c] sm:$0xf]
    %v222 = vld [vmem:[%s1 + $0x310] sm:$0xf]
    %v223 = vld [vmem:[%s1 + $0x314] sm:$0xf]
    %v224 = vld [vmem:[%s1 + $0x318] sm:$0xf]
    %v225 = vld [vmem:[%s1 + $0x31c] sm:$0xf]
    %v226 = vld [vmem:[%s1 + $0x320] sm:$0xf]
    %v227 = vld [vmem:[%s1 + $0x324] sm:$0xf]
    %v228 = vld [vmem:[%s1 + $0x328] sm:$0xf]
    %v229 = vld [vmem:[%s1 + $0x32c] sm:$0xf]
    %v230 = vld [vmem:[%s1 + $0x330] sm:$0xf]
    %v231 = vld [vmem:[%s1 + $0x334] sm:$0xf]
    %v232 = vld [vmem:[%s1 + $0x338] sm:$0xf]
    %v233 = vld [vmem:[%s1 + $0x33c] sm:$0xf]
    %v234 = vld [vmem:[%s1 + $0x340] sm:$0xf]
    %v235 = vld [vmem:[%s1 + $0x344] sm:$0xf]
    %v236 = vld [vmem:[%s1 + $0x348] sm:$0xf]
    %v237 = vld [vmem:[%s1 + $0x34c] sm:$0xf]
    %v238 = vld [vmem:[%s1 + $0x350] sm:$0xf]
    %v239 = vld [vmem:[%s1 + $0x354] sm:$0xf]
    %v240 = vld [vmem:[%s1 + $0x358] sm:$0xf]
    %v241 = vld [vmem:[%s1 + $0x35c] sm:$0xf]
    %v242 = vld [vmem:[%s1 + $0x360] sm:$0xf]
    %v243 = vld [vmem:[%s1 + $0x364] sm:$0xf]
    %v244 = vld [vmem:[%s1 + $0x368] sm:$0xf]
    %v245 = vld [vmem:[%s1 + $0x36c] sm:$0xf]
    %v246 = vld [vmem:[%s1 + $0x370] sm:$0xf]
    %v247 = vld [vmem:[%s1 + $0x374] sm:$0xf]
    %v248 = vld [vmem:[%s1 + $0x378] sm:$0xf]
    %v249 = vld [vmem:[%s1 + $0x37c] sm:$0xf]
    %v250 = vld [vmem:[%s1 + $0x380] sm:$0xf]
    %v251 = vld [vmem:[%s1 + $0x384] sm:$0xf]
    %v252 = vld [vmem:[%s1 + $0x388] sm:$0xf]
    %v253 = vld [vmem:[%s1 + $0x38c] sm:$0xf]
    %v254 = vld [vmem:[%s1 + $0x390] sm:$0xf]
    %v255 = vld [vmem:[%s1 + $0x394] sm:$0xf]
    %v256 = vld [vmem:[%s1 + $0x398] sm:$0xf]
    %v257 = vld [vmem:[%s1 + $0x39c] sm:$0xf]
    %v258 = vld [vmem:[%s1 + $0x3a0] sm:$0xf]
    %v259 = vld [vmem:[%s1 + $0x3a4] sm:$0xf]
    %v260 = vld [vmem:[%s1 + $0x3a8] sm:$0xf]
    %v261 = vld [vmem:[%s1 + $0x3ac] sm:$0xf]
    %v262 = vld [vmem:[%s1 + $0x3b0] sm:$0xf]
    %v263 = vld [vmem:[%s1 + $0x3b4] sm:$0xf]
    %v264 = vld [vmem:[%s1 + $0x3b8] sm:$0xf]
    %v265 = vld [vmem:[%s1 + $0x3bc] sm:$0xf]
    %v266 = vld [vmem:[%s1 + $0x3c0] sm:$0xf]
    %v267 = vld [vmem:[%s1 + $0x3c4] sm:$0xf]
    %v268 = vld [vmem:[%s1 + $0x3c8] sm:$0xf]
    %v269 = vld [vmem:[%s1 + $0x3cc] sm:$0xf]
    %v270 = vld [vmem:[%s1 + $0x3d0] sm:$0xf]
    %v271 = vld [vmem:[%s1 + $0x3d4] sm:$0xf]
    %v272 = vld [vmem:[%s1 + $0x3d8] sm:$0xf]
    %v273 = vld [vmem:[%s1 + $0x3dc] sm:$0xf]
    %v274 = vld [vmem:[%s1 + $0x3e0] sm:$0xf]
    %v275 = vld [vmem:[%s1 + $0x3e4] sm:$0xf]
    %v276 = vld [vmem:[%s1 + $0x3e8] sm:$0xf]
    %v277 = vld [vmem:[%s1 + $0x3ec] sm:$0xf]
    %v278 = vld [vmem:[%s1 + $0x3f0] sm:$0xf]
    %v279 = vld [vmem:[%s1 + $0x3f4] sm:$0xf]
    %v280 = vld [vmem:[%s1 + $0x3f8] sm:$0xf]
    %v281 = vld [vmem:[%s1 + $0x3fc] sm:$0xf]
    %v282 = vld [vmem:[%s1 + $0x400] sm:$0xf]
    %v283 = vld [vmem:[%s1 + $0x404] sm:$0xf]
    %v284 = vld [vmem:[%s1 + $0x408] sm:$0xf]
    %v285 = vld [vmem:[%s1 + $0x40c] sm:$0xf]
    %v286 = vld [vmem:[%s1 + $0x410] sm:$0xf]
    %v287 = vld [vmem:[%s1 + $0x414] sm:$0xf]
    %v288 = vld [vmem:[%s1 + $0x418] sm:$0xf]
    %v289 = vld [vmem:[%s1 + $0x41c] sm:$0xf]
    %v290 = vld [vmem:[%s1 + $0x420] sm:$0xf]
    %v291 = vld [vmem:[%s1 + $0x424] sm:$0xf]
    %v292 = vld [vmem:[%s1 + $0x428] sm:$0xf]
    %v293 = vld [vmem:[%s1 + $0x42c] sm:$0xf]
    %v294 = vld [vmem:[%s1 + $0x430] sm:$0xf]
    %v295 = vld [vmem:[%s1 + $0x434] sm:$0xf]
    %v296 = vld [vmem:[%s1 + $0x438] sm:$0xf]
    %v297 = vld [vmem:[%s1 + $0x43c] sm:$0xf]
    %v298 = vld [vmem:[%s1 + $0x440] sm:$0xf]
    %v299 = vld [vmem:[%s1 + $0x444] sm:$0xf]
    %v300 = vld [vmem:[%s1 + $0x448] sm:$0xf]
    %v301 = vld [vmem:[%s1 + $0x44c] sm:$0xf]
    %v302 = vld [vmem:[%s1 + $0x450] sm:$0xf]
    %v303 = vld [vmem:[%s1 + $0x454] sm:$0xf]
    %v304 = vld [vmem:[%s1 + $0x458] sm:$0xf]
    %v305 = vld [vmem:[%s1 + $0x45c] sm:$0xf]
    %v306 = vld [vmem:[%s1 + $0x460] sm:$0xf]
    %v307 = vld [vmem:[%s1 + $0x464] sm:$0xf]
    %v308 = vld [vmem:[%s1 + $0x468] sm:$0xf]
    %v309 = vld [vmem:[%s1 + $0x46c] sm:$0xf]
    %v310 = vld [vmem:[%s1 + $0x470] sm:$0xf]
    %v311 = vld [vmem:[%s1 + $0x474] sm:$0xf]
    %v312 = vld [vmem:[%s1 + $0x478] sm:$0xf]
    %v313 = vld [vmem:[%s1 + $0x47c] sm:$0xf]
    %v314 = vld [vmem:[%s1 + $0x480] sm:$0xf]
    %v315 = vld [vmem:[%s1 + $0x484] sm:$0xf]
    %v316 = vld [vmem:[%s1 + $0x488] sm:$0xf]
    %v317 = vld [vmem:[%s1 + $0x48c] sm:$0xf]
    %v318 = vld [vmem:[%s1 + $0x490] sm:$0xf]
    %v319 = vld [vmem:[%s1 + $0x494] sm:$0xf]
    %v320 = vld [vmem:[%s1 + $0x498] sm:$0xf]
    %v321 = vld [vmem:[%s1 + $0x49c] sm:$0xf]
    %v322 = vld [vmem:[%s1 + $0x4a0] sm:$0xf]
    %v323 = vld [vmem:[%s1 + $0x4a4] sm:$0xf]
    %v324 = vld [vmem:[%s1 + $0x4a8] sm:$0xf]
    %v325 = vld [vmem:[%s1 + $0x4ac] sm:$0xf]
    %v326 = vld [vmem:[%s1 + $0x4b0] sm:$0xf]
    %v327 = vld [vmem:[%s1 + $0x4b4] sm:$0xf]
    %v328 = vld [vmem:[%s1 + $0x4b8] sm:$0xf]
    %v329 = vld [vmem:[%s1 + $0x4bc] sm:$0xf]
    %v330 = vld [vmem:[%s1 + $0x4c0] sm:$0xf]
    %v331 = vld [vmem:[%s1 + $0x4c4] sm:$0xf]
    %v332 = vld [vmem:[%s1 + $0x4c8] sm:$0xf]
    %v333 = vld [vmem:[%s1 + $0x4cc] sm:$0xf]
    %v334 = vld [vmem:[%s1 + $0x4d0] sm:$0xf]
    %v335 = vld [vmem:[%s1 + $0x4d4] sm:$0xf]
    %v336 = vld [vmem:[%s1 + $0x4d8] sm:$0xf]
    %v337 = vld [vmem:[%s1 + $0x4dc] sm:$0xf]
    %v338 = vld [vmem:[%s1 + $0x4e0] sm:$0xf]
    %v339 = vld [vmem:[%s1 + $0x4e4] sm:$0xf]
    %v340 = vld [vmem:[%s1 + $0x4e8] sm:$0xf]
    %v341 = vld [vmem:[%s1 + $0x4ec] sm:$0xf]
    %v342 = vld [vmem:[%s1 + $0x4f0] sm:$0xf]
    %v343 = vld [vmem:[%s1 + $0x4f4] sm:$0xf]
    %v344 = vld [vmem:[%s1 + $0x4f8] sm:$0xf]
    %v345 = vld [vmem:[%s1 + $0x4fc] sm:$0xf]
    %v346 = vld [vmem:[%s1 + $0x500] sm:$0xf]
    %v347 = vld [vmem:[%s1 + $0x504] sm:$0xf]
    %v348 = vld [vmem:[%s1 + $0x508] sm:$0xf]
    %v349 = vld [vmem:[%s1 + $0x50c] sm:$0xf]
    %v350 = vld [vmem:[%s1 + $0x510] sm:$0xf]
    %v351 = vld [vmem:[%s1 + $0x514] sm:$0xf]
    %v352 = vld [vmem:[%s1 + $0x518] sm:$0xf]
    %v353 = vld [vmem:[%s1 + $0x51c] sm:$0xf]
    %v354 = vld [vmem:[%s1 + $0x520] sm:$0xf]
    %v355 = vld [vmem:[%s1 + $0x524] sm:$0xf]
    %v356 = vld [vmem:[%s1 + $0x528] sm:$0xf]
    %v357 = vld [vmem:[%s1 + $0x52c] sm:$0xf]
    %v358 = vld [vmem:[%s1 + $0x530] sm:$0xf]
    %v359 = vld [vmem:[%s1 + $0x534] sm:$0xf]
    %v360 = vld [vmem:[%s1 + $0x538] sm:$0xf]
    %v361 = vld [vmem:[%s1 + $0x53c] sm:$0xf]
    %v362 = vld [vmem:[%s1 + $0x540] sm:$0xf]
    %v363 = vld [vmem:[%s1 + $0x544] sm:$0xf]
    %v364 = vld [vmem:[%s1 + $0x548] sm:$0xf]
    %v365 = vld [vmem:[%s1 + $0x54c] sm:$0xf]
    %v366 = vld [vmem:[%s1 + $0x550] sm:$0xf]
    %v367 = vld [vmem:[%s1 + $0x554] sm:$0xf]
    %v368 = vld [vmem:[%s1 + $0x558] sm:$0xf]
    %v369 = vld [vmem:[%s1 + $0x55c] sm:$0xf]
    %v370 = vld [vmem:[%s1 + $0x560] sm:$0xf]
    %v371 = vld [vmem:[%s1 + $0x564] sm:$0xf]
    %v372 = vld [vmem:[%s1 + $0x568] sm:$0xf]
    %v373 = vld [vmem:[%s1 + $0x56c] sm:$0xf]
    %v374 = vld [vmem:[%s1 + $0x570] sm:$0xf]
    %v375 = vld [vmem:[%s1 + $0x574] sm:$0xf]
    %v376 = vld [vmem:[%s1 + $0x578] sm:$0xf]
    %v377 = vld [vmem:[%s1 + $0x57c] sm:$0xf]
    %v378 = vld [vmem:[%s1 + $0x580] sm:$0xf]
    %v379 = vld [vmem:[%s1 + $0x584] sm:$0xf]
    %v380 = vld [vmem:[%s1 + $0x588] sm:$0xf]
    %v381 = vld [vmem:[%s1 + $0x58c] sm:$0xf]
    %v382 = vld [vmem:[%s1 + $0x590] sm:$0xf]
    %v383 = vld [vmem:[%s1 + $0x594] sm:$0xf]
    %v384 = vld [vmem:[%s1 + $0x598] sm:$0xf]
    %v385 = vld [vmem:[%s1 + $0x59c] sm:$0xf]
    %v386 = vld [vmem:[%s1 + $0x5a0] sm:$0xf]
    %v387 = vld [vmem:[%s1 + $0x5a4] sm:$0xf]
    %v388 = vld [vmem:[%s1 + $0x5a8] sm:$0xf]
    %v389 = vld [vmem:[%s1 + $0x5ac] sm:$0xf]
    %v390 = vld [vmem:[%s1 + $0x5b0] sm:$0xf]
    %v391 = vld [vmem:[%s1 + $0x5b4] sm:$0xf]
    %v392 = vld [vmem:[%s1 + $0x5b8] sm:$0xf]
    %v393 = vld [vmem:[%s1 + $0x5bc] sm:$0xf]
    %v394 = vld [vmem:[%s1 + $0x5c0] sm:$0xf]
    %v395 = vld [vmem:[%s1 + $0x5c4] sm:$0xf]
    %v396 = vld [vmem:[%s1 + $0x5c8] sm:$0xf]
    %v397 = vld [vmem:[%s1 + $0x5cc] sm:$0xf]
    %v398 = vld [vmem:[%s1 + $0x5d0] sm:$0xf]
    %v399 = vld [vmem:[%s1 + $0x5d4] sm:$0xf]
    %v400 = vld [vmem:[%s1 + $0x5d8] sm:$0xf]
    %v401 = vld [vmem:[%s1 + $0x5dc] sm:$0xf]
    %v402 = vld [vmem:[%s1 + $0x5e0] sm:$0xf]
    %v403 = vld [vmem:[%s1 + $0x5e4] sm:$0xf]
    %v404 = vld [vmem:[%s1 + $0x5e8] sm:$0xf]
    %v405 = vld [vmem:[%s1 + $0x5ec] sm:$0xf]
    %v406 = vld [vmem:[%s1 + $0x5f0] sm:$0xf]
    %v407 = vld [vmem:[%s1 + $0x5f4] sm:$0xf]
    %v408 = vld [vmem:[%s1 + $0x5f8] sm:$0xf]
    %v409 = vld [vmem:[%s1 + $0x5fc] sm:$0xf]
    %v410 = vld [vmem:[%s1 + $0x600] sm:$0xf]
    %v411 = vld [vmem:[%s1 + $0x604] sm:$0xf]
    %v412 = vld [vmem:[%s1 + $0x608] sm:$0xf]
    %v413 = vld [vmem:[%s1 + $0x60c] sm:$0xf]
    %v414 = vld [vmem:[%s1 + $0x610] sm:$0xf]
    %v415 = vld [vmem:[%s1 + $0x614] sm:$0xf]
    %v416 = vld [vmem:[%s1 + $0x618] sm:$0xf]
    %v417 = vld [vmem:[%s1 + $0x61c] sm:$0xf]
    %v418 = vld [vmem:[%s1 + $0x620] sm:$0xf]
    %v419 = vld [vmem:[%s1 + $0x624] sm:$0xf]
    %v420 = vld [vmem:[%s1 + $0x628] sm:$0xf]
    %v421 = vld [vmem:[%s1 + $0x62c] sm:$0xf]
    %v422 = vld [vmem:[%s1 + $0x630] sm:$0xf]
    %v423 = vld [vmem:[%s1 + $0x634] sm:$0xf]
    %v424 = vld [vmem:[%s1 + $0x638] sm:$0xf]
    %v425 = vld [vmem:[%s1 + $0x63c] sm:$0xf]
    %v426 = vld [vmem:[%s1 + $0x640] sm:$0xf]
    %v427 = vld [vmem:[%s1 + $0x644] sm:$0xf]
    %v428 = vld [vmem:[%s1 + $0x648] sm:$0xf]
    %v429 = vld [vmem:[%s1 + $0x64c] sm:$0xf]
    %v430 = vld [vmem:[%s1 + $0x650] sm:$0xf]
    %v431 = vld [vmem:[%s1 + $0x654] sm:$0xf]
    %v432 = vld [vmem:[%s1 + $0x658] sm:$0xf]
    %v433 = vld [vmem:[%s1 + $0x65c] sm:$0xf]
    %v434 = vld [vmem:[%s1 + $0x660] sm:$0xf]
    %v435 = vld [vmem:[%s1 + $0x664] sm:$0xf]
    %v436 = vld [vmem:[%s1 + $0x668] sm:$0xf]
    %v437 = vld [vmem:[%s1 + $0x66c] sm:$0xf]
    %v438 = vld [vmem:[%s1 + $0x670] sm:$0xf]
    %v439 = vld [vmem:[%s1 + $0x674] sm:$0xf]
    %v440 = vld [vmem:[%s1 + $0x678] sm:$0xf]
    %v441 = vld [vmem:[%s1 + $0x67c] sm:$0xf]
    %v442 = vld [vmem:[%s1 + $0x680] sm:$0xf]
    %v443 = vld [vmem:[%s1 + $0x684] sm:$0xf]
    %v444 = vld [vmem:[%s1 + $0x688] sm:$0xf]
    %v445 = vld [vmem:[%s1 + $0x68c] sm:$0xf]
    %v446 = vld [vmem:[%s1 + $0x690] sm:$0xf]
    %v447 = vld [vmem:[%s1 + $0x694] sm:$0xf]
    %v448 = vld [vmem:[%s1 + $0x698] sm:$0xf]
    %v449 = vld [vmem:[%s1 + $0x69c] sm:$0xf]
    %v450 = vld [vmem:[%s1 + $0x6a0] sm:$0xf]
    %v451 = vld [vmem:[%s1 + $0x6a4] sm:$0xf]
    %v452 = vld [vmem:[%s1 + $0x6a8] sm:$0xf]
    %v453 = vld [vmem:[%s1 + $0x6ac] sm:$0xf]
    %v454 = vld [vmem:[%s1 + $0x6b0] sm:$0xf]
    %v455 = vld [vmem:[%s1 + $0x6b4] sm:$0xf]
    %v456 = vld [vmem:[%s1 + $0x6b8] sm:$0xf]
    %v457 = vld [vmem:[%s1 + $0x6bc] sm:$0xf]
    %v458 = vld [vmem:[%s1 + $0x6c0] sm:$0xf]
    %v459 = vld [vmem:[%s1 + $0x6c4] sm:$0xf]
    %v460 = vld [vmem:[%s1 + $0x6c8] sm:$0xf]
    %v461 = vld [vmem:[%s1 + $0x6cc] sm:$0xf]
    %v462 = vld [vmem:[%s1 + $0x6d0] sm:$0xf]
    %v463 = vld [vmem:[%s1 + $0x6d4] sm:$0xf]
    %v464 = vld [vmem:[%s1 + $0x6d8] sm:$0xf]
    %v465 = vld [vmem:[%s1 + $0x6dc] sm:$0xf]
    %v466 = vld [vmem:[%s1 + $0x6e0] sm:$0xf]
    %v467 = vld [vmem:[%s1 + $0x6e4] sm:$0xf]
    %v468 = vld [vmem:[%s1 + $0x6e8] sm:$0xf]
    %v469 = vld [vmem:[%s1 + $0x6ec] sm:$0xf]
    %v470 = vld [vmem:[%s1 + $0x6f0] sm:$0xf]
    %v471 = vld [vmem:[%s1 + $0x6f4] sm:$0xf]
    %v472 = vld [vmem:[%s1 + $0x6f8] sm:$0xf]
    %v473 = vld [vmem:[%s1 + $0x6fc] sm:$0xf]
    %v474 = vld [vmem:[%s1 + $0x700] sm:$0xf]
    %v475 = vld [vmem:[%s1 + $0x704] sm:$0xf]
    %v476 = vld [vmem:[%s1 + $0x708] sm:$0xf]
    %v477 = vld [vmem:[%s1 + $0x70c] sm:$0xf]
    %v478 = vld [vmem:[%s1 + $0x710] sm:$0xf]
    %v479 = vld [vmem:[%s1 + $0x714] sm:$0xf]
    %v480 = vld [vmem:[%s1 + $0x718] sm:$0xf]
    %v481 = vld [vmem:[%s1 + $0x71c] sm:$0xf]
    %v482 = vld [vmem:[%s1 + $0x720] sm:$0xf]
    %v483 = vld [vmem:[%s1 + $0x724] sm:$0xf]
    %v484 = vld [vmem:[%s1 + $0x728] sm:$0xf]
    %v485 = vld [vmem:[%s1 + $0x72c] sm:$0xf]
    %v486 = vld [vmem:[%s1 + $0x730] sm:$0xf]
    %v487 = vld [vmem:[%s1 + $0x734] sm:$0xf]
    %v488 = vld [vmem:[%s1 + $0x738] sm:$0xf]
    %v489 = vld [vmem:[%s1 + $0x73c] sm:$0xf]
    %v490 = vld [vmem:[%s1 + $0x740] sm:$0xf]
    %v491 = vld [vmem:[%s1 + $0x744] sm:$0xf]
    %v492 = vld [vmem:[%s1 + $0x748] sm:$0xf]
    %v493 = vld [vmem:[%s1 + $0x74c] sm:$0xf]
    %v494 = vld [vmem:[%s1 + $0x750] sm:$0xf]
    %v495 = vld [vmem:[%s1 + $0x754] sm:$0xf]
    %v496 = vld [vmem:[%s1 + $0x758] sm:$0xf]
    %v497 = vld [vmem:[%s1 + $0x75c] sm:$0xf]
    %v498 = vld [vmem:[%s1 + $0x760] sm:$0xf]
    %v499 = vld [vmem:[%s1 + $0x764] sm:$0xf]
    %v500 = vld [vmem:[%s1 + $0x768] sm:$0xf]
    %v501 = vld [vmem:[%s1 + $0x76c] sm:$0xf]
    %v502 = vld [vmem:[%s1 + $0x770] sm:$0xf]
    %v503 = vld [vmem:[%s1 + $0x774] sm:$0xf]
    %v504 = vld [vmem:[%s1 + $0x778] sm:$0xf]
    %v505 = vld [vmem:[%s1 + $0x77c] sm:$0xf]
    %v506 = vld [vmem:[%s1 + $0x780] sm:$0xf]
    %v507 = vld [vmem:[%s1 + $0x784] sm:$0xf]
    %v508 = vld [vmem:[%s1 + $0x788] sm:$0xf]
    %v509 = vld [vmem:[%s1 + $0x78c] sm:$0xf]
    %v510 = vld [vmem:[%s1 + $0x790] sm:$0xf]
    %v511 = vld [vmem:[%s1 + $0x794] sm:$0xf]
    %v512 = vld [vmem:[%s1 + $0x798] sm:$0xf]
    %v513 = vld [vmem:[%s1 + $0x79c] sm:$0xf]
    %v514 = vld [vmem:[%s1 + $0x7a0] sm:$0xf]
    %v515 = vld [vmem:[%s1 + $0x7a4] sm:$0xf]
    %v516 = vld [vmem:[%s1 + $0x7a8] sm:$0xf]
    %v517 = vld [vmem:[%s1 + $0x7ac] sm:$0xf]
    %v518 = vld [vmem:[%s1 + $0x7b0] sm:$0xf]
    %v519 = vld [vmem:[%s1 + $0x7b4] sm:$0xf]
    %v520 = vld [vmem:[%s1 + $0x7b8] sm:$0xf]
    %v521 = vld [vmem:[%s1 + $0x7bc] sm:$0xf]
    %v522 = vld [vmem:[%s1 + $0x7c0] sm:$0xf]
    %v523 = vld [vmem:[%s1 + $0x7c4] sm:$0xf]
    %v524 = vld [vmem:[%s1 + $0x7c8] sm:$0xf]
    %v525 = vld [vmem:[%s1 + $0x7cc] sm:$0xf]
    %v526 = vld [vmem:[%s1 + $0x7d0] sm:$0xf]
    %v527 = vld [vmem:[%s1 + $0x7d4] sm:$0xf]
    %v528 = vld [vmem:[%s1 + $0x7d8] sm:$0xf]
    %v529 = vld [vmem:[%s1 + $0x7dc] sm:$0xf]
    %v530 = vld [vmem:[%s1 + $0x7e0] sm:$0xf]
    %v531 = vld [vmem:[%s1 + $0x7e4] sm:$0xf]
    %v532 = vld [vmem:[%s1 + $0x7e8] sm:$0xf]
    %v533 = vld [vmem:[%s1 + $0x7ec] sm:$0xf]
    %v534 = vld [vmem:[%s1 + $0x7f0] sm:$0xf]
    %v535 = vld [vmem:[%s1 + $0x7f4] sm:$0xf]
    %v536 = vld [vmem:[%s1 + $0x7f8] sm:$0xf]
    %v537 = vld [vmem:[%s1 + $0x7fc] sm:$0xf]
    %v538 = vld [vmem:[%s2] sm:$0x1]
    %v540 = vlaneseq
    %v541 = vshrl.u32 %v540, 7
    %v542 = vsub.s32 0, %v541
    %v543 = vrot.slane %v538, %v542
    %v549 = vcombine.high %v22, %v22
    %v551 = vunpack.c.l.s4 1966171168
    %v552 = vunpack.c.0.s8 %v551
    %v553 = vlaneseq
    %v554 = vshrl.u32 %v553, 7
    %v555 = vsub.s32 %v552, %v554
    %v556 = vrot.slane %v22, %v555
    %v558 = vunpack.c.l.s4 1966171168
    %v559 = vunpack.c.0.s8 %v558
    %v560 = vlaneseq
    %v561 = vshrl.u32 %v560, 7
    %v562 = vsub.s32 %v559, %v561
    %v563 = vrot.slane %v549, %v562
    %v564 = vcombine.high %v556, %v556
    %v565 = vcombine.high %v563, %v563
    %v567 = vunpack.c.l.s4 1966171168
    %v568 = vunpack.c.0.s8 %v567
    %v569 = vlaneseq
    %v570 = vshrl.u32 %v569, 7
    %v571 = vsub.s32 %v568, %v570
    %v572 = vrot.slane %v556, %v571
    %v574 = vunpack.c.l.s4 1966171168
    %v575 = vunpack.c.0.s8 %v574
    %v576 = vlaneseq
    %v577 = vshrl.u32 %v576, 7
    %v578 = vsub.s32 %v575, %v577
    %v579 = vrot.slane %v563, %v578
    %v581 = vunpack.c.l.s4 1966171168
    %v582 = vunpack.c.0.s8 %v581
    %v583 = vlaneseq
    %v584 = vshrl.u32 %v583, 7
    %v585 = vsub.s32 %v582, %v584
    %v586 = vrot.slane %v564, %v585
    %v588 = vunpack.c.l.s4 1966171168
    %v589 = vunpack.c.0.s8 %v588
    %v590 = vlaneseq
    %v591 = vshrl.u32 %v590, 7
    %v592 = vsub.s32 %v589, %v591
    %v593 = vrot.slane %v565, %v592
    %v594 = vcombine.high %v572, %v572
    %v595 = vcombine.high %v579, %v579
    %v596 = vcombine.high %v586, %v586
    %v597 = vcombine.high %v593, %v593
    %v598 = vcombine.high %v23, %v23
    %v600 = vunpack.c.l.s4 1966171168
    %v601 = vunpack.c.0.s8 %v600
    %v602 = vlaneseq
    %v603 = vshrl.u32 %v602, 7
    %v604 = vsub.s32 %v601, %v603
    %v605 = vrot.slane %v23, %v604
    %v607 = vunpack.c.l.s4 1966171168
    %v608 = vunpack.c.0.s8 %v607
    %v609 = vlaneseq
    %v610 = vshrl.u32 %v609, 7
    %v611 = vsub.s32 %v608, %v610
    %v612 = vrot.slane %v598, %v611
    %v613 = vcombine.high %v605, %v605
    %v614 = vcombine.high %v612, %v612
    %v616 = vunpack.c.l.s4 1966171168
    %v617 = vunpack.c.0.s8 %v616
    %v618 = vlaneseq
    %v619 = vshrl.u32 %v618, 7
    %v620 = vsub.s32 %v617, %v619
    %v621 = vrot.slane %v605, %v620
    %v623 = vunpack.c.l.s4 1966171168
    %v624 = vunpack.c.0.s8 %v623
    %v625 = vlaneseq
    %v626 = vshrl.u32 %v625, 7
    %v627 = vsub.s32 %v624, %v626
    %v628 = vrot.slane %v612, %v627
    %v630 = vunpack.c.l.s4 1966171168
    %v631 = vunpack.c.0.s8 %v630
    %v632 = vlaneseq
    %v633 = vshrl.u32 %v632, 7
    %v634 = vsub.s32 %v631, %v633
    %v635 = vrot.slane %v613, %v634
    %v637 = vunpack.c.l.s4 1966171168
    %v638 = vunpack.c.0.s8 %v637
    %v639 = vlaneseq
    %v640 = vshrl.u32 %v639, 7
    %v641 = vsub.s32 %v638, %v640
    %v642 = vrot.slane %v614, %v641
    %v643 = vcombine.high %v621, %v621
    %v644 = vcombine.high %v628, %v628
    %v645 = vcombine.high %v635, %v635
    %v646 = vcombine.high %v642, %v642
    %v647 = vcombine.high %v24, %v24
    %v649 = vunpack.c.l.s4 1966171168
    %v650 = vunpack.c.0.s8 %v649
    %v651 = vlaneseq
    %v652 = vshrl.u32 %v651, 7
    %v653 = vsub.s32 %v650, %v652
    %v654 = vrot.slane %v24, %v653
    %v656 = vunpack.c.l.s4 1966171168
    %v657 = vunpack.c.0.s8 %v656
    %v658 = vlaneseq
    %v659 = vshrl.u32 %v658, 7
    %v660 = vsub.s32 %v657, %v659
    %v661 = vrot.slane %v647, %v660
    %v662 = vcombine.high %v654, %v654
    %v663 = vcombine.high %v661, %v661
    %v665 = vunpack.c.l.s4 1966171168
    %v666 = vunpack.c.0.s8 %v665
    %v667 = vlaneseq
    %v668 = vshrl.u32 %v667, 7
    %v669 = vsub.s32 %v666, %v668
    %v670 = vrot.slane %v654, %v669
    %v672 = vunpack.c.l.s4 1966171168
    %v673 = vunpack.c.0.s8 %v672
    %v674 = vlaneseq
    %v675 = vshrl.u32 %v674, 7
    %v676 = vsub.s32 %v673, %v675
    %v677 = vrot.slane %v661, %v676
    %v679 = vunpack.c.l.s4 1966171168
    %v680 = vunpack.c.0.s8 %v679
    %v681 = vlaneseq
    %v682 = vshrl.u32 %v681, 7
    %v683 = vsub.s32 %v680, %v682
    %v684 = vrot.slane %v662, %v683
    %v686 = vunpack.c.l.s4 1966171168
    %v687 = vunpack.c.0.s8 %v686
    %v688 = vlaneseq
    %v689 = vshrl.u32 %v688, 7
    %v690 = vsub.s32 %v687, %v689
    %v691 = vrot.slane %v663, %v690
    %v692 = vcombine.high %v670, %v670
    %v693 = vcombine.high %v677, %v677
    %v694 = vcombine.high %v684, %v684
    %v695 = vcombine.high %v691, %v691
    %v696 = vcombine.high %v25, %v25
    %v698 = vunpack.c.l.s4 1966171168
    %v699 = vunpack.c.0.s8 %v698
    %v700 = vlaneseq
    %v701 = vshrl.u32 %v700, 7
    %v702 = vsub.s32 %v699, %v701
    %v703 = vrot.slane %v25, %v702
    %v705 = vunpack.c.l.s4 1966171168
    %v706 = vunpack.c.0.s8 %v705
    %v707 = vlaneseq
    %v708 = vshrl.u32 %v707, 7
    %v709 = vsub.s32 %v706, %v708
    %v710 = vrot.slane %v696, %v709
    %v711 = vcombine.high %v703, %v703
    %v712 = vcombine.high %v710, %v710
    %v714 = vunpack.c.l.s4 1966171168
    %v715 = vunpack.c.0.s8 %v714
    %v716 = vlaneseq
    %v717 = vshrl.u32 %v716, 7
    %v718 = vsub.s32 %v715, %v717
    %v719 = vrot.slane %v703, %v718
    %v721 = vunpack.c.l.s4 1966171168
    %v722 = vunpack.c.0.s8 %v721
    %v723 = vlaneseq
    %v724 = vshrl.u32 %v723, 7
    %v725 = vsub.s32 %v722, %v724
    %v726 = vrot.slane %v710, %v725
    %v728 = vunpack.c.l.s4 1966171168
    %v729 = vunpack.c.0.s8 %v728
    %v730 = vlaneseq
    %v731 = vshrl.u32 %v730, 7
    %v732 = vsub.s32 %v729, %v731
    %v733 = vrot.slane %v711, %v732
    %v735 = vunpack.c.l.s4 1966171168
    %v736 = vunpack.c.0.s8 %v735
    %v737 = vlaneseq
    %v738 = vshrl.u32 %v737, 7
    %v739 = vsub.s32 %v736, %v738
    %v740 = vrot.slane %v712, %v739
    %v741 = vcombine.high %v719, %v719
    %v742 = vcombine.high %v726, %v726
    %v743 = vcombine.high %v733, %v733
    %v744 = vcombine.high %v740, %v740
    %v1289 = vunpack.c.l.b16 %v26
    %v1290 = vunpack.c.l.b16 %v27
    %v1291 = vunpack.c.l.b16 %v28
    %v1292 = vunpack.c.l.b16 %v29
    %v1293 = vunpack.c.l.b16 %v30
    %v1294 = vunpack.c.l.b16 %v31
    %v1295 = vunpack.c.l.b16 %v32
    %v1296 = vunpack.c.l.b16 %v33
    %v1297 = vunpack.c.l.b16 %v34
    %v1298 = vunpack.c.l.b16 %v35
    %v1299 = vunpack.c.l.b16 %v36
    %v1300 = vunpack.c.l.b16 %v37
    %v1301 = vunpack.c.l.b16 %v38
    %v1302 = vunpack.c.l.b16 %v39
    %v1303 = vunpack.c.l.b16 %v40
    %v1304 = vunpack.c.l.b16 %v41
    %v1305 = vunpack.c.l.b16 %v42
    %v1306 = vunpack.c.l.b16 %v43
    %v1307 = vunpack.c.l.b16 %v44
    %v1308 = vunpack.c.l.b16 %v45
    %v1309 = vunpack.c.l.b16 %v46
    %v1310 = vunpack.c.l.b16 %v47
    %v1311 = vunpack.c.l.b16 %v48
    %v1312 = vunpack.c.l.b16 %v49
    %v1313 = vunpack.c.l.b16 %v50
    %v1314 = vunpack.c.l.b16 %v51
    %v1315 = vunpack.c.l.b16 %v52
    %v1316 = vunpack.c.l.b16 %v53
    %v1317 = vunpack.c.l.b16 %v54
    %v1318 = vunpack.c.l.b16 %v55
    %v1319 = vunpack.c.l.b16 %v56
    %v1320 = vunpack.c.l.b16 %v57
    %v1321 = vunpack.c.l.b16 %v58
    %v1322 = vunpack.c.l.b16 %v59
    %v1323 = vunpack.c.l.b16 %v60
    %v1324 = vunpack.c.l.b16 %v61
    %v1325 = vunpack.c.l.b16 %v62
    %v1326 = vunpack.c.l.b16 %v63
    %v1327 = vunpack.c.l.b16 %v64
    %v1328 = vunpack.c.l.b16 %v65
    %v1329 = vunpack.c.l.b16 %v66
    %v1330 = vunpack.c.l.b16 %v67
    %v1331 = vunpack.c.l.b16 %v68
    %v1332 = vunpack.c.l.b16 %v69
    %v1333 = vunpack.c.l.b16 %v70
    %v1334 = vunpack.c.l.b16 %v71
    %v1335 = vunpack.c.l.b16 %v72
    %v1336 = vunpack.c.l.b16 %v73
    %v1337 = vunpack.c.l.b16 %v74
    %v1338 = vunpack.c.l.b16 %v75
    %v1339 = vunpack.c.l.b16 %v76
    %v1340 = vunpack.c.l.b16 %v77
    %v1341 = vunpack.c.l.b16 %v78
    %v1342 = vunpack.c.l.b16 %v79
    %v1343 = vunpack.c.l.b16 %v80
    %v1344 = vunpack.c.l.b16 %v81
    %v1345 = vunpack.c.l.b16 %v82
    %v1346 = vunpack.c.l.b16 %v83
    %v1347 = vunpack.c.l.b16 %v84
    %v1348 = vunpack.c.l.b16 %v85
    %v1349 = vunpack.c.l.b16 %v86
    %v1350 = vunpack.c.l.b16 %v87
    %v1351 = vunpack.c.l.b16 %v88
    %v1352 = vunpack.c.l.b16 %v89
    %v1353 = vunpack.c.l.b16 %v90
    %v1354 = vunpack.c.l.b16 %v91
    %v1355 = vunpack.c.l.b16 %v92
    %v1356 = vunpack.c.l.b16 %v93
    %v1357 = vunpack.c.l.b16 %v94
    %v1358 = vunpack.c.l.b16 %v95
    %v1359 = vunpack.c.l.b16 %v96
    %v1360 = vunpack.c.l.b16 %v97
    %v1361 = vunpack.c.l.b16 %v98
    %v1362 = vunpack.c.l.b16 %v99
    %v1363 = vunpack.c.l.b16 %v100
    %v1364 = vunpack.c.l.b16 %v101
    %v1365 = vunpack.c.l.b16 %v102
    %v1366 = vunpack.c.l.b16 %v103
    %v1367 = vunpack.c.l.b16 %v104
    %v1368 = vunpack.c.l.b16 %v105
    %v1369 = vunpack.c.l.b16 %v106
    %v1370 = vunpack.c.l.b16 %v107
    %v1371 = vunpack.c.l.b16 %v108
    %v1372 = vunpack.c.l.b16 %v109
    %v1373 = vunpack.c.l.b16 %v110
    %v1374 = vunpack.c.l.b16 %v111
    %v1375 = vunpack.c.l.b16 %v112
    %v1376 = vunpack.c.l.b16 %v113
    %v1377 = vunpack.c.l.b16 %v114
    %v1378 = vunpack.c.l.b16 %v115
    %v1379 = vunpack.c.l.b16 %v116
    %v1380 = vunpack.c.l.b16 %v117
    %v1381 = vunpack.c.l.b16 %v118
    %v1382 = vunpack.c.l.b16 %v119
    %v1383 = vunpack.c.l.b16 %v120
    %v1384 = vunpack.c.l.b16 %v121
    %v1385 = vunpack.c.l.b16 %v122
    %v1386 = vunpack.c.l.b16 %v123
    %v1387 = vunpack.c.l.b16 %v124
    %v1388 = vunpack.c.l.b16 %v125
    %v1389 = vunpack.c.l.b16 %v126
    %v1390 = vunpack.c.l.b16 %v127
    %v1391 = vunpack.c.l.b16 %v128
    %v1392 = vunpack.c.l.b16 %v129
    %v1393 = vunpack.c.l.b16 %v130
    %v1394 = vunpack.c.l.b16 %v131
    %v1395 = vunpack.c.l.b16 %v132
    %v1396 = vunpack.c.l.b16 %v133
    %v1397 = vunpack.c.l.b16 %v134
    %v1398 = vunpack.c.l.b16 %v135
    %v1399 = vunpack.c.l.b16 %v136
    %v1400 = vunpack.c.l.b16 %v137
    %v1401 = vunpack.c.l.b16 %v138
    %v1402 = vunpack.c.l.b16 %v139
    %v1403 = vunpack.c.l.b16 %v140
    %v1404 = vunpack.c.l.b16 %v141
    %v1405 = vunpack.c.l.b16 %v142
    %v1406 = vunpack.c.l.b16 %v143
    %v1407 = vunpack.c.l.b16 %v144
    %v1408 = vunpack.c.l.b16 %v145
    %v1409 = vunpack.c.l.b16 %v146
    %v1410 = vunpack.c.l.b16 %v147
    %v1411 = vunpack.c.l.b16 %v148
    %v1412 = vunpack.c.l.b16 %v149
    %v1413 = vunpack.c.l.b16 %v150
    %v1414 = vunpack.c.l.b16 %v151
    %v1415 = vunpack.c.l.b16 %v152
    %v1416 = vunpack.c.l.b16 %v153
    %v1417 = vunpack.c.l.b16 %v154
    %v1418 = vunpack.c.l.b16 %v155
    %v1419 = vunpack.c.l.b16 %v156
    %v1420 = vunpack.c.l.b16 %v157
    %v1421 = vunpack.c.l.b16 %v158
    %v1422 = vunpack.c.l.b16 %v159
    %v1423 = vunpack.c.l.b16 %v160
    %v1424 = vunpack.c.l.b16 %v161
    %v1425 = vunpack.c.l.b16 %v162
    %v1426 = vunpack.c.l.b16 %v163
    %v1427 = vunpack.c.l.b16 %v164
    %v1428 = vunpack.c.l.b16 %v165
    %v1429 = vunpack.c.l.b16 %v166
    %v1430 = vunpack.c.l.b16 %v167
    %v1431 = vunpack.c.l.b16 %v168
    %v1432 = vunpack.c.l.b16 %v169
    %v1433 = vunpack.c.l.b16 %v170
    %v1434 = vunpack.c.l.b16 %v171
    %v1435 = vunpack.c.l.b16 %v172
    %v1436 = vunpack.c.l.b16 %v173
    %v1437 = vunpack.c.l.b16 %v174
    %v1438 = vunpack.c.l.b16 %v175
    %v1439 = vunpack.c.l.b16 %v176
    %v1440 = vunpack.c.l.b16 %v177
    %v1441 = vunpack.c.l.b16 %v178
    %v1442 = vunpack.c.l.b16 %v179
    %v1443 = vunpack.c.l.b16 %v180
    %v1444 = vunpack.c.l.b16 %v181
    %v1445 = vunpack.c.l.b16 %v182
    %v1446 = vunpack.c.l.b16 %v183
    %v1447 = vunpack.c.l.b16 %v184
    %v1448 = vunpack.c.l.b16 %v185
    %v1449 = vunpack.c.l.b16 %v186
    %v1450 = vunpack.c.l.b16 %v187
    %v1451 = vunpack.c.l.b16 %v188
    %v1452 = vunpack.c.l.b16 %v189
    %v1453 = vunpack.c.l.b16 %v190
    %v1454 = vunpack.c.l.b16 %v191
    %v1455 = vunpack.c.l.b16 %v192
    %v1456 = vunpack.c.l.b16 %v193
    %v1457 = vunpack.c.l.b16 %v194
    %v1458 = vunpack.c.l.b16 %v195
    %v1459 = vunpack.c.l.b16 %v196
    %v1460 = vunpack.c.l.b16 %v197
    %v1461 = vunpack.c.l.b16 %v198
    %v1462 = vunpack.c.l.b16 %v199
    %v1463 = vunpack.c.l.b16 %v200
    %v1464 = vunpack.c.l.b16 %v201
    %v1465 = vunpack.c.l.b16 %v202
    %v1466 = vunpack.c.l.b16 %v203
    %v1467 = vunpack.c.l.b16 %v204
    %v1468 = vunpack.c.l.b16 %v205
    %v1469 = vunpack.c.l.b16 %v206
    %v1470 = vunpack.c.l.b16 %v207
    %v1471 = vunpack.c.l.b16 %v208
    %v1472 = vunpack.c.l.b16 %v209
    %v1473 = vunpack.c.l.b16 %v210
    %v1474 = vunpack.c.l.b16 %v211
    %v1475 = vunpack.c.l.b16 %v212
    %v1476 = vunpack.c.l.b16 %v213
    %v1477 = vunpack.c.l.b16 %v214
    %v1478 = vunpack.c.l.b16 %v215
    %v1479 = vunpack.c.l.b16 %v216
    %v1480 = vunpack.c.l.b16 %v217
    %v1481 = vunpack.c.l.b16 %v218
    %v1482 = vunpack.c.l.b16 %v219
    %v1483 = vunpack.c.l.b16 %v220
    %v1484 = vunpack.c.l.b16 %v221
    %v1485 = vunpack.c.l.b16 %v222
    %v1486 = vunpack.c.l.b16 %v223
    %v1487 = vunpack.c.l.b16 %v224
    %v1488 = vunpack.c.l.b16 %v225
    %v1489 = vunpack.c.l.b16 %v226
    %v1490 = vunpack.c.l.b16 %v227
    %v1491 = vunpack.c.l.b16 %v228
    %v1492 = vunpack.c.l.b16 %v229
    %v1493 = vunpack.c.l.b16 %v230
    %v1494 = vunpack.c.l.b16 %v231
    %v1495 = vunpack.c.l.b16 %v232
    %v1496 = vunpack.c.l.b16 %v233
    %v1497 = vunpack.c.l.b16 %v234
    %v1498 = vunpack.c.l.b16 %v235
    %v1499 = vunpack.c.l.b16 %v236
    %v1500 = vunpack.c.l.b16 %v237
    %v1501 = vunpack.c.l.b16 %v238
    %v1502 = vunpack.c.l.b16 %v239
    %v1503 = vunpack.c.l.b16 %v240
    %v1504 = vunpack.c.l.b16 %v241
    %v1505 = vunpack.c.l.b16 %v242
    %v1506 = vunpack.c.l.b16 %v243
    %v1507 = vunpack.c.l.b16 %v244
    %v1508 = vunpack.c.l.b16 %v245
    %v1509 = vunpack.c.l.b16 %v246
    %v1510 = vunpack.c.l.b16 %v247
    %v1511 = vunpack.c.l.b16 %v248
    %v1512 = vunpack.c.l.b16 %v249
    %v1513 = vunpack.c.l.b16 %v250
    %v1514 = vunpack.c.l.b16 %v251
    %v1515 = vunpack.c.l.b16 %v252
    %v1516 = vunpack.c.l.b16 %v253
    %v1517 = vunpack.c.l.b16 %v254
    %v1518 = vunpack.c.l.b16 %v255
    %v1519 = vunpack.c.l.b16 %v256
    %v1520 = vunpack.c.l.b16 %v257
    %v1521 = vunpack.c.l.b16 %v258
    %v1522 = vunpack.c.l.b16 %v259
    %v1523 = vunpack.c.l.b16 %v260
    %v1524 = vunpack.c.l.b16 %v261
    %v1525 = vunpack.c.l.b16 %v262
    %v1526 = vunpack.c.l.b16 %v263
    %v1527 = vunpack.c.l.b16 %v264
    %v1528 = vunpack.c.l.b16 %v265
    %v1529 = vunpack.c.l.b16 %v266
    %v1530 = vunpack.c.l.b16 %v267
    %v1531 = vunpack.c.l.b16 %v268
    %v1532 = vunpack.c.l.b16 %v269
    %v1533 = vunpack.c.l.b16 %v270
    %v1534 = vunpack.c.l.b16 %v271
    %v1535 = vunpack.c.l.b16 %v272
    %v1536 = vunpack.c.l.b16 %v273
    %v1537 = vunpack.c.l.b16 %v274
    %v1538 = vunpack.c.l.b16 %v275
    %v1539 = vunpack.c.l.b16 %v276
    %v1540 = vunpack.c.l.b16 %v277
    %v1541 = vunpack.c.l.b16 %v278
    %v1542 = vunpack.c.l.b16 %v279
    %v1543 = vunpack.c.l.b16 %v280
    %v1544 = vunpack.c.l.b16 %v281
    %v1545 = vunpack.c.l.b16 %v282
    %v1546 = vunpack.c.l.b16 %v283
    %v1547 = vunpack.c.l.b16 %v284
    %v1548 = vunpack.c.l.b16 %v285
    %v1549 = vunpack.c.l.b16 %v286
    %v1550 = vunpack.c.l.b16 %v287
    %v1551 = vunpack.c.l.b16 %v288
    %v1552 = vunpack.c.l.b16 %v289
    %v1553 = vunpack.c.l.b16 %v290
    %v1554 = vunpack.c.l.b16 %v291
    %v1555 = vunpack.c.l.b16 %v292
    %v1556 = vunpack.c.l.b16 %v293
    %v1557 = vunpack.c.l.b16 %v294
    %v1558 = vunpack.c.l.b16 %v295
    %v1559 = vunpack.c.l.b16 %v296
    %v1560 = vunpack.c.l.b16 %v297
    %v1561 = vunpack.c.l.b16 %v298
    %v1562 = vunpack.c.l.b16 %v299
    %v1563 = vunpack.c.l.b16 %v300
    %v1564 = vunpack.c.l.b16 %v301
    %v1565 = vunpack.c.l.b16 %v302
    %v1566 = vunpack.c.l.b16 %v303
    %v1567 = vunpack.c.l.b16 %v304
    %v1568 = vunpack.c.l.b16 %v305
    %v1569 = vunpack.c.l.b16 %v306
    %v1570 = vunpack.c.l.b16 %v307
    %v1571 = vunpack.c.l.b16 %v308
    %v1572 = vunpack.c.l.b16 %v309
    %v1573 = vunpack.c.l.b16 %v310
    %v1574 = vunpack.c.l.b16 %v311
    %v1575 = vunpack.c.l.b16 %v312
    %v1576 = vunpack.c.l.b16 %v313
    %v1577 = vunpack.c.l.b16 %v314
    %v1578 = vunpack.c.l.b16 %v315
    %v1579 = vunpack.c.l.b16 %v316
    %v1580 = vunpack.c.l.b16 %v317
    %v1581 = vunpack.c.l.b16 %v318
    %v1582 = vunpack.c.l.b16 %v319
    %v1583 = vunpack.c.l.b16 %v320
    %v1584 = vunpack.c.l.b16 %v321
    %v1585 = vunpack.c.l.b16 %v322
    %v1586 = vunpack.c.l.b16 %v323
    %v1587 = vunpack.c.l.b16 %v324
    %v1588 = vunpack.c.l.b16 %v325
    %v1589 = vunpack.c.l.b16 %v326
    %v1590 = vunpack.c.l.b16 %v327
    %v1591 = vunpack.c.l.b16 %v328
    %v1592 = vunpack.c.l.b16 %v329
    %v1593 = vunpack.c.l.b16 %v330
    %v1594 = vunpack.c.l.b16 %v331
    %v1595 = vunpack.c.l.b16 %v332
    %v1596 = vunpack.c.l.b16 %v333
    %v1597 = vunpack.c.l.b16 %v334
    %v1598 = vunpack.c.l.b16 %v335
    %v1599 = vunpack.c.l.b16 %v336
    %v1600 = vunpack.c.l.b16 %v337
    %v1601 = vunpack.c.l.b16 %v338
    %v1602 = vunpack.c.l.b16 %v339
    %v1603 = vunpack.c.l.b16 %v340
    %v1604 = vunpack.c.l.b16 %v341
    %v1605 = vunpack.c.l.b16 %v342
    %v1606 = vunpack.c.l.b16 %v343
    %v1607 = vunpack.c.l.b16 %v344
    %v1608 = vunpack.c.l.b16 %v345
    %v1609 = vunpack.c.l.b16 %v346
    %v1610 = vunpack.c.l.b16 %v347
    %v1611 = vunpack.c.l.b16 %v348
    %v1612 = vunpack.c.l.b16 %v349
    %v1613 = vunpack.c.l.b16 %v350
    %v1614 = vunpack.c.l.b16 %v351
    %v1615 = vunpack.c.l.b16 %v352
    %v1616 = vunpack.c.l.b16 %v353
    %v1617 = vunpack.c.l.b16 %v354
    %v1618 = vunpack.c.l.b16 %v355
    %v1619 = vunpack.c.l.b16 %v356
    %v1620 = vunpack.c.l.b16 %v357
    %v1621 = vunpack.c.l.b16 %v358
    %v1622 = vunpack.c.l.b16 %v359
    %v1623 = vunpack.c.l.b16 %v360
    %v1624 = vunpack.c.l.b16 %v361
    %v1625 = vunpack.c.l.b16 %v362
    %v1626 = vunpack.c.l.b16 %v363
    %v1627 = vunpack.c.l.b16 %v364
    %v1628 = vunpack.c.l.b16 %v365
    %v1629 = vunpack.c.l.b16 %v366
    %v1630 = vunpack.c.l.b16 %v367
    %v1631 = vunpack.c.l.b16 %v368
    %v1632 = vunpack.c.l.b16 %v369
    %v1633 = vunpack.c.l.b16 %v370
    %v1634 = vunpack.c.l.b16 %v371
    %v1635 = vunpack.c.l.b16 %v372
    %v1636 = vunpack.c.l.b16 %v373
    %v1637 = vunpack.c.l.b16 %v374
    %v1638 = vunpack.c.l.b16 %v375
    %v1639 = vunpack.c.l.b16 %v376
    %v1640 = vunpack.c.l.b16 %v377
    %v1641 = vunpack.c.l.b16 %v378
    %v1642 = vunpack.c.l.b16 %v379
    %v1643 = vunpack.c.l.b16 %v380
    %v1644 = vunpack.c.l.b16 %v381
    %v1645 = vunpack.c.l.b16 %v382
    %v1646 = vunpack.c.l.b16 %v383
    %v1647 = vunpack.c.l.b16 %v384
    %v1648 = vunpack.c.l.b16 %v385
    %v1649 = vunpack.c.l.b16 %v386
    %v1650 = vunpack.c.l.b16 %v387
    %v1651 = vunpack.c.l.b16 %v388
    %v1652 = vunpack.c.l.b16 %v389
    %v1653 = vunpack.c.l.b16 %v390
    %v1654 = vunpack.c.l.b16 %v391
    %v1655 = vunpack.c.l.b16 %v392
    %v1656 = vunpack.c.l.b16 %v393
    %v1657 = vunpack.c.l.b16 %v394
    %v1658 = vunpack.c.l.b16 %v395
    %v1659 = vunpack.c.l.b16 %v396
    %v1660 = vunpack.c.l.b16 %v397
    %v1661 = vunpack.c.l.b16 %v398
    %v1662 = vunpack.c.l.b16 %v399
    %v1663 = vunpack.c.l.b16 %v400
    %v1664 = vunpack.c.l.b16 %v401
    %v1665 = vunpack.c.l.b16 %v402
    %v1666 = vunpack.c.l.b16 %v403
    %v1667 = vunpack.c.l.b16 %v404
    %v1668 = vunpack.c.l.b16 %v405
    %v1669 = vunpack.c.l.b16 %v406
    %v1670 = vunpack.c.l.b16 %v407
    %v1671 = vunpack.c.l.b16 %v408
    %v1672 = vunpack.c.l.b16 %v409
    %v1673 = vunpack.c.l.b16 %v410
    %v1674 = vunpack.c.l.b16 %v411
    %v1675 = vunpack.c.l.b16 %v412
    %v1676 = vunpack.c.l.b16 %v413
    %v1677 = vunpack.c.l.b16 %v414
    %v1678 = vunpack.c.l.b16 %v415
    %v1679 = vunpack.c.l.b16 %v416
    %v1680 = vunpack.c.l.b16 %v417
    %v1681 = vunpack.c.l.b16 %v418
    %v1682 = vunpack.c.l.b16 %v419
    %v1683 = vunpack.c.l.b16 %v420
    %v1684 = vunpack.c.l.b16 %v421
    %v1685 = vunpack.c.l.b16 %v422
    %v1686 = vunpack.c.l.b16 %v423
    %v1687 = vunpack.c.l.b16 %v424
    %v1688 = vunpack.c.l.b16 %v425
    %v1689 = vunpack.c.l.b16 %v426
    %v1690 = vunpack.c.l.b16 %v427
    %v1691 = vunpack.c.l.b16 %v428
    %v1692 = vunpack.c.l.b16 %v429
    %v1693 = vunpack.c.l.b16 %v430
    %v1694 = vunpack.c.l.b16 %v431
    %v1695 = vunpack.c.l.b16 %v432
    %v1696 = vunpack.c.l.b16 %v433
    %v1697 = vunpack.c.l.b16 %v434
    %v1698 = vunpack.c.l.b16 %v435
    %v1699 = vunpack.c.l.b16 %v436
    %v1700 = vunpack.c.l.b16 %v437
    %v1701 = vunpack.c.l.b16 %v438
    %v1702 = vunpack.c.l.b16 %v439
    %v1703 = vunpack.c.l.b16 %v440
    %v1704 = vunpack.c.l.b16 %v441
    %v1705 = vunpack.c.l.b16 %v442
    %v1706 = vunpack.c.l.b16 %v443
    %v1707 = vunpack.c.l.b16 %v444
    %v1708 = vunpack.c.l.b16 %v445
    %v1709 = vunpack.c.l.b16 %v446
    %v1710 = vunpack.c.l.b16 %v447
    %v1711 = vunpack.c.l.b16 %v448
    %v1712 = vunpack.c.l.b16 %v449
    %v1713 = vunpack.c.l.b16 %v450
    %v1714 = vunpack.c.l.b16 %v451
    %v1715 = vunpack.c.l.b16 %v452
    %v1716 = vunpack.c.l.b16 %v453
    %v1717 = vunpack.c.l.b16 %v454
    %v1718 = vunpack.c.l.b16 %v455
    %v1719 = vunpack.c.l.b16 %v456
    %v1720 = vunpack.c.l.b16 %v457
    %v1721 = vunpack.c.l.b16 %v458
    %v1722 = vunpack.c.l.b16 %v459
    %v1723 = vunpack.c.l.b16 %v460
    %v1724 = vunpack.c.l.b16 %v461
    %v1725 = vunpack.c.l.b16 %v462
    %v1726 = vunpack.c.l.b16 %v463
    %v1727 = vunpack.c.l.b16 %v464
    %v1728 = vunpack.c.l.b16 %v465
    %v1729 = vunpack.c.l.b16 %v466
    %v1730 = vunpack.c.l.b16 %v467
    %v1731 = vunpack.c.l.b16 %v468
    %v1732 = vunpack.c.l.b16 %v469
    %v1733 = vunpack.c.l.b16 %v470
    %v1734 = vunpack.c.l.b16 %v471
    %v1735 = vunpack.c.l.b16 %v472
    %v1736 = vunpack.c.l.b16 %v473
    %v1737 = vunpack.c.l.b16 %v474
    %v1738 = vunpack.c.l.b16 %v475
    %v1739 = vunpack.c.l.b16 %v476
    %v1740 = vunpack.c.l.b16 %v477
    %v1741 = vunpack.c.l.b16 %v478
    %v1742 = vunpack.c.l.b16 %v479
    %v1743 = vunpack.c.l.b16 %v480
    %v1744 = vunpack.c.l.b16 %v481
    %v1745 = vunpack.c.l.b16 %v482
    %v1746 = vunpack.c.l.b16 %v483
    %v1747 = vunpack.c.l.b16 %v484
    %v1748 = vunpack.c.l.b16 %v485
    %v1749 = vunpack.c.l.b16 %v486
    %v1750 = vunpack.c.l.b16 %v487
    %v1751 = vunpack.c.l.b16 %v488
    %v1752 = vunpack.c.l.b16 %v489
    %v1753 = vunpack.c.l.b16 %v490
    %v1754 = vunpack.c.l.b16 %v491
    %v1755 = vunpack.c.l.b16 %v492
    %v1756 = vunpack.c.l.b16 %v493
    %v1757 = vunpack.c.l.b16 %v494
    %v1758 = vunpack.c.l.b16 %v495
    %v1759 = vunpack.c.l.b16 %v496
    %v1760 = vunpack.c.l.b16 %v497
    %v1761 = vunpack.c.l.b16 %v498
    %v1762 = vunpack.c.l.b16 %v499
    %v1763 = vunpack.c.l.b16 %v500
    %v1764 = vunpack.c.l.b16 %v501
    %v1765 = vunpack.c.l.b16 %v502
    %v1766 = vunpack.c.l.b16 %v503
    %v1767 = vunpack.c.l.b16 %v504
    %v1768 = vunpack.c.l.b16 %v505
    %v1769 = vunpack.c.l.b16 %v506
    %v1770 = vunpack.c.l.b16 %v507
    %v1771 = vunpack.c.l.b16 %v508
    %v1772 = vunpack.c.l.b16 %v509
    %v1773 = vunpack.c.l.b16 %v510
    %v1774 = vunpack.c.l.b16 %v511
    %v1775 = vunpack.c.l.b16 %v512
    %v1776 = vunpack.c.l.b16 %v513
    %v1777 = vunpack.c.l.b16 %v514
    %v1778 = vunpack.c.l.b16 %v515
    %v1779 = vunpack.c.l.b16 %v516
    %v1780 = vunpack.c.l.b16 %v517
    %v1781 = vunpack.c.l.b16 %v518
    %v1782 = vunpack.c.l.b16 %v519
    %v1783 = vunpack.c.l.b16 %v520
    %v1784 = vunpack.c.l.b16 %v521
    %v1785 = vunpack.c.l.b16 %v522
    %v1786 = vunpack.c.l.b16 %v523
    %v1787 = vunpack.c.l.b16 %v524
    %v1788 = vunpack.c.l.b16 %v525
    %v1789 = vunpack.c.l.b16 %v526
    %v1790 = vunpack.c.l.b16 %v527
    %v1791 = vunpack.c.l.b16 %v528
    %v1792 = vunpack.c.l.b16 %v529
    %v1793 = vunpack.c.l.b16 %v530
    %v1794 = vunpack.c.l.b16 %v531
    %v1795 = vunpack.c.l.b16 %v532
    %v1796 = vunpack.c.l.b16 %v533
    %v1797 = vunpack.c.l.b16 %v534
    %v1798 = vunpack.c.l.b16 %v535
    %v1799 = vunpack.c.l.b16 %v536
    %v1800 = vunpack.c.l.b16 %v537
    %v1801 = vpack.c.b16 %v1290, %v1289
    %v1802 = vpack.c.b16 %v1292, %v1291
    %v1803 = vpack.c.b16 %v1294, %v1293
    %v1804 = vpack.c.b16 %v1296, %v1295
    %v1805 = vpack.c.b16 %v1298, %v1297
    %v1806 = vpack.c.b16 %v1300, %v1299
    %v1807 = vpack.c.b16 %v1302, %v1301
    %v1808 = vpack.c.b16 %v1304, %v1303
    %v1809 = vpack.c.b16 %v1306, %v1305
    %v1810 = vpack.c.b16 %v1308, %v1307
    %v1811 = vpack.c.b16 %v1310, %v1309
    %v1812 = vpack.c.b16 %v1312, %v1311
    %v1813 = vpack.c.b16 %v1314, %v1313
    %v1814 = vpack.c.b16 %v1316, %v1315
    %v1815 = vpack.c.b16 %v1318, %v1317
    %v1816 = vpack.c.b16 %v1320, %v1319
    %v1817 = vpack.c.b16 %v1322, %v1321
    %v1818 = vpack.c.b16 %v1324, %v1323
    %v1819 = vpack.c.b16 %v1326, %v1325
    %v1820 = vpack.c.b16 %v1328, %v1327
    %v1821 = vpack.c.b16 %v1330, %v1329
    %v1822 = vpack.c.b16 %v1332, %v1331
    %v1823 = vpack.c.b16 %v1334, %v1333
    %v1824 = vpack.c.b16 %v1336, %v1335
    %v1825 = vpack.c.b16 %v1338, %v1337
    %v1826 = vpack.c.b16 %v1340, %v1339
    %v1827 = vpack.c.b16 %v1342, %v1341
    %v1828 = vpack.c.b16 %v1344, %v1343
    %v1829 = vpack.c.b16 %v1346, %v1345
    %v1830 = vpack.c.b16 %v1348, %v1347
    %v1831 = vpack.c.b16 %v1350, %v1349
    %v1832 = vpack.c.b16 %v1352, %v1351
    %v1833 = vpack.c.b16 %v1354, %v1353
    %v1834 = vpack.c.b16 %v1356, %v1355
    %v1835 = vpack.c.b16 %v1358, %v1357
    %v1836 = vpack.c.b16 %v1360, %v1359
    %v1837 = vpack.c.b16 %v1362, %v1361
    %v1838 = vpack.c.b16 %v1364, %v1363
    %v1839 = vpack.c.b16 %v1366, %v1365
    %v1840 = vpack.c.b16 %v1368, %v1367
    %v1841 = vpack.c.b16 %v1370, %v1369
    %v1842 = vpack.c.b16 %v1372, %v1371
    %v1843 = vpack.c.b16 %v1374, %v1373
    %v1844 = vpack.c.b16 %v1376, %v1375
    %v1845 = vpack.c.b16 %v1378, %v1377
    %v1846 = vpack.c.b16 %v1380, %v1379
    %v1847 = vpack.c.b16 %v1382, %v1381
    %v1848 = vpack.c.b16 %v1384, %v1383
    %v1849 = vpack.c.b16 %v1386, %v1385
    %v1850 = vpack.c.b16 %v1388, %v1387
    %v1851 = vpack.c.b16 %v1390, %v1389
    %v1852 = vpack.c.b16 %v1392, %v1391
    %v1853 = vpack.c.b16 %v1394, %v1393
    %v1854 = vpack.c.b16 %v1396, %v1395
    %v1855 = vpack.c.b16 %v1398, %v1397
    %v1856 = vpack.c.b16 %v1400, %v1399
    %v1857 = vpack.c.b16 %v1402, %v1401
    %v1858 = vpack.c.b16 %v1404, %v1403
    %v1859 = vpack.c.b16 %v1406, %v1405
    %v1860 = vpack.c.b16 %v1408, %v1407
    %v1861 = vpack.c.b16 %v1410, %v1409
    %v1862 = vpack.c.b16 %v1412, %v1411
    %v1863 = vpack.c.b16 %v1414, %v1413
    %v1864 = vpack.c.b16 %v1416, %v1415
    %v1865 = vpack.c.b16 %v1418, %v1417
    %v1866 = vpack.c.b16 %v1420, %v1419
    %v1867 = vpack.c.b16 %v1422, %v1421
    %v1868 = vpack.c.b16 %v1424, %v1423
    %v1869 = vpack.c.b16 %v1426, %v1425
    %v1870 = vpack.c.b16 %v1428, %v1427
    %v1871 = vpack.c.b16 %v1430, %v1429
    %v1872 = vpack.c.b16 %v1432, %v1431
    %v1873 = vpack.c.b16 %v1434, %v1433
    %v1874 = vpack.c.b16 %v1436, %v1435
    %v1875 = vpack.c.b16 %v1438, %v1437
    %v1876 = vpack.c.b16 %v1440, %v1439
    %v1877 = vpack.c.b16 %v1442, %v1441
    %v1878 = vpack.c.b16 %v1444, %v1443
    %v1879 = vpack.c.b16 %v1446, %v1445
    %v1880 = vpack.c.b16 %v1448, %v1447
    %v1881 = vpack.c.b16 %v1450, %v1449
    %v1882 = vpack.c.b16 %v1452, %v1451
    %v1883 = vpack.c.b16 %v1454, %v1453
    %v1884 = vpack.c.b16 %v1456, %v1455
    %v1885 = vpack.c.b16 %v1458, %v1457
    %v1886 = vpack.c.b16 %v1460, %v1459
    %v1887 = vpack.c.b16 %v1462, %v1461
    %v1888 = vpack.c.b16 %v1464, %v1463
    %v1889 = vpack.c.b16 %v1466, %v1465
    %v1890 = vpack.c.b16 %v1468, %v1467
    %v1891 = vpack.c.b16 %v1470, %v1469
    %v1892 = vpack.c.b16 %v1472, %v1471
    %v1893 = vpack.c.b16 %v1474, %v1473
    %v1894 = vpack.c.b16 %v1476, %v1475
    %v1895 = vpack.c.b16 %v1478, %v1477
    %v1896 = vpack.c.b16 %v1480, %v1479
    %v1897 = vpack.c.b16 %v1482, %v1481
    %v1898 = vpack.c.b16 %v1484, %v1483
    %v1899 = vpack.c.b16 %v1486, %v1485
    %v1900 = vpack.c.b16 %v1488, %v1487
    %v1901 = vpack.c.b16 %v1490, %v1489
    %v1902 = vpack.c.b16 %v1492, %v1491
    %v1903 = vpack.c.b16 %v1494, %v1493
    %v1904 = vpack.c.b16 %v1496, %v1495
    %v1905 = vpack.c.b16 %v1498, %v1497
    %v1906 = vpack.c.b16 %v1500, %v1499
    %v1907 = vpack.c.b16 %v1502, %v1501
    %v1908 = vpack.c.b16 %v1504, %v1503
    %v1909 = vpack.c.b16 %v1506, %v1505
    %v1910 = vpack.c.b16 %v1508, %v1507
    %v1911 = vpack.c.b16 %v1510, %v1509
    %v1912 = vpack.c.b16 %v1512, %v1511
    %v1913 = vpack.c.b16 %v1514, %v1513
    %v1914 = vpack.c.b16 %v1516, %v1515
    %v1915 = vpack.c.b16 %v1518, %v1517
    %v1916 = vpack.c.b16 %v1520, %v1519
    %v1917 = vpack.c.b16 %v1522, %v1521
    %v1918 = vpack.c.b16 %v1524, %v1523
    %v1919 = vpack.c.b16 %v1526, %v1525
    %v1920 = vpack.c.b16 %v1528, %v1527
    %v1921 = vpack.c.b16 %v1530, %v1529
    %v1922 = vpack.c.b16 %v1532, %v1531
    %v1923 = vpack.c.b16 %v1534, %v1533
    %v1924 = vpack.c.b16 %v1536, %v1535
    %v1925 = vpack.c.b16 %v1538, %v1537
    %v1926 = vpack.c.b16 %v1540, %v1539
    %v1927 = vpack.c.b16 %v1542, %v1541
    %v1928 = vpack.c.b16 %v1544, %v1543
    %v1929 = vpack.c.b16 %v1546, %v1545
    %v1930 = vpack.c.b16 %v1548, %v1547
    %v1931 = vpack.c.b16 %v1550, %v1549
    %v1932 = vpack.c.b16 %v1552, %v1551
    %v1933 = vpack.c.b16 %v1554, %v1553
    %v1934 = vpack.c.b16 %v1556, %v1555
    %v1935 = vpack.c.b16 %v1558, %v1557
    %v1936 = vpack.c.b16 %v1560, %v1559
    %v1937 = vpack.c.b16 %v1562, %v1561
    %v1938 = vpack.c.b16 %v1564, %v1563
    %v1939 = vpack.c.b16 %v1566, %v1565
    %v1940 = vpack.c.b16 %v1568, %v1567
    %v1941 = vpack.c.b16 %v1570, %v1569
    %v1942 = vpack.c.b16 %v1572, %v1571
    %v1943 = vpack.c.b16 %v1574, %v1573
    %v1944 = vpack.c.b16 %v1576, %v1575
    %v1945 = vpack.c.b16 %v1578, %v1577
    %v1946 = vpack.c.b16 %v1580, %v1579
    %v1947 = vpack.c.b16 %v1582, %v1581
    %v1948 = vpack.c.b16 %v1584, %v1583
    %v1949 = vpack.c.b16 %v1586, %v1585
    %v1950 = vpack.c.b16 %v1588, %v1587
    %v1951 = vpack.c.b16 %v1590, %v1589
    %v1952 = vpack.c.b16 %v1592, %v1591
    %v1953 = vpack.c.b16 %v1594, %v1593
    %v1954 = vpack.c.b16 %v1596, %v1595
    %v1955 = vpack.c.b16 %v1598, %v1597
    %v1956 = vpack.c.b16 %v1600, %v1599
    %v1957 = vpack.c.b16 %v1602, %v1601
    %v1958 = vpack.c.b16 %v1604, %v1603
    %v1959 = vpack.c.b16 %v1606, %v1605
    %v1960 = vpack.c.b16 %v1608, %v1607
    %v1961 = vpack.c.b16 %v1610, %v1609
    %v1962 = vpack.c.b16 %v1612, %v1611
    %v1963 = vpack.c.b16 %v1614, %v1613
    %v1964 = vpack.c.b16 %v1616, %v1615
    %v1965 = vpack.c.b16 %v1618, %v1617
    %v1966 = vpack.c.b16 %v1620, %v1619
    %v1967 = vpack.c.b16 %v1622, %v1621
    %v1968 = vpack.c.b16 %v1624, %v1623
    %v1969 = vpack.c.b16 %v1626, %v1625
    %v1970 = vpack.c.b16 %v1628, %v1627
    %v1971 = vpack.c.b16 %v1630, %v1629
    %v1972 = vpack.c.b16 %v1632, %v1631
    %v1973 = vpack.c.b16 %v1634, %v1633
    %v1974 = vpack.c.b16 %v1636, %v1635
    %v1975 = vpack.c.b16 %v1638, %v1637
    %v1976 = vpack.c.b16 %v1640, %v1639
    %v1977 = vpack.c.b16 %v1642, %v1641
    %v1978 = vpack.c.b16 %v1644, %v1643
    %v1979 = vpack.c.b16 %v1646, %v1645
    %v1980 = vpack.c.b16 %v1648, %v1647
    %v1981 = vpack.c.b16 %v1650, %v1649
    %v1982 = vpack.c.b16 %v1652, %v1651
    %v1983 = vpack.c.b16 %v1654, %v1653
    %v1984 = vpack.c.b16 %v1656, %v1655
    %v1985 = vpack.c.b16 %v1658, %v1657
    %v1986 = vpack.c.b16 %v1660, %v1659
    %v1987 = vpack.c.b16 %v1662, %v1661
    %v1988 = vpack.c.b16 %v1664, %v1663
    %v1989 = vpack.c.b16 %v1666, %v1665
    %v1990 = vpack.c.b16 %v1668, %v1667
    %v1991 = vpack.c.b16 %v1670, %v1669
    %v1992 = vpack.c.b16 %v1672, %v1671
    %v1993 = vpack.c.b16 %v1674, %v1673
    %v1994 = vpack.c.b16 %v1676, %v1675
    %v1995 = vpack.c.b16 %v1678, %v1677
    %v1996 = vpack.c.b16 %v1680, %v1679
    %v1997 = vpack.c.b16 %v1682, %v1681
    %v1998 = vpack.c.b16 %v1684, %v1683
    %v1999 = vpack.c.b16 %v1686, %v1685
    %v2000 = vpack.c.b16 %v1688, %v1687
    %v2001 = vpack.c.b16 %v1690, %v1689
    %v2002 = vpack.c.b16 %v1692, %v1691
    %v2003 = vpack.c.b16 %v1694, %v1693
    %v2004 = vpack.c.b16 %v1696, %v1695
    %v2005 = vpack.c.b16 %v1698, %v1697
    %v2006 = vpack.c.b16 %v1700, %v1699
    %v2007 = vpack.c.b16 %v1702, %v1701
    %v2008 = vpack.c.b16 %v1704, %v1703
    %v2009 = vpack.c.b16 %v1706, %v1705
    %v2010 = vpack.c.b16 %v1708, %v1707
    %v2011 = vpack.c.b16 %v1710, %v1709
    %v2012 = vpack.c.b16 %v1712, %v1711
    %v2013 = vpack.c.b16 %v1714, %v1713
    %v2014 = vpack.c.b16 %v1716, %v1715
    %v2015 = vpack.c.b16 %v1718, %v1717
    %v2016 = vpack.c.b16 %v1720, %v1719
    %v2017 = vpack.c.b16 %v1722, %v1721
    %v2018 = vpack.c.b16 %v1724, %v1723
    %v2019 = vpack.c.b16 %v1726, %v1725
    %v2020 = vpack.c.b16 %v1728, %v1727
    %v2021 = vpack.c.b16 %v1730, %v1729
    %v2022 = vpack.c.b16 %v1732, %v1731
    %v2023 = vpack.c.b16 %v1734, %v1733
    %v2024 = vpack.c.b16 %v1736, %v1735
    %v2025 = vpack.c.b16 %v1738, %v1737
    %v2026 = vpack.c.b16 %v1740, %v1739
    %v2027 = vpack.c.b16 %v1742, %v1741
    %v2028 = vpack.c.b16 %v1744, %v1743
    %v2029 = vpack.c.b16 %v1746, %v1745
    %v2030 = vpack.c.b16 %v1748, %v1747
    %v2031 = vpack.c.b16 %v1750, %v1749
    %v2032 = vpack.c.b16 %v1752, %v1751
    %v2033 = vpack.c.b16 %v1754, %v1753
    %v2034 = vpack.c.b16 %v1756, %v1755
    %v2035 = vpack.c.b16 %v1758, %v1757
    %v2036 = vpack.c.b16 %v1760, %v1759
    %v2037 = vpack.c.b16 %v1762, %v1761
    %v2038 = vpack.c.b16 %v1764, %v1763
    %v2039 = vpack.c.b16 %v1766, %v1765
    %v2040 = vpack.c.b16 %v1768, %v1767
    %v2041 = vpack.c.b16 %v1770, %v1769
    %v2042 = vpack.c.b16 %v1772, %v1771
    %v2043 = vpack.c.b16 %v1774, %v1773
    %v2044 = vpack.c.b16 %v1776, %v1775
    %v2045 = vpack.c.b16 %v1778, %v1777
    %v2046 = vpack.c.b16 %v1780, %v1779
    %v2047 = vpack.c.b16 %v1782, %v1781
    %v2048 = vpack.c.b16 %v1784, %v1783
    %v2049 = vpack.c.b16 %v1786, %v1785
    %v2050 = vpack.c.b16 %v1788, %v1787
    %v2051 = vpack.c.b16 %v1790, %v1789
    %v2052 = vpack.c.b16 %v1792, %v1791
    %v2053 = vpack.c.b16 %v1794, %v1793
    %v2054 = vpack.c.b16 %v1796, %v1795
    %v2055 = vpack.c.b16 %v1798, %v1797
    %v2056 = vpack.c.b16 %v1800, %v1799
    %2313 = vmatprep.subr.bf16.mxu0 0
    %2314 = vmatpush1.bf16.msra.mxu0 %v1808
    %2315 = vmatprep.subr.bf16.mxu0 0
    %2316 = vmatpush1.bf16.msra.mxu0 %v1807
    %2317 = vmatprep.subr.bf16.mxu0 0
    %2318 = vmatpush1.bf16.msra.mxu0 %v1806
    %2319 = vmatprep.subr.bf16.mxu0 0
    %2320 = vmatpush1.bf16.msra.mxu0 %v1805
    %2321 = vmatprep.subr.bf16.mxu0 0
    %2322 = vmatpush1.bf16.msra.mxu0 %v1804
    %2323 = vmatprep.subr.bf16.mxu0 0
    %2324 = vmatpush1.bf16.msra.mxu0 %v1803
    %2325 = vmatprep.subr.bf16.mxu0 0
    %2326 = vmatpush1.bf16.msra.mxu0 %v1802
    %2327 = vmatprep.subr.bf16.mxu0 0
    %2328 = vmatpush1.bf16.msra.mxu0 %v1801
    %2329 = vmatprep.subr.bf16.mxu0 0
    %2330 = vmatpush2.bf16.msra.mxu0 %v1816
    %2331 = vmatprep.subr.bf16.mxu0 0
    %2332 = vmatpush2.bf16.msra.mxu0 %v1815
    %2333 = vmatprep.subr.bf16.mxu0 0
    %2334 = vmatpush2.bf16.msra.mxu0 %v1814
    %2335 = vmatprep.subr.bf16.mxu0 0
    %2336 = vmatpush2.bf16.msra.mxu0 %v1813
    %2337 = vmatprep.subr.bf16.mxu0 0
    %2338 = vmatpush2.bf16.msra.mxu0 %v1812
    %2339 = vmatprep.subr.bf16.mxu0 0
    %2340 = vmatpush2.bf16.msra.mxu0 %v1811
    %2341 = vmatprep.subr.bf16.mxu0 0
    %2342 = vmatpush2.bf16.msra.mxu0 %v1810
    %2343 = vmatprep.subr.bf16.mxu0 0
    %2344 = vmatpush2.bf16.msra.mxu0 %v1809
    %2345 = vmatprep.mubr.bf16.mxu0 %v586
    %2346 = vmatmul.mubr.bf16.gmra.mxu0 %v572
    %v2347 = vpop.f32.mrf.mxu0
    %v2348 = vadd.f32 %v543, %v2347
    %v2349 = vpop.f32.mrf.mxu0
    %v2350 = vpop.f32.mrf.mxu0
    %v2351 = vpop.f32.mrf.mxu0
    %2352 = vdwg.mxu0
    %2353 = vmatprep.subr.bf16.mxu0 0
    %2354 = vmatpush1.bf16.msra.mxu0 %v1824
    %2355 = vmatprep.subr.bf16.mxu0 0
    %2356 = vmatpush1.bf16.msra.mxu0 %v1823
    %2357 = vmatprep.subr.bf16.mxu0 0
    %2358 = vmatpush1.bf16.msra.mxu0 %v1822
    %2359 = vmatprep.subr.bf16.mxu0 0
    %2360 = vmatpush1.bf16.msra.mxu0 %v1821
    %2361 = vmatprep.subr.bf16.mxu0 0
    %2362 = vmatpush1.bf16.msra.mxu0 %v1820
    %2363 = vmatprep.subr.bf16.mxu0 0
    %2364 = vmatpush1.bf16.msra.mxu0 %v1819
    %2365 = vmatprep.subr.bf16.mxu0 0
    %2366 = vmatpush1.bf16.msra.mxu0 %v1818
    %2367 = vmatprep.subr.bf16.mxu0 0
    %2368 = vmatpush1.bf16.msra.mxu0 %v1817
    %2369 = vmatprep.subr.bf16.mxu0 0
    %2370 = vmatpush2.bf16.msra.mxu0 %v1832
    %2371 = vmatprep.subr.bf16.mxu0 0
    %2372 = vmatpush2.bf16.msra.mxu0 %v1831
    %2373 = vmatprep.subr.bf16.mxu0 0
    %2374 = vmatpush2.bf16.msra.mxu0 %v1830
    %2375 = vmatprep.subr.bf16.mxu0 0
    %2376 = vmatpush2.bf16.msra.mxu0 %v1829
    %2377 = vmatprep.subr.bf16.mxu0 0
    %2378 = vmatpush2.bf16.msra.mxu0 %v1828
    %2379 = vmatprep.subr.bf16.mxu0 0
    %2380 = vmatpush2.bf16.msra.mxu0 %v1827
    %2381 = vmatprep.subr.bf16.mxu0 0
    %2382 = vmatpush2.bf16.msra.mxu0 %v1826
    %2383 = vmatprep.subr.bf16.mxu0 0
    %2384 = vmatpush2.bf16.msra.mxu0 %v1825
    %2385 = vmatprep.mubr.bf16.mxu0 %v596
    %2386 = vmatmul.mubr.bf16.gmra.mxu0 %v594
    %v2387 = vpop.f32.mrf.mxu0
    %v2388 = vadd.f32 %v2348, %v2387
    %v2389 = vpop.f32.mrf.mxu0
    %v2390 = vpop.f32.mrf.mxu0
    %v2391 = vpop.f32.mrf.mxu0
    %2392 = vdwg.mxu0
    %2393 = vmatprep.subr.bf16.mxu0 0
    %2394 = vmatpush1.bf16.msra.mxu0 %v1840
    %2395 = vmatprep.subr.bf16.mxu0 0
    %2396 = vmatpush1.bf16.msra.mxu0 %v1839
    %2397 = vmatprep.subr.bf16.mxu0 0
    %2398 = vmatpush1.bf16.msra.mxu0 %v1838
    %2399 = vmatprep.subr.bf16.mxu0 0
    %2400 = vmatpush1.bf16.msra.mxu0 %v1837
    %2401 = vmatprep.subr.bf16.mxu0 0
    %2402 = vmatpush1.bf16.msra.mxu0 %v1836
    %2403 = vmatprep.subr.bf16.mxu0 0
    %2404 = vmatpush1.bf16.msra.mxu0 %v1835
    %2405 = vmatprep.subr.bf16.mxu0 0
    %2406 = vmatpush1.bf16.msra.mxu0 %v1834
    %2407 = vmatprep.subr.bf16.mxu0 0
    %2408 = vmatpush1.bf16.msra.mxu0 %v1833
    %2409 = vmatprep.subr.bf16.mxu0 0
    %2410 = vmatpush2.bf16.msra.mxu0 %v1848
    %2411 = vmatprep.subr.bf16.mxu0 0
    %2412 = vmatpush2.bf16.msra.mxu0 %v1847
    %2413 = vmatprep.subr.bf16.mxu0 0
    %2414 = vmatpush2.bf16.msra.mxu0 %v1846
    %2415 = vmatprep.subr.bf16.mxu0 0
    %2416 = vmatpush2.bf16.msra.mxu0 %v1845
    %2417 = vmatprep.subr.bf16.mxu0 0
    %2418 = vmatpush2.bf16.msra.mxu0 %v1844
    %2419 = vmatprep.subr.bf16.mxu0 0
    %2420 = vmatpush2.bf16.msra.mxu0 %v1843
    %2421 = vmatprep.subr.bf16.mxu0 0
    %2422 = vmatpush2.bf16.msra.mxu0 %v1842
    %2423 = vmatprep.subr.bf16.mxu0 0
    %2424 = vmatpush2.bf16.msra.mxu0 %v1841
    %2425 = vmatprep.mubr.bf16.mxu0 %v593
    %2426 = vmatmul.mubr.bf16.gmra.mxu0 %v579
    %v2427 = vpop.f32.mrf.mxu0
    %v2428 = vadd.f32 %v2388, %v2427
    %v2429 = vpop.f32.mrf.mxu0
    %v2430 = vpop.f32.mrf.mxu0
    %v2431 = vpop.f32.mrf.mxu0
    %2432 = vdwg.mxu0
    %2433 = vmatprep.subr.bf16.mxu0 0
    %2434 = vmatpush1.bf16.msra.mxu0 %v1856
    %2435 = vmatprep.subr.bf16.mxu0 0
    %2436 = vmatpush1.bf16.msra.mxu0 %v1855
    %2437 = vmatprep.subr.bf16.mxu0 0
    %2438 = vmatpush1.bf16.msra.mxu0 %v1854
    %2439 = vmatprep.subr.bf16.mxu0 0
    %2440 = vmatpush1.bf16.msra.mxu0 %v1853
    %2441 = vmatprep.subr.bf16.mxu0 0
    %2442 = vmatpush1.bf16.msra.mxu0 %v1852
    %2443 = vmatprep.subr.bf16.mxu0 0
    %2444 = vmatpush1.bf16.msra.mxu0 %v1851
    %2445 = vmatprep.subr.bf16.mxu0 0
    %2446 = vmatpush1.bf16.msra.mxu0 %v1850
    %2447 = vmatprep.subr.bf16.mxu0 0
    %2448 = vmatpush1.bf16.msra.mxu0 %v1849
    %2449 = vmatprep.subr.bf16.mxu0 0
    %2450 = vmatpush2.bf16.msra.mxu0 %v1864
    %2451 = vmatprep.subr.bf16.mxu0 0
    %2452 = vmatpush2.bf16.msra.mxu0 %v1863
    %2453 = vmatprep.subr.bf16.mxu0 0
    %2454 = vmatpush2.bf16.msra.mxu0 %v1862
    %2455 = vmatprep.subr.bf16.mxu0 0
    %2456 = vmatpush2.bf16.msra.mxu0 %v1861
    %2457 = vmatprep.subr.bf16.mxu0 0
    %2458 = vmatpush2.bf16.msra.mxu0 %v1860
    %2459 = vmatprep.subr.bf16.mxu0 0
    %2460 = vmatpush2.bf16.msra.mxu0 %v1859
    %2461 = vmatprep.subr.bf16.mxu0 0
    %2462 = vmatpush2.bf16.msra.mxu0 %v1858
    %2463 = vmatprep.subr.bf16.mxu0 0
    %2464 = vmatpush2.bf16.msra.mxu0 %v1857
    %2465 = vmatprep.mubr.bf16.mxu0 %v597
    %2466 = vmatmul.mubr.bf16.gmra.mxu0 %v595
    %v2467 = vpop.f32.mrf.mxu0
    %v2468 = vadd.f32 %v2428, %v2467
    %v2469 = vpop.f32.mrf.mxu0
    %v2470 = vpop.f32.mrf.mxu0
    %v2471 = vpop.f32.mrf.mxu0
    %2472 = vdwg.mxu0
    %2473 = vmatprep.subr.bf16.mxu0 0
    %2474 = vmatpush1.bf16.msra.mxu0 %v1872
    %2475 = vmatprep.subr.bf16.mxu0 0
    %2476 = vmatpush1.bf16.msra.mxu0 %v1871
    %2477 = vmatprep.subr.bf16.mxu0 0
    %2478 = vmatpush1.bf16.msra.mxu0 %v1870
    %2479 = vmatprep.subr.bf16.mxu0 0
    %2480 = vmatpush1.bf16.msra.mxu0 %v1869
    %2481 = vmatprep.subr.bf16.mxu0 0
    %2482 = vmatpush1.bf16.msra.mxu0 %v1868
    %2483 = vmatprep.subr.bf16.mxu0 0
    %2484 = vmatpush1.bf16.msra.mxu0 %v1867
    %2485 = vmatprep.subr.bf16.mxu0 0
    %2486 = vmatpush1.bf16.msra.mxu0 %v1866
    %2487 = vmatprep.subr.bf16.mxu0 0
    %2488 = vmatpush1.bf16.msra.mxu0 %v1865
    %2489 = vmatprep.subr.bf16.mxu0 0
    %2490 = vmatpush2.bf16.msra.mxu0 %v1880
    %2491 = vmatprep.subr.bf16.mxu0 0
    %2492 = vmatpush2.bf16.msra.mxu0 %v1879
    %2493 = vmatprep.subr.bf16.mxu0 0
    %2494 = vmatpush2.bf16.msra.mxu0 %v1878
    %2495 = vmatprep.subr.bf16.mxu0 0
    %2496 = vmatpush2.bf16.msra.mxu0 %v1877
    %2497 = vmatprep.subr.bf16.mxu0 0
    %2498 = vmatpush2.bf16.msra.mxu0 %v1876
    %2499 = vmatprep.subr.bf16.mxu0 0
    %2500 = vmatpush2.bf16.msra.mxu0 %v1875
    %2501 = vmatprep.subr.bf16.mxu0 0
    %2502 = vmatpush2.bf16.msra.mxu0 %v1874
    %2503 = vmatprep.subr.bf16.mxu0 0
    %2504 = vmatpush2.bf16.msra.mxu0 %v1873
    %2505 = vmatprep.mubr.bf16.mxu0 %v635
    %2506 = vmatmul.mubr.bf16.gmra.mxu0 %v621
    %v2507 = vpop.f32.mrf.mxu0
    %v2508 = vadd.f32 %v2468, %v2507
    %v2509 = vpop.f32.mrf.mxu0
    %v2510 = vpop.f32.mrf.mxu0
    %v2511 = vpop.f32.mrf.mxu0
    %2512 = vdwg.mxu0
    %2513 = vmatprep.subr.bf16.mxu0 0
    %2514 = vmatpush1.bf16.msra.mxu0 %v1888
    %2515 = vmatprep.subr.bf16.mxu0 0
    %2516 = vmatpush1.bf16.msra.mxu0 %v1887
    %2517 = vmatprep.subr.bf16.mxu0 0
    %2518 = vmatpush1.bf16.msra.mxu0 %v1886
    %2519 = vmatprep.subr.bf16.mxu0 0
    %2520 = vmatpush1.bf16.msra.mxu0 %v1885
    %2521 = vmatprep.subr.bf16.mxu0 0
    %2522 = vmatpush1.bf16.msra.mxu0 %v1884
    %2523 = vmatprep.subr.bf16.mxu0 0
    %2524 = vmatpush1.bf16.msra.mxu0 %v1883
    %2525 = vmatprep.subr.bf16.mxu0 0
    %2526 = vmatpush1.bf16.msra.mxu0 %v1882
    %2527 = vmatprep.subr.bf16.mxu0 0
    %2528 = vmatpush1.bf16.msra.mxu0 %v1881
    %2529 = vmatprep.subr.bf16.mxu0 0
    %2530 = vmatpush2.bf16.msra.mxu0 %v1896
    %2531 = vmatprep.subr.bf16.mxu0 0
    %2532 = vmatpush2.bf16.msra.mxu0 %v1895
    %2533 = vmatprep.subr.bf16.mxu0 0
    %2534 = vmatpush2.bf16.msra.mxu0 %v1894
    %2535 = vmatprep.subr.bf16.mxu0 0
    %2536 = vmatpush2.bf16.msra.mxu0 %v1893
    %2537 = vmatprep.subr.bf16.mxu0 0
    %2538 = vmatpush2.bf16.msra.mxu0 %v1892
    %2539 = vmatprep.subr.bf16.mxu0 0
    %2540 = vmatpush2.bf16.msra.mxu0 %v1891
    %2541 = vmatprep.subr.bf16.mxu0 0
    %2542 = vmatpush2.bf16.msra.mxu0 %v1890
    %2543 = vmatprep.subr.bf16.mxu0 0
    %2544 = vmatpush2.bf16.msra.mxu0 %v1889
    %2545 = vmatprep.mubr.bf16.mxu0 %v645
    %2546 = vmatmul.mubr.bf16.gmra.mxu0 %v643
    %v2547 = vpop.f32.mrf.mxu0
    %v2548 = vadd.f32 %v2508, %v2547
    %v2549 = vpop.f32.mrf.mxu0
    %v2550 = vpop.f32.mrf.mxu0
    %v2551 = vpop.f32.mrf.mxu0
    %2552 = vdwg.mxu0
    %2553 = vmatprep.subr.bf16.mxu0 0
    %2554 = vmatpush1.bf16.msra.mxu0 %v1904
    %2555 = vmatprep.subr.bf16.mxu0 0
    %2556 = vmatpush1.bf16.msra.mxu0 %v1903
    %2557 = vmatprep.subr.bf16.mxu0 0
    %2558 = vmatpush1.bf16.msra.mxu0 %v1902
    %2559 = vmatprep.subr.bf16.mxu0 0
    %2560 = vmatpush1.bf16.msra.mxu0 %v1901
    %2561 = vmatprep.subr.bf16.mxu0 0
    %2562 = vmatpush1.bf16.msra.mxu0 %v1900
    %2563 = vmatprep.subr.bf16.mxu0 0
    %2564 = vmatpush1.bf16.msra.mxu0 %v1899
    %2565 = vmatprep.subr.bf16.mxu0 0
    %2566 = vmatpush1.bf16.msra.mxu0 %v1898
    %2567 = vmatprep.subr.bf16.mxu0 0
    %2568 = vmatpush1.bf16.msra.mxu0 %v1897
    %2569 = vmatprep.subr.bf16.mxu0 0
    %2570 = vmatpush2.bf16.msra.mxu0 %v1912
    %2571 = vmatprep.subr.bf16.mxu0 0
    %2572 = vmatpush2.bf16.msra.mxu0 %v1911
    %2573 = vmatprep.subr.bf16.mxu0 0
    %2574 = vmatpush2.bf16.msra.mxu0 %v1910
    %2575 = vmatprep.subr.bf16.mxu0 0
    %2576 = vmatpush2.bf16.msra.mxu0 %v1909
    %2577 = vmatprep.subr.bf16.mxu0 0
    %2578 = vmatpush2.bf16.msra.mxu0 %v1908
    %2579 = vmatprep.subr.bf16.mxu0 0
    %2580 = vmatpush2.bf16.msra.mxu0 %v1907
    %2581 = vmatprep.subr.bf16.mxu0 0
    %2582 = vmatpush2.bf16.msra.mxu0 %v1906
    %2583 = vmatprep.subr.bf16.mxu0 0
    %2584 = vmatpush2.bf16.msra.mxu0 %v1905
    %2585 = vmatprep.mubr.bf16.mxu0 %v642
    %2586 = vmatmul.mubr.bf16.gmra.mxu0 %v628
    %v2587 = vpop.f32.mrf.mxu0
    %v2588 = vadd.f32 %v2548, %v2587
    %v2589 = vpop.f32.mrf.mxu0
    %v2590 = vpop.f32.mrf.mxu0
    %v2591 = vpop.f32.mrf.mxu0
    %2592 = vdwg.mxu0
    %2593 = vmatprep.subr.bf16.mxu0 0
    %2594 = vmatpush1.bf16.msra.mxu0 %v1920
    %2595 = vmatprep.subr.bf16.mxu0 0
    %2596 = vmatpush1.bf16.msra.mxu0 %v1919
    %2597 = vmatprep.subr.bf16.mxu0 0
    %2598 = vmatpush1.bf16.msra.mxu0 %v1918
    %2599 = vmatprep.subr.bf16.mxu0 0
    %2600 = vmatpush1.bf16.msra.mxu0 %v1917
    %2601 = vmatprep.subr.bf16.mxu0 0
    %2602 = vmatpush1.bf16.msra.mxu0 %v1916
    %2603 = vmatprep.subr.bf16.mxu0 0
    %2604 = vmatpush1.bf16.msra.mxu0 %v1915
    %2605 = vmatprep.subr.bf16.mxu0 0
    %2606 = vmatpush1.bf16.msra.mxu0 %v1914
    %2607 = vmatprep.subr.bf16.mxu0 0
    %2608 = vmatpush1.bf16.msra.mxu0 %v1913
    %2609 = vmatprep.subr.bf16.mxu0 0
    %2610 = vmatpush2.bf16.msra.mxu0 %v1928
    %2611 = vmatprep.subr.bf16.mxu0 0
    %2612 = vmatpush2.bf16.msra.mxu0 %v1927
    %2613 = vmatprep.subr.bf16.mxu0 0
    %2614 = vmatpush2.bf16.msra.mxu0 %v1926
    %2615 = vmatprep.subr.bf16.mxu0 0
    %2616 = vmatpush2.bf16.msra.mxu0 %v1925
    %2617 = vmatprep.subr.bf16.mxu0 0
    %2618 = vmatpush2.bf16.msra.mxu0 %v1924
    %2619 = vmatprep.subr.bf16.mxu0 0
    %2620 = vmatpush2.bf16.msra.mxu0 %v1923
    %2621 = vmatprep.subr.bf16.mxu0 0
    %2622 = vmatpush2.bf16.msra.mxu0 %v1922
    %2623 = vmatprep.subr.bf16.mxu0 0
    %2624 = vmatpush2.bf16.msra.mxu0 %v1921
    %2625 = vmatprep.mubr.bf16.mxu0 %v646
    %2626 = vmatmul.mubr.bf16.gmra.mxu0 %v644
    %v2627 = vpop.f32.mrf.mxu0
    %v2628 = vadd.f32 %v2588, %v2627
    %v2629 = vpop.f32.mrf.mxu0
    %v2630 = vpop.f32.mrf.mxu0
    %v2631 = vpop.f32.mrf.mxu0
    %2632 = vdwg.mxu0
    %2633 = vmatprep.subr.bf16.mxu0 0
    %2634 = vmatpush1.bf16.msra.mxu0 %v1936
    %2635 = vmatprep.subr.bf16.mxu0 0
    %2636 = vmatpush1.bf16.msra.mxu0 %v1935
    %2637 = vmatprep.subr.bf16.mxu0 0
    %2638 = vmatpush1.bf16.msra.mxu0 %v1934
    %2639 = vmatprep.subr.bf16.mxu0 0
    %2640 = vmatpush1.bf16.msra.mxu0 %v1933
    %2641 = vmatprep.subr.bf16.mxu0 0
    %2642 = vmatpush1.bf16.msra.mxu0 %v1932
    %2643 = vmatprep.subr.bf16.mxu0 0
    %2644 = vmatpush1.bf16.msra.mxu0 %v1931
    %2645 = vmatprep.subr.bf16.mxu0 0
    %2646 = vmatpush1.bf16.msra.mxu0 %v1930
    %2647 = vmatprep.subr.bf16.mxu0 0
    %2648 = vmatpush1.bf16.msra.mxu0 %v1929
    %2649 = vmatprep.subr.bf16.mxu0 0
    %2650 = vmatpush2.bf16.msra.mxu0 %v1944
    %2651 = vmatprep.subr.bf16.mxu0 0
    %2652 = vmatpush2.bf16.msra.mxu0 %v1943
    %2653 = vmatprep.subr.bf16.mxu0 0
    %2654 = vmatpush2.bf16.msra.mxu0 %v1942
    %2655 = vmatprep.subr.bf16.mxu0 0
    %2656 = vmatpush2.bf16.msra.mxu0 %v1941
    %2657 = vmatprep.subr.bf16.mxu0 0
    %2658 = vmatpush2.bf16.msra.mxu0 %v1940
    %2659 = vmatprep.subr.bf16.mxu0 0
    %2660 = vmatpush2.bf16.msra.mxu0 %v1939
    %2661 = vmatprep.subr.bf16.mxu0 0
    %2662 = vmatpush2.bf16.msra.mxu0 %v1938
    %2663 = vmatprep.subr.bf16.mxu0 0
    %2664 = vmatpush2.bf16.msra.mxu0 %v1937
    %2665 = vmatprep.mubr.bf16.mxu0 %v684
    %2666 = vmatmul.mubr.bf16.gmra.mxu0 %v670
    %v2667 = vpop.f32.mrf.mxu0
    %v2668 = vadd.f32 %v2628, %v2667
    %v2669 = vpop.f32.mrf.mxu0
    %v2670 = vpop.f32.mrf.mxu0
    %v2671 = vpop.f32.mrf.mxu0
    %2672 = vdwg.mxu0
    %2673 = vmatprep.subr.bf16.mxu0 0
    %2674 = vmatpush1.bf16.msra.mxu0 %v1952
    %2675 = vmatprep.subr.bf16.mxu0 0
    %2676 = vmatpush1.bf16.msra.mxu0 %v1951
    %2677 = vmatprep.subr.bf16.mxu0 0
    %2678 = vmatpush1.bf16.msra.mxu0 %v1950
    %2679 = vmatprep.subr.bf16.mxu0 0
    %2680 = vmatpush1.bf16.msra.mxu0 %v1949
    %2681 = vmatprep.subr.bf16.mxu0 0
    %2682 = vmatpush1.bf16.msra.mxu0 %v1948
    %2683 = vmatprep.subr.bf16.mxu0 0
    %2684 = vmatpush1.bf16.msra.mxu0 %v1947
    %2685 = vmatprep.subr.bf16.mxu0 0
    %2686 = vmatpush1.bf16.msra.mxu0 %v1946
    %2687 = vmatprep.subr.bf16.mxu0 0
    %2688 = vmatpush1.bf16.msra.mxu0 %v1945
    %2689 = vmatprep.subr.bf16.mxu0 0
    %2690 = vmatpush2.bf16.msra.mxu0 %v1960
    %2691 = vmatprep.subr.bf16.mxu0 0
    %2692 = vmatpush2.bf16.msra.mxu0 %v1959
    %2693 = vmatprep.subr.bf16.mxu0 0
    %2694 = vmatpush2.bf16.msra.mxu0 %v1958
    %2695 = vmatprep.subr.bf16.mxu0 0
    %2696 = vmatpush2.bf16.msra.mxu0 %v1957
    %2697 = vmatprep.subr.bf16.mxu0 0
    %2698 = vmatpush2.bf16.msra.mxu0 %v1956
    %2699 = vmatprep.subr.bf16.mxu0 0
    %2700 = vmatpush2.bf16.msra.mxu0 %v1955
    %2701 = vmatprep.subr.bf16.mxu0 0
    %2702 = vmatpush2.bf16.msra.mxu0 %v1954
    %2703 = vmatprep.subr.bf16.mxu0 0
    %2704 = vmatpush2.bf16.msra.mxu0 %v1953
    %2705 = vmatprep.mubr.bf16.mxu0 %v694
    %2706 = vmatmul.mubr.bf16.gmra.mxu0 %v692
    %v2707 = vpop.f32.mrf.mxu0
    %v2708 = vadd.f32 %v2668, %v2707
    %v2709 = vpop.f32.mrf.mxu0
    %v2710 = vpop.f32.mrf.mxu0
    %v2711 = vpop.f32.mrf.mxu0
    %2712 = vdwg.mxu0
    %2713 = vmatprep.subr.bf16.mxu0 0
    %2714 = vmatpush1.bf16.msra.mxu0 %v1968
    %2715 = vmatprep.subr.bf16.mxu0 0
    %2716 = vmatpush1.bf16.msra.mxu0 %v1967
    %2717 = vmatprep.subr.bf16.mxu0 0
    %2718 = vmatpush1.bf16.msra.mxu0 %v1966
    %2719 = vmatprep.subr.bf16.mxu0 0
    %2720 = vmatpush1.bf16.msra.mxu0 %v1965
    %2721 = vmatprep.subr.bf16.mxu0 0
    %2722 = vmatpush1.bf16.msra.mxu0 %v1964
    %2723 = vmatprep.subr.bf16.mxu0 0
    %2724 = vmatpush1.bf16.msra.mxu0 %v1963
    %2725 = vmatprep.subr.bf16.mxu0 0
    %2726 = vmatpush1.bf16.msra.mxu0 %v1962
    %2727 = vmatprep.subr.bf16.mxu0 0
    %2728 = vmatpush1.bf16.msra.mxu0 %v1961
    %2729 = vmatprep.subr.bf16.mxu0 0
    %2730 = vmatpush2.bf16.msra.mxu0 %v1976
    %2731 = vmatprep.subr.bf16.mxu0 0
    %2732 = vmatpush2.bf16.msra.mxu0 %v1975
    %2733 = vmatprep.subr.bf16.mxu0 0
    %2734 = vmatpush2.bf16.msra.mxu0 %v1974
    %2735 = vmatprep.subr.bf16.mxu0 0
    %2736 = vmatpush2.bf16.msra.mxu0 %v1973
    %2737 = vmatprep.subr.bf16.mxu0 0
    %2738 = vmatpush2.bf16.msra.mxu0 %v1972
    %2739 = vmatprep.subr.bf16.mxu0 0
    %2740 = vmatpush2.bf16.msra.mxu0 %v1971
    %2741 = vmatprep.subr.bf16.mxu0 0
    %2742 = vmatpush2.bf16.msra.mxu0 %v1970
    %2743 = vmatprep.subr.bf16.mxu0 0
    %2744 = vmatpush2.bf16.msra.mxu0 %v1969
    %2745 = vmatprep.mubr.bf16.mxu0 %v691
    %2746 = vmatmul.mubr.bf16.gmra.mxu0 %v677
    %v2747 = vpop.f32.mrf.mxu0
    %v2748 = vadd.f32 %v2708, %v2747
    %v2749 = vpop.f32.mrf.mxu0
    %v2750 = vpop.f32.mrf.mxu0
    %v2751 = vpop.f32.mrf.mxu0
    %2752 = vdwg.mxu0
    %2753 = vmatprep.subr.bf16.mxu0 0
    %2754 = vmatpush1.bf16.msra.mxu0 %v1984
    %2755 = vmatprep.subr.bf16.mxu0 0
    %2756 = vmatpush1.bf16.msra.mxu0 %v1983
    %2757 = vmatprep.subr.bf16.mxu0 0
    %2758 = vmatpush1.bf16.msra.mxu0 %v1982
    %2759 = vmatprep.subr.bf16.mxu0 0
    %2760 = vmatpush1.bf16.msra.mxu0 %v1981
    %2761 = vmatprep.subr.bf16.mxu0 0
    %2762 = vmatpush1.bf16.msra.mxu0 %v1980
    %2763 = vmatprep.subr.bf16.mxu0 0
    %2764 = vmatpush1.bf16.msra.mxu0 %v1979
    %2765 = vmatprep.subr.bf16.mxu0 0
    %2766 = vmatpush1.bf16.msra.mxu0 %v1978
    %2767 = vmatprep.subr.bf16.mxu0 0
    %2768 = vmatpush1.bf16.msra.mxu0 %v1977
    %2769 = vmatprep.subr.bf16.mxu0 0
    %2770 = vmatpush2.bf16.msra.mxu0 %v1992
    %2771 = vmatprep.subr.bf16.mxu0 0
    %2772 = vmatpush2.bf16.msra.mxu0 %v1991
    %2773 = vmatprep.subr.bf16.mxu0 0
    %2774 = vmatpush2.bf16.msra.mxu0 %v1990
    %2775 = vmatprep.subr.bf16.mxu0 0
    %2776 = vmatpush2.bf16.msra.mxu0 %v1989
    %2777 = vmatprep.subr.bf16.mxu0 0
    %2778 = vmatpush2.bf16.msra.mxu0 %v1988
    %2779 = vmatprep.subr.bf16.mxu0 0
    %2780 = vmatpush2.bf16.msra.mxu0 %v1987
    %2781 = vmatprep.subr.bf16.mxu0 0
    %2782 = vmatpush2.bf16.msra.mxu0 %v1986
    %2783 = vmatprep.subr.bf16.mxu0 0
    %2784 = vmatpush2.bf16.msra.mxu0 %v1985
    %2785 = vmatprep.mubr.bf16.mxu0 %v695
    %2786 = vmatmul.mubr.bf16.gmra.mxu0 %v693
    %v2787 = vpop.f32.mrf.mxu0
    %v2788 = vadd.f32 %v2748, %v2787
    %v2789 = vpop.f32.mrf.mxu0
    %v2790 = vpop.f32.mrf.mxu0
    %v2791 = vpop.f32.mrf.mxu0
    %2792 = vdwg.mxu0
    %2793 = vmatprep.subr.bf16.mxu0 0
    %2794 = vmatpush1.bf16.msra.mxu0 %v2000
    %2795 = vmatprep.subr.bf16.mxu0 0
    %2796 = vmatpush1.bf16.msra.mxu0 %v1999
    %2797 = vmatprep.subr.bf16.mxu0 0
    %2798 = vmatpush1.bf16.msra.mxu0 %v1998
    %2799 = vmatprep.subr.bf16.mxu0 0
    %2800 = vmatpush1.bf16.msra.mxu0 %v1997
    %2801 = vmatprep.subr.bf16.mxu0 0
    %2802 = vmatpush1.bf16.msra.mxu0 %v1996
    %2803 = vmatprep.subr.bf16.mxu0 0
    %2804 = vmatpush1.bf16.msra.mxu0 %v1995
    %2805 = vmatprep.subr.bf16.mxu0 0
    %2806 = vmatpush1.bf16.msra.mxu0 %v1994
    %2807 = vmatprep.subr.bf16.mxu0 0
    %2808 = vmatpush1.bf16.msra.mxu0 %v1993
    %2809 = vmatprep.subr.bf16.mxu0 0
    %2810 = vmatpush2.bf16.msra.mxu0 %v2008
    %2811 = vmatprep.subr.bf16.mxu0 0
    %2812 = vmatpush2.bf16.msra.mxu0 %v2007
    %2813 = vmatprep.subr.bf16.mxu0 0
    %2814 = vmatpush2.bf16.msra.mxu0 %v2006
    %2815 = vmatprep.subr.bf16.mxu0 0
    %2816 = vmatpush2.bf16.msra.mxu0 %v2005
    %2817 = vmatprep.subr.bf16.mxu0 0
    %2818 = vmatpush2.bf16.msra.mxu0 %v2004
    %2819 = vmatprep.subr.bf16.mxu0 0
    %2820 = vmatpush2.bf16.msra.mxu0 %v2003
    %2821 = vmatprep.subr.bf16.mxu0 0
    %2822 = vmatpush2.bf16.msra.mxu0 %v2002
    %2823 = vmatprep.subr.bf16.mxu0 0
    %2824 = vmatpush2.bf16.msra.mxu0 %v2001
    %2825 = vmatprep.mubr.bf16.mxu0 %v733
    %2826 = vmatmul.mubr.bf16.gmra.mxu0 %v719
    %v2827 = vpop.f32.mrf.mxu0
    %v2828 = vadd.f32 %v2788, %v2827
    %v2829 = vpop.f32.mrf.mxu0
    %v2830 = vpop.f32.mrf.mxu0
    %v2831 = vpop.f32.mrf.mxu0
    %2832 = vdwg.mxu0
    %2833 = vmatprep.subr.bf16.mxu0 0
    %2834 = vmatpush1.bf16.msra.mxu0 %v2016
    %2835 = vmatprep.subr.bf16.mxu0 0
    %2836 = vmatpush1.bf16.msra.mxu0 %v2015
    %2837 = vmatprep.subr.bf16.mxu0 0
    %2838 = vmatpush1.bf16.msra.mxu0 %v2014
    %2839 = vmatprep.subr.bf16.mxu0 0
    %2840 = vmatpush1.bf16.msra.mxu0 %v2013
    %2841 = vmatprep.subr.bf16.mxu0 0
    %2842 = vmatpush1.bf16.msra.mxu0 %v2012
    %2843 = vmatprep.subr.bf16.mxu0 0
    %2844 = vmatpush1.bf16.msra.mxu0 %v2011
    %2845 = vmatprep.subr.bf16.mxu0 0
    %2846 = vmatpush1.bf16.msra.mxu0 %v2010
    %2847 = vmatprep.subr.bf16.mxu0 0
    %2848 = vmatpush1.bf16.msra.mxu0 %v2009
    %2849 = vmatprep.subr.bf16.mxu0 0
    %2850 = vmatpush2.bf16.msra.mxu0 %v2024
    %2851 = vmatprep.subr.bf16.mxu0 0
    %2852 = vmatpush2.bf16.msra.mxu0 %v2023
    %2853 = vmatprep.subr.bf16.mxu0 0
    %2854 = vmatpush2.bf16.msra.mxu0 %v2022
    %2855 = vmatprep.subr.bf16.mxu0 0
    %2856 = vmatpush2.bf16.msra.mxu0 %v2021
    %2857 = vmatprep.subr.bf16.mxu0 0
    %2858 = vmatpush2.bf16.msra.mxu0 %v2020
    %2859 = vmatprep.subr.bf16.mxu0 0
    %2860 = vmatpush2.bf16.msra.mxu0 %v2019
    %2861 = vmatprep.subr.bf16.mxu0 0
    %2862 = vmatpush2.bf16.msra.mxu0 %v2018
    %2863 = vmatprep.subr.bf16.mxu0 0
    %2864 = vmatpush2.bf16.msra.mxu0 %v2017
    %2865 = vmatprep.mubr.bf16.mxu0 %v743
    %2866 = vmatmul.mubr.bf16.gmra.mxu0 %v741
    %v2867 = vpop.f32.mrf.mxu0
    %v2868 = vadd.f32 %v2828, %v2867
    %v2869 = vpop.f32.mrf.mxu0
    %v2870 = vpop.f32.mrf.mxu0
    %v2871 = vpop.f32.mrf.mxu0
    %2872 = vdwg.mxu0
    %2873 = vmatprep.subr.bf16.mxu0 0
    %2874 = vmatpush1.bf16.msra.mxu0 %v2032
    %2875 = vmatprep.subr.bf16.mxu0 0
    %2876 = vmatpush1.bf16.msra.mxu0 %v2031
    %2877 = vmatprep.subr.bf16.mxu0 0
    %2878 = vmatpush1.bf16.msra.mxu0 %v2030
    %2879 = vmatprep.subr.bf16.mxu0 0
    %2880 = vmatpush1.bf16.msra.mxu0 %v2029
    %2881 = vmatprep.subr.bf16.mxu0 0
    %2882 = vmatpush1.bf16.msra.mxu0 %v2028
    %2883 = vmatprep.subr.bf16.mxu0 0
    %2884 = vmatpush1.bf16.msra.mxu0 %v2027
    %2885 = vmatprep.subr.bf16.mxu0 0
    %2886 = vmatpush1.bf16.msra.mxu0 %v2026
    %2887 = vmatprep.subr.bf16.mxu0 0
    %2888 = vmatpush1.bf16.msra.mxu0 %v2025
    %2889 = vmatprep.subr.bf16.mxu0 0
    %2890 = vmatpush2.bf16.msra.mxu0 %v2040
    %2891 = vmatprep.subr.bf16.mxu0 0
    %2892 = vmatpush2.bf16.msra.mxu0 %v2039
    %2893 = vmatprep.subr.bf16.mxu0 0
    %2894 = vmatpush2.bf16.msra.mxu0 %v2038
    %2895 = vmatprep.subr.bf16.mxu0 0
    %2896 = vmatpush2.bf16.msra.mxu0 %v2037
    %2897 = vmatprep.subr.bf16.mxu0 0
    %2898 = vmatpush2.bf16.msra.mxu0 %v2036
    %2899 = vmatprep.subr.bf16.mxu0 0
    %2900 = vmatpush2.bf16.msra.mxu0 %v2035
    %2901 = vmatprep.subr.bf16.mxu0 0
    %2902 = vmatpush2.bf16.msra.mxu0 %v2034
    %2903 = vmatprep.subr.bf16.mxu0 0
    %2904 = vmatpush2.bf16.msra.mxu0 %v2033
    %2905 = vmatprep.mubr.bf16.mxu0 %v740
    %2906 = vmatmul.mubr.bf16.gmra.mxu0 %v726
    %v2907 = vpop.f32.mrf.mxu0
    %v2908 = vadd.f32 %v2868, %v2907
    %v2909 = vpop.f32.mrf.mxu0
    %v2910 = vpop.f32.mrf.mxu0
    %v2911 = vpop.f32.mrf.mxu0
    %2912 = vdwg.mxu0
    %2913 = vmatprep.subr.bf16.mxu0 0
    %2914 = vmatpush1.bf16.msra.mxu0 %v2048
    %2915 = vmatprep.subr.bf16.mxu0 0
    %2916 = vmatpush1.bf16.msra.mxu0 %v2047
    %2917 = vmatprep.subr.bf16.mxu0 0
    %2918 = vmatpush1.bf16.msra.mxu0 %v2046
    %2919 = vmatprep.subr.bf16.mxu0 0
    %2920 = vmatpush1.bf16.msra.mxu0 %v2045
    %2921 = vmatprep.subr.bf16.mxu0 0
    %2922 = vmatpush1.bf16.msra.mxu0 %v2044
    %2923 = vmatprep.subr.bf16.mxu0 0
    %2924 = vmatpush1.bf16.msra.mxu0 %v2043
    %2925 = vmatprep.subr.bf16.mxu0 0
    %2926 = vmatpush1.bf16.msra.mxu0 %v2042
    %2927 = vmatprep.subr.bf16.mxu0 0
    %2928 = vmatpush1.bf16.msra.mxu0 %v2041
    %2929 = vmatprep.subr.bf16.mxu0 0
    %2930 = vmatpush2.bf16.msra.mxu0 %v2056
    %2931 = vmatprep.subr.bf16.mxu0 0
    %2932 = vmatpush2.bf16.msra.mxu0 %v2055
    %2933 = vmatprep.subr.bf16.mxu0 0
    %2934 = vmatpush2.bf16.msra.mxu0 %v2054
    %2935 = vmatprep.subr.bf16.mxu0 0
    %2936 = vmatpush2.bf16.msra.mxu0 %v2053
    %2937 = vmatprep.subr.bf16.mxu0 0
    %2938 = vmatpush2.bf16.msra.mxu0 %v2052
    %2939 = vmatprep.subr.bf16.mxu0 0
    %2940 = vmatpush2.bf16.msra.mxu0 %v2051
    %2941 = vmatprep.subr.bf16.mxu0 0
    %2942 = vmatpush2.bf16.msra.mxu0 %v2050
    %2943 = vmatprep.subr.bf16.mxu0 0
    %2944 = vmatpush2.bf16.msra.mxu0 %v2049
    %2945 = vmatprep.mubr.bf16.mxu0 %v744
    %2946 = vmatmul.mubr.bf16.gmra.mxu0 %v742
    %v2947 = vpop.f32.mrf.mxu0
    %v2948 = vadd.f32 %v2908, %v2947
    %v2949 = vpop.f32.mrf.mxu0
    %v2950 = vpop.f32.mrf.mxu0
    %v2951 = vpop.f32.mrf.mxu0
    %2952 = vdwg.mxu0
    %v2953 = vmax.f32 %v2948, 0.0
    %v2954 = vld [vmem:[%s3] sm:$0xff]
    %v2955 = vld [vmem:[%s3 + $0x8] sm:$0xff]
    %v2956 = vld [vmem:[%s3 + $0x10] sm:$0xff]
    %v2957 = vld [vmem:[%s3 + $0x18] sm:$0xff]
    %v2958 = vld [vmem:[%s3 + $0x20] sm:$0xff]
    %v2959 = vld [vmem:[%s3 + $0x28] sm:$0xff]
    %v2960 = vld [vmem:[%s3 + $0x30] sm:$0xff]
    %v2961 = vld [vmem:[%s3 + $0x38] sm:$0xff]
    %v2962 = vld [vmem:[%s3 + $0x40] sm:$0xff]
    %v2963 = vld [vmem:[%s3 + $0x48] sm:$0xff]
    %v2964 = vld [vmem:[%s3 + $0x50] sm:$0xff]
    %v2965 = vld [vmem:[%s3 + $0x58] sm:$0xff]
    %v2966 = vld [vmem:[%s3 + $0x60] sm:$0xff]
    %v2967 = vld [vmem:[%s3 + $0x68] sm:$0xff]
    %v2968 = vld [vmem:[%s3 + $0x70] sm:$0xff]
    %v2969 = vld [vmem:[%s3 + $0x78] sm:$0xff]
    %v2970 = vld [vmem:[%s4] sm:$0x1]
    %v2972 = vlaneseq
    %v2973 = vshrl.u32 %v2972, 7
    %v2974 = vsub.s32 0, %v2973
    %v2975 = vrot.slane %v2970, %v2974
    %2977 = vmatprep.subr.mxu0 0.0
    %2978 = vmatpush1.msra.mxu0 %v2969
    %2979 = vmatprep.subr.mxu0 0.0
    %2980 = vmatpush1.msra.mxu0 %v2968
    %2981 = vmatprep.subr.mxu0 0.0
    %2982 = vmatpush1.msra.mxu0 %v2967
    %2983 = vmatprep.subr.mxu0 0.0
    %2984 = vmatpush1.msra.mxu0 %v2966
    %2985 = vmatprep.subr.mxu0 0.0
    %2986 = vmatpush1.msra.mxu0 %v2965
    %2987 = vmatprep.subr.mxu0 0.0
    %2988 = vmatpush1.msra.mxu0 %v2964
    %2989 = vmatprep.subr.mxu0 0.0
    %2990 = vmatpush1.msra.mxu0 %v2963
    %2991 = vmatprep.subr.mxu0 0.0
    %2992 = vmatpush1.msra.mxu0 %v2962
    %2993 = vmatprep.subr.mxu0 0.0
    %2994 = vmatpush1.msra.mxu0 %v2961
    %2995 = vmatprep.subr.mxu0 0.0
    %2996 = vmatpush1.msra.mxu0 %v2960
    %2997 = vmatprep.subr.mxu0 0.0
    %2998 = vmatpush1.msra.mxu0 %v2959
    %2999 = vmatprep.subr.mxu0 0.0
    %3000 = vmatpush1.msra.mxu0 %v2958
    %3001 = vmatprep.subr.mxu0 0.0
    %3002 = vmatpush1.msra.mxu0 %v2957
    %3003 = vmatprep.subr.mxu0 0.0
    %3004 = vmatpush1.msra.mxu0 %v2956
    %3005 = vmatprep.subr.mxu0 0.0
    %3006 = vmatpush1.msra.mxu0 %v2955
    %3007 = vmatprep.subr.mxu0 0.0
    %3008 = vmatpush1.msra.mxu0 %v2954
    %3009 = vmatprep.subr.mxu0 0.0
    %3010 = vmatpush2.msra.mxu0 0.0
    %3011 = vmatprep.subr.mxu0 0.0
    %3012 = vmatpush2.msra.mxu0 0.0
    %3013 = vmatprep.subr.mxu0 0.0
    %3014 = vmatpush2.msra.mxu0 0.0
    %3015 = vmatprep.subr.mxu0 0.0
    %3016 = vmatpush2.msra.mxu0 0.0
    %3017 = vmatprep.subr.mxu0 0.0
    %3018 = vmatpush2.msra.mxu0 0.0
    %3019 = vmatprep.subr.mxu0 0.0
    %3020 = vmatpush2.msra.mxu0 0.0
    %3021 = vmatprep.subr.mxu0 0.0
    %3022 = vmatpush2.msra.mxu0 0.0
    %3023 = vmatprep.subr.mxu0 0.0
    %3024 = vmatpush2.msra.mxu0 0.0
    %3025 = vmatprep.subr.mxu0 0.0
    %3026 = vmatpush2.msra.mxu0 0.0
    %3027 = vmatprep.subr.mxu0 0.0
    %3028 = vmatpush2.msra.mxu0 0.0
    %3029 = vmatprep.subr.mxu0 0.0
    %3030 = vmatpush2.msra.mxu0 0.0
    %3031 = vmatprep.subr.mxu0 0.0
    %3032 = vmatpush2.msra.mxu0 0.0
    %3033 = vmatprep.subr.mxu0 0.0
    %3034 = vmatpush2.msra.mxu0 0.0
    %3035 = vmatprep.subr.mxu0 0.0
    %3036 = vmatpush2.msra.mxu0 0.0
    %3037 = vmatprep.subr.mxu0 0.0
    %3038 = vmatpush2.msra.mxu0 0.0
    %3039 = vmatprep.subr.mxu0 0.0
    %3040 = vmatpush2.msra.mxu0 0.0
    %3041 = vmatprep.mubr.f32.mxu0 0.0
    %3042 = vmatmul.mubr.f32.gmra.mxu0 %v2953
    %v3043 = vpop.f32.mrf.mxu0
    %v3044 = vadd.f32 %v2975, %v3043
    %v3045 = vpop.f32.mrf.mxu0
    %3046 = vdwg.mxu0
    %3047 = vst [vmem:[#allocation2] sm:$0x3] %v3044
    // Predicated region
    $region22: #{net_forward.3} parent=1 // pred_check
      _
    $region23: #{net_forward.3} parent=1 // pred_check_branch
      %3049 = sbr.rel (0) target = $region25
    $region24: #{net_forward.3} parent=1 // pred_region
      %s3051 = ssub.s32 32, 32
      %3052 = vsyncadd [#allocation3], %s3051
      %s3054 = sshll.u32 [#allocation2], 4
      %s3055 = int_to_ptr.vmem [resolvable:$true] %s3054
      %3057 = dma.vmem_to_hbm [thread:$0]  %s3055, 32, %s5, [#allocation3]
    $region25: #{net_forward.3} parent=1 // pred_fallthru
      _
    // Predicated region
    $region26: #{net_forward.3} parent=1 // pred_check
      _
    $region27: #{net_forward.3} parent=1 // pred_check_branch
      %3059 = sbr.rel (0) target = $region29
    $region28: #{net_forward.3} parent=1 // pred_region
      %3060 = dma.done [#allocation3], 32
    $region29: #{net_forward.3} parent=1 // pred_fallthru
      _
    %3061 = vsyncpa [#allocation3], 1

// kernel: net_forward.2
$region0: #{net_forward.2}
  #allocation0 [shape = 'u32[]', space=smem, size = 0x4, offset = 0x4, fixed_abs, tag = 'smem constant byte address 0x4 - core index']
  #allocation1 [shape = 'u32[144,128]{1,0:T(1,128)}', space=vmem, size = 0x12000, scoped, tag = 'internal scratch']
  #allocation2 [shape = 'f32[2,18,18,32]{3,2,1,0:T(8,128)}', space=vmem, size = 0x6c000, scoped, tag = 'scratch operand']
  #allocation3 [shape = 'bf16[512,288]{1,0:T(8,128)(2,1)}', space=vmem, size = 0x60000, scoped, tag = 'scratch operand']
  #allocation4 [shape = 'f32[1024,32]{1,0:T(8,128)}', space=vmem, size = 0x80000, scoped, tag = 'scratch operand']
  #allocation5 [shape = 'f32[256,64]{1,0:T(8,128)}', space=vmem, size = 0x20000, scoped, tag = 'scratch operand']
  %s0 = inlined_call_operand.vmem [shape: bf16[2,32,32,32], index: 0, kind: input, shape index: {}]
  %s1 = inlined_call_operand.vmem [shape: bf16[32,32], index: 1, kind: input, shape index: {}]
  %s2 = inlined_call_operand.vmem [shape: f32[1,32], index: 2, kind: input, shape index: {}]
  %s3 = inlined_call_operand.vmem [shape: bf16[288,64], index: 3, kind: input, shape index: {}]
  %s4 = inlined_call_operand.vmem [shape: f32[1,64], index: 4, kind: input, shape index: {}]
  %s5 = inlined_call_operand.vmem [shape: bf16[2,8,8,64], index: 5, kind: output, shape index: {}]
  %s6 = sld [smem:[#allocation0]]
  $region30: #{net_forward.2} parent=0
    _
  %s8 = ssub.s32 1, %s6
  %s9 = scalar_select 0, %s8, %s6
  // Predicated region
  $region2: #{net_forward.2} parent=0 // pred_check
    _
  $region3: #{net_forward.2} parent=0 // pred_check_branch
    %11 = sbr.rel (0) target = $region5
  $region4: #{net_forward.2} parent=0 // pred_region
    _
  $region5: #{net_forward.2} parent=0 // pred_fallthru
    _
  // Predicated region
  $region6: #{net_forward.2} parent=0 // pred_check
    _
  $region7: #{net_forward.2} parent=0 // pred_check_branch
    %13 = sbr.rel (0) target = $region9
  $region8: #{net_forward.2} parent=0 // pred_region
    _
  $region9: #{net_forward.2} parent=0 // pred_fallthru
    _
  // Predicated region
  $region10: #{net_forward.2} parent=0 // pred_check
    _
  $region11: #{net_forward.2} parent=0 // pred_check_branch
    %15 = sbr.rel (0) target = $region13
  $region12: #{net_forward.2} parent=0 // pred_region
    _
  $region13: #{net_forward.2} parent=0 // pred_fallthru
    _
  // Predicated region
  $region14: #{net_forward.2} parent=0 // pred_check
    _
  $region15: #{net_forward.2} parent=0 // pred_check_branch
    %17 = sbr.rel (0) target = $region17
  $region16: #{net_forward.2} parent=0 // pred_region
    _
  $region17: #{net_forward.2} parent=0 // pred_fallthru
    _
  // Predicated region
  $region18: #{net_forward.2} parent=0 // pred_check
    _
  $region19: #{net_forward.2} parent=0 // pred_check_branch
    %19 = sbr.rel (0) target = $region21
  $region20: #{net_forward.2} parent=0 // pred_region
    _
  $region21: #{net_forward.2} parent=0 // pred_fallthru
    _
  %v21 = vld [vmem:[%s0] sm:$0xf]
  %v22 = vld [vmem:[%s0 + $0x4] sm:$0xf]
  %v23 = vld [vmem:[%s0 + $0x8] sm:$0xf]
  %v24 = vld [vmem:[%s0 + $0xc] sm:$0xf]
  %v25 = vld [vmem:[%s0 + $0x10] sm:$0xf]
  %v26 = vld [vmem:[%s0 + $0x14] sm:$0xf]
  %v27 = vld [vmem:[%s0 + $0x18] sm:$0xf]
  %v28 = vld [vmem:[%s0 + $0x1c] sm:$0xf]
  %v29 = vld [vmem:[%s0 + $0x20] sm:$0xf]
  %v30 = vld [vmem:[%s0 + $0x24] sm:$0xf]
  %v31 = vld [vmem:[%s0 + $0x28] sm:$0xf]
  %v32 = vld [vmem:[%s0 + $0x2c] sm:$0xf]
  %v33 = vld [vmem:[%s0 + $0x30] sm:$0xf]
  %v34 = vld [vmem:[%s0 + $0x34] sm:$0xf]
  %v35 = vld [vmem:[%s0 + $0x38] sm:$0xf]
  %v36 = vld [vmem:[%s0 + $0x3c] sm:$0xf]
  %v37 = vld [vmem:[%s0 + $0x40] sm:$0xf]
  %v38 = vld [vmem:[%s0 + $0x44] sm:$0xf]
  %v39 = vld [vmem:[%s0 + $0x48] sm:$0xf]
  %v40 = vld [vmem:[%s0 + $0x4c] sm:$0xf]
  %v41 = vld [vmem:[%s0 + $0x50] sm:$0xf]
  %v42 = vld [vmem:[%s0 + $0x54] sm:$0xf]
  %v43 = vld [vmem:[%s0 + $0x58] sm:$0xf]
  %v44 = vld [vmem:[%s0 + $0x5c] sm:$0xf]
  %v45 = vld [vmem:[%s0 + $0x60] sm:$0xf]
  %v46 = vld [vmem:[%s0 + $0x64] sm:$0xf]
  %v47 = vld [vmem:[%s0 + $0x68] sm:$0xf]
  %v48 = vld [vmem:[%s0 + $0x6c] sm:$0xf]
  %v49 = vld [vmem:[%s0 + $0x70] sm:$0xf]
  %v50 = vld [vmem:[%s0 + $0x74] sm:$0xf]
  %v51 = vld [vmem:[%s0 + $0x78] sm:$0xf]
  %v52 = vld [vmem:[%s0 + $0x7c] sm:$0xf]
  %v53 = vld [vmem:[%s0 + $0x80] sm:$0xf]
  %v54 = vld [vmem:[%s0 + $0x84] sm:$0xf]
  %v55 = vld [vmem:[%s0 + $0x88] sm:$0xf]
  %v56 = vld [vmem:[%s0 + $0x8c] sm:$0xf]
  %v57 = vld [vmem:[%s0 + $0x90] sm:$0xf]
  %v58 = vld [vmem:[%s0 + $0x94] sm:$0xf]
  %v59 = vld [vmem:[%s0 + $0x98] sm:$0xf]
  %v60 = vld [vmem:[%s0 + $0x9c] sm:$0xf]
  %v61 = vld [vmem:[%s0 + $0xa0] sm:$0xf]
  %v62 = vld [vmem:[%s0 + $0xa4] sm:$0xf]
  %v63 = vld [vmem:[%s0 + $0xa8] sm:$0xf]
  %v64 = vld [vmem:[%s0 + $0xac] sm:$0xf]
  %v65 = vld [vmem:[%s0 + $0xb0] sm:$0xf]
  %v66 = vld [vmem:[%s0 + $0xb4] sm:$0xf]
  %v67 = vld [vmem:[%s0 + $0xb8] sm:$0xf]
  %v68 = vld [vmem:[%s0 + $0xbc] sm:$0xf]
  %v69 = vld [vmem:[%s0 + $0xc0] sm:$0xf]
  %v70 = vld [vmem:[%s0 + $0xc4] sm:$0xf]
  %v71 = vld [vmem:[%s0 + $0xc8] sm:$0xf]
  %v72 = vld [vmem:[%s0 + $0xcc] sm:$0xf]
  %v73 = vld [vmem:[%s0 + $0xd0] sm:$0xf]
  %v74 = vld [vmem:[%s0 + $0xd4] sm:$0xf]
  %v75 = vld [vmem:[%s0 + $0xd8] sm:$0xf]
  %v76 = vld [vmem:[%s0 + $0xdc] sm:$0xf]
  %v77 = vld [vmem:[%s0 + $0xe0] sm:$0xf]
  %v78 = vld [vmem:[%s0 + $0xe4] sm:$0xf]
  %v79 = vld [vmem:[%s0 + $0xe8] sm:$0xf]
  %v80 = vld [vmem:[%s0 + $0xec] sm:$0xf]
  %v81 = vld [vmem:[%s0 + $0xf0] sm:$0xf]
  %v82 = vld [vmem:[%s0 + $0xf4] sm:$0xf]
  %v83 = vld [vmem:[%s0 + $0xf8] sm:$0xf]
  %v84 = vld [vmem:[%s0 + $0xfc] sm:$0xf]
  %v85 = vld [vmem:[%s0 + $0x100] sm:$0xf]
  %v86 = vld [vmem:[%s0 + $0x104] sm:$0xf]
  %v87 = vld [vmem:[%s0 + $0x108] sm:$0xf]
  %v88 = vld [vmem:[%s0 + $0x10c] sm:$0xf]
  %v89 = vld [vmem:[%s0 + $0x110] sm:$0xf]
  %v90 = vld [vmem:[%s0 + $0x114] sm:$0xf]
  %v91 = vld [vmem:[%s0 + $0x118] sm:$0xf]
  %v92 = vld [vmem:[%s0 + $0x11c] sm:$0xf]
  %v93 = vld [vmem:[%s0 + $0x120] sm:$0xf]
  %v94 = vld [vmem:[%s0 + $0x124] sm:$0xf]
  %v95 = vld [vmem:[%s0 + $0x128] sm:$0xf]
  %v96 = vld [vmem:[%s0 + $0x12c] sm:$0xf]
  %v97 = vld [vmem:[%s0 + $0x130] sm:$0xf]
  %v98 = vld [vmem:[%s0 + $0x134] sm:$0xf]
  %v99 = vld [vmem:[%s0 + $0x138] sm:$0xf]
  %v100 = vld [vmem:[%s0 + $0x13c] sm:$0xf]
  %v101 = vld [vmem:[%s0 + $0x140] sm:$0xf]
  %v102 = vld [vmem:[%s0 + $0x144] sm:$0xf]
  %v103 = vld [vmem:[%s0 + $0x148] sm:$0xf]
  %v104 = vld [vmem:[%s0 + $0x14c] sm:$0xf]
  %v105 = vld [vmem:[%s0 + $0x150] sm:$0xf]
  %v106 = vld [vmem:[%s0 + $0x154] sm:$0xf]
  %v107 = vld [vmem:[%s0 + $0x158] sm:$0xf]
  %v108 = vld [vmem:[%s0 + $0x15c] sm:$0xf]
  %v109 = vld [vmem:[%s0 + $0x160] sm:$0xf]
  %v110 = vld [vmem:[%s0 + $0x164] sm:$0xf]
  %v111 = vld [vmem:[%s0 + $0x168] sm:$0xf]
  %v112 = vld [vmem:[%s0 + $0x16c] sm:$0xf]
  %v113 = vld [vmem:[%s0 + $0x170] sm:$0xf]
  %v114 = vld [vmem:[%s0 + $0x174] sm:$0xf]
  %v115 = vld [vmem:[%s0 + $0x178] sm:$0xf]
  %v116 = vld [vmem:[%s0 + $0x17c] sm:$0xf]
  %v117 = vld [vmem:[%s0 + $0x180] sm:$0xf]
  %v118 = vld [vmem:[%s0 + $0x184] sm:$0xf]
  %v119 = vld [vmem:[%s0 + $0x188] sm:$0xf]
  %v120 = vld [vmem:[%s0 + $0x18c] sm:$0xf]
  %v121 = vld [vmem:[%s0 + $0x190] sm:$0xf]
  %v122 = vld [vmem:[%s0 + $0x194] sm:$0xf]
  %v123 = vld [vmem:[%s0 + $0x198] sm:$0xf]
  %v124 = vld [vmem:[%s0 + $0x19c] sm:$0xf]
  %v125 = vld [vmem:[%s0 + $0x1a0] sm:$0xf]
  %v126 = vld [vmem:[%s0 + $0x1a4] sm:$0xf]
  %v127 = vld [vmem:[%s0 + $0x1a8] sm:$0xf]
  %v128 = vld [vmem:[%s0 + $0x1ac] sm:$0xf]
  %v129 = vld [vmem:[%s0 + $0x1b0] sm:$0xf]
  %v130 = vld [vmem:[%s0 + $0x1b4] sm:$0xf]
  %v131 = vld [vmem:[%s0 + $0x1b8] sm:$0xf]
  %v132 = vld [vmem:[%s0 + $0x1bc] sm:$0xf]
  %v133 = vld [vmem:[%s0 + $0x1c0] sm:$0xf]
  %v134 = vld [vmem:[%s0 + $0x1c4] sm:$0xf]
  %v135 = vld [vmem:[%s0 + $0x1c8] sm:$0xf]
  %v136 = vld [vmem:[%s0 + $0x1cc] sm:$0xf]
  %v137 = vld [vmem:[%s0 + $0x1d0] sm:$0xf]
  %v138 = vld [vmem:[%s0 + $0x1d4] sm:$0xf]
  %v139 = vld [vmem:[%s0 + $0x1d8] sm:$0xf]
  %v140 = vld [vmem:[%s0 + $0x1dc] sm:$0xf]
  %v141 = vld [vmem:[%s0 + $0x1e0] sm:$0xf]
  %v142 = vld [vmem:[%s0 + $0x1e4] sm:$0xf]
  %v143 = vld [vmem:[%s0 + $0x1e8] sm:$0xf]
  %v144 = vld [vmem:[%s0 + $0x1ec] sm:$0xf]
  %v145 = vld [vmem:[%s0 + $0x1f0] sm:$0xf]
  %v146 = vld [vmem:[%s0 + $0x1f4] sm:$0xf]
  %v147 = vld [vmem:[%s0 + $0x1f8] sm:$0xf]
  %v148 = vld [vmem:[%s0 + $0x1fc] sm:$0xf]
  %v149 = vld [vmem:[%s0 + $0x200] sm:$0xf]
  %v150 = vld [vmem:[%s0 + $0x204] sm:$0xf]
  %v151 = vld [vmem:[%s0 + $0x208] sm:$0xf]
  %v152 = vld [vmem:[%s0 + $0x20c] sm:$0xf]
  %v153 = vld [vmem:[%s0 + $0x210] sm:$0xf]
  %v154 = vld [vmem:[%s0 + $0x214] sm:$0xf]
  %v155 = vld [vmem:[%s0 + $0x218] sm:$0xf]
  %v156 = vld [vmem:[%s0 + $0x21c] sm:$0xf]
  %v157 = vld [vmem:[%s0 + $0x220] sm:$0xf]
  %v158 = vld [vmem:[%s0 + $0x224] sm:$0xf]
  %v159 = vld [vmem:[%s0 + $0x228] sm:$0xf]
  %v160 = vld [vmem:[%s0 + $0x22c] sm:$0xf]
  %v161 = vld [vmem:[%s0 + $0x230] sm:$0xf]
  %v162 = vld [vmem:[%s0 + $0x234] sm:$0xf]
  %v163 = vld [vmem:[%s0 + $0x238] sm:$0xf]
  %v164 = vld [vmem:[%s0 + $0x23c] sm:$0xf]
  %v165 = vld [vmem:[%s0 + $0x240] sm:$0xf]
  %v166 = vld [vmem:[%s0 + $0x244] sm:$0xf]
  %v167 = vld [vmem:[%s0 + $0x248] sm:$0xf]
  %v168 = vld [vmem:[%s0 + $0x24c] sm:$0xf]
  %v169 = vld [vmem:[%s0 + $0x250] sm:$0xf]
  %v170 = vld [vmem:[%s0 + $0x254] sm:$0xf]
  %v171 = vld [vmem:[%s0 + $0x258] sm:$0xf]
  %v172 = vld [vmem:[%s0 + $0x25c] sm:$0xf]
  %v173 = vld [vmem:[%s0 + $0x260] sm:$0xf]
  %v174 = vld [vmem:[%s0 + $0x264] sm:$0xf]
  %v175 = vld [vmem:[%s0 + $0x268] sm:$0xf]
  %v176 = vld [vmem:[%s0 + $0x26c] sm:$0xf]
  %v177 = vld [vmem:[%s0 + $0x270] sm:$0xf]
  %v178 = vld [vmem:[%s0 + $0x274] sm:$0xf]
  %v179 = vld [vmem:[%s0 + $0x278] sm:$0xf]
  %v180 = vld [vmem:[%s0 + $0x27c] sm:$0xf]
  %v181 = vld [vmem:[%s0 + $0x280] sm:$0xf]
  %v182 = vld [vmem:[%s0 + $0x284] sm:$0xf]
  %v183 = vld [vmem:[%s0 + $0x288] sm:$0xf]
  %v184 = vld [vmem:[%s0 + $0x28c] sm:$0xf]
  %v185 = vld [vmem:[%s0 + $0x290] sm:$0xf]
  %v186 = vld [vmem:[%s0 + $0x294] sm:$0xf]
  %v187 = vld [vmem:[%s0 + $0x298] sm:$0xf]
  %v188 = vld [vmem:[%s0 + $0x29c] sm:$0xf]
  %v189 = vld [vmem:[%s0 + $0x2a0] sm:$0xf]
  %v190 = vld [vmem:[%s0 + $0x2a4] sm:$0xf]
  %v191 = vld [vmem:[%s0 + $0x2a8] sm:$0xf]
  %v192 = vld [vmem:[%s0 + $0x2ac] sm:$0xf]
  %v193 = vld [vmem:[%s0 + $0x2b0] sm:$0xf]
  %v194 = vld [vmem:[%s0 + $0x2b4] sm:$0xf]
  %v195 = vld [vmem:[%s0 + $0x2b8] sm:$0xf]
  %v196 = vld [vmem:[%s0 + $0x2bc] sm:$0xf]
  %v197 = vld [vmem:[%s0 + $0x2c0] sm:$0xf]
  %v198 = vld [vmem:[%s0 + $0x2c4] sm:$0xf]
  %v199 = vld [vmem:[%s0 + $0x2c8] sm:$0xf]
  %v200 = vld [vmem:[%s0 + $0x2cc] sm:$0xf]
  %v201 = vld [vmem:[%s0 + $0x2d0] sm:$0xf]
  %v202 = vld [vmem:[%s0 + $0x2d4] sm:$0xf]
  %v203 = vld [vmem:[%s0 + $0x2d8] sm:$0xf]
  %v204 = vld [vmem:[%s0 + $0x2dc] sm:$0xf]
  %v205 = vld [vmem:[%s0 + $0x2e0] sm:$0xf]
  %v206 = vld [vmem:[%s0 + $0x2e4] sm:$0xf]
  %v207 = vld [vmem:[%s0 + $0x2e8] sm:$0xf]
  %v208 = vld [vmem:[%s0 + $0x2ec] sm:$0xf]
  %v209 = vld [vmem:[%s0 + $0x2f0] sm:$0xf]
  %v210 = vld [vmem:[%s0 + $0x2f4] sm:$0xf]
  %v211 = vld [vmem:[%s0 + $0x2f8] sm:$0xf]
  %v212 = vld [vmem:[%s0 + $0x2fc] sm:$0xf]
  %v213 = vld [vmem:[%s0 + $0x300] sm:$0xf]
  %v214 = vld [vmem:[%s0 + $0x304] sm:$0xf]
  %v215 = vld [vmem:[%s0 + $0x308] sm:$0xf]
  %v216 = vld [vmem:[%s0 + $0x30c] sm:$0xf]
  %v217 = vld [vmem:[%s0 + $0x310] sm:$0xf]
  %v218 = vld [vmem:[%s0 + $0x314] sm:$0xf]
  %v219 = vld [vmem:[%s0 + $0x318] sm:$0xf]
  %v220 = vld [vmem:[%s0 + $0x31c] sm:$0xf]
  %v221 = vld [vmem:[%s0 + $0x320] sm:$0xf]
  %v222 = vld [vmem:[%s0 + $0x324] sm:$0xf]
  %v223 = vld [vmem:[%s0 + $0x328] sm:$0xf]
  %v224 = vld [vmem:[%s0 + $0x32c] sm:$0xf]
  %v225 = vld [vmem:[%s0 + $0x330] sm:$0xf]
  %v226 = vld [vmem:[%s0 + $0x334] sm:$0xf]
  %v227 = vld [vmem:[%s0 + $0x338] sm:$0xf]
  %v228 = vld [vmem:[%s0 + $0x33c] sm:$0xf]
  %v229 = vld [vmem:[%s0 + $0x340] sm:$0xf]
  %v230 = vld [vmem:[%s0 + $0x344] sm:$0xf]
  %v231 = vld [vmem:[%s0 + $0x348] sm:$0xf]
  %v232 = vld [vmem:[%s0 + $0x34c] sm:$0xf]
  %v233 = vld [vmem:[%s0 + $0x350] sm:$0xf]
  %v234 = vld [vmem:[%s0 + $0x354] sm:$0xf]
  %v235 = vld [vmem:[%s0 + $0x358] sm:$0xf]
  %v236 = vld [vmem:[%s0 + $0x35c] sm:$0xf]
  %v237 = vld [vmem:[%s0 + $0x360] sm:$0xf]
  %v238 = vld [vmem:[%s0 + $0x364] sm:$0xf]
  %v239 = vld [vmem:[%s0 + $0x368] sm:$0xf]
  %v240 = vld [vmem:[%s0 + $0x36c] sm:$0xf]
  %v241 = vld [vmem:[%s0 + $0x370] sm:$0xf]
  %v242 = vld [vmem:[%s0 + $0x374] sm:$0xf]
  %v243 = vld [vmem:[%s0 + $0x378] sm:$0xf]
  %v244 = vld [vmem:[%s0 + $0x37c] sm:$0xf]
  %v245 = vld [vmem:[%s0 + $0x380] sm:$0xf]
  %v246 = vld [vmem:[%s0 + $0x384] sm:$0xf]
  %v247 = vld [vmem:[%s0 + $0x388] sm:$0xf]
  %v248 = vld [vmem:[%s0 + $0x38c] sm:$0xf]
  %v249 = vld [vmem:[%s0 + $0x390] sm:$0xf]
  %v250 = vld [vmem:[%s0 + $0x394] sm:$0xf]
  %v251 = vld [vmem:[%s0 + $0x398] sm:$0xf]
  %v252 = vld [vmem:[%s0 + $0x39c] sm:$0xf]
  %v253 = vld [vmem:[%s0 + $0x3a0] sm:$0xf]
  %v254 = vld [vmem:[%s0 + $0x3a4] sm:$0xf]
  %v255 = vld [vmem:[%s0 + $0x3a8] sm:$0xf]
  %v256 = vld [vmem:[%s0 + $0x3ac] sm:$0xf]
  %v257 = vld [vmem:[%s0 + $0x3b0] sm:$0xf]
  %v258 = vld [vmem:[%s0 + $0x3b4] sm:$0xf]
  %v259 = vld [vmem:[%s0 + $0x3b8] sm:$0xf]
  %v260 = vld [vmem:[%s0 + $0x3bc] sm:$0xf]
  %v261 = vld [vmem:[%s0 + $0x3c0] sm:$0xf]
  %v262 = vld [vmem:[%s0 + $0x3c4] sm:$0xf]
  %v263 = vld [vmem:[%s0 + $0x3c8] sm:$0xf]
  %v264 = vld [vmem:[%s0 + $0x3cc] sm:$0xf]
  %v265 = vld [vmem:[%s0 + $0x3d0] sm:$0xf]
  %v266 = vld [vmem:[%s0 + $0x3d4] sm:$0xf]
  %v267 = vld [vmem:[%s0 + $0x3d8] sm:$0xf]
  %v268 = vld [vmem:[%s0 + $0x3dc] sm:$0xf]
  %v269 = vld [vmem:[%s0 + $0x3e0] sm:$0xf]
  %v270 = vld [vmem:[%s0 + $0x3e4] sm:$0xf]
  %v271 = vld [vmem:[%s0 + $0x3e8] sm:$0xf]
  %v272 = vld [vmem:[%s0 + $0x3ec] sm:$0xf]
  %v273 = vld [vmem:[%s0 + $0x3f0] sm:$0xf]
  %v274 = vld [vmem:[%s0 + $0x3f4] sm:$0xf]
  %v275 = vld [vmem:[%s0 + $0x3f8] sm:$0xf]
  %v276 = vld [vmem:[%s0 + $0x3fc] sm:$0xf]
  %v277 = vld [vmem:[%s1] sm:$0xf]
  %v278 = vld [vmem:[%s1 + $0x4] sm:$0xf]
  %v279 = vld [vmem:[%s1 + $0x8] sm:$0xf]
  %v280 = vld [vmem:[%s1 + $0xc] sm:$0xf]
  %v537 = vunpack.c.l.b16 %v21
  %v538 = vunpack.c.l.b16 %v22
  %v539 = vunpack.c.l.b16 %v23
  %v540 = vunpack.c.l.b16 %v24
  %v541 = vunpack.c.l.b16 %v25
  %v542 = vunpack.c.l.b16 %v26
  %v543 = vunpack.c.l.b16 %v27
  %v544 = vunpack.c.l.b16 %v28
  %v545 = vunpack.c.l.b16 %v29
  %v546 = vunpack.c.l.b16 %v30
  %v547 = vunpack.c.l.b16 %v31
  %v548 = vunpack.c.l.b16 %v32
  %v549 = vunpack.c.l.b16 %v33
  %v550 = vunpack.c.l.b16 %v34
  %v551 = vunpack.c.l.b16 %v35
  %v552 = vunpack.c.l.b16 %v36
  %v553 = vunpack.c.l.b16 %v37
  %v554 = vunpack.c.l.b16 %v38
  %v555 = vunpack.c.l.b16 %v39
  %v556 = vunpack.c.l.b16 %v40
  %v557 = vunpack.c.l.b16 %v41
  %v558 = vunpack.c.l.b16 %v42
  %v559 = vunpack.c.l.b16 %v43
  %v560 = vunpack.c.l.b16 %v44
  %v561 = vunpack.c.l.b16 %v45
  %v562 = vunpack.c.l.b16 %v46
  %v563 = vunpack.c.l.b16 %v47
  %v564 = vunpack.c.l.b16 %v48
  %v565 = vunpack.c.l.b16 %v49
  %v566 = vunpack.c.l.b16 %v50
  %v567 = vunpack.c.l.b16 %v51
  %v568 = vunpack.c.l.b16 %v52
  %v569 = vunpack.c.l.b16 %v53
  %v570 = vunpack.c.l.b16 %v54
  %v571 = vunpack.c.l.b16 %v55
  %v572 = vunpack.c.l.b16 %v56
  %v573 = vunpack.c.l.b16 %v57
  %v574 = vunpack.c.l.b16 %v58
  %v575 = vunpack.c.l.b16 %v59
  %v576 = vunpack.c.l.b16 %v60
  %v577 = vunpack.c.l.b16 %v61
  %v578 = vunpack.c.l.b16 %v62
  %v579 = vunpack.c.l.b16 %v63
  %v580 = vunpack.c.l.b16 %v64
  %v581 = vunpack.c.l.b16 %v65
  %v582 = vunpack.c.l.b16 %v66
  %v583 = vunpack.c.l.b16 %v67
  %v584 = vunpack.c.l.b16 %v68
  %v585 = vunpack.c.l.b16 %v69
  %v586 = vunpack.c.l.b16 %v70
  %v587 = vunpack.c.l.b16 %v71
  %v588 = vunpack.c.l.b16 %v72
  %v589 = vunpack.c.l.b16 %v73
  %v590 = vunpack.c.l.b16 %v74
  %v591 = vunpack.c.l.b16 %v75
  %v592 = vunpack.c.l.b16 %v76
  %v593 = vunpack.c.l.b16 %v77
  %v594 = vunpack.c.l.b16 %v78
  %v595 = vunpack.c.l.b16 %v79
  %v596 = vunpack.c.l.b16 %v80
  %v597 = vunpack.c.l.b16 %v81
  %v598 = vunpack.c.l.b16 %v82
  %v599 = vunpack.c.l.b16 %v83
  %v600 = vunpack.c.l.b16 %v84
  %v601 = vunpack.c.l.b16 %v85
  %v602 = vunpack.c.l.b16 %v86
  %v603 = vunpack.c.l.b16 %v87
  %v604 = vunpack.c.l.b16 %v88
  %v605 = vunpack.c.l.b16 %v89
  %v606 = vunpack.c.l.b16 %v90
  %v607 = vunpack.c.l.b16 %v91
  %v608 = vunpack.c.l.b16 %v92
  %v609 = vunpack.c.l.b16 %v93
  %v610 = vunpack.c.l.b16 %v94
  %v611 = vunpack.c.l.b16 %v95
  %v612 = vunpack.c.l.b16 %v96
  %v613 = vunpack.c.l.b16 %v97
  %v614 = vunpack.c.l.b16 %v98
  %v615 = vunpack.c.l.b16 %v99
  %v616 = vunpack.c.l.b16 %v100
  %v617 = vunpack.c.l.b16 %v101
  %v618 = vunpack.c.l.b16 %v102
  %v619 = vunpack.c.l.b16 %v103
  %v620 = vunpack.c.l.b16 %v104
  %v621 = vunpack.c.l.b16 %v105
  %v622 = vunpack.c.l.b16 %v106
  %v623 = vunpack.c.l.b16 %v107
  %v624 = vunpack.c.l.b16 %v108
  %v625 = vunpack.c.l.b16 %v109
  %v626 = vunpack.c.l.b16 %v110
  %v627 = vunpack.c.l.b16 %v111
  %v628 = vunpack.c.l.b16 %v112
  %v629 = vunpack.c.l.b16 %v113
  %v630 = vunpack.c.l.b16 %v114
  %v631 = vunpack.c.l.b16 %v115
  %v632 = vunpack.c.l.b16 %v116
  %v633 = vunpack.c.l.b16 %v117
  %v634 = vunpack.c.l.b16 %v118
  %v635 = vunpack.c.l.b16 %v119
  %v636 = vunpack.c.l.b16 %v120
  %v637 = vunpack.c.l.b16 %v121
  %v638 = vunpack.c.l.b16 %v122
  %v639 = vunpack.c.l.b16 %v123
  %v640 = vunpack.c.l.b16 %v124
  %v641 = vunpack.c.l.b16 %v125
  %v642 = vunpack.c.l.b16 %v126
  %v643 = vunpack.c.l.b16 %v127
  %v644 = vunpack.c.l.b16 %v128
  %v645 = vunpack.c.l.b16 %v129
  %v646 = vunpack.c.l.b16 %v130
  %v647 = vunpack.c.l.b16 %v131
  %v648 = vunpack.c.l.b16 %v132
  %v649 = vunpack.c.l.b16 %v133
  %v650 = vunpack.c.l.b16 %v134
  %v651 = vunpack.c.l.b16 %v135
  %v652 = vunpack.c.l.b16 %v136
  %v653 = vunpack.c.l.b16 %v137
  %v654 = vunpack.c.l.b16 %v138
  %v655 = vunpack.c.l.b16 %v139
  %v656 = vunpack.c.l.b16 %v140
  %v657 = vunpack.c.l.b16 %v141
  %v658 = vunpack.c.l.b16 %v142
  %v659 = vunpack.c.l.b16 %v143
  %v660 = vunpack.c.l.b16 %v144
  %v661 = vunpack.c.l.b16 %v145
  %v662 = vunpack.c.l.b16 %v146
  %v663 = vunpack.c.l.b16 %v147
  %v664 = vunpack.c.l.b16 %v148
  %v665 = vunpack.c.l.b16 %v149
  %v666 = vunpack.c.l.b16 %v150
  %v667 = vunpack.c.l.b16 %v151
  %v668 = vunpack.c.l.b16 %v152
  %v669 = vunpack.c.l.b16 %v153
  %v670 = vunpack.c.l.b16 %v154
  %v671 = vunpack.c.l.b16 %v155
  %v672 = vunpack.c.l.b16 %v156
  %v673 = vunpack.c.l.b16 %v157
  %v674 = vunpack.c.l.b16 %v158
  %v675 = vunpack.c.l.b16 %v159
  %v676 = vunpack.c.l.b16 %v160
  %v677 = vunpack.c.l.b16 %v161
  %v678 = vunpack.c.l.b16 %v162
  %v679 = vunpack.c.l.b16 %v163
  %v680 = vunpack.c.l.b16 %v164
  %v681 = vunpack.c.l.b16 %v165
  %v682 = vunpack.c.l.b16 %v166
  %v683 = vunpack.c.l.b16 %v167
  %v684 = vunpack.c.l.b16 %v168
  %v685 = vunpack.c.l.b16 %v169
  %v686 = vunpack.c.l.b16 %v170
  %v687 = vunpack.c.l.b16 %v171
  %v688 = vunpack.c.l.b16 %v172
  %v689 = vunpack.c.l.b16 %v173
  %v690 = vunpack.c.l.b16 %v174
  %v691 = vunpack.c.l.b16 %v175
  %v692 = vunpack.c.l.b16 %v176
  %v693 = vunpack.c.l.b16 %v177
  %v694 = vunpack.c.l.b16 %v178
  %v695 = vunpack.c.l.b16 %v179
  %v696 = vunpack.c.l.b16 %v180
  %v697 = vunpack.c.l.b16 %v181
  %v698 = vunpack.c.l.b16 %v182
  %v699 = vunpack.c.l.b16 %v183
  %v700 = vunpack.c.l.b16 %v184
  %v701 = vunpack.c.l.b16 %v185
  %v702 = vunpack.c.l.b16 %v186
  %v703 = vunpack.c.l.b16 %v187
  %v704 = vunpack.c.l.b16 %v188
  %v705 = vunpack.c.l.b16 %v189
  %v706 = vunpack.c.l.b16 %v190
  %v707 = vunpack.c.l.b16 %v191
  %v708 = vunpack.c.l.b16 %v192
  %v709 = vunpack.c.l.b16 %v193
  %v710 = vunpack.c.l.b16 %v194
  %v711 = vunpack.c.l.b16 %v195
  %v712 = vunpack.c.l.b16 %v196
  %v713 = vunpack.c.l.b16 %v197
  %v714 = vunpack.c.l.b16 %v198
  %v715 = vunpack.c.l.b16 %v199
  %v716 = vunpack.c.l.b16 %v200
  %v717 = vunpack.c.l.b16 %v201
  %v718 = vunpack.c.l.b16 %v202
  %v719 = vunpack.c.l.b16 %v203
  %v720 = vunpack.c.l.b16 %v204
  %v721 = vunpack.c.l.b16 %v205
  %v722 = vunpack.c.l.b16 %v206
  %v723 = vunpack.c.l.b16 %v207
  %v724 = vunpack.c.l.b16 %v208
  %v725 = vunpack.c.l.b16 %v209
  %v726 = vunpack.c.l.b16 %v210
  %v727 = vunpack.c.l.b16 %v211
  %v728 = vunpack.c.l.b16 %v212
  %v729 = vunpack.c.l.b16 %v213
  %v730 = vunpack.c.l.b16 %v214
  %v731 = vunpack.c.l.b16 %v215
  %v732 = vunpack.c.l.b16 %v216
  %v733 = vunpack.c.l.b16 %v217
  %v734 = vunpack.c.l.b16 %v218
  %v735 = vunpack.c.l.b16 %v219
  %v736 = vunpack.c.l.b16 %v220
  %v737 = vunpack.c.l.b16 %v221
  %v738 = vunpack.c.l.b16 %v222
  %v739 = vunpack.c.l.b16 %v223
  %v740 = vunpack.c.l.b16 %v224
  %v741 = vunpack.c.l.b16 %v225
  %v742 = vunpack.c.l.b16 %v226
  %v743 = vunpack.c.l.b16 %v227
  %v744 = vunpack.c.l.b16 %v228
  %v745 = vunpack.c.l.b16 %v229
  %v746 = vunpack.c.l.b16 %v230
  %v747 = vunpack.c.l.b16 %v231
  %v748 = vunpack.c.l.b16 %v232
  %v749 = vunpack.c.l.b16 %v233
  %v750 = vunpack.c.l.b16 %v234
  %v751 = vunpack.c.l.b16 %v235
  %v752 = vunpack.c.l.b16 %v236
  %v753 = vunpack.c.l.b16 %v237
  %v754 = vunpack.c.l.b16 %v238
  %v755 = vunpack.c.l.b16 %v239
  %v756 = vunpack.c.l.b16 %v240
  %v757 = vunpack.c.l.b16 %v241
  %v758 = vunpack.c.l.b16 %v242
  %v759 = vunpack.c.l.b16 %v243
  %v760 = vunpack.c.l.b16 %v244
  %v761 = vunpack.c.l.b16 %v245
  %v762 = vunpack.c.l.b16 %v246
  %v763 = vunpack.c.l.b16 %v247
  %v764 = vunpack.c.l.b16 %v248
  %v765 = vunpack.c.l.b16 %v249
  %v766 = vunpack.c.l.b16 %v250
  %v767 = vunpack.c.l.b16 %v251
  %v768 = vunpack.c.l.b16 %v252
  %v769 = vunpack.c.l.b16 %v253
  %v770 = vunpack.c.l.b16 %v254
  %v771 = vunpack.c.l.b16 %v255
  %v772 = vunpack.c.l.b16 %v256
  %v773 = vunpack.c.l.b16 %v257
  %v774 = vunpack.c.l.b16 %v258
  %v775 = vunpack.c.l.b16 %v259
  %v776 = vunpack.c.l.b16 %v260
  %v777 = vunpack.c.l.b16 %v261
  %v778 = vunpack.c.l.b16 %v262
  %v779 = vunpack.c.l.b16 %v263
  %v780 = vunpack.c.l.b16 %v264
  %v781 = vunpack.c.l.b16 %v265
  %v782 = vunpack.c.l.b16 %v266
  %v783 = vunpack.c.l.b16 %v267
  %v784 = vunpack.c.l.b16 %v268
  %v785 = vunpack.c.l.b16 %v269
  %v786 = vunpack.c.l.b16 %v270
  %v787 = vunpack.c.l.b16 %v271
  %v788 = vunpack.c.l.b16 %v272
  %v789 = vunpack.c.l.b16 %v273
  %v790 = vunpack.c.l.b16 %v274
  %v791 = vunpack.c.l.b16 %v275
  %v792 = vunpack.c.l.b16 %v276
  %v793 = vpack.c.b16 %v538, %v537
  %v794 = vpack.c.b16 %v540, %v539
  %v795 = vpack.c.b16 %v542, %v541
  %v796 = vpack.c.b16 %v544, %v543
  %v797 = vpack.c.b16 %v546, %v545
  %v798 = vpack.c.b16 %v548, %v547
  %v799 = vpack.c.b16 %v550, %v549
  %v800 = vpack.c.b16 %v552, %v551
  %v801 = vpack.c.b16 %v554, %v553
  %v802 = vpack.c.b16 %v556, %v555
  %v803 = vpack.c.b16 %v558, %v557
  %v804 = vpack.c.b16 %v560, %v559
  %v805 = vpack.c.b16 %v562, %v561
  %v806 = vpack.c.b16 %v564, %v563
  %v807 = vpack.c.b16 %v566, %v565
  %v808 = vpack.c.b16 %v568, %v567
  %v809 = vpack.c.b16 %v570, %v569
  %v810 = vpack.c.b16 %v572, %v571
  %v811 = vpack.c.b16 %v574, %v573
  %v812 = vpack.c.b16 %v576, %v575
  %v813 = vpack.c.b16 %v578, %v577
  %v814 = vpack.c.b16 %v580, %v579
  %v815 = vpack.c.b16 %v582, %v581
  %v816 = vpack.c.b16 %v584, %v583
  %v817 = vpack.c.b16 %v586, %v585
  %v818 = vpack.c.b16 %v588, %v587
  %v819 = vpack.c.b16 %v590, %v589
  %v820 = vpack.c.b16 %v592, %v591
  %v821 = vpack.c.b16 %v594, %v593
  %v822 = vpack.c.b16 %v596, %v595
  %v823 = vpack.c.b16 %v598, %v597
  %v824 = vpack.c.b16 %v600, %v599
  %v825 = vpack.c.b16 %v602, %v601
  %v826 = vpack.c.b16 %v604, %v603
  %v827 = vpack.c.b16 %v606, %v605
  %v828 = vpack.c.b16 %v608, %v607
  %v829 = vpack.c.b16 %v610, %v609
  %v830 = vpack.c.b16 %v612, %v611
  %v831 = vpack.c.b16 %v614, %v613
  %v832 = vpack.c.b16 %v616, %v615
  %v833 = vpack.c.b16 %v618, %v617
  %v834 = vpack.c.b16 %v620, %v619
  %v835 = vpack.c.b16 %v622, %v621
  %v836 = vpack.c.b16 %v624, %v623
  %v837 = vpack.c.b16 %v626, %v625
  %v838 = vpack.c.b16 %v628, %v627
  %v839 = vpack.c.b16 %v630, %v629
  %v840 = vpack.c.b16 %v632, %v631
  %v841 = vpack.c.b16 %v634, %v633
  %v842 = vpack.c.b16 %v636, %v635
  %v843 = vpack.c.b16 %v638, %v637
  %v844 = vpack.c.b16 %v640, %v639
  %v845 = vpack.c.b16 %v642, %v641
  %v846 = vpack.c.b16 %v644, %v643
  %v847 = vpack.c.b16 %v646, %v645
  %v848 = vpack.c.b16 %v648, %v647
  %v849 = vpack.c.b16 %v650, %v649
  %v850 = vpack.c.b16 %v652, %v651
  %v851 = vpack.c.b16 %v654, %v653
  %v852 = vpack.c.b16 %v656, %v655
  %v853 = vpack.c.b16 %v658, %v657
  %v854 = vpack.c.b16 %v660, %v659
  %v855 = vpack.c.b16 %v662, %v661
  %v856 = vpack.c.b16 %v664, %v663
  %v857 = vpack.c.b16 %v666, %v665
  %v858 = vpack.c.b16 %v668, %v667
  %v859 = vpack.c.b16 %v670, %v669
  %v860 = vpack.c.b16 %v672, %v671
  %v861 = vpack.c.b16 %v674, %v673
  %v862 = vpack.c.b16 %v676, %v675
  %v863 = vpack.c.b16 %v678, %v677
  %v864 = vpack.c.b16 %v680, %v679
  %v865 = vpack.c.b16 %v682, %v681
  %v866 = vpack.c.b16 %v684, %v683
  %v867 = vpack.c.b16 %v686, %v685
  %v868 = vpack.c.b16 %v688, %v687
  %v869 = vpack.c.b16 %v690, %v689
  %v870 = vpack.c.b16 %v692, %v691
  %v871 = vpack.c.b16 %v694, %v693
  %v872 = vpack.c.b16 %v696, %v695
  %v873 = vpack.c.b16 %v698, %v697
  %v874 = vpack.c.b16 %v700, %v699
  %v875 = vpack.c.b16 %v702, %v701
  %v876 = vpack.c.b16 %v704, %v703
  %v877 = vpack.c.b16 %v706, %v705
  %v878 = vpack.c.b16 %v708, %v707
  %v879 = vpack.c.b16 %v710, %v709
  %v880 = vpack.c.b16 %v712, %v711
  %v881 = vpack.c.b16 %v714, %v713
  %v882 = vpack.c.b16 %v716, %v715
  %v883 = vpack.c.b16 %v718, %v717
  %v884 = vpack.c.b16 %v720, %v719
  %v885 = vpack.c.b16 %v722, %v721
  %v886 = vpack.c.b16 %v724, %v723
  %v887 = vpack.c.b16 %v726, %v725
  %v888 = vpack.c.b16 %v728, %v727
  %v889 = vpack.c.b16 %v730, %v729
  %v890 = vpack.c.b16 %v732, %v731
  %v891 = vpack.c.b16 %v734, %v733
  %v892 = vpack.c.b16 %v736, %v735
  %v893 = vpack.c.b16 %v738, %v737
  %v894 = vpack.c.b16 %v740, %v739
  %v895 = vpack.c.b16 %v742, %v741
  %v896 = vpack.c.b16 %v744, %v743
  %v897 = vpack.c.b16 %v746, %v745
  %v898 = vpack.c.b16 %v748, %v747
  %v899 = vpack.c.b16 %v750, %v749
  %v900 = vpack.c.b16 %v752, %v751
  %v901 = vpack.c.b16 %v754, %v753
  %v902 = vpack.c.b16 %v756, %v755
  %v903 = vpack.c.b16 %v758, %v757
  %v904 = vpack.c.b16 %v760, %v759
  %v905 = vpack.c.b16 %v762, %v761
  %v906 = vpack.c.b16 %v764, %v763
  %v907 = vpack.c.b16 %v766, %v765
  %v908 = vpack.c.b16 %v768, %v767
  %v909 = vpack.c.b16 %v770, %v769
  %v910 = vpack.c.b16 %v772, %v771
  %v911 = vpack.c.b16 %v774, %v773
  %v912 = vpack.c.b16 %v776, %v775
  %v913 = vpack.c.b16 %v778, %v777
  %v914 = vpack.c.b16 %v780, %v779
  %v915 = vpack.c.b16 %v782, %v781
  %v916 = vpack.c.b16 %v784, %v783
  %v917 = vpack.c.b16 %v786, %v785
  %v918 = vpack.c.b16 %v788, %v787
  %v919 = vpack.c.b16 %v790, %v789
  %v920 = vpack.c.b16 %v792, %v791
  %v925 = vunpack.c.l.b16 %v277
  %v926 = vunpack.c.l.b16 %v278
  %v927 = vunpack.c.l.b16 %v279
  %v928 = vunpack.c.l.b16 %v280
  %v929 = vpack.c.b16 %v926, %v925
  %v930 = vpack.c.b16 %v928, %v927
  %vm933 = vcmask 261120
  %v935 = vsel %vm933, %v793, 0
  %v938 = vsel %vm933, %v794, 0
  %v941 = vsel %vm933, %v795, 0
  %v944 = vsel %vm933, %v796, 0
  %v947 = vsel %vm933, %v797, 0
  %v950 = vsel %vm933, %v798, 0
  %v953 = vsel %vm933, %v799, 0
  %v956 = vsel %vm933, %v800, 0
  %v959 = vsel %vm933, %v801, 0
  %v962 = vsel %vm933, %v802, 0
  %v965 = vsel %vm933, %v803, 0
  %v968 = vsel %vm933, %v804, 0
  %v971 = vsel %vm933, %v805, 0
  %v974 = vsel %vm933, %v806, 0
  %v977 = vsel %vm933, %v807, 0
  %v980 = vsel %vm933, %v808, 0
  %v983 = vsel %vm933, %v809, 0
  %v986 = vsel %vm933, %v810, 0
  %v989 = vsel %vm933, %v811, 0
  %v992 = vsel %vm933, %v812, 0
  %v995 = vsel %vm933, %v813, 0
  %v998 = vsel %vm933, %v814, 0
  %v1001 = vsel %vm933, %v815, 0
  %v1004 = vsel %vm933, %v816, 0
  %v1007 = vsel %vm933, %v817, 0
  %v1010 = vsel %vm933, %v818, 0
  %v1013 = vsel %vm933, %v819, 0
  %v1016 = vsel %vm933, %v820, 0
  %v1019 = vsel %vm933, %v821, 0
  %v1022 = vsel %vm933, %v822, 0
  %v1025 = vsel %vm933, %v823, 0
  %v1028 = vsel %vm933, %v824, 0
  %v1031 = vsel %vm933, %v825, 0
  %v1034 = vsel %vm933, %v826, 0
  %v1037 = vsel %vm933, %v827, 0
  %v1040 = vsel %vm933, %v828, 0
  %v1043 = vsel %vm933, %v829, 0
  %v1046 = vsel %vm933, %v830, 0
  %v1049 = vsel %vm933, %v831, 0
  %v1052 = vsel %vm933, %v832, 0
  %v1055 = vsel %vm933, %v833, 0
  %v1058 = vsel %vm933, %v834, 0
  %v1061 = vsel %vm933, %v835, 0
  %v1064 = vsel %vm933, %v836, 0
  %v1067 = vsel %vm933, %v837, 0
  %v1070 = vsel %vm933, %v838, 0
  %v1073 = vsel %vm933, %v839, 0
  %v1076 = vsel %vm933, %v840, 0
  %v1079 = vsel %vm933, %v841, 0
  %v1082 = vsel %vm933, %v842, 0
  %v1085 = vsel %vm933, %v843, 0
  %v1088 = vsel %vm933, %v844, 0
  %v1091 = vsel %vm933, %v845, 0
  %v1094 = vsel %vm933, %v846, 0
  %v1097 = vsel %vm933, %v847, 0
  %v1100 = vsel %vm933, %v848, 0
  %v1103 = vsel %vm933, %v849, 0
  %v1106 = vsel %vm933, %v850, 0
  %v1109 = vsel %vm933, %v851, 0
  %v1112 = vsel %vm933, %v852, 0
  %v1115 = vsel %vm933, %v853, 0
  %v1118 = vsel %vm933, %v854, 0
  %v1121 = vsel %vm933, %v855, 0
  %v1124 = vsel %vm933, %v856, 0
  %v1127 = vsel %vm933, %v857, 0
  %v1130 = vsel %vm933, %v858, 0
  %v1133 = vsel %vm933, %v859, 0
  %v1136 = vsel %vm933, %v860, 0
  %v1139 = vsel %vm933, %v861, 0
  %v1142 = vsel %vm933, %v862, 0
  %v1145 = vsel %vm933, %v863, 0
  %v1148 = vsel %vm933, %v864, 0
  %v1151 = vsel %vm933, %v865, 0
  %v1154 = vsel %vm933, %v866, 0
  %v1157 = vsel %vm933, %v867, 0
  %v1160 = vsel %vm933, %v868, 0
  %v1163 = vsel %vm933, %v869, 0
  %v1166 = vsel %vm933, %v870, 0
  %v1169 = vsel %vm933, %v871, 0
  %v1172 = vsel %vm933, %v872, 0
  %v1175 = vsel %vm933, %v873, 0
  %v1178 = vsel %vm933, %v874, 0
  %v1181 = vsel %vm933, %v875, 0
  %v1184 = vsel %vm933, %v876, 0
  %v1187 = vsel %vm933, %v877, 0
  %v1190 = vsel %vm933, %v878, 0
  %v1193 = vsel %vm933, %v879, 0
  %v1196 = vsel %vm933, %v880, 0
  %v1199 = vsel %vm933, %v881, 0
  %v1202 = vsel %vm933, %v882, 0
  %v1205 = vsel %vm933, %v883, 0
  %v1208 = vsel %vm933, %v884, 0
  %v1211 = vsel %vm933, %v885, 0
  %v1214 = vsel %vm933, %v886, 0
  %v1217 = vsel %vm933, %v887, 0
  %v1220 = vsel %vm933, %v888, 0
  %v1223 = vsel %vm933, %v889, 0
  %v1226 = vsel %vm933, %v890, 0
  %v1229 = vsel %vm933, %v891, 0
  %v1232 = vsel %vm933, %v892, 0
  %v1235 = vsel %vm933, %v893, 0
  %v1238 = vsel %vm933, %v894, 0
  %v1241 = vsel %vm933, %v895, 0
  %v1244 = vsel %vm933, %v896, 0
  %v1247 = vsel %vm933, %v897, 0
  %v1250 = vsel %vm933, %v898, 0
  %v1253 = vsel %vm933, %v899, 0
  %v1256 = vsel %vm933, %v900, 0
  %v1259 = vsel %vm933, %v901, 0
  %v1262 = vsel %vm933, %v902, 0
  %v1265 = vsel %vm933, %v903, 0
  %v1268 = vsel %vm933, %v904, 0
  %v1271 = vsel %vm933, %v905, 0
  %v1274 = vsel %vm933, %v906, 0
  %v1277 = vsel %vm933, %v907, 0
  %v1280 = vsel %vm933, %v908, 0
  %v1283 = vsel %vm933, %v909, 0
  %v1286 = vsel %vm933, %v910, 0
  %v1289 = vsel %vm933, %v911, 0
  %v1292 = vsel %vm933, %v912, 0
  %v1295 = vsel %vm933, %v913, 0
  %v1298 = vsel %vm933, %v914, 0
  %v1301 = vsel %vm933, %v915, 0
  %v1304 = vsel %vm933, %v916, 0
  %v1307 = vsel %vm933, %v917, 0
  %v1310 = vsel %vm933, %v918, 0
  %v1313 = vsel %vm933, %v919, 0
  %v1316 = vsel %vm933, %v920, 0
  %1318 = vmatprep.subr.bf16.mxu0 0
  %1319 = vmatpush1.bf16.msra.mxu0 0
  %1320 = vmatprep.subr.bf16.mxu0 0
  %1321 = vmatpush1.bf16.msra.mxu0 0
  %1322 = vmatprep.subr.bf16.mxu0 0
  %1323 = vmatpush1.bf16.msra.mxu0 0
  %1324 = vmatprep.subr.bf16.mxu0 0
  %1325 = vmatpush1.bf16.msra.mxu0 0
  %1326 = vmatprep.subr.bf16.mxu0 0
  %1327 = vmatpush1.bf16.msra.mxu0 0
  %1328 = vmatprep.subr.bf16.mxu0 0
  %1329 = vmatpush1.bf16.msra.mxu0 0
  %1330 = vmatprep.subr.bf16.mxu0 0
  %1331 = vmatpush1.bf16.msra.mxu0 %v930
  %1332 = vmatprep.subr.bf16.mxu0 0
  %1333 = vmatpush1.bf16.msra.mxu0 %v929
  %1334 = vmatprep.subr.bf16.mxu0 0
  %1335 = vmatpush2.bf16.msra.mxu0 0
  %1336 = vmatprep.subr.bf16.mxu0 0
  %1337 = vmatpush2.bf16.msra.mxu0 0
  %1338 = vmatprep.subr.bf16.mxu0 0
  %1339 = vmatpush2.bf16.msra.mxu0 0
  %1340 = vmatprep.subr.bf16.mxu0 0
  %1341 = vmatpush2.bf16.msra.mxu0 0
  %1342 = vmatprep.subr.bf16.mxu0 0
  %1343 = vmatpush2.bf16.msra.mxu0 0
  %1344 = vmatprep.subr.bf16.mxu0 0
  %1345 = vmatpush2.bf16.msra.mxu0 0
  %1346 = vmatprep.subr.bf16.mxu0 0
  %1347 = vmatpush2.bf16.msra.mxu0 0
  %1348 = vmatprep.subr.bf16.mxu0 0
  %1349 = vmatpush2.bf16.msra.mxu0 0
  %1350 = vmatprep.mubr.bf16.mxu0 0
  %1351 = vmatmul.mubr.bf16.gmra.mxu0 %v935
  %v1352 = vpop.f32.mrf.mxu0
  %v1353 = vadd.f32 0.0, %v1352
  %v1354 = vpop.f32.mrf.mxu0
  %v1355 = vpop.f32.mrf.mxu0
  %v1356 = vadd.f32 0.0, %v1355
  %v1357 = vpop.f32.mrf.mxu0
  %1358 = vmatprep.mubr.bf16.mxu0 0
  %1359 = vmatmul.mubr.bf16.gmra.mxu0 %v938
  %v1360 = vpop.f32.mrf.mxu0
  %v1361 = vadd.f32 0.0, %v1360
  %v1362 = vpop.f32.mrf.mxu0
  %v1363 = vpop.f32.mrf.mxu0
  %v1364 = vadd.f32 0.0, %v1363
  %v1365 = vpop.f32.mrf.mxu0
  %1366 = vmatprep.mubr.bf16.mxu0 0
  %1367 = vmatmul.mubr.bf16.gmra.mxu0 %v941
  %v1368 = vpop.f32.mrf.mxu0
  %v1369 = vadd.f32 0.0, %v1368
  %v1370 = vpop.f32.mrf.mxu0
  %v1371 = vpop.f32.mrf.mxu0
  %v1372 = vadd.f32 0.0, %v1371
  %v1373 = vpop.f32.mrf.mxu0
  %1374 = vmatprep.mubr.bf16.mxu0 0
  %1375 = vmatmul.mubr.bf16.gmra.mxu0 %v944
  %v1376 = vpop.f32.mrf.mxu0
  %v1377 = vadd.f32 0.0, %v1376
  %v1378 = vpop.f32.mrf.mxu0
  %v1379 = vpop.f32.mrf.mxu0
  %v1380 = vadd.f32 0.0, %v1379
  %v1381 = vpop.f32.mrf.mxu0
  %1382 = vmatprep.mubr.bf16.mxu0 0
  %1383 = vmatmul.mubr.bf16.gmra.mxu0 %v947
  %v1384 = vpop.f32.mrf.mxu0
  %v1385 = vadd.f32 0.0, %v1384
  %v1386 = vpop.f32.mrf.mxu0
  %v1387 = vpop.f32.mrf.mxu0
  %v1388 = vadd.f32 0.0, %v1387
  %v1389 = vpop.f32.mrf.mxu0
  %1390 = vmatprep.mubr.bf16.mxu0 0
  %1391 = vmatmul.mubr.bf16.gmra.mxu0 %v950
  %v1392 = vpop.f32.mrf.mxu0
  %v1393 = vadd.f32 0.0, %v1392
  %v1394 = vpop.f32.mrf.mxu0
  %v1395 = vpop.f32.mrf.mxu0
  %v1396 = vadd.f32 0.0, %v1395
  %v1397 = vpop.f32.mrf.mxu0
  %1398 = vmatprep.mubr.bf16.mxu0 0
  %1399 = vmatmul.mubr.bf16.gmra.mxu0 %v953
  %v1400 = vpop.f32.mrf.mxu0
  %v1401 = vadd.f32 0.0, %v1400
  %v1402 = vpop.f32.mrf.mxu0
  %v1403 = vpop.f32.mrf.mxu0
  %v1404 = vadd.f32 0.0, %v1403
  %v1405 = vpop.f32.mrf.mxu0
  %1406 = vmatprep.mubr.bf16.mxu0 0
  %1407 = vmatmul.mubr.bf16.gmra.mxu0 %v956
  %v1408 = vpop.f32.mrf.mxu0
  %v1409 = vadd.f32 0.0, %v1408
  %v1410 = vpop.f32.mrf.mxu0
  %v1411 = vpop.f32.mrf.mxu0
  %v1412 = vadd.f32 0.0, %v1411
  %v1413 = vpop.f32.mrf.mxu0
  %1414 = vmatprep.mubr.bf16.mxu0 0
  %1415 = vmatmul.mubr.bf16.gmra.mxu0 %v959
  %v1416 = vpop.f32.mrf.mxu0
  %v1417 = vadd.f32 0.0, %v1416
  %v1418 = vpop.f32.mrf.mxu0
  %v1419 = vpop.f32.mrf.mxu0
  %v1420 = vadd.f32 0.0, %v1419
  %v1421 = vpop.f32.mrf.mxu0
  %1422 = vmatprep.mubr.bf16.mxu0 0
  %1423 = vmatmul.mubr.bf16.gmra.mxu0 %v962
  %v1424 = vpop.f32.mrf.mxu0
  %v1425 = vadd.f32 0.0, %v1424
  %v1426 = vpop.f32.mrf.mxu0
  %v1427 = vpop.f32.mrf.mxu0
  %v1428 = vadd.f32 0.0, %v1427
  %v1429 = vpop.f32.mrf.mxu0
  %1430 = vmatprep.mubr.bf16.mxu0 0
  %1431 = vmatmul.mubr.bf16.gmra.mxu0 %v965
  %v1432 = vpop.f32.mrf.mxu0
  %v1433 = vadd.f32 0.0, %v1432
  %v1434 = vpop.f32.mrf.mxu0
  %v1435 = vpop.f32.mrf.mxu0
  %v1436 = vadd.f32 0.0, %v1435
  %v1437 = vpop.f32.mrf.mxu0
  %1438 = vmatprep.mubr.bf16.mxu0 0
  %1439 = vmatmul.mubr.bf16.gmra.mxu0 %v968
  %v1440 = vpop.f32.mrf.mxu0
  %v1441 = vadd.f32 0.0, %v1440
  %v1442 = vpop.f32.mrf.mxu0
  %v1443 = vpop.f32.mrf.mxu0
  %v1444 = vadd.f32 0.0, %v1443
  %v1445 = vpop.f32.mrf.mxu0
  %1446 = vmatprep.mubr.bf16.mxu0 0
  %1447 = vmatmul.mubr.bf16.gmra.mxu0 %v971
  %v1448 = vpop.f32.mrf.mxu0
  %v1449 = vadd.f32 0.0, %v1448
  %v1450 = vpop.f32.mrf.mxu0
  %v1451 = vpop.f32.mrf.mxu0
  %v1452 = vadd.f32 0.0, %v1451
  %v1453 = vpop.f32.mrf.mxu0
  %1454 = vmatprep.mubr.bf16.mxu0 0
  %1455 = vmatmul.mubr.bf16.gmra.mxu0 %v974
  %v1456 = vpop.f32.mrf.mxu0
  %v1457 = vadd.f32 0.0, %v1456
  %v1458 = vpop.f32.mrf.mxu0
  %v1459 = vpop.f32.mrf.mxu0
  %v1460 = vadd.f32 0.0, %v1459
  %v1461 = vpop.f32.mrf.mxu0
  %1462 = vmatprep.mubr.bf16.mxu0 0
  %1463 = vmatmul.mubr.bf16.gmra.mxu0 %v977
  %v1464 = vpop.f32.mrf.mxu0
  %v1465 = vadd.f32 0.0, %v1464
  %v1466 = vpop.f32.mrf.mxu0
  %v1467 = vpop.f32.mrf.mxu0
  %v1468 = vadd.f32 0.0, %v1467
  %v1469 = vpop.f32.mrf.mxu0
  %1470 = vmatprep.mubr.bf16.mxu0 0
  %1471 = vmatmul.mubr.bf16.gmra.mxu0 %v980
  %v1472 = vpop.f32.mrf.mxu0
  %v1473 = vadd.f32 0.0, %v1472
  %v1474 = vpop.f32.mrf.mxu0
  %v1475 = vpop.f32.mrf.mxu0
  %v1476 = vadd.f32 0.0, %v1475
  %v1477 = vpop.f32.mrf.mxu0
  %1478 = vmatprep.mubr.bf16.mxu0 0
  %1479 = vmatmul.mubr.bf16.gmra.mxu0 %v983
  %v1480 = vpop.f32.mrf.mxu0
  %v1481 = vadd.f32 0.0, %v1480
  %v1482 = vpop.f32.mrf.mxu0
  %v1483 = vpop.f32.mrf.mxu0
  %v1484 = vadd.f32 0.0, %v1483
  %v1485 = vpop.f32.mrf.mxu0
  %1486 = vmatprep.mubr.bf16.mxu0 0
  %1487 = vmatmul.mubr.bf16.gmra.mxu0 %v986
  %v1488 = vpop.f32.mrf.mxu0
  %v1489 = vadd.f32 0.0, %v1488
  %v1490 = vpop.f32.mrf.mxu0
  %v1491 = vpop.f32.mrf.mxu0
  %v1492 = vadd.f32 0.0, %v1491
  %v1493 = vpop.f32.mrf.mxu0
  %1494 = vmatprep.mubr.bf16.mxu0 0
  %1495 = vmatmul.mubr.bf16.gmra.mxu0 %v989
  %v1496 = vpop.f32.mrf.mxu0
  %v1497 = vadd.f32 0.0, %v1496
  %v1498 = vpop.f32.mrf.mxu0
  %v1499 = vpop.f32.mrf.mxu0
  %v1500 = vadd.f32 0.0, %v1499
  %v1501 = vpop.f32.mrf.mxu0
  %1502 = vmatprep.mubr.bf16.mxu0 0
  %1503 = vmatmul.mubr.bf16.gmra.mxu0 %v992
  %v1504 = vpop.f32.mrf.mxu0
  %v1505 = vadd.f32 0.0, %v1504
  %v1506 = vpop.f32.mrf.mxu0
  %v1507 = vpop.f32.mrf.mxu0
  %v1508 = vadd.f32 0.0, %v1507
  %v1509 = vpop.f32.mrf.mxu0
  %1510 = vmatprep.mubr.bf16.mxu0 0
  %1511 = vmatmul.mubr.bf16.gmra.mxu0 %v995
  %v1512 = vpop.f32.mrf.mxu0
  %v1513 = vadd.f32 0.0, %v1512
  %v1514 = vpop.f32.mrf.mxu0
  %v1515 = vpop.f32.mrf.mxu0
  %v1516 = vadd.f32 0.0, %v1515
  %v1517 = vpop.f32.mrf.mxu0
  %1518 = vmatprep.mubr.bf16.mxu0 0
  %1519 = vmatmul.mubr.bf16.gmra.mxu0 %v998
  %v1520 = vpop.f32.mrf.mxu0
  %v1521 = vadd.f32 0.0, %v1520
  %v1522 = vpop.f32.mrf.mxu0
  %v1523 = vpop.f32.mrf.mxu0
  %v1524 = vadd.f32 0.0, %v1523
  %v1525 = vpop.f32.mrf.mxu0
  %1526 = vmatprep.mubr.bf16.mxu0 0
  %1527 = vmatmul.mubr.bf16.gmra.mxu0 %v1001
  %v1528 = vpop.f32.mrf.mxu0
  %v1529 = vadd.f32 0.0, %v1528
  %v1530 = vpop.f32.mrf.mxu0
  %v1531 = vpop.f32.mrf.mxu0
  %v1532 = vadd.f32 0.0, %v1531
  %v1533 = vpop.f32.mrf.mxu0
  %1534 = vmatprep.mubr.bf16.mxu0 0
  %1535 = vmatmul.mubr.bf16.gmra.mxu0 %v1004
  %v1536 = vpop.f32.mrf.mxu0
  %v1537 = vadd.f32 0.0, %v1536
  %v1538 = vpop.f32.mrf.mxu0
  %v1539 = vpop.f32.mrf.mxu0
  %v1540 = vadd.f32 0.0, %v1539
  %v1541 = vpop.f32.mrf.mxu0
  %1542 = vmatprep.mubr.bf16.mxu0 0
  %1543 = vmatmul.mubr.bf16.gmra.mxu0 %v1007
  %v1544 = vpop.f32.mrf.mxu0
  %v1545 = vadd.f32 0.0, %v1544
  %v1546 = vpop.f32.mrf.mxu0
  %v1547 = vpop.f32.mrf.mxu0
  %v1548 = vadd.f32 0.0, %v1547
  %v1549 = vpop.f32.mrf.mxu0
  %1550 = vmatprep.mubr.bf16.mxu0 0
  %1551 = vmatmul.mubr.bf16.gmra.mxu0 %v1010
  %v1552 = vpop.f32.mrf.mxu0
  %v1553 = vadd.f32 0.0, %v1552
  %v1554 = vpop.f32.mrf.mxu0
  %v1555 = vpop.f32.mrf.mxu0
  %v1556 = vadd.f32 0.0, %v1555
  %v1557 = vpop.f32.mrf.mxu0
  %1558 = vmatprep.mubr.bf16.mxu0 0
  %1559 = vmatmul.mubr.bf16.gmra.mxu0 %v1013
  %v1560 = vpop.f32.mrf.mxu0
  %v1561 = vadd.f32 0.0, %v1560
  %v1562 = vpop.f32.mrf.mxu0
  %v1563 = vpop.f32.mrf.mxu0
  %v1564 = vadd.f32 0.0, %v1563
  %v1565 = vpop.f32.mrf.mxu0
  %1566 = vmatprep.mubr.bf16.mxu0 0
  %1567 = vmatmul.mubr.bf16.gmra.mxu0 %v1016
  %v1568 = vpop.f32.mrf.mxu0
  %v1569 = vadd.f32 0.0, %v1568
  %v1570 = vpop.f32.mrf.mxu0
  %v1571 = vpop.f32.mrf.mxu0
  %v1572 = vadd.f32 0.0, %v1571
  %v1573 = vpop.f32.mrf.mxu0
  %1574 = vmatprep.mubr.bf16.mxu0 0
  %1575 = vmatmul.mubr.bf16.gmra.mxu0 %v1019
  %v1576 = vpop.f32.mrf.mxu0
  %v1577 = vadd.f32 0.0, %v1576
  %v1578 = vpop.f32.mrf.mxu0
  %v1579 = vpop.f32.mrf.mxu0
  %v1580 = vadd.f32 0.0, %v1579
  %v1581 = vpop.f32.mrf.mxu0
  %1582 = vmatprep.mubr.bf16.mxu0 0
  %1583 = vmatmul.mubr.bf16.gmra.mxu0 %v1022
  %v1584 = vpop.f32.mrf.mxu0
  %v1585 = vadd.f32 0.0, %v1584
  %v1586 = vpop.f32.mrf.mxu0
  %v1587 = vpop.f32.mrf.mxu0
  %v1588 = vadd.f32 0.0, %v1587
  %v1589 = vpop.f32.mrf.mxu0
  %1590 = vmatprep.mubr.bf16.mxu0 0
  %1591 = vmatmul.mubr.bf16.gmra.mxu0 %v1025
  %v1592 = vpop.f32.mrf.mxu0
  %v1593 = vadd.f32 0.0, %v1592
  %v1594 = vpop.f32.mrf.mxu0
  %v1595 = vpop.f32.mrf.mxu0
  %v1596 = vadd.f32 0.0, %v1595
  %v1597 = vpop.f32.mrf.mxu0
  %1598 = vmatprep.mubr.bf16.mxu0 0
  %1599 = vmatmul.mubr.bf16.gmra.mxu0 %v1028
  %v1600 = vpop.f32.mrf.mxu0
  %v1601 = vadd.f32 0.0, %v1600
  %v1602 = vpop.f32.mrf.mxu0
  %v1603 = vpop.f32.mrf.mxu0
  %v1604 = vadd.f32 0.0, %v1603
  %v1605 = vpop.f32.mrf.mxu0
  %1606 = vmatprep.mubr.bf16.mxu0 0
  %1607 = vmatmul.mubr.bf16.gmra.mxu0 %v1031
  %v1608 = vpop.f32.mrf.mxu0
  %v1609 = vadd.f32 0.0, %v1608
  %v1610 = vpop.f32.mrf.mxu0
  %v1611 = vpop.f32.mrf.mxu0
  %v1612 = vadd.f32 0.0, %v1611
  %v1613 = vpop.f32.mrf.mxu0
  %1614 = vmatprep.mubr.bf16.mxu0 0
  %1615 = vmatmul.mubr.bf16.gmra.mxu0 %v1034
  %v1616 = vpop.f32.mrf.mxu0
  %v1617 = vadd.f32 0.0, %v1616
  %v1618 = vpop.f32.mrf.mxu0
  %v1619 = vpop.f32.mrf.mxu0
  %v1620 = vadd.f32 0.0, %v1619
  %v1621 = vpop.f32.mrf.mxu0
  %1622 = vmatprep.mubr.bf16.mxu0 0
  %1623 = vmatmul.mubr.bf16.gmra.mxu0 %v1037
  %v1624 = vpop.f32.mrf.mxu0
  %v1625 = vadd.f32 0.0, %v1624
  %v1626 = vpop.f32.mrf.mxu0
  %v1627 = vpop.f32.mrf.mxu0
  %v1628 = vadd.f32 0.0, %v1627
  %v1629 = vpop.f32.mrf.mxu0
  %1630 = vmatprep.mubr.bf16.mxu0 0
  %1631 = vmatmul.mubr.bf16.gmra.mxu0 %v1040
  %v1632 = vpop.f32.mrf.mxu0
  %v1633 = vadd.f32 0.0, %v1632
  %v1634 = vpop.f32.mrf.mxu0
  %v1635 = vpop.f32.mrf.mxu0
  %v1636 = vadd.f32 0.0, %v1635
  %v1637 = vpop.f32.mrf.mxu0
  %1638 = vmatprep.mubr.bf16.mxu0 0
  %1639 = vmatmul.mubr.bf16.gmra.mxu0 %v1043
  %v1640 = vpop.f32.mrf.mxu0
  %v1641 = vadd.f32 0.0, %v1640
  %v1642 = vpop.f32.mrf.mxu0
  %v1643 = vpop.f32.mrf.mxu0
  %v1644 = vadd.f32 0.0, %v1643
  %v1645 = vpop.f32.mrf.mxu0
  %1646 = vmatprep.mubr.bf16.mxu0 0
  %1647 = vmatmul.mubr.bf16.gmra.mxu0 %v1046
  %v1648 = vpop.f32.mrf.mxu0
  %v1649 = vadd.f32 0.0, %v1648
  %v1650 = vpop.f32.mrf.mxu0
  %v1651 = vpop.f32.mrf.mxu0
  %v1652 = vadd.f32 0.0, %v1651
  %v1653 = vpop.f32.mrf.mxu0
  %1654 = vmatprep.mubr.bf16.mxu0 0
  %1655 = vmatmul.mubr.bf16.gmra.mxu0 %v1049
  %v1656 = vpop.f32.mrf.mxu0
  %v1657 = vadd.f32 0.0, %v1656
  %v1658 = vpop.f32.mrf.mxu0
  %v1659 = vpop.f32.mrf.mxu0
  %v1660 = vadd.f32 0.0, %v1659
  %v1661 = vpop.f32.mrf.mxu0
  %1662 = vmatprep.mubr.bf16.mxu0 0
  %1663 = vmatmul.mubr.bf16.gmra.mxu0 %v1052
  %v1664 = vpop.f32.mrf.mxu0
  %v1665 = vadd.f32 0.0, %v1664
  %v1666 = vpop.f32.mrf.mxu0
  %v1667 = vpop.f32.mrf.mxu0
  %v1668 = vadd.f32 0.0, %v1667
  %v1669 = vpop.f32.mrf.mxu0
  %1670 = vmatprep.mubr.bf16.mxu0 0
  %1671 = vmatmul.mubr.bf16.gmra.mxu0 %v1055
  %v1672 = vpop.f32.mrf.mxu0
  %v1673 = vadd.f32 0.0, %v1672
  %v1674 = vpop.f32.mrf.mxu0
  %v1675 = vpop.f32.mrf.mxu0
  %v1676 = vadd.f32 0.0, %v1675
  %v1677 = vpop.f32.mrf.mxu0
  %1678 = vmatprep.mubr.bf16.mxu0 0
  %1679 = vmatmul.mubr.bf16.gmra.mxu0 %v1058
  %v1680 = vpop.f32.mrf.mxu0
  %v1681 = vadd.f32 0.0, %v1680
  %v1682 = vpop.f32.mrf.mxu0
  %v1683 = vpop.f32.mrf.mxu0
  %v1684 = vadd.f32 0.0, %v1683
  %v1685 = vpop.f32.mrf.mxu0
  %1686 = vmatprep.mubr.bf16.mxu0 0
  %1687 = vmatmul.mubr.bf16.gmra.mxu0 %v1061
  %v1688 = vpop.f32.mrf.mxu0
  %v1689 = vadd.f32 0.0, %v1688
  %v1690 = vpop.f32.mrf.mxu0
  %v1691 = vpop.f32.mrf.mxu0
  %v1692 = vadd.f32 0.0, %v1691
  %v1693 = vpop.f32.mrf.mxu0
  %1694 = vmatprep.mubr.bf16.mxu0 0
  %1695 = vmatmul.mubr.bf16.gmra.mxu0 %v1064
  %v1696 = vpop.f32.mrf.mxu0
  %v1697 = vadd.f32 0.0, %v1696
  %v1698 = vpop.f32.mrf.mxu0
  %v1699 = vpop.f32.mrf.mxu0
  %v1700 = vadd.f32 0.0, %v1699
  %v1701 = vpop.f32.mrf.mxu0
  %1702 = vmatprep.mubr.bf16.mxu0 0
  %1703 = vmatmul.mubr.bf16.gmra.mxu0 %v1067
  %v1704 = vpop.f32.mrf.mxu0
  %v1705 = vadd.f32 0.0, %v1704
  %v1706 = vpop.f32.mrf.mxu0
  %v1707 = vpop.f32.mrf.mxu0
  %v1708 = vadd.f32 0.0, %v1707
  %v1709 = vpop.f32.mrf.mxu0
  %1710 = vmatprep.mubr.bf16.mxu0 0
  %1711 = vmatmul.mubr.bf16.gmra.mxu0 %v1070
  %v1712 = vpop.f32.mrf.mxu0
  %v1713 = vadd.f32 0.0, %v1712
  %v1714 = vpop.f32.mrf.mxu0
  %v1715 = vpop.f32.mrf.mxu0
  %v1716 = vadd.f32 0.0, %v1715
  %v1717 = vpop.f32.mrf.mxu0
  %1718 = vmatprep.mubr.bf16.mxu0 0
  %1719 = vmatmul.mubr.bf16.gmra.mxu0 %v1073
  %v1720 = vpop.f32.mrf.mxu0
  %v1721 = vadd.f32 0.0, %v1720
  %v1722 = vpop.f32.mrf.mxu0
  %v1723 = vpop.f32.mrf.mxu0
  %v1724 = vadd.f32 0.0, %v1723
  %v1725 = vpop.f32.mrf.mxu0
  %1726 = vmatprep.mubr.bf16.mxu0 0
  %1727 = vmatmul.mubr.bf16.gmra.mxu0 %v1076
  %v1728 = vpop.f32.mrf.mxu0
  %v1729 = vadd.f32 0.0, %v1728
  %v1730 = vpop.f32.mrf.mxu0
  %v1731 = vpop.f32.mrf.mxu0
  %v1732 = vadd.f32 0.0, %v1731
  %v1733 = vpop.f32.mrf.mxu0
  %1734 = vmatprep.mubr.bf16.mxu0 0
  %1735 = vmatmul.mubr.bf16.gmra.mxu0 %v1079
  %v1736 = vpop.f32.mrf.mxu0
  %v1737 = vadd.f32 0.0, %v1736
  %v1738 = vpop.f32.mrf.mxu0
  %v1739 = vpop.f32.mrf.mxu0
  %v1740 = vadd.f32 0.0, %v1739
  %v1741 = vpop.f32.mrf.mxu0
  %1742 = vmatprep.mubr.bf16.mxu0 0
  %1743 = vmatmul.mubr.bf16.gmra.mxu0 %v1082
  %v1744 = vpop.f32.mrf.mxu0
  %v1745 = vadd.f32 0.0, %v1744
  %v1746 = vpop.f32.mrf.mxu0
  %v1747 = vpop.f32.mrf.mxu0
  %v1748 = vadd.f32 0.0, %v1747
  %v1749 = vpop.f32.mrf.mxu0
  %1750 = vmatprep.mubr.bf16.mxu0 0
  %1751 = vmatmul.mubr.bf16.gmra.mxu0 %v1085
  %v1752 = vpop.f32.mrf.mxu0
  %v1753 = vadd.f32 0.0, %v1752
  %v1754 = vpop.f32.mrf.mxu0
  %v1755 = vpop.f32.mrf.mxu0
  %v1756 = vadd.f32 0.0, %v1755
  %v1757 = vpop.f32.mrf.mxu0
  %1758 = vmatprep.mubr.bf16.mxu0 0
  %1759 = vmatmul.mubr.bf16.gmra.mxu0 %v1088
  %v1760 = vpop.f32.mrf.mxu0
  %v1761 = vadd.f32 0.0, %v1760
  %v1762 = vpop.f32.mrf.mxu0
  %v1763 = vpop.f32.mrf.mxu0
  %v1764 = vadd.f32 0.0, %v1763
  %v1765 = vpop.f32.mrf.mxu0
  %1766 = vmatprep.mubr.bf16.mxu0 0
  %1767 = vmatmul.mubr.bf16.gmra.mxu0 %v1091
  %v1768 = vpop.f32.mrf.mxu0
  %v1769 = vadd.f32 0.0, %v1768
  %v1770 = vpop.f32.mrf.mxu0
  %v1771 = vpop.f32.mrf.mxu0
  %v1772 = vadd.f32 0.0, %v1771
  %v1773 = vpop.f32.mrf.mxu0
  %1774 = vmatprep.mubr.bf16.mxu0 0
  %1775 = vmatmul.mubr.bf16.gmra.mxu0 %v1094
  %v1776 = vpop.f32.mrf.mxu0
  %v1777 = vadd.f32 0.0, %v1776
  %v1778 = vpop.f32.mrf.mxu0
  %v1779 = vpop.f32.mrf.mxu0
  %v1780 = vadd.f32 0.0, %v1779
  %v1781 = vpop.f32.mrf.mxu0
  %1782 = vmatprep.mubr.bf16.mxu0 0
  %1783 = vmatmul.mubr.bf16.gmra.mxu0 %v1097
  %v1784 = vpop.f32.mrf.mxu0
  %v1785 = vadd.f32 0.0, %v1784
  %v1786 = vpop.f32.mrf.mxu0
  %v1787 = vpop.f32.mrf.mxu0
  %v1788 = vadd.f32 0.0, %v1787
  %v1789 = vpop.f32.mrf.mxu0
  %1790 = vmatprep.mubr.bf16.mxu0 0
  %1791 = vmatmul.mubr.bf16.gmra.mxu0 %v1100
  %v1792 = vpop.f32.mrf.mxu0
  %v1793 = vadd.f32 0.0, %v1792
  %v1794 = vpop.f32.mrf.mxu0
  %v1795 = vpop.f32.mrf.mxu0
  %v1796 = vadd.f32 0.0, %v1795
  %v1797 = vpop.f32.mrf.mxu0
  %1798 = vmatprep.mubr.bf16.mxu0 0
  %1799 = vmatmul.mubr.bf16.gmra.mxu0 %v1103
  %v1800 = vpop.f32.mrf.mxu0
  %v1801 = vadd.f32 0.0, %v1800
  %v1802 = vpop.f32.mrf.mxu0
  %v1803 = vpop.f32.mrf.mxu0
  %v1804 = vadd.f32 0.0, %v1803
  %v1805 = vpop.f32.mrf.mxu0
  %1806 = vmatprep.mubr.bf16.mxu0 0
  %1807 = vmatmul.mubr.bf16.gmra.mxu0 %v1106
  %v1808 = vpop.f32.mrf.mxu0
  %v1809 = vadd.f32 0.0, %v1808
  %v1810 = vpop.f32.mrf.mxu0
  %v1811 = vpop.f32.mrf.mxu0
  %v1812 = vadd.f32 0.0, %v1811
  %v1813 = vpop.f32.mrf.mxu0
  %1814 = vmatprep.mubr.bf16.mxu0 0
  %1815 = vmatmul.mubr.bf16.gmra.mxu0 %v1109
  %v1816 = vpop.f32.mrf.mxu0
  %v1817 = vadd.f32 0.0, %v1816
  %v1818 = vpop.f32.mrf.mxu0
  %v1819 = vpop.f32.mrf.mxu0
  %v1820 = vadd.f32 0.0, %v1819
  %v1821 = vpop.f32.mrf.mxu0
  %1822 = vmatprep.mubr.bf16.mxu0 0
  %1823 = vmatmul.mubr.bf16.gmra.mxu0 %v1112
  %v1824 = vpop.f32.mrf.mxu0
  %v1825 = vadd.f32 0.0, %v1824
  %v1826 = vpop.f32.mrf.mxu0
  %v1827 = vpop.f32.mrf.mxu0
  %v1828 = vadd.f32 0.0, %v1827
  %v1829 = vpop.f32.mrf.mxu0
  %1830 = vmatprep.mubr.bf16.mxu0 0
  %1831 = vmatmul.mubr.bf16.gmra.mxu0 %v1115
  %v1832 = vpop.f32.mrf.mxu0
  %v1833 = vadd.f32 0.0, %v1832
  %v1834 = vpop.f32.mrf.mxu0
  %v1835 = vpop.f32.mrf.mxu0
  %v1836 = vadd.f32 0.0, %v1835
  %v1837 = vpop.f32.mrf.mxu0
  %1838 = vmatprep.mubr.bf16.mxu0 0
  %1839 = vmatmul.mubr.bf16.gmra.mxu0 %v1118
  %v1840 = vpop.f32.mrf.mxu0
  %v1841 = vadd.f32 0.0, %v1840
  %v1842 = vpop.f32.mrf.mxu0
  %v1843 = vpop.f32.mrf.mxu0
  %v1844 = vadd.f32 0.0, %v1843
  %v1845 = vpop.f32.mrf.mxu0
  %1846 = vmatprep.mubr.bf16.mxu0 0
  %1847 = vmatmul.mubr.bf16.gmra.mxu0 %v1121
  %v1848 = vpop.f32.mrf.mxu0
  %v1849 = vadd.f32 0.0, %v1848
  %v1850 = vpop.f32.mrf.mxu0
  %v1851 = vpop.f32.mrf.mxu0
  %v1852 = vadd.f32 0.0, %v1851
  %v1853 = vpop.f32.mrf.mxu0
  %1854 = vmatprep.mubr.bf16.mxu0 0
  %1855 = vmatmul.mubr.bf16.gmra.mxu0 %v1124
  %v1856 = vpop.f32.mrf.mxu0
  %v1857 = vadd.f32 0.0, %v1856
  %v1858 = vpop.f32.mrf.mxu0
  %v1859 = vpop.f32.mrf.mxu0
  %v1860 = vadd.f32 0.0, %v1859
  %v1861 = vpop.f32.mrf.mxu0
  %1862 = vmatprep.mubr.bf16.mxu0 0
  %1863 = vmatmul.mubr.bf16.gmra.mxu0 %v1127
  %v1864 = vpop.f32.mrf.mxu0
  %v1865 = vadd.f32 0.0, %v1864
  %v1866 = vpop.f32.mrf.mxu0
  %v1867 = vpop.f32.mrf.mxu0
  %v1868 = vadd.f32 0.0, %v1867
  %v1869 = vpop.f32.mrf.mxu0
  %1870 = vmatprep.mubr.bf16.mxu0 0
  %1871 = vmatmul.mubr.bf16.gmra.mxu0 %v1130
  %v1872 = vpop.f32.mrf.mxu0
  %v1873 = vadd.f32 0.0, %v1872
  %v1874 = vpop.f32.mrf.mxu0
  %v1875 = vpop.f32.mrf.mxu0
  %v1876 = vadd.f32 0.0, %v1875
  %v1877 = vpop.f32.mrf.mxu0
  %1878 = vmatprep.mubr.bf16.mxu0 0
  %1879 = vmatmul.mubr.bf16.gmra.mxu0 %v1133
  %v1880 = vpop.f32.mrf.mxu0
  %v1881 = vadd.f32 0.0, %v1880
  %v1882 = vpop.f32.mrf.mxu0
  %v1883 = vpop.f32.mrf.mxu0
  %v1884 = vadd.f32 0.0, %v1883
  %v1885 = vpop.f32.mrf.mxu0
  %1886 = vmatprep.mubr.bf16.mxu0 0
  %1887 = vmatmul.mubr.bf16.gmra.mxu0 %v1136
  %v1888 = vpop.f32.mrf.mxu0
  %v1889 = vadd.f32 0.0, %v1888
  %v1890 = vpop.f32.mrf.mxu0
  %v1891 = vpop.f32.mrf.mxu0
  %v1892 = vadd.f32 0.0, %v1891
  %v1893 = vpop.f32.mrf.mxu0
  %1894 = vmatprep.mubr.bf16.mxu0 0
  %1895 = vmatmul.mubr.bf16.gmra.mxu0 %v1139
  %v1896 = vpop.f32.mrf.mxu0
  %v1897 = vadd.f32 0.0, %v1896
  %v1898 = vpop.f32.mrf.mxu0
  %v1899 = vpop.f32.mrf.mxu0
  %v1900 = vadd.f32 0.0, %v1899
  %v1901 = vpop.f32.mrf.mxu0
  %1902 = vmatprep.mubr.bf16.mxu0 0
  %1903 = vmatmul.mubr.bf16.gmra.mxu0 %v1142
  %v1904 = vpop.f32.mrf.mxu0
  %v1905 = vadd.f32 0.0, %v1904
  %v1906 = vpop.f32.mrf.mxu0
  %v1907 = vpop.f32.mrf.mxu0
  %v1908 = vadd.f32 0.0, %v1907
  %v1909 = vpop.f32.mrf.mxu0
  %1910 = vmatprep.mubr.bf16.mxu0 0
  %1911 = vmatmul.mubr.bf16.gmra.mxu0 %v1145
  %v1912 = vpop.f32.mrf.mxu0
  %v1913 = vadd.f32 0.0, %v1912
  %v1914 = vpop.f32.mrf.mxu0
  %v1915 = vpop.f32.mrf.mxu0
  %v1916 = vadd.f32 0.0, %v1915
  %v1917 = vpop.f32.mrf.mxu0
  %1918 = vmatprep.mubr.bf16.mxu0 0
  %1919 = vmatmul.mubr.bf16.gmra.mxu0 %v1148
  %v1920 = vpop.f32.mrf.mxu0
  %v1921 = vadd.f32 0.0, %v1920
  %v1922 = vpop.f32.mrf.mxu0
  %v1923 = vpop.f32.mrf.mxu0
  %v1924 = vadd.f32 0.0, %v1923
  %v1925 = vpop.f32.mrf.mxu0
  %1926 = vmatprep.mubr.bf16.mxu0 0
  %1927 = vmatmul.mubr.bf16.gmra.mxu0 %v1151
  %v1928 = vpop.f32.mrf.mxu0
  %v1929 = vadd.f32 0.0, %v1928
  %v1930 = vpop.f32.mrf.mxu0
  %v1931 = vpop.f32.mrf.mxu0
  %v1932 = vadd.f32 0.0, %v1931
  %v1933 = vpop.f32.mrf.mxu0
  %1934 = vmatprep.mubr.bf16.mxu0 0
  %1935 = vmatmul.mubr.bf16.gmra.mxu0 %v1154
  %v1936 = vpop.f32.mrf.mxu0
  %v1937 = vadd.f32 0.0, %v1936
  %v1938 = vpop.f32.mrf.mxu0
  %v1939 = vpop.f32.mrf.mxu0
  %v1940 = vadd.f32 0.0, %v1939
  %v1941 = vpop.f32.mrf.mxu0
  %1942 = vmatprep.mubr.bf16.mxu0 0
  %1943 = vmatmul.mubr.bf16.gmra.mxu0 %v1157
  %v1944 = vpop.f32.mrf.mxu0
  %v1945 = vadd.f32 0.0, %v1944
  %v1946 = vpop.f32.mrf.mxu0
  %v1947 = vpop.f32.mrf.mxu0
  %v1948 = vadd.f32 0.0, %v1947
  %v1949 = vpop.f32.mrf.mxu0
  %1950 = vmatprep.mubr.bf16.mxu0 0
  %1951 = vmatmul.mubr.bf16.gmra.mxu0 %v1160
  %v1952 = vpop.f32.mrf.mxu0
  %v1953 = vadd.f32 0.0, %v1952
  %v1954 = vpop.f32.mrf.mxu0
  %v1955 = vpop.f32.mrf.mxu0
  %v1956 = vadd.f32 0.0, %v1955
  %v1957 = vpop.f32.mrf.mxu0
  %1958 = vmatprep.mubr.bf16.mxu0 0
  %1959 = vmatmul.mubr.bf16.gmra.mxu0 %v1163
  %v1960 = vpop.f32.mrf.mxu0
  %v1961 = vadd.f32 0.0, %v1960
  %v1962 = vpop.f32.mrf.mxu0
  %v1963 = vpop.f32.mrf.mxu0
  %v1964 = vadd.f32 0.0, %v1963
  %v1965 = vpop.f32.mrf.mxu0
  %1966 = vmatprep.mubr.bf16.mxu0 0
  %1967 = vmatmul.mubr.bf16.gmra.mxu0 %v1166
  %v1968 = vpop.f32.mrf.mxu0
  %v1969 = vadd.f32 0.0, %v1968
  %v1970 = vpop.f32.mrf.mxu0
  %v1971 = vpop.f32.mrf.mxu0
  %v1972 = vadd.f32 0.0, %v1971
  %v1973 = vpop.f32.mrf.mxu0
  %1974 = vmatprep.mubr.bf16.mxu0 0
  %1975 = vmatmul.mubr.bf16.gmra.mxu0 %v1169
  %v1976 = vpop.f32.mrf.mxu0
  %v1977 = vadd.f32 0.0, %v1976
  %v1978 = vpop.f32.mrf.mxu0
  %v1979 = vpop.f32.mrf.mxu0
  %v1980 = vadd.f32 0.0, %v1979
  %v1981 = vpop.f32.mrf.mxu0
  %1982 = vmatprep.mubr.bf16.mxu0 0
  %1983 = vmatmul.mubr.bf16.gmra.mxu0 %v1172
  %v1984 = vpop.f32.mrf.mxu0
  %v1985 = vadd.f32 0.0, %v1984
  %v1986 = vpop.f32.mrf.mxu0
  %v1987 = vpop.f32.mrf.mxu0
  %v1988 = vadd.f32 0.0, %v1987
  %v1989 = vpop.f32.mrf.mxu0
  %1990 = vmatprep.mubr.bf16.mxu0 0
  %1991 = vmatmul.mubr.bf16.gmra.mxu0 %v1175
  %v1992 = vpop.f32.mrf.mxu0
  %v1993 = vadd.f32 0.0, %v1992
  %v1994 = vpop.f32.mrf.mxu0
  %v1995 = vpop.f32.mrf.mxu0
  %v1996 = vadd.f32 0.0, %v1995
  %v1997 = vpop.f32.mrf.mxu0
  %1998 = vmatprep.mubr.bf16.mxu0 0
  %1999 = vmatmul.mubr.bf16.gmra.mxu0 %v1178
  %v2000 = vpop.f32.mrf.mxu0
  %v2001 = vadd.f32 0.0, %v2000
  %v2002 = vpop.f32.mrf.mxu0
  %v2003 = vpop.f32.mrf.mxu0
  %v2004 = vadd.f32 0.0, %v2003
  %v2005 = vpop.f32.mrf.mxu0
  %2006 = vmatprep.mubr.bf16.mxu0 0
  %2007 = vmatmul.mubr.bf16.gmra.mxu0 %v1181
  %v2008 = vpop.f32.mrf.mxu0
  %v2009 = vadd.f32 0.0, %v2008
  %v2010 = vpop.f32.mrf.mxu0
  %v2011 = vpop.f32.mrf.mxu0
  %v2012 = vadd.f32 0.0, %v2011
  %v2013 = vpop.f32.mrf.mxu0
  %2014 = vmatprep.mubr.bf16.mxu0 0
  %2015 = vmatmul.mubr.bf16.gmra.mxu0 %v1184
  %v2016 = vpop.f32.mrf.mxu0
  %v2017 = vadd.f32 0.0, %v2016
  %v2018 = vpop.f32.mrf.mxu0
  %v2019 = vpop.f32.mrf.mxu0
  %v2020 = vadd.f32 0.0, %v2019
  %v2021 = vpop.f32.mrf.mxu0
  %2022 = vmatprep.mubr.bf16.mxu0 0
  %2023 = vmatmul.mubr.bf16.gmra.mxu0 %v1187
  %v2024 = vpop.f32.mrf.mxu0
  %v2025 = vadd.f32 0.0, %v2024
  %v2026 = vpop.f32.mrf.mxu0
  %v2027 = vpop.f32.mrf.mxu0
  %v2028 = vadd.f32 0.0, %v2027
  %v2029 = vpop.f32.mrf.mxu0
  %2030 = vmatprep.mubr.bf16.mxu0 0
  %2031 = vmatmul.mubr.bf16.gmra.mxu0 %v1190
  %v2032 = vpop.f32.mrf.mxu0
  %v2033 = vadd.f32 0.0, %v2032
  %v2034 = vpop.f32.mrf.mxu0
  %v2035 = vpop.f32.mrf.mxu0
  %v2036 = vadd.f32 0.0, %v2035
  %v2037 = vpop.f32.mrf.mxu0
  %2038 = vmatprep.mubr.bf16.mxu0 0
  %2039 = vmatmul.mubr.bf16.gmra.mxu0 %v1193
  %v2040 = vpop.f32.mrf.mxu0
  %v2041 = vadd.f32 0.0, %v2040
  %v2042 = vpop.f32.mrf.mxu0
  %v2043 = vpop.f32.mrf.mxu0
  %v2044 = vadd.f32 0.0, %v2043
  %v2045 = vpop.f32.mrf.mxu0
  %2046 = vmatprep.mubr.bf16.mxu0 0
  %2047 = vmatmul.mubr.bf16.gmra.mxu0 %v1196
  %v2048 = vpop.f32.mrf.mxu0
  %v2049 = vadd.f32 0.0, %v2048
  %v2050 = vpop.f32.mrf.mxu0
  %v2051 = vpop.f32.mrf.mxu0
  %v2052 = vadd.f32 0.0, %v2051
  %v2053 = vpop.f32.mrf.mxu0
  %2054 = vmatprep.mubr.bf16.mxu0 0
  %2055 = vmatmul.mubr.bf16.gmra.mxu0 %v1199
  %v2056 = vpop.f32.mrf.mxu0
  %v2057 = vadd.f32 0.0, %v2056
  %v2058 = vpop.f32.mrf.mxu0
  %v2059 = vpop.f32.mrf.mxu0
  %v2060 = vadd.f32 0.0, %v2059
  %v2061 = vpop.f32.mrf.mxu0
  %2062 = vmatprep.mubr.bf16.mxu0 0
  %2063 = vmatmul.mubr.bf16.gmra.mxu0 %v1202
  %v2064 = vpop.f32.mrf.mxu0
  %v2065 = vadd.f32 0.0, %v2064
  %v2066 = vpop.f32.mrf.mxu0
  %v2067 = vpop.f32.mrf.mxu0
  %v2068 = vadd.f32 0.0, %v2067
  %v2069 = vpop.f32.mrf.mxu0
  %2070 = vmatprep.mubr.bf16.mxu0 0
  %2071 = vmatmul.mubr.bf16.gmra.mxu0 %v1205
  %v2072 = vpop.f32.mrf.mxu0
  %v2073 = vadd.f32 0.0, %v2072
  %v2074 = vpop.f32.mrf.mxu0
  %v2075 = vpop.f32.mrf.mxu0
  %v2076 = vadd.f32 0.0, %v2075
  %v2077 = vpop.f32.mrf.mxu0
  %2078 = vmatprep.mubr.bf16.mxu0 0
  %2079 = vmatmul.mubr.bf16.gmra.mxu0 %v1208
  %v2080 = vpop.f32.mrf.mxu0
  %v2081 = vadd.f32 0.0, %v2080
  %v2082 = vpop.f32.mrf.mxu0
  %v2083 = vpop.f32.mrf.mxu0
  %v2084 = vadd.f32 0.0, %v2083
  %v2085 = vpop.f32.mrf.mxu0
  %2086 = vmatprep.mubr.bf16.mxu0 0
  %2087 = vmatmul.mubr.bf16.gmra.mxu0 %v1211
  %v2088 = vpop.f32.mrf.mxu0
  %v2089 = vadd.f32 0.0, %v2088
  %v2090 = vpop.f32.mrf.mxu0
  %v2091 = vpop.f32.mrf.mxu0
  %v2092 = vadd.f32 0.0, %v2091
  %v2093 = vpop.f32.mrf.mxu0
  %2094 = vmatprep.mubr.bf16.mxu0 0
  %2095 = vmatmul.mubr.bf16.gmra.mxu0 %v1214
  %v2096 = vpop.f32.mrf.mxu0
  %v2097 = vadd.f32 0.0, %v2096
  %v2098 = vpop.f32.mrf.mxu0
  %v2099 = vpop.f32.mrf.mxu0
  %v2100 = vadd.f32 0.0, %v2099
  %v2101 = vpop.f32.mrf.mxu0
  %2102 = vmatprep.mubr.bf16.mxu0 0
  %2103 = vmatmul.mubr.bf16.gmra.mxu0 %v1217
  %v2104 = vpop.f32.mrf.mxu0
  %v2105 = vadd.f32 0.0, %v2104
  %v2106 = vpop.f32.mrf.mxu0
  %v2107 = vpop.f32.mrf.mxu0
  %v2108 = vadd.f32 0.0, %v2107
  %v2109 = vpop.f32.mrf.mxu0
  %2110 = vmatprep.mubr.bf16.mxu0 0
  %2111 = vmatmul.mubr.bf16.gmra.mxu0 %v1220
  %v2112 = vpop.f32.mrf.mxu0
  %v2113 = vadd.f32 0.0, %v2112
  %v2114 = vpop.f32.mrf.mxu0
  %v2115 = vpop.f32.mrf.mxu0
  %v2116 = vadd.f32 0.0, %v2115
  %v2117 = vpop.f32.mrf.mxu0
  %2118 = vmatprep.mubr.bf16.mxu0 0
  %2119 = vmatmul.mubr.bf16.gmra.mxu0 %v1223
  %v2120 = vpop.f32.mrf.mxu0
  %v2121 = vadd.f32 0.0, %v2120
  %v2122 = vpop.f32.mrf.mxu0
  %v2123 = vpop.f32.mrf.mxu0
  %v2124 = vadd.f32 0.0, %v2123
  %v2125 = vpop.f32.mrf.mxu0
  %2126 = vmatprep.mubr.bf16.mxu0 0
  %2127 = vmatmul.mubr.bf16.gmra.mxu0 %v1226
  %v2128 = vpop.f32.mrf.mxu0
  %v2129 = vadd.f32 0.0, %v2128
  %v2130 = vpop.f32.mrf.mxu0
  %v2131 = vpop.f32.mrf.mxu0
  %v2132 = vadd.f32 0.0, %v2131
  %v2133 = vpop.f32.mrf.mxu0
  %2134 = vmatprep.mubr.bf16.mxu0 0
  %2135 = vmatmul.mubr.bf16.gmra.mxu0 %v1229
  %v2136 = vpop.f32.mrf.mxu0
  %v2137 = vadd.f32 0.0, %v2136
  %v2138 = vpop.f32.mrf.mxu0
  %v2139 = vpop.f32.mrf.mxu0
  %v2140 = vadd.f32 0.0, %v2139
  %v2141 = vpop.f32.mrf.mxu0
  %2142 = vmatprep.mubr.bf16.mxu0 0
  %2143 = vmatmul.mubr.bf16.gmra.mxu0 %v1232
  %v2144 = vpop.f32.mrf.mxu0
  %v2145 = vadd.f32 0.0, %v2144
  %v2146 = vpop.f32.mrf.mxu0
  %v2147 = vpop.f32.mrf.mxu0
  %v2148 = vadd.f32 0.0, %v2147
  %v2149 = vpop.f32.mrf.mxu0
  %2150 = vmatprep.mubr.bf16.mxu0 0
  %2151 = vmatmul.mubr.bf16.gmra.mxu0 %v1235
  %v2152 = vpop.f32.mrf.mxu0
  %v2153 = vadd.f32 0.0, %v2152
  %v2154 = vpop.f32.mrf.mxu0
  %v2155 = vpop.f32.mrf.mxu0
  %v2156 = vadd.f32 0.0, %v2155
  %v2157 = vpop.f32.mrf.mxu0
  %2158 = vmatprep.mubr.bf16.mxu0 0
  %2159 = vmatmul.mubr.bf16.gmra.mxu0 %v1238
  %v2160 = vpop.f32.mrf.mxu0
  %v2161 = vadd.f32 0.0, %v2160
  %v2162 = vpop.f32.mrf.mxu0
  %v2163 = vpop.f32.mrf.mxu0
  %v2164 = vadd.f32 0.0, %v2163
  %v2165 = vpop.f32.mrf.mxu0
  %2166 = vmatprep.mubr.bf16.mxu0 0
  %2167 = vmatmul.mubr.bf16.gmra.mxu0 %v1241
  %v2168 = vpop.f32.mrf.mxu0
  %v2169 = vadd.f32 0.0, %v2168
  %v2170 = vpop.f32.mrf.mxu0
  %v2171 = vpop.f32.mrf.mxu0
  %v2172 = vadd.f32 0.0, %v2171
  %v2173 = vpop.f32.mrf.mxu0
  %2174 = vmatprep.mubr.bf16.mxu0 0
  %2175 = vmatmul.mubr.bf16.gmra.mxu0 %v1244
  %v2176 = vpop.f32.mrf.mxu0
  %v2177 = vadd.f32 0.0, %v2176
  %v2178 = vpop.f32.mrf.mxu0
  %v2179 = vpop.f32.mrf.mxu0
  %v2180 = vadd.f32 0.0, %v2179
  %v2181 = vpop.f32.mrf.mxu0
  %2182 = vmatprep.mubr.bf16.mxu0 0
  %2183 = vmatmul.mubr.bf16.gmra.mxu0 %v1247
  %v2184 = vpop.f32.mrf.mxu0
  %v2185 = vadd.f32 0.0, %v2184
  %v2186 = vpop.f32.mrf.mxu0
  %v2187 = vpop.f32.mrf.mxu0
  %v2188 = vadd.f32 0.0, %v2187
  %v2189 = vpop.f32.mrf.mxu0
  %2190 = vmatprep.mubr.bf16.mxu0 0
  %2191 = vmatmul.mubr.bf16.gmra.mxu0 %v1250
  %v2192 = vpop.f32.mrf.mxu0
  %v2193 = vadd.f32 0.0, %v2192
  %v2194 = vpop.f32.mrf.mxu0
  %v2195 = vpop.f32.mrf.mxu0
  %v2196 = vadd.f32 0.0, %v2195
  %v2197 = vpop.f32.mrf.mxu0
  %2198 = vmatprep.mubr.bf16.mxu0 0
  %2199 = vmatmul.mubr.bf16.gmra.mxu0 %v1253
  %v2200 = vpop.f32.mrf.mxu0
  %v2201 = vadd.f32 0.0, %v2200
  %v2202 = vpop.f32.mrf.mxu0
  %v2203 = vpop.f32.mrf.mxu0
  %v2204 = vadd.f32 0.0, %v2203
  %v2205 = vpop.f32.mrf.mxu0
  %2206 = vmatprep.mubr.bf16.mxu0 0
  %2207 = vmatmul.mubr.bf16.gmra.mxu0 %v1256
  %v2208 = vpop.f32.mrf.mxu0
  %v2209 = vadd.f32 0.0, %v2208
  %v2210 = vpop.f32.mrf.mxu0
  %v2211 = vpop.f32.mrf.mxu0
  %v2212 = vadd.f32 0.0, %v2211
  %v2213 = vpop.f32.mrf.mxu0
  %2214 = vmatprep.mubr.bf16.mxu0 0
  %2215 = vmatmul.mubr.bf16.gmra.mxu0 %v1259
  %v2216 = vpop.f32.mrf.mxu0
  %v2217 = vadd.f32 0.0, %v2216
  %v2218 = vpop.f32.mrf.mxu0
  %v2219 = vpop.f32.mrf.mxu0
  %v2220 = vadd.f32 0.0, %v2219
  %v2221 = vpop.f32.mrf.mxu0
  %2222 = vmatprep.mubr.bf16.mxu0 0
  %2223 = vmatmul.mubr.bf16.gmra.mxu0 %v1262
  %v2224 = vpop.f32.mrf.mxu0
  %v2225 = vadd.f32 0.0, %v2224
  %v2226 = vpop.f32.mrf.mxu0
  %v2227 = vpop.f32.mrf.mxu0
  %v2228 = vadd.f32 0.0, %v2227
  %v2229 = vpop.f32.mrf.mxu0
  %2230 = vmatprep.mubr.bf16.mxu0 0
  %2231 = vmatmul.mubr.bf16.gmra.mxu0 %v1265
  %v2232 = vpop.f32.mrf.mxu0
  %v2233 = vadd.f32 0.0, %v2232
  %v2234 = vpop.f32.mrf.mxu0
  %v2235 = vpop.f32.mrf.mxu0
  %v2236 = vadd.f32 0.0, %v2235
  %v2237 = vpop.f32.mrf.mxu0
  %2238 = vmatprep.mubr.bf16.mxu0 0
  %2239 = vmatmul.mubr.bf16.gmra.mxu0 %v1268
  %v2240 = vpop.f32.mrf.mxu0
  %v2241 = vadd.f32 0.0, %v2240
  %v2242 = vpop.f32.mrf.mxu0
  %v2243 = vpop.f32.mrf.mxu0
  %v2244 = vadd.f32 0.0, %v2243
  %v2245 = vpop.f32.mrf.mxu0
  %2246 = vmatprep.mubr.bf16.mxu0 0
  %2247 = vmatmul.mubr.bf16.gmra.mxu0 %v1271
  %v2248 = vpop.f32.mrf.mxu0
  %v2249 = vadd.f32 0.0, %v2248
  %v2250 = vpop.f32.mrf.mxu0
  %v2251 = vpop.f32.mrf.mxu0
  %v2252 = vadd.f32 0.0, %v2251
  %v2253 = vpop.f32.mrf.mxu0
  %2254 = vmatprep.mubr.bf16.mxu0 0
  %2255 = vmatmul.mubr.bf16.gmra.mxu0 %v1274
  %v2256 = vpop.f32.mrf.mxu0
  %v2257 = vadd.f32 0.0, %v2256
  %v2258 = vpop.f32.mrf.mxu0
  %v2259 = vpop.f32.mrf.mxu0
  %v2260 = vadd.f32 0.0, %v2259
  %v2261 = vpop.f32.mrf.mxu0
  %2262 = vmatprep.mubr.bf16.mxu0 0
  %2263 = vmatmul.mubr.bf16.gmra.mxu0 %v1277
  %v2264 = vpop.f32.mrf.mxu0
  %v2265 = vadd.f32 0.0, %v2264
  %v2266 = vpop.f32.mrf.mxu0
  %v2267 = vpop.f32.mrf.mxu0
  %v2268 = vadd.f32 0.0, %v2267
  %v2269 = vpop.f32.mrf.mxu0
  %2270 = vmatprep.mubr.bf16.mxu0 0
  %2271 = vmatmul.mubr.bf16.gmra.mxu0 %v1280
  %v2272 = vpop.f32.mrf.mxu0
  %v2273 = vadd.f32 0.0, %v2272
  %v2274 = vpop.f32.mrf.mxu0
  %v2275 = vpop.f32.mrf.mxu0
  %v2276 = vadd.f32 0.0, %v2275
  %v2277 = vpop.f32.mrf.mxu0
  %2278 = vmatprep.mubr.bf16.mxu0 0
  %2279 = vmatmul.mubr.bf16.gmra.mxu0 %v1283
  %v2280 = vpop.f32.mrf.mxu0
  %v2281 = vadd.f32 0.0, %v2280
  %v2282 = vpop.f32.mrf.mxu0
  %v2283 = vpop.f32.mrf.mxu0
  %v2284 = vadd.f32 0.0, %v2283
  %v2285 = vpop.f32.mrf.mxu0
  %2286 = vmatprep.mubr.bf16.mxu0 0
  %2287 = vmatmul.mubr.bf16.gmra.mxu0 %v1286
  %v2288 = vpop.f32.mrf.mxu0
  %v2289 = vadd.f32 0.0, %v2288
  %v2290 = vpop.f32.mrf.mxu0
  %v2291 = vpop.f32.mrf.mxu0
  %v2292 = vadd.f32 0.0, %v2291
  %v2293 = vpop.f32.mrf.mxu0
  %2294 = vmatprep.mubr.bf16.mxu0 0
  %2295 = vmatmul.mubr.bf16.gmra.mxu0 %v1289
  %v2296 = vpop.f32.mrf.mxu0
  %v2297 = vadd.f32 0.0, %v2296
  %v2298 = vpop.f32.mrf.mxu0
  %v2299 = vpop.f32.mrf.mxu0
  %v2300 = vadd.f32 0.0, %v2299
  %v2301 = vpop.f32.mrf.mxu0
  %2302 = vmatprep.mubr.bf16.mxu0 0
  %2303 = vmatmul.mubr.bf16.gmra.mxu0 %v1292
  %v2304 = vpop.f32.mrf.mxu0
  %v2305 = vadd.f32 0.0, %v2304
  %v2306 = vpop.f32.mrf.mxu0
  %v2307 = vpop.f32.mrf.mxu0
  %v2308 = vadd.f32 0.0, %v2307
  %v2309 = vpop.f32.mrf.mxu0
  %2310 = vmatprep.mubr.bf16.mxu0 0
  %2311 = vmatmul.mubr.bf16.gmra.mxu0 %v1295
  %v2312 = vpop.f32.mrf.mxu0
  %v2313 = vadd.f32 0.0, %v2312
  %v2314 = vpop.f32.mrf.mxu0
  %v2315 = vpop.f32.mrf.mxu0
  %v2316 = vadd.f32 0.0, %v2315
  %v2317 = vpop.f32.mrf.mxu0
  %2318 = vmatprep.mubr.bf16.mxu0 0
  %2319 = vmatmul.mubr.bf16.gmra.mxu0 %v1298
  %v2320 = vpop.f32.mrf.mxu0
  %v2321 = vadd.f32 0.0, %v2320
  %v2322 = vpop.f32.mrf.mxu0
  %v2323 = vpop.f32.mrf.mxu0
  %v2324 = vadd.f32 0.0, %v2323
  %v2325 = vpop.f32.mrf.mxu0
  %2326 = vmatprep.mubr.bf16.mxu0 0
  %2327 = vmatmul.mubr.bf16.gmra.mxu0 %v1301
  %v2328 = vpop.f32.mrf.mxu0
  %v2329 = vadd.f32 0.0, %v2328
  %v2330 = vpop.f32.mrf.mxu0
  %v2331 = vpop.f32.mrf.mxu0
  %v2332 = vadd.f32 0.0, %v2331
  %v2333 = vpop.f32.mrf.mxu0
  %2334 = vmatprep.mubr.bf16.mxu0 0
  %2335 = vmatmul.mubr.bf16.gmra.mxu0 %v1304
  %v2336 = vpop.f32.mrf.mxu0
  %v2337 = vadd.f32 0.0, %v2336
  %v2338 = vpop.f32.mrf.mxu0
  %v2339 = vpop.f32.mrf.mxu0
  %v2340 = vadd.f32 0.0, %v2339
  %v2341 = vpop.f32.mrf.mxu0
  %2342 = vmatprep.mubr.bf16.mxu0 0
  %2343 = vmatmul.mubr.bf16.gmra.mxu0 %v1307
  %v2344 = vpop.f32.mrf.mxu0
  %v2345 = vadd.f32 0.0, %v2344
  %v2346 = vpop.f32.mrf.mxu0
  %v2347 = vpop.f32.mrf.mxu0
  %v2348 = vadd.f32 0.0, %v2347
  %v2349 = vpop.f32.mrf.mxu0
  %2350 = vmatprep.mubr.bf16.mxu0 0
  %2351 = vmatmul.mubr.bf16.gmra.mxu0 %v1310
  %v2352 = vpop.f32.mrf.mxu0
  %v2353 = vadd.f32 0.0, %v2352
  %v2354 = vpop.f32.mrf.mxu0
  %v2355 = vpop.f32.mrf.mxu0
  %v2356 = vadd.f32 0.0, %v2355
  %v2357 = vpop.f32.mrf.mxu0
  %2358 = vmatprep.mubr.bf16.mxu0 0
  %2359 = vmatmul.mubr.bf16.gmra.mxu0 %v1313
  %v2360 = vpop.f32.mrf.mxu0
  %v2361 = vadd.f32 0.0, %v2360
  %v2362 = vpop.f32.mrf.mxu0
  %v2363 = vpop.f32.mrf.mxu0
  %v2364 = vadd.f32 0.0, %v2363
  %v2365 = vpop.f32.mrf.mxu0
  %2366 = vmatprep.mubr.bf16.mxu0 0
  %2367 = vmatmul.mubr.bf16.gmra.mxu0 %v1316
  %v2368 = vpop.f32.mrf.mxu0
  %v2369 = vadd.f32 0.0, %v2368
  %v2370 = vpop.f32.mrf.mxu0
  %v2371 = vpop.f32.mrf.mxu0
  %v2372 = vadd.f32 0.0, %v2371
  %v2373 = vpop.f32.mrf.mxu0
  %2374 = vdwg.mxu0
  %v2375 = vmax.f32 %v1353, %v1369
  %v2376 = vmax.f32 %v1356, %v1372
  %v2377 = vmax.f32 %v1361, %v1377
  %v2378 = vmax.f32 %v1364, %v1380
  %v2379 = vmax.f32 %v1385, %v1401
  %v2380 = vmax.f32 %v1388, %v1404
  %v2381 = vmax.f32 %v1393, %v1409
  %v2382 = vmax.f32 %v1396, %v1412
  %v2383 = vmax.f32 %v1417, %v1433
  %v2384 = vmax.f32 %v1420, %v1436
  %v2385 = vmax.f32 %v1425, %v1441
  %v2386 = vmax.f32 %v1428, %v1444
  %v2387 = vmax.f32 %v1449, %v1465
  %v2388 = vmax.f32 %v1452, %v1468
  %v2389 = vmax.f32 %v1457, %v1473
  %v2390 = vmax.f32 %v1460, %v1476
  %v2391 = vmax.f32 %v1481, %v1497
  %v2392 = vmax.f32 %v1484, %v1500
  %v2393 = vmax.f32 %v1489, %v1505
  %v2394 = vmax.f32 %v1492, %v1508
  %v2395 = vmax.f32 %v1513, %v1529
  %v2396 = vmax.f32 %v1516, %v1532
  %v2397 = vmax.f32 %v1521, %v1537
  %v2398 = vmax.f32 %v1524, %v1540
  %v2399 = vmax.f32 %v1545, %v1561
  %v2400 = vmax.f32 %v1548, %v1564
  %v2401 = vmax.f32 %v1553, %v1569
  %v2402 = vmax.f32 %v1556, %v1572
  %v2403 = vmax.f32 %v1577, %v1593
  %v2404 = vmax.f32 %v1580, %v1596
  %v2405 = vmax.f32 %v1585, %v1601
  %v2406 = vmax.f32 %v1588, %v1604
  %v2407 = vmax.f32 %v1609, %v1625
  %v2408 = vmax.f32 %v1612, %v1628
  %v2409 = vmax.f32 %v1617, %v1633
  %v2410 = vmax.f32 %v1620, %v1636
  %v2411 = vmax.f32 %v1641, %v1657
  %v2412 = vmax.f32 %v1644, %v1660
  %v2413 = vmax.f32 %v1649, %v1665
  %v2414 = vmax.f32 %v1652, %v1668
  %v2415 = vmax.f32 %v1673, %v1689
  %v2416 = vmax.f32 %v1676, %v1692
  %v2417 = vmax.f32 %v1681, %v1697
  %v2418 = vmax.f32 %v1684, %v1700
  %v2419 = vmax.f32 %v1705, %v1721
  %v2420 = vmax.f32 %v1708, %v1724
  %v2421 = vmax.f32 %v1713, %v1729
  %v2422 = vmax.f32 %v1716, %v1732
  %v2423 = vmax.f32 %v1737, %v1753
  %v2424 = vmax.f32 %v1740, %v1756
  %v2425 = vmax.f32 %v1745, %v1761
  %v2426 = vmax.f32 %v1748, %v1764
  %v2427 = vmax.f32 %v1769, %v1785
  %v2428 = vmax.f32 %v1772, %v1788
  %v2429 = vmax.f32 %v1777, %v1793
  %v2430 = vmax.f32 %v1780, %v1796
  %v2431 = vmax.f32 %v1801, %v1817
  %v2432 = vmax.f32 %v1804, %v1820
  %v2433 = vmax.f32 %v1809, %v1825
  %v2434 = vmax.f32 %v1812, %v1828
  %v2435 = vmax.f32 %v1833, %v1849
  %v2436 = vmax.f32 %v1836, %v1852
  %v2437 = vmax.f32 %v1841, %v1857
  %v2438 = vmax.f32 %v1844, %v1860
  %v2439 = vmax.f32 %v1865, %v1881
  %v2440 = vmax.f32 %v1868, %v1884
  %v2441 = vmax.f32 %v1873, %v1889
  %v2442 = vmax.f32 %v1876, %v1892
  %v2443 = vmax.f32 %v1897, %v1913
  %v2444 = vmax.f32 %v1900, %v1916
  %v2445 = vmax.f32 %v1905, %v1921
  %v2446 = vmax.f32 %v1908, %v1924
  %v2447 = vmax.f32 %v1929, %v1945
  %v2448 = vmax.f32 %v1932, %v1948
  %v2449 = vmax.f32 %v1937, %v1953
  %v2450 = vmax.f32 %v1940, %v1956
  %v2451 = vmax.f32 %v1961, %v1977
  %v2452 = vmax.f32 %v1964, %v1980
  %v2453 = vmax.f32 %v1969, %v1985
  %v2454 = vmax.f32 %v1972, %v1988
  %v2455 = vmax.f32 %v1993, %v2009
  %v2456 = vmax.f32 %v1996, %v2012
  %v2457 = vmax.f32 %v2001, %v2017
  %v2458 = vmax.f32 %v2004, %v2020
  %v2459 = vmax.f32 %v2025, %v2041
  %v2460 = vmax.f32 %v2028, %v2044
  %v2461 = vmax.f32 %v2033, %v2049
  %v2462 = vmax.f32 %v2036, %v2052
  %v2463 = vmax.f32 %v2057, %v2073
  %v2464 = vmax.f32 %v2060, %v2076
  %v2465 = vmax.f32 %v2065, %v2081
  %v2466 = vmax.f32 %v2068, %v2084
  %v2467 = vmax.f32 %v2089, %v2105
  %v2468 = vmax.f32 %v2092, %v2108
  %v2469 = vmax.f32 %v2097, %v2113
  %v2470 = vmax.f32 %v2100, %v2116
  %v2471 = vmax.f32 %v2121, %v2137
  %v2472 = vmax.f32 %v2124, %v2140
  %v2473 = vmax.f32 %v2129, %v2145
  %v2474 = vmax.f32 %v2132, %v2148
  %v2475 = vmax.f32 %v2153, %v2169
  %v2476 = vmax.f32 %v2156, %v2172
  %v2477 = vmax.f32 %v2161, %v2177
  %v2478 = vmax.f32 %v2164, %v2180
  %v2479 = vmax.f32 %v2185, %v2201
  %v2480 = vmax.f32 %v2188, %v2204
  %v2481 = vmax.f32 %v2193, %v2209
  %v2482 = vmax.f32 %v2196, %v2212
  %v2483 = vmax.f32 %v2217, %v2233
  %v2484 = vmax.f32 %v2220, %v2236
  %v2485 = vmax.f32 %v2225, %v2241
  %v2486 = vmax.f32 %v2228, %v2244
  %v2487 = vmax.f32 %v2249, %v2265
  %v2488 = vmax.f32 %v2252, %v2268
  %v2489 = vmax.f32 %v2257, %v2273
  %v2490 = vmax.f32 %v2260, %v2276
  %v2491 = vmax.f32 %v2281, %v2297
  %v2492 = vmax.f32 %v2284, %v2300
  %v2493 = vmax.f32 %v2289, %v2305
  %v2494 = vmax.f32 %v2292, %v2308
  %v2495 = vmax.f32 %v2313, %v2329
  %v2496 = vmax.f32 %v2316, %v2332
  %v2497 = vmax.f32 %v2321, %v2337
  %v2498 = vmax.f32 %v2324, %v2340
  %v2499 = vmax.f32 %v2345, %v2361
  %v2500 = vmax.f32 %v2348, %v2364
  %v2501 = vmax.f32 %v2353, %v2369
  %v2502 = vmax.f32 %v2356, %v2372
  %2503 = vst.msk [vmem:[#allocation4] sm:$0xff] %vm933, %v2375
  %2504 = vst.msk [vmem:[#allocation4 + $0x8] sm:$0xff] %vm933, %v2376
  %2505 = vst.msk [vmem:[#allocation4 + $0x10] sm:$0xff] %vm933, %v2377
  %2506 = vst.msk [vmem:[#allocation4 + $0x18] sm:$0xff] %vm933, %v2378
  %2507 = vst.msk [vmem:[#allocation4 + $0x20] sm:$0xff] %vm933, %v2379
  %2508 = vst.msk [vmem:[#allocation4 + $0x28] sm:$0xff] %vm933, %v2380
  %2509 = vst.msk [vmem:[#allocation4 + $0x30] sm:$0xff] %vm933, %v2381
  %2510 = vst.msk [vmem:[#allocation4 + $0x38] sm:$0xff] %vm933, %v2382
  %2511 = vst.msk [vmem:[#allocation4 + $0x40] sm:$0xff] %vm933, %v2383
  %2512 = vst.msk [vmem:[#allocation4 + $0x48] sm:$0xff] %vm933, %v2384
  %2513 = vst.msk [vmem:[#allocation4 + $0x50] sm:$0xff] %vm933, %v2385
  %2514 = vst.msk [vmem:[#allocation4 + $0x58] sm:$0xff] %vm933, %v2386
  %2515 = vst.msk [vmem:[#allocation4 + $0x60] sm:$0xff] %vm933, %v2387
  %2516 = vst.msk [vmem:[#allocation4 + $0x68] sm:$0xff] %vm933, %v2388
  %2517 = vst.msk [vmem:[#allocation4 + $0x70] sm:$0xff] %vm933, %v2389
  %2518 = vst.msk [vmem:[#allocation4 + $0x78] sm:$0xff] %vm933, %v2390
  %2519 = vst.msk [vmem:[#allocation4 + $0x80] sm:$0xff] %vm933, %v2391
  %2520 = vst.msk [vmem:[#allocation4 + $0x88] sm:$0xff] %vm933, %v2392
  %2521 = vst.msk [vmem:[#allocation4 + $0x90] sm:$0xff] %vm933, %v2393
  %2522 = vst.msk [vmem:[#allocation4 + $0x98] sm:$0xff] %vm933, %v2394
  %2523 = vst.msk [vmem:[#allocation4 + $0xa0] sm:$0xff] %vm933, %v2395
  %2524 = vst.msk [vmem:[#allocation4 + $0xa8] sm:$0xff] %vm933, %v2396
  %2525 = vst.msk [vmem:[#allocation4 + $0xb0] sm:$0xff] %vm933, %v2397
  %2526 = vst.msk [vmem:[#allocation4 + $0xb8] sm:$0xff] %vm933, %v2398
  %2527 = vst.msk [vmem:[#allocation4 + $0xc0] sm:$0xff] %vm933, %v2399
  %2528 = vst.msk [vmem:[#allocation4 + $0xc8] sm:$0xff] %vm933, %v2400
  %2529 = vst.msk [vmem:[#allocation4 + $0xd0] sm:$0xff] %vm933, %v2401
  %2530 = vst.msk [vmem:[#allocation4 + $0xd8] sm:$0xff] %vm933, %v2402
  %2531 = vst.msk [vmem:[#allocation4 + $0xe0] sm:$0xff] %vm933, %v2403
  %2532 = vst.msk [vmem:[#allocation4 + $0xe8] sm:$0xff] %vm933, %v2404
  %2533 = vst.msk [vmem:[#allocation4 + $0xf0] sm:$0xff] %vm933, %v2405
  %2534 = vst.msk [vmem:[#allocation4 + $0xf8] sm:$0xff] %vm933, %v2406
  %2535 = vst.msk [vmem:[#allocation4 + $0x100] sm:$0xff] %vm933, %v2407
  %2536 = vst.msk [vmem:[#allocation4 + $0x108] sm:$0xff] %vm933, %v2408
  %2537 = vst.msk [vmem:[#allocation4 + $0x110] sm:$0xff] %vm933, %v2409
  %2538 = vst.msk [vmem:[#allocation4 + $0x118] sm:$0xff] %vm933, %v2410
  %2539 = vst.msk [vmem:[#allocation4 + $0x120] sm:$0xff] %vm933, %v2411
  %2540 = vst.msk [vmem:[#allocation4 + $0x128] sm:$0xff] %vm933, %v2412
  %2541 = vst.msk [vmem:[#allocation4 + $0x130] sm:$0xff] %vm933, %v2413
  %2542 = vst.msk [vmem:[#allocation4 + $0x138] sm:$0xff] %vm933, %v2414
  %2543 = vst.msk [vmem:[#allocation4 + $0x140] sm:$0xff] %vm933, %v2415
  %2544 = vst.msk [vmem:[#allocation4 + $0x148] sm:$0xff] %vm933, %v2416
  %2545 = vst.msk [vmem:[#allocation4 + $0x150] sm:$0xff] %vm933, %v2417
  %2546 = vst.msk [vmem:[#allocation4 + $0x158] sm:$0xff] %vm933, %v2418
  %2547 = vst.msk [vmem:[#allocation4 + $0x160] sm:$0xff] %vm933, %v2419
  %2548 = vst.msk [vmem:[#allocation4 + $0x168] sm:$0xff] %vm933, %v2420
  %2549 = vst.msk [vmem:[#allocation4 + $0x170] sm:$0xff] %vm933, %v2421
  %2550 = vst.msk [vmem:[#allocation4 + $0x178] sm:$0xff] %vm933, %v2422
  %2551 = vst.msk [vmem:[#allocation4 + $0x180] sm:$0xff] %vm933, %v2423
  %2552 = vst.msk [vmem:[#allocation4 + $0x188] sm:$0xff] %vm933, %v2424
  %2553 = vst.msk [vmem:[#allocation4 + $0x190] sm:$0xff] %vm933, %v2425
  %2554 = vst.msk [vmem:[#allocation4 + $0x198] sm:$0xff] %vm933, %v2426
  %2555 = vst.msk [vmem:[#allocation4 + $0x1a0] sm:$0xff] %vm933, %v2427
  %2556 = vst.msk [vmem:[#allocation4 + $0x1a8] sm:$0xff] %vm933, %v2428
  %2557 = vst.msk [vmem:[#allocation4 + $0x1b0] sm:$0xff] %vm933, %v2429
  %2558 = vst.msk [vmem:[#allocation4 + $0x1b8] sm:$0xff] %vm933, %v2430
  %2559 = vst.msk [vmem:[#allocation4 + $0x1c0] sm:$0xff] %vm933, %v2431
  %2560 = vst.msk [vmem:[#allocation4 + $0x1c8] sm:$0xff] %vm933, %v2432
  %2561 = vst.msk [vmem:[#allocation4 + $0x1d0] sm:$0xff] %vm933, %v2433
  %2562 = vst.msk [vmem:[#allocation4 + $0x1d8] sm:$0xff] %vm933, %v2434
  %2563 = vst.msk [vmem:[#allocation4 + $0x1e0] sm:$0xff] %vm933, %v2435
  %2564 = vst.msk [vmem:[#allocation4 + $0x1e8] sm:$0xff] %vm933, %v2436
  %2565 = vst.msk [vmem:[#allocation4 + $0x1f0] sm:$0xff] %vm933, %v2437
  %2566 = vst.msk [vmem:[#allocation4 + $0x1f8] sm:$0xff] %vm933, %v2438
  %2567 = vst.msk [vmem:[#allocation4 + $0x200] sm:$0xff] %vm933, %v2439
  %2568 = vst.msk [vmem:[#allocation4 + $0x208] sm:$0xff] %vm933, %v2440
  %2569 = vst.msk [vmem:[#allocation4 + $0x210] sm:$0xff] %vm933, %v2441
  %2570 = vst.msk [vmem:[#allocation4 + $0x218] sm:$0xff] %vm933, %v2442
  %2571 = vst.msk [vmem:[#allocation4 + $0x220] sm:$0xff] %vm933, %v2443
  %2572 = vst.msk [vmem:[#allocation4 + $0x228] sm:$0xff] %vm933, %v2444
  %2573 = vst.msk [vmem:[#allocation4 + $0x230] sm:$0xff] %vm933, %v2445
  %2574 = vst.msk [vmem:[#allocation4 + $0x238] sm:$0xff] %vm933, %v2446
  %2575 = vst.msk [vmem:[#allocation4 + $0x240] sm:$0xff] %vm933, %v2447
  %2576 = vst.msk [vmem:[#allocation4 + $0x248] sm:$0xff] %vm933, %v2448
  %2577 = vst.msk [vmem:[#allocation4 + $0x250] sm:$0xff] %vm933, %v2449
  %2578 = vst.msk [vmem:[#allocation4 + $0x258] sm:$0xff] %vm933, %v2450
  %2579 = vst.msk [vmem:[#allocation4 + $0x260] sm:$0xff] %vm933, %v2451
  %2580 = vst.msk [vmem:[#allocation4 + $0x268] sm:$0xff] %vm933, %v2452
  %2581 = vst.msk [vmem:[#allocation4 + $0x270] sm:$0xff] %vm933, %v2453
  %2582 = vst.msk [vmem:[#allocation4 + $0x278] sm:$0xff] %vm933, %v2454
  %2583 = vst.msk [vmem:[#allocation4 + $0x280] sm:$0xff] %vm933, %v2455
  %2584 = vst.msk [vmem:[#allocation4 + $0x288] sm:$0xff] %vm933, %v2456
  %2585 = vst.msk [vmem:[#allocation4 + $0x290] sm:$0xff] %vm933, %v2457
  %2586 = vst.msk [vmem:[#allocation4 + $0x298] sm:$0xff] %vm933, %v2458
  %2587 = vst.msk [vmem:[#allocation4 + $0x2a0] sm:$0xff] %vm933, %v2459
  %2588 = vst.msk [vmem:[#allocation4 + $0x2a8] sm:$0xff] %vm933, %v2460
  %2589 = vst.msk [vmem:[#allocation4 + $0x2b0] sm:$0xff] %vm933, %v2461
  %2590 = vst.msk [vmem:[#allocation4 + $0x2b8] sm:$0xff] %vm933, %v2462
  %2591 = vst.msk [vmem:[#allocation4 + $0x2c0] sm:$0xff] %vm933, %v2463
  %2592 = vst.msk [vmem:[#allocation4 + $0x2c8] sm:$0xff] %vm933, %v2464
  %2593 = vst.msk [vmem:[#allocation4 + $0x2d0] sm:$0xff] %vm933, %v2465
  %2594 = vst.msk [vmem:[#allocation4 + $0x2d8] sm:$0xff] %vm933, %v2466
  %2595 = vst.msk [vmem:[#allocation4 + $0x2e0] sm:$0xff] %vm933, %v2467
  %2596 = vst.msk [vmem:[#allocation4 + $0x2e8] sm:$0xff] %vm933, %v2468
  %2597 = vst.msk [vmem:[#allocation4 + $0x2f0] sm:$0xff] %vm933, %v2469
  %2598 = vst.msk [vmem:[#allocation4 + $0x2f8] sm:$0xff] %vm933, %v2470
  %2599 = vst.msk [vmem:[#allocation4 + $0x300] sm:$0xff] %vm933, %v2471
  %2600 = vst.msk [vmem:[#allocation4 + $0x308] sm:$0xff] %vm933, %v2472
  %2601 = vst.msk [vmem:[#allocation4 + $0x310] sm:$0xff] %vm933, %v2473
  %2602 = vst.msk [vmem:[#allocation4 + $0x318] sm:$0xff] %vm933, %v2474
  %2603 = vst.msk [vmem:[#allocation4 + $0x320] sm:$0xff] %vm933, %v2475
  %2604 = vst.msk [vmem:[#allocation4 + $0x328] sm:$0xff] %vm933, %v2476
  %2605 = vst.msk [vmem:[#allocation4 + $0x330] sm:$0xff] %vm933, %v2477
  %2606 = vst.msk [vmem:[#allocation4 + $0x338] sm:$0xff] %vm933, %v2478
  %2607 = vst.msk [vmem:[#allocation4 + $0x340] sm:$0xff] %vm933, %v2479
  %2608 = vst.msk [vmem:[#allocation4 + $0x348] sm:$0xff] %vm933, %v2480
  %2609 = vst.msk [vmem:[#allocation4 + $0x350] sm:$0xff] %vm933, %v2481
  %2610 = vst.msk [vmem:[#allocation4 + $0x358] sm:$0xff] %vm933, %v2482
  %2611 = vst.msk [vmem:[#allocation4 + $0x360] sm:$0xff] %vm933, %v2483
  %2612 = vst.msk [vmem:[#allocation4 + $0x368] sm:$0xff] %vm933, %v2484
  %2613 = vst.msk [vmem:[#allocation4 + $0x370] sm:$0xff] %vm933, %v2485
  %2614 = vst.msk [vmem:[#allocation4 + $0x378] sm:$0xff] %vm933, %v2486
  %2615 = vst.msk [vmem:[#allocation4 + $0x380] sm:$0xff] %vm933, %v2487
  %2616 = vst.msk [vmem:[#allocation4 + $0x388] sm:$0xff] %vm933, %v2488
  %2617 = vst.msk [vmem:[#allocation4 + $0x390] sm:$0xff] %vm933, %v2489
  %2618 = vst.msk [vmem:[#allocation4 + $0x398] sm:$0xff] %vm933, %v2490
  %2619 = vst.msk [vmem:[#allocation4 + $0x3a0] sm:$0xff] %vm933, %v2491
  %2620 = vst.msk [vmem:[#allocation4 + $0x3a8] sm:$0xff] %vm933, %v2492
  %2621 = vst.msk [vmem:[#allocation4 + $0x3b0] sm:$0xff] %vm933, %v2493
  %2622 = vst.msk [vmem:[#allocation4 + $0x3b8] sm:$0xff] %vm933, %v2494
  %2623 = vst.msk [vmem:[#allocation4 + $0x3c0] sm:$0xff] %vm933, %v2495
  %2624 = vst.msk [vmem:[#allocation4 + $0x3c8] sm:$0xff] %vm933, %v2496
  %2625 = vst.msk [vmem:[#allocation4 + $0x3d0] sm:$0xff] %vm933, %v2497
  %2626 = vst.msk [vmem:[#allocation4 + $0x3d8] sm:$0xff] %vm933, %v2498
  %2627 = vst.msk [vmem:[#allocation4 + $0x3e0] sm:$0xff] %vm933, %v2499
  %2628 = vst.msk [vmem:[#allocation4 + $0x3e8] sm:$0xff] %vm933, %v2500
  %2629 = vst.msk [vmem:[#allocation4 + $0x3f0] sm:$0xff] %vm933, %v2501
  %2630 = vst.msk [vmem:[#allocation4 + $0x3f8] sm:$0xff] %vm933, %v2502
  %v2631 = vld [vmem:[#allocation4] ss:$2 sm:$0xff]
  %s2632 = scalar_lea.vmem [#allocation4], 16
  %v2633 = vld [vmem:[%s2632] ss:$2 sm:$0xff]
  %s2634 = scalar_lea.vmem [#allocation4], 32
  %v2635 = vld [vmem:[%s2634] ss:$2 sm:$0xff]
  %s2636 = scalar_lea.vmem [#allocation4], 48
  %v2637 = vld [vmem:[%s2636] ss:$2 sm:$0xff]
  %s2638 = scalar_lea.vmem [#allocation4], 64
  %v2639 = vld [vmem:[%s2638] ss:$2 sm:$0xff]
  %s2640 = scalar_lea.vmem [#allocation4], 80
  %v2641 = vld [vmem:[%s2640] ss:$2 sm:$0xff]
  %s2642 = scalar_lea.vmem [#allocation4], 96
  %v2643 = vld [vmem:[%s2642] ss:$2 sm:$0xff]
  %s2644 = scalar_lea.vmem [#allocation4], 112
  %v2645 = vld [vmem:[%s2644] ss:$2 sm:$0xff]
  %s2646 = scalar_lea.vmem [#allocation4], 128
  %v2647 = vld [vmem:[%s2646] ss:$2 sm:$0xff]
  %s2648 = scalar_lea.vmem [#allocation4], 144
  %v2649 = vld [vmem:[%s2648] ss:$2 sm:$0xff]
  %s2650 = scalar_lea.vmem [#allocation4], 160
  %v2651 = vld [vmem:[%s2650] ss:$2 sm:$0xff]
  %s2652 = scalar_lea.vmem [#allocation4], 176
  %v2653 = vld [vmem:[%s2652] ss:$2 sm:$0xff]
  %s2654 = scalar_lea.vmem [#allocation4], 192
  %v2655 = vld [vmem:[%s2654] ss:$2 sm:$0xff]
  %s2656 = scalar_lea.vmem [#allocation4], 208
  %v2657 = vld [vmem:[%s2656] ss:$2 sm:$0xff]
  %s2658 = scalar_lea.vmem [#allocation4], 224
  %v2659 = vld [vmem:[%s2658] ss:$2 sm:$0xff]
  %s2660 = scalar_lea.vmem [#allocation4], 240
  %v2661 = vld [vmem:[%s2660] ss:$2 sm:$0xff]
  %s2662 = scalar_lea.vmem [#allocation4], 256
  %v2663 = vld [vmem:[%s2662] ss:$2 sm:$0xff]
  %s2664 = scalar_lea.vmem [#allocation4], 272
  %v2665 = vld [vmem:[%s2664] ss:$2 sm:$0xff]
  %s2666 = scalar_lea.vmem [#allocation4], 288
  %v2667 = vld [vmem:[%s2666] ss:$2 sm:$0xff]
  %s2668 = scalar_lea.vmem [#allocation4], 304
  %v2669 = vld [vmem:[%s2668] ss:$2 sm:$0xff]
  %s2670 = scalar_lea.vmem [#allocation4], 320
  %v2671 = vld [vmem:[%s2670] ss:$2 sm:$0xff]
  %s2672 = scalar_lea.vmem [#allocation4], 336
  %v2673 = vld [vmem:[%s2672] ss:$2 sm:$0xff]
  %s2674 = scalar_lea.vmem [#allocation4], 352
  %v2675 = vld [vmem:[%s2674] ss:$2 sm:$0xff]
  %s2676 = scalar_lea.vmem [#allocation4], 368
  %v2677 = vld [vmem:[%s2676] ss:$2 sm:$0xff]
  %s2678 = scalar_lea.vmem [#allocation4], 384
  %v2679 = vld [vmem:[%s2678] ss:$2 sm:$0xff]
  %s2680 = scalar_lea.vmem [#allocation4], 400
  %v2681 = vld [vmem:[%s2680] ss:$2 sm:$0xff]
  %s2682 = scalar_lea.vmem [#allocation4], 416
  %v2683 = vld [vmem:[%s2682] ss:$2 sm:$0xff]
  %s2684 = scalar_lea.vmem [#allocation4], 432
  %v2685 = vld [vmem:[%s2684] ss:$2 sm:$0xff]
  %s2686 = scalar_lea.vmem [#allocation4], 448
  %v2687 = vld [vmem:[%s2686] ss:$2 sm:$0xff]
  %s2688 = scalar_lea.vmem [#allocation4], 464
  %v2689 = vld [vmem:[%s2688] ss:$2 sm:$0xff]
  %s2690 = scalar_lea.vmem [#allocation4], 480
  %v2691 = vld [vmem:[%s2690] ss:$2 sm:$0xff]
  %s2692 = scalar_lea.vmem [#allocation4], 496
  %v2693 = vld [vmem:[%s2692] ss:$2 sm:$0xff]
  %s2694 = scalar_lea.vmem [#allocation4], 512
  %v2695 = vld [vmem:[%s2694] ss:$2 sm:$0xff]
  %s2696 = scalar_lea.vmem [#allocation4], 528
  %v2697 = vld [vmem:[%s2696] ss:$2 sm:$0xff]
  %s2698 = scalar_lea.vmem [#allocation4], 544
  %v2699 = vld [vmem:[%s2698] ss:$2 sm:$0xff]
  %s2700 = scalar_lea.vmem [#allocation4], 560
  %v2701 = vld [vmem:[%s2700] ss:$2 sm:$0xff]
  %s2702 = scalar_lea.vmem [#allocation4], 576
  %v2703 = vld [vmem:[%s2702] ss:$2 sm:$0xff]
  %s2704 = scalar_lea.vmem [#allocation4], 592
  %v2705 = vld [vmem:[%s2704] ss:$2 sm:$0xff]
  %s2706 = scalar_lea.vmem [#allocation4], 608
  %v2707 = vld [vmem:[%s2706] ss:$2 sm:$0xff]
  %s2708 = scalar_lea.vmem [#allocation4], 624
  %v2709 = vld [vmem:[%s2708] ss:$2 sm:$0xff]
  %s2710 = scalar_lea.vmem [#allocation4], 640
  %v2711 = vld [vmem:[%s2710] ss:$2 sm:$0xff]
  %s2712 = scalar_lea.vmem [#allocation4], 656
  %v2713 = vld [vmem:[%s2712] ss:$2 sm:$0xff]
  %s2714 = scalar_lea.vmem [#allocation4], 672
  %v2715 = vld [vmem:[%s2714] ss:$2 sm:$0xff]
  %s2716 = scalar_lea.vmem [#allocation4], 688
  %v2717 = vld [vmem:[%s2716] ss:$2 sm:$0xff]
  %s2718 = scalar_lea.vmem [#allocation4], 704
  %v2719 = vld [vmem:[%s2718] ss:$2 sm:$0xff]
  %s2720 = scalar_lea.vmem [#allocation4], 720
  %v2721 = vld [vmem:[%s2720] ss:$2 sm:$0xff]
  %s2722 = scalar_lea.vmem [#allocation4], 736
  %v2723 = vld [vmem:[%s2722] ss:$2 sm:$0xff]
  %s2724 = scalar_lea.vmem [#allocation4], 752
  %v2725 = vld [vmem:[%s2724] ss:$2 sm:$0xff]
  %s2726 = scalar_lea.vmem [#allocation4], 768
  %v2727 = vld [vmem:[%s2726] ss:$2 sm:$0xff]
  %s2728 = scalar_lea.vmem [#allocation4], 784
  %v2729 = vld [vmem:[%s2728] ss:$2 sm:$0xff]
  %s2730 = scalar_lea.vmem [#allocation4], 800
  %v2731 = vld [vmem:[%s2730] ss:$2 sm:$0xff]
  %s2732 = scalar_lea.vmem [#allocation4], 816
  %v2733 = vld [vmem:[%s2732] ss:$2 sm:$0xff]
  %s2734 = scalar_lea.vmem [#allocation4], 832
  %v2735 = vld [vmem:[%s2734] ss:$2 sm:$0xff]
  %s2736 = scalar_lea.vmem [#allocation4], 848
  %v2737 = vld [vmem:[%s2736] ss:$2 sm:$0xff]
  %s2738 = scalar_lea.vmem [#allocation4], 864
  %v2739 = vld [vmem:[%s2738] ss:$2 sm:$0xff]
  %s2740 = scalar_lea.vmem [#allocation4], 880
  %v2741 = vld [vmem:[%s2740] ss:$2 sm:$0xff]
  %s2742 = scalar_lea.vmem [#allocation4], 896
  %v2743 = vld [vmem:[%s2742] ss:$2 sm:$0xff]
  %s2744 = scalar_lea.vmem [#allocation4], 912
  %v2745 = vld [vmem:[%s2744] ss:$2 sm:$0xff]
  %s2746 = scalar_lea.vmem [#allocation4], 928
  %v2747 = vld [vmem:[%s2746] ss:$2 sm:$0xff]
  %s2748 = scalar_lea.vmem [#allocation4], 944
  %v2749 = vld [vmem:[%s2748] ss:$2 sm:$0xff]
  %s2750 = scalar_lea.vmem [#allocation4], 960
  %v2751 = vld [vmem:[%s2750] ss:$2 sm:$0xff]
  %s2752 = scalar_lea.vmem [#allocation4], 976
  %v2753 = vld [vmem:[%s2752] ss:$2 sm:$0xff]
  %s2754 = scalar_lea.vmem [#allocation4], 992
  %v2755 = vld [vmem:[%s2754] ss:$2 sm:$0xff]
  %s2756 = scalar_lea.vmem [#allocation4], 1008
  %v2757 = vld [vmem:[%s2756] ss:$2 sm:$0xff]
  %s2758 = scalar_lea.vmem [#allocation4], 1
  %v2759 = vld [vmem:[%s2758] ss:$2 sm:$0xff]
  %s2760 = scalar_lea.vmem [#allocation4], 17
  %v2761 = vld [vmem:[%s2760] ss:$2 sm:$0xff]
  %s2762 = scalar_lea.vmem [#allocation4], 33
  %v2763 = vld [vmem:[%s2762] ss:$2 sm:$0xff]
  %s2764 = scalar_lea.vmem [#allocation4], 49
  %v2765 = vld [vmem:[%s2764] ss:$2 sm:$0xff]
  %s2766 = scalar_lea.vmem [#allocation4], 65
  %v2767 = vld [vmem:[%s2766] ss:$2 sm:$0xff]
  %s2768 = scalar_lea.vmem [#allocation4], 81
  %v2769 = vld [vmem:[%s2768] ss:$2 sm:$0xff]
  %s2770 = scalar_lea.vmem [#allocation4], 97
  %v2771 = vld [vmem:[%s2770] ss:$2 sm:$0xff]
  %s2772 = scalar_lea.vmem [#allocation4], 113
  %v2773 = vld [vmem:[%s2772] ss:$2 sm:$0xff]
  %s2774 = scalar_lea.vmem [#allocation4], 129
  %v2775 = vld [vmem:[%s2774] ss:$2 sm:$0xff]
  %s2776 = scalar_lea.vmem [#allocation4], 145
  %v2777 = vld [vmem:[%s2776] ss:$2 sm:$0xff]
  %s2778 = scalar_lea.vmem [#allocation4], 161
  %v2779 = vld [vmem:[%s2778] ss:$2 sm:$0xff]
  %s2780 = scalar_lea.vmem [#allocation4], 177
  %v2781 = vld [vmem:[%s2780] ss:$2 sm:$0xff]
  %s2782 = scalar_lea.vmem [#allocation4], 193
  %v2783 = vld [vmem:[%s2782] ss:$2 sm:$0xff]
  %s2784 = scalar_lea.vmem [#allocation4], 209
  %v2785 = vld [vmem:[%s2784] ss:$2 sm:$0xff]
  %s2786 = scalar_lea.vmem [#allocation4], 225
  %v2787 = vld [vmem:[%s2786] ss:$2 sm:$0xff]
  %s2788 = scalar_lea.vmem [#allocation4], 241
  %v2789 = vld [vmem:[%s2788] ss:$2 sm:$0xff]
  %s2790 = scalar_lea.vmem [#allocation4], 257
  %v2791 = vld [vmem:[%s2790] ss:$2 sm:$0xff]
  %s2792 = scalar_lea.vmem [#allocation4], 273
  %v2793 = vld [vmem:[%s2792] ss:$2 sm:$0xff]
  %s2794 = scalar_lea.vmem [#allocation4], 289
  %v2795 = vld [vmem:[%s2794] ss:$2 sm:$0xff]
  %s2796 = scalar_lea.vmem [#allocation4], 305
  %v2797 = vld [vmem:[%s2796] ss:$2 sm:$0xff]
  %s2798 = scalar_lea.vmem [#allocation4], 321
  %v2799 = vld [vmem:[%s2798] ss:$2 sm:$0xff]
  %s2800 = scalar_lea.vmem [#allocation4], 337
  %v2801 = vld [vmem:[%s2800] ss:$2 sm:$0xff]
  %s2802 = scalar_lea.vmem [#allocation4], 353
  %v2803 = vld [vmem:[%s2802] ss:$2 sm:$0xff]
  %s2804 = scalar_lea.vmem [#allocation4], 369
  %v2805 = vld [vmem:[%s2804] ss:$2 sm:$0xff]
  %s2806 = scalar_lea.vmem [#allocation4], 385
  %v2807 = vld [vmem:[%s2806] ss:$2 sm:$0xff]
  %s2808 = scalar_lea.vmem [#allocation4], 401
  %v2809 = vld [vmem:[%s2808] ss:$2 sm:$0xff]
  %s2810 = scalar_lea.vmem [#allocation4], 417
  %v2811 = vld [vmem:[%s2810] ss:$2 sm:$0xff]
  %s2812 = scalar_lea.vmem [#allocation4], 433
  %v2813 = vld [vmem:[%s2812] ss:$2 sm:$0xff]
  %s2814 = scalar_lea.vmem [#allocation4], 449
  %v2815 = vld [vmem:[%s2814] ss:$2 sm:$0xff]
  %s2816 = scalar_lea.vmem [#allocation4], 465
  %v2817 = vld [vmem:[%s2816] ss:$2 sm:$0xff]
  %s2818 = scalar_lea.vmem [#allocation4], 481
  %v2819 = vld [vmem:[%s2818] ss:$2 sm:$0xff]
  %s2820 = scalar_lea.vmem [#allocation4], 497
  %v2821 = vld [vmem:[%s2820] ss:$2 sm:$0xff]
  %s2822 = scalar_lea.vmem [#allocation4], 513
  %v2823 = vld [vmem:[%s2822] ss:$2 sm:$0xff]
  %s2824 = scalar_lea.vmem [#allocation4], 529
  %v2825 = vld [vmem:[%s2824] ss:$2 sm:$0xff]
  %s2826 = scalar_lea.vmem [#allocation4], 545
  %v2827 = vld [vmem:[%s2826] ss:$2 sm:$0xff]
  %s2828 = scalar_lea.vmem [#allocation4], 561
  %v2829 = vld [vmem:[%s2828] ss:$2 sm:$0xff]
  %s2830 = scalar_lea.vmem [#allocation4], 577
  %v2831 = vld [vmem:[%s2830] ss:$2 sm:$0xff]
  %s2832 = scalar_lea.vmem [#allocation4], 593
  %v2833 = vld [vmem:[%s2832] ss:$2 sm:$0xff]
  %s2834 = scalar_lea.vmem [#allocation4], 609
  %v2835 = vld [vmem:[%s2834] ss:$2 sm:$0xff]
  %s2836 = scalar_lea.vmem [#allocation4], 625
  %v2837 = vld [vmem:[%s2836] ss:$2 sm:$0xff]
  %s2838 = scalar_lea.vmem [#allocation4], 641
  %v2839 = vld [vmem:[%s2838] ss:$2 sm:$0xff]
  %s2840 = scalar_lea.vmem [#allocation4], 657
  %v2841 = vld [vmem:[%s2840] ss:$2 sm:$0xff]
  %s2842 = scalar_lea.vmem [#allocation4], 673
  %v2843 = vld [vmem:[%s2842] ss:$2 sm:$0xff]
  %s2844 = scalar_lea.vmem [#allocation4], 689
  %v2845 = vld [vmem:[%s2844] ss:$2 sm:$0xff]
  %s2846 = scalar_lea.vmem [#allocation4], 705
  %v2847 = vld [vmem:[%s2846] ss:$2 sm:$0xff]
  %s2848 = scalar_lea.vmem [#allocation4], 721
  %v2849 = vld [vmem:[%s2848] ss:$2 sm:$0xff]
  %s2850 = scalar_lea.vmem [#allocation4], 737
  %v2851 = vld [vmem:[%s2850] ss:$2 sm:$0xff]
  %s2852 = scalar_lea.vmem [#allocation4], 753
  %v2853 = vld [vmem:[%s2852] ss:$2 sm:$0xff]
  %s2854 = scalar_lea.vmem [#allocation4], 769
  %v2855 = vld [vmem:[%s2854] ss:$2 sm:$0xff]
  %s2856 = scalar_lea.vmem [#allocation4], 785
  %v2857 = vld [vmem:[%s2856] ss:$2 sm:$0xff]
  %s2858 = scalar_lea.vmem [#allocation4], 801
  %v2859 = vld [vmem:[%s2858] ss:$2 sm:$0xff]
  %s2860 = scalar_lea.vmem [#allocation4], 817
  %v2861 = vld [vmem:[%s2860] ss:$2 sm:$0xff]
  %s2862 = scalar_lea.vmem [#allocation4], 833
  %v2863 = vld [vmem:[%s2862] ss:$2 sm:$0xff]
  %s2864 = scalar_lea.vmem [#allocation4], 849
  %v2865 = vld [vmem:[%s2864] ss:$2 sm:$0xff]
  %s2866 = scalar_lea.vmem [#allocation4], 865
  %v2867 = vld [vmem:[%s2866] ss:$2 sm:$0xff]
  %s2868 = scalar_lea.vmem [#allocation4], 881
  %v2869 = vld [vmem:[%s2868] ss:$2 sm:$0xff]
  %s2870 = scalar_lea.vmem [#allocation4], 897
  %v2871 = vld [vmem:[%s2870] ss:$2 sm:$0xff]
  %s2872 = scalar_lea.vmem [#allocation4], 913
  %v2873 = vld [vmem:[%s2872] ss:$2 sm:$0xff]
  %s2874 = scalar_lea.vmem [#allocation4], 929
  %v2875 = vld [vmem:[%s2874] ss:$2 sm:$0xff]
  %s2876 = scalar_lea.vmem [#allocation4], 945
  %v2877 = vld [vmem:[%s2876] ss:$2 sm:$0xff]
  %s2878 = scalar_lea.vmem [#allocation4], 961
  %v2879 = vld [vmem:[%s2878] ss:$2 sm:$0xff]
  %s2880 = scalar_lea.vmem [#allocation4], 977
  %v2881 = vld [vmem:[%s2880] ss:$2 sm:$0xff]
  %s2882 = scalar_lea.vmem [#allocation4], 993
  %v2883 = vld [vmem:[%s2882] ss:$2 sm:$0xff]
  %s2884 = scalar_lea.vmem [#allocation4], 1009
  %v2885 = vld [vmem:[%s2884] ss:$2 sm:$0xff]
  %v2886 = vmax.f32 %v2631, %v2759
  %v2887 = vmax.f32 %v2633, %v2761
  %v2888 = vmax.f32 %v2635, %v2763
  %v2889 = vmax.f32 %v2637, %v2765
  %v2890 = vmax.f32 %v2639, %v2767
  %v2891 = vmax.f32 %v2641, %v2769
  %v2892 = vmax.f32 %v2643, %v2771
  %v2893 = vmax.f32 %v2645, %v2773
  %v2894 = vmax.f32 %v2647, %v2775
  %v2895 = vmax.f32 %v2649, %v2777
  %v2896 = vmax.f32 %v2651, %v2779
  %v2897 = vmax.f32 %v2653, %v2781
  %v2898 = vmax.f32 %v2655, %v2783
  %v2899 = vmax.f32 %v2657, %v2785
  %v2900 = vmax.f32 %v2659, %v2787
  %v2901 = vmax.f32 %v2661, %v2789
  %v2902 = vmax.f32 %v2663, %v2791
  %v2903 = vmax.f32 %v2665, %v2793
  %v2904 = vmax.f32 %v2667, %v2795
  %v2905 = vmax.f32 %v2669, %v2797
  %v2906 = vmax.f32 %v2671, %v2799
  %v2907 = vmax.f32 %v2673, %v2801
  %v2908 = vmax.f32 %v2675, %v2803
  %v2909 = vmax.f32 %v2677, %v2805
  %v2910 = vmax.f32 %v2679, %v2807
  %v2911 = vmax.f32 %v2681, %v2809
  %v2912 = vmax.f32 %v2683, %v2811
  %v2913 = vmax.f32 %v2685, %v2813
  %v2914 = vmax.f32 %v2687, %v2815
  %v2915 = vmax.f32 %v2689, %v2817
  %v2916 = vmax.f32 %v2691, %v2819
  %v2917 = vmax.f32 %v2693, %v2821
  %v2918 = vmax.f32 %v2695, %v2823
  %v2919 = vmax.f32 %v2697, %v2825
  %v2920 = vmax.f32 %v2699, %v2827
  %v2921 = vmax.f32 %v2701, %v2829
  %v2922 = vmax.f32 %v2703, %v2831
  %v2923 = vmax.f32 %v2705, %v2833
  %v2924 = vmax.f32 %v2707, %v2835
  %v2925 = vmax.f32 %v2709, %v2837
  %v2926 = vmax.f32 %v2711, %v2839
  %v2927 = vmax.f32 %v2713, %v2841
  %v2928 = vmax.f32 %v2715, %v2843
  %v2929 = vmax.f32 %v2717, %v2845
  %v2930 = vmax.f32 %v2719, %v2847
  %v2931 = vmax.f32 %v2721, %v2849
  %v2932 = vmax.f32 %v2723, %v2851
  %v2933 = vmax.f32 %v2725, %v2853
  %v2934 = vmax.f32 %v2727, %v2855
  %v2935 = vmax.f32 %v2729, %v2857
  %v2936 = vmax.f32 %v2731, %v2859
  %v2937 = vmax.f32 %v2733, %v2861
  %v2938 = vmax.f32 %v2735, %v2863
  %v2939 = vmax.f32 %v2737, %v2865
  %v2940 = vmax.f32 %v2739, %v2867
  %v2941 = vmax.f32 %v2741, %v2869
  %v2942 = vmax.f32 %v2743, %v2871
  %v2943 = vmax.f32 %v2745, %v2873
  %v2944 = vmax.f32 %v2747, %v2875
  %v2945 = vmax.f32 %v2749, %v2877
  %v2946 = vmax.f32 %v2751, %v2879
  %v2947 = vmax.f32 %v2753, %v2881
  %v2948 = vmax.f32 %v2755, %v2883
  %v2949 = vmax.f32 %v2757, %v2885
  %v2950 = vld [vmem:[%s2] sm:$0x1]
  %v2952 = vlaneseq
  %v2953 = vshrl.u32 %v2952, 7
  %v2954 = vsub.s32 0, %v2953
  %v2955 = vrot.slane %v2950, %v2954
  %v2957 = vadd.f32 %v2886, %v2955
  %v2958 = vadd.f32 %v2887, %v2955
  %v2959 = vadd.f32 %v2888, %v2955
  %v2960 = vadd.f32 %v2889, %v2955
  %v2961 = vadd.f32 %v2890, %v2955
  %v2962 = vadd.f32 %v2891, %v2955
  %v2963 = vadd.f32 %v2892, %v2955
  %v2964 = vadd.f32 %v2893, %v2955
  %v2965 = vadd.f32 %v2894, %v2955
  %v2966 = vadd.f32 %v2895, %v2955
  %v2967 = vadd.f32 %v2896, %v2955
  %v2968 = vadd.f32 %v2897, %v2955
  %v2969 = vadd.f32 %v2898, %v2955
  %v2970 = vadd.f32 %v2899, %v2955
  %v2971 = vadd.f32 %v2900, %v2955
  %v2972 = vadd.f32 %v2901, %v2955
  %v2973 = vadd.f32 %v2902, %v2955
  %v2974 = vadd.f32 %v2903, %v2955
  %v2975 = vadd.f32 %v2904, %v2955
  %v2976 = vadd.f32 %v2905, %v2955
  %v2977 = vadd.f32 %v2906, %v2955
  %v2978 = vadd.f32 %v2907, %v2955
  %v2979 = vadd.f32 %v2908, %v2955
  %v2980 = vadd.f32 %v2909, %v2955
  %v2981 = vadd.f32 %v2910, %v2955
  %v2982 = vadd.f32 %v2911, %v2955
  %v2983 = vadd.f32 %v2912, %v2955
  %v2984 = vadd.f32 %v2913, %v2955
  %v2985 = vadd.f32 %v2914, %v2955
  %v2986 = vadd.f32 %v2915, %v2955
  %v2987 = vadd.f32 %v2916, %v2955
  %v2988 = vadd.f32 %v2917, %v2955
  %v2989 = vadd.f32 %v2918, %v2955
  %v2990 = vadd.f32 %v2919, %v2955
  %v2991 = vadd.f32 %v2920, %v2955
  %v2992 = vadd.f32 %v2921, %v2955
  %v2993 = vadd.f32 %v2922, %v2955
  %v2994 = vadd.f32 %v2923, %v2955
  %v2995 = vadd.f32 %v2924, %v2955
  %v2996 = vadd.f32 %v2925, %v2955
  %v2997 = vadd.f32 %v2926, %v2955
  %v2998 = vadd.f32 %v2927, %v2955
  %v2999 = vadd.f32 %v2928, %v2955
  %v3000 = vadd.f32 %v2929, %v2955
  %v3001 = vadd.f32 %v2930, %v2955
  %v3002 = vadd.f32 %v2931, %v2955
  %v3003 = vadd.f32 %v2932, %v2955
  %v3004 = vadd.f32 %v2933, %v2955
  %v3005 = vadd.f32 %v2934, %v2955
  %v3006 = vadd.f32 %v2935, %v2955
  %v3007 = vadd.f32 %v2936, %v2955
  %v3008 = vadd.f32 %v2937, %v2955
  %v3009 = vadd.f32 %v2938, %v2955
  %v3010 = vadd.f32 %v2939, %v2955
  %v3011 = vadd.f32 %v2940, %v2955
  %v3012 = vadd.f32 %v2941, %v2955
  %v3013 = vadd.f32 %v2942, %v2955
  %v3014 = vadd.f32 %v2943, %v2955
  %v3015 = vadd.f32 %v2944, %v2955
  %v3016 = vadd.f32 %v2945, %v2955
  %v3017 = vadd.f32 %v2946, %v2955
  %v3018 = vadd.f32 %v2947, %v2955
  %v3019 = vadd.f32 %v2948, %v2955
  %v3020 = vadd.f32 %v2949, %v2955
  %v3021 = vmax.f32 %v2957, 0.0
  %v3022 = vmax.f32 %v2958, 0.0
  %v3023 = vmax.f32 %v2959, 0.0
  %v3024 = vmax.f32 %v2960, 0.0
  %v3025 = vmax.f32 %v2961, 0.0
  %v3026 = vmax.f32 %v2962, 0.0
  %v3027 = vmax.f32 %v2963, 0.0
  %v3028 = vmax.f32 %v2964, 0.0
  %v3029 = vmax.f32 %v2965, 0.0
  %v3030 = vmax.f32 %v2966, 0.0
  %v3031 = vmax.f32 %v2967, 0.0
  %v3032 = vmax.f32 %v2968, 0.0
  %v3033 = vmax.f32 %v2969, 0.0
  %v3034 = vmax.f32 %v2970, 0.0
  %v3035 = vmax.f32 %v2971, 0.0
  %v3036 = vmax.f32 %v2972, 0.0
  %v3037 = vmax.f32 %v2973, 0.0
  %v3038 = vmax.f32 %v2974, 0.0
  %v3039 = vmax.f32 %v2975, 0.0
  %v3040 = vmax.f32 %v2976, 0.0
  %v3041 = vmax.f32 %v2977, 0.0
  %v3042 = vmax.f32 %v2978, 0.0
  %v3043 = vmax.f32 %v2979, 0.0
  %v3044 = vmax.f32 %v2980, 0.0
  %v3045 = vmax.f32 %v2981, 0.0
  %v3046 = vmax.f32 %v2982, 0.0
  %v3047 = vmax.f32 %v2983, 0.0
  %v3048 = vmax.f32 %v2984, 0.0
  %v3049 = vmax.f32 %v2985, 0.0
  %v3050 = vmax.f32 %v2986, 0.0
  %v3051 = vmax.f32 %v2987, 0.0
  %v3052 = vmax.f32 %v2988, 0.0
  %v3053 = vmax.f32 %v2989, 0.0
  %v3054 = vmax.f32 %v2990, 0.0
  %v3055 = vmax.f32 %v2991, 0.0
  %v3056 = vmax.f32 %v2992, 0.0
  %v3057 = vmax.f32 %v2993, 0.0
  %v3058 = vmax.f32 %v2994, 0.0
  %v3059 = vmax.f32 %v2995, 0.0
  %v3060 = vmax.f32 %v2996, 0.0
  %v3061 = vmax.f32 %v2997, 0.0
  %v3062 = vmax.f32 %v2998, 0.0
  %v3063 = vmax.f32 %v2999, 0.0
  %v3064 = vmax.f32 %v3000, 0.0
  %v3065 = vmax.f32 %v3001, 0.0
  %v3066 = vmax.f32 %v3002, 0.0
  %v3067 = vmax.f32 %v3003, 0.0
  %v3068 = vmax.f32 %v3004, 0.0
  %v3069 = vmax.f32 %v3005, 0.0
  %v3070 = vmax.f32 %v3006, 0.0
  %v3071 = vmax.f32 %v3007, 0.0
  %v3072 = vmax.f32 %v3008, 0.0
  %v3073 = vmax.f32 %v3009, 0.0
  %v3074 = vmax.f32 %v3010, 0.0
  %v3075 = vmax.f32 %v3011, 0.0
  %v3076 = vmax.f32 %v3012, 0.0
  %v3077 = vmax.f32 %v3013, 0.0
  %v3078 = vmax.f32 %v3014, 0.0
  %v3079 = vmax.f32 %v3015, 0.0
  %v3080 = vmax.f32 %v3016, 0.0
  %v3081 = vmax.f32 %v3017, 0.0
  %v3082 = vmax.f32 %v3018, 0.0
  %v3083 = vmax.f32 %v3019, 0.0
  %v3084 = vmax.f32 %v3020, 0.0
  %3085 = vst.msk [vmem:[#allocation2] sm:$0xff] %vm933, 0.0
  %3086 = vst.msk [vmem:[#allocation2 + $0x8] sm:$0xff] %vm933, 0.0
  %vm3087 = vcmask 254976
  %3088 = vst.msk [vmem:[#allocation2 + $0x10] sm:$0x3] %vm3087, 0.0
  %3089 = vst.msk [vmem:[#allocation2 + $0x1b0] sm:$0xff] %vm933, 0.0
  %3090 = vst.msk [vmem:[#allocation2 + $0x1b8] sm:$0xff] %vm933, 0.0
  %3091 = vst.msk [vmem:[#allocation2 + $0x1c0] sm:$0x3] %vm3087, 0.0
  %s3092 = scalar_lea.vmem [#allocation2], 408
  %3093 = vst.msk [vmem:[%s3092] sm:$0xff] %vm933, 0.0
  %3094 = vst.msk [vmem:[%s3092 + $0x8] sm:$0xff] %vm933, 0.0
  %3095 = vst.msk [vmem:[%s3092 + $0x10] sm:$0x3] %vm3087, 0.0
  %3096 = vst.msk [vmem:[%s3092 + $0x1b0] sm:$0xff] %vm933, 0.0
  %3097 = vst.msk [vmem:[%s3092 + $0x1b8] sm:$0xff] %vm933, 0.0
  %3098 = vst.msk [vmem:[%s3092 + $0x1c0] sm:$0x3] %vm3087, 0.0
  %vm3099 = vcmask 253952
  %3100 = vst.msk [vmem:[#allocation2] sm:$0x1] %vm3099, 0.0
  %3101 = vst.msk [vmem:[#allocation2 + $0x18] sm:$0x1] %vm3099, 0.0
  %3102 = vst.msk [vmem:[#allocation2 + $0x30] sm:$0x1] %vm3099, 0.0
  %3103 = vst.msk [vmem:[#allocation2 + $0x48] sm:$0x1] %vm3099, 0.0
  %3104 = vst.msk [vmem:[#allocation2 + $0x60] sm:$0x1] %vm3099, 0.0
  %3105 = vst.msk [vmem:[#allocation2 + $0x78] sm:$0x1] %vm3099, 0.0
  %3106 = vst.msk [vmem:[#allocation2 + $0x90] sm:$0x1] %vm3099, 0.0
  %3107 = vst.msk [vmem:[#allocation2 + $0xa8] sm:$0x1] %vm3099, 0.0
  %3108 = vst.msk [vmem:[#allocation2 + $0xc0] sm:$0x1] %vm3099, 0.0
  %3109 = vst.msk [vmem:[#allocation2 + $0xd8] sm:$0x1] %vm3099, 0.0
  %3110 = vst.msk [vmem:[#allocation2 + $0xf0] sm:$0x1] %vm3099, 0.0
  %3111 = vst.msk [vmem:[#allocation2 + $0x108] sm:$0x1] %vm3099, 0.0
  %3112 = vst.msk [vmem:[#allocation2 + $0x120] sm:$0x1] %vm3099, 0.0
  %3113 = vst.msk [vmem:[#allocation2 + $0x138] sm:$0x1] %vm3099, 0.0
  %3114 = vst.msk [vmem:[#allocation2 + $0x150] sm:$0x1] %vm3099, 0.0
  %3115 = vst.msk [vmem:[#allocation2 + $0x168] sm:$0x1] %vm3099, 0.0
  %3116 = vst.msk [vmem:[#allocation2 + $0x180] sm:$0x1] %vm3099, 0.0
  %3117 = vst.msk [vmem:[#allocation2 + $0x198] sm:$0x1] %vm3099, 0.0
  %3118 = vst.msk [vmem:[#allocation2 + $0x1b0] sm:$0x1] %vm3099, 0.0
  %3119 = vst.msk [vmem:[#allocation2 + $0x1c8] sm:$0x1] %vm3099, 0.0
  %3120 = vst.msk [vmem:[#allocation2 + $0x1e0] sm:$0x1] %vm3099, 0.0
  %3121 = vst.msk [vmem:[#allocation2 + $0x1f8] sm:$0x1] %vm3099, 0.0
  %3122 = vst.msk [vmem:[#allocation2 + $0x210] sm:$0x1] %vm3099, 0.0
  %3123 = vst.msk [vmem:[#allocation2 + $0x228] sm:$0x1] %vm3099, 0.0
  %3124 = vst.msk [vmem:[#allocation2 + $0x240] sm:$0x1] %vm3099, 0.0
  %3125 = vst.msk [vmem:[#allocation2 + $0x258] sm:$0x1] %vm3099, 0.0
  %3126 = vst.msk [vmem:[#allocation2 + $0x270] sm:$0x1] %vm3099, 0.0
  %3127 = vst.msk [vmem:[#allocation2 + $0x288] sm:$0x1] %vm3099, 0.0
  %3128 = vst.msk [vmem:[#allocation2 + $0x2a0] sm:$0x1] %vm3099, 0.0
  %3129 = vst.msk [vmem:[#allocation2 + $0x2b8] sm:$0x1] %vm3099, 0.0
  %3130 = vst.msk [vmem:[#allocation2 + $0x2d0] sm:$0x1] %vm3099, 0.0
  %3131 = vst.msk [vmem:[#allocation2 + $0x2e8] sm:$0x1] %vm3099, 0.0
  %3132 = vst.msk [vmem:[#allocation2 + $0x300] sm:$0x1] %vm3099, 0.0
  %3133 = vst.msk [vmem:[#allocation2 + $0x318] sm:$0x1] %vm3099, 0.0
  %3134 = vst.msk [vmem:[#allocation2 + $0x330] sm:$0x1] %vm3099, 0.0
  %3135 = vst.msk [vmem:[#allocation2 + $0x348] sm:$0x1] %vm3099, 0.0
  %3136 = vst.msk [vmem:[#allocation2 + $0x11] sm:$0x1] %vm3099, 0.0
  %3137 = vst.msk [vmem:[#allocation2 + $0x29] sm:$0x1] %vm3099, 0.0
  %3138 = vst.msk [vmem:[#allocation2 + $0x41] sm:$0x1] %vm3099, 0.0
  %3139 = vst.msk [vmem:[#allocation2 + $0x59] sm:$0x1] %vm3099, 0.0
  %3140 = vst.msk [vmem:[#allocation2 + $0x71] sm:$0x1] %vm3099, 0.0
  %3141 = vst.msk [vmem:[#allocation2 + $0x89] sm:$0x1] %vm3099, 0.0
  %3142 = vst.msk [vmem:[#allocation2 + $0xa1] sm:$0x1] %vm3099, 0.0
  %3143 = vst.msk [vmem:[#allocation2 + $0xb9] sm:$0x1] %vm3099, 0.0
  %3144 = vst.msk [vmem:[#allocation2 + $0xd1] sm:$0x1] %vm3099, 0.0
  %3145 = vst.msk [vmem:[#allocation2 + $0xe9] sm:$0x1] %vm3099, 0.0
  %3146 = vst.msk [vmem:[#allocation2 + $0x101] sm:$0x1] %vm3099, 0.0
  %3147 = vst.msk [vmem:[#allocation2 + $0x119] sm:$0x1] %vm3099, 0.0
  %3148 = vst.msk [vmem:[#allocation2 + $0x131] sm:$0x1] %vm3099, 0.0
  %3149 = vst.msk [vmem:[#allocation2 + $0x149] sm:$0x1] %vm3099, 0.0
  %3150 = vst.msk [vmem:[#allocation2 + $0x161] sm:$0x1] %vm3099, 0.0
  %3151 = vst.msk [vmem:[#allocation2 + $0x179] sm:$0x1] %vm3099, 0.0
  %3152 = vst.msk [vmem:[#allocation2 + $0x191] sm:$0x1] %vm3099, 0.0
  %3153 = vst.msk [vmem:[#allocation2 + $0x1a9] sm:$0x1] %vm3099, 0.0
  %3154 = vst.msk [vmem:[#allocation2 + $0x1c1] sm:$0x1] %vm3099, 0.0
  %3155 = vst.msk [vmem:[#allocation2 + $0x1d9] sm:$0x1] %vm3099, 0.0
  %3156 = vst.msk [vmem:[#allocation2 + $0x1f1] sm:$0x1] %vm3099, 0.0
  %3157 = vst.msk [vmem:[#allocation2 + $0x209] sm:$0x1] %vm3099, 0.0
  %3158 = vst.msk [vmem:[#allocation2 + $0x221] sm:$0x1] %vm3099, 0.0
  %3159 = vst.msk [vmem:[#allocation2 + $0x239] sm:$0x1] %vm3099, 0.0
  %3160 = vst.msk [vmem:[#allocation2 + $0x251] sm:$0x1] %vm3099, 0.0
  %3161 = vst.msk [vmem:[#allocation2 + $0x269] sm:$0x1] %vm3099, 0.0
  %3162 = vst.msk [vmem:[#allocation2 + $0x281] sm:$0x1] %vm3099, 0.0
  %3163 = vst.msk [vmem:[#allocation2 + $0x299] sm:$0x1] %vm3099, 0.0
  %3164 = vst.msk [vmem:[#allocation2 + $0x2b1] sm:$0x1] %vm3099, 0.0
  %3165 = vst.msk [vmem:[#allocation2 + $0x2c9] sm:$0x1] %vm3099, 0.0
  %3166 = vst.msk [vmem:[#allocation2 + $0x2e1] sm:$0x1] %vm3099, 0.0
  %3167 = vst.msk [vmem:[#allocation2 + $0x2f9] sm:$0x1] %vm3099, 0.0
  %3168 = vst.msk [vmem:[#allocation2 + $0x311] sm:$0x1] %vm3099, 0.0
  %3169 = vst.msk [vmem:[#allocation2 + $0x329] sm:$0x1] %vm3099, 0.0
  %3170 = vst.msk [vmem:[#allocation2 + $0x341] sm:$0x1] %vm3099, 0.0
  %3171 = vst.msk [vmem:[#allocation2 + $0x359] sm:$0x1] %vm3099, 0.0
  %s3172 = scalar_lea.vmem [#allocation2], 24
  %3173 = vst.msk [vmem:[%s3172 + $0x1] sm:$0xff] %vm933, %v3021
  %3174 = vst.msk [vmem:[%s3172 + $0x9] sm:$0xff] %vm933, %v3022
  %3175 = vst.msk [vmem:[%s3172 + $0x19] sm:$0xff] %vm933, %v3023
  %3176 = vst.msk [vmem:[%s3172 + $0x21] sm:$0xff] %vm933, %v3024
  %3177 = vst.msk [vmem:[%s3172 + $0x31] sm:$0xff] %vm933, %v3025
  %3178 = vst.msk [vmem:[%s3172 + $0x39] sm:$0xff] %vm933, %v3026
  %3179 = vst.msk [vmem:[%s3172 + $0x49] sm:$0xff] %vm933, %v3027
  %3180 = vst.msk [vmem:[%s3172 + $0x51] sm:$0xff] %vm933, %v3028
  %3181 = vst.msk [vmem:[%s3172 + $0x61] sm:$0xff] %vm933, %v3029
  %3182 = vst.msk [vmem:[%s3172 + $0x69] sm:$0xff] %vm933, %v3030
  %3183 = vst.msk [vmem:[%s3172 + $0x79] sm:$0xff] %vm933, %v3031
  %3184 = vst.msk [vmem:[%s3172 + $0x81] sm:$0xff] %vm933, %v3032
  %3185 = vst.msk [vmem:[%s3172 + $0x91] sm:$0xff] %vm933, %v3033
  %3186 = vst.msk [vmem:[%s3172 + $0x99] sm:$0xff] %vm933, %v3034
  %3187 = vst.msk [vmem:[%s3172 + $0xa9] sm:$0xff] %vm933, %v3035
  %3188 = vst.msk [vmem:[%s3172 + $0xb1] sm:$0xff] %vm933, %v3036
  %3189 = vst.msk [vmem:[%s3172 + $0xc1] sm:$0xff] %vm933, %v3037
  %3190 = vst.msk [vmem:[%s3172 + $0xc9] sm:$0xff] %vm933, %v3038
  %3191 = vst.msk [vmem:[%s3172 + $0xd9] sm:$0xff] %vm933, %v3039
  %3192 = vst.msk [vmem:[%s3172 + $0xe1] sm:$0xff] %vm933, %v3040
  %3193 = vst.msk [vmem:[%s3172 + $0xf1] sm:$0xff] %vm933, %v3041
  %3194 = vst.msk [vmem:[%s3172 + $0xf9] sm:$0xff] %vm933, %v3042
  %3195 = vst.msk [vmem:[%s3172 + $0x109] sm:$0xff] %vm933, %v3043
  %3196 = vst.msk [vmem:[%s3172 + $0x111] sm:$0xff] %vm933, %v3044
  %3197 = vst.msk [vmem:[%s3172 + $0x121] sm:$0xff] %vm933, %v3045
  %3198 = vst.msk [vmem:[%s3172 + $0x129] sm:$0xff] %vm933, %v3046
  %3199 = vst.msk [vmem:[%s3172 + $0x139] sm:$0xff] %vm933, %v3047
  %3200 = vst.msk [vmem:[%s3172 + $0x141] sm:$0xff] %vm933, %v3048
  %3201 = vst.msk [vmem:[%s3172 + $0x151] sm:$0xff] %vm933, %v3049
  %3202 = vst.msk [vmem:[%s3172 + $0x159] sm:$0xff] %vm933, %v3050
  %3203 = vst.msk [vmem:[%s3172 + $0x169] sm:$0xff] %vm933, %v3051
  %3204 = vst.msk [vmem:[%s3172 + $0x171] sm:$0xff] %vm933, %v3052
  %3205 = vst.msk [vmem:[%s3172 + $0x1b1] sm:$0xff] %vm933, %v3053
  %3206 = vst.msk [vmem:[%s3172 + $0x1b9] sm:$0xff] %vm933, %v3054
  %3207 = vst.msk [vmem:[%s3172 + $0x1c9] sm:$0xff] %vm933, %v3055
  %3208 = vst.msk [vmem:[%s3172 + $0x1d1] sm:$0xff] %vm933, %v3056
  %3209 = vst.msk [vmem:[%s3172 + $0x1e1] sm:$0xff] %vm933, %v3057
  %3210 = vst.msk [vmem:[%s3172 + $0x1e9] sm:$0xff] %vm933, %v3058
  %3211 = vst.msk [vmem:[%s3172 + $0x1f9] sm:$0xff] %vm933, %v3059
  %3212 = vst.msk [vmem:[%s3172 + $0x201] sm:$0xff] %vm933, %v3060
  %3213 = vst.msk [vmem:[%s3172 + $0x211] sm:$0xff] %vm933, %v3061
  %3214 = vst.msk [vmem:[%s3172 + $0x219] sm:$0xff] %vm933, %v3062
  %3215 = vst.msk [vmem:[%s3172 + $0x229] sm:$0xff] %vm933, %v3063
  %3216 = vst.msk [vmem:[%s3172 + $0x231] sm:$0xff] %vm933, %v3064
  %3217 = vst.msk [vmem:[%s3172 + $0x241] sm:$0xff] %vm933, %v3065
  %3218 = vst.msk [vmem:[%s3172 + $0x249] sm:$0xff] %vm933, %v3066
  %3219 = vst.msk [vmem:[%s3172 + $0x259] sm:$0xff] %vm933, %v3067
  %3220 = vst.msk [vmem:[%s3172 + $0x261] sm:$0xff] %vm933, %v3068
  %3221 = vst.msk [vmem:[%s3172 + $0x271] sm:$0xff] %vm933, %v3069
  %3222 = vst.msk [vmem:[%s3172 + $0x279] sm:$0xff] %vm933, %v3070
  %3223 = vst.msk [vmem:[%s3172 + $0x289] sm:$0xff] %vm933, %v3071
  %3224 = vst.msk [vmem:[%s3172 + $0x291] sm:$0xff] %vm933, %v3072
  %3225 = vst.msk [vmem:[%s3172 + $0x2a1] sm:$0xff] %vm933, %v3073
  %3226 = vst.msk [vmem:[%s3172 + $0x2a9] sm:$0xff] %vm933, %v3074
  %3227 = vst.msk [vmem:[%s3172 + $0x2b9] sm:$0xff] %vm933, %v3075
  %3228 = vst.msk [vmem:[%s3172 + $0x2c1] sm:$0xff] %vm933, %v3076
  %3229 = vst.msk [vmem:[%s3172 + $0x2d1] sm:$0xff] %vm933, %v3077
  %3230 = vst.msk [vmem:[%s3172 + $0x2d9] sm:$0xff] %vm933, %v3078
  %3231 = vst.msk [vmem:[%s3172 + $0x2e9] sm:$0xff] %vm933, %v3079
  %3232 = vst.msk [vmem:[%s3172 + $0x2f1] sm:$0xff] %vm933, %v3080
  %3233 = vst.msk [vmem:[%s3172 + $0x301] sm:$0xff] %vm933, %v3081
  %3234 = vst.msk [vmem:[%s3172 + $0x309] sm:$0xff] %vm933, %v3082
  %3235 = vst.msk [vmem:[%s3172 + $0x319] sm:$0xff] %vm933, %v3083
  %3236 = vst.msk [vmem:[%s3172 + $0x321] sm:$0xff] %vm933, %v3084
  %v3237 = vld [vmem:[#allocation2] sm:$0xff]
  %v3238 = vld [vmem:[#allocation2 + $0x8] sm:$0xff]
  %v3239 = vld [vmem:[#allocation2 + $0x18] sm:$0xff]
  %v3240 = vld [vmem:[#allocation2 + $0x20] sm:$0xff]
  %v3241 = vld [vmem:[#allocation2 + $0x30] sm:$0xff]
  %v3242 = vld [vmem:[#allocation2 + $0x38] sm:$0xff]
  %v3243 = vld [vmem:[#allocation2 + $0x48] sm:$0xff]
  %v3244 = vld [vmem:[#allocation2 + $0x50] sm:$0xff]
  %v3245 = vld [vmem:[#allocation2 + $0x60] sm:$0xff]
  %v3246 = vld [vmem:[#allocation2 + $0x68] sm:$0xff]
  %v3247 = vld [vmem:[#allocation2 + $0x78] sm:$0xff]
  %v3248 = vld [vmem:[#allocation2 + $0x80] sm:$0xff]
  %v3249 = vld [vmem:[#allocation2 + $0x90] sm:$0xff]
  %v3250 = vld [vmem:[#allocation2 + $0x98] sm:$0xff]
  %v3251 = vld [vmem:[#allocation2 + $0xa8] sm:$0xff]
  %v3252 = vld [vmem:[#allocation2 + $0xb0] sm:$0xff]
  %v3253 = vld [vmem:[#allocation2 + $0xc0] sm:$0xff]
  %v3254 = vld [vmem:[#allocation2 + $0xc8] sm:$0xff]
  %v3255 = vld [vmem:[#allocation2 + $0xd8] sm:$0xff]
  %v3256 = vld [vmem:[#allocation2 + $0xe0] sm:$0xff]
  %v3257 = vld [vmem:[#allocation2 + $0xf0] sm:$0xff]
  %v3258 = vld [vmem:[#allocation2 + $0xf8] sm:$0xff]
  %v3259 = vld [vmem:[#allocation2 + $0x108] sm:$0xff]
  %v3260 = vld [vmem:[#allocation2 + $0x110] sm:$0xff]
  %v3261 = vld [vmem:[#allocation2 + $0x120] sm:$0xff]
  %v3262 = vld [vmem:[#allocation2 + $0x128] sm:$0xff]
  %v3263 = vld [vmem:[#allocation2 + $0x138] sm:$0xff]
  %v3264 = vld [vmem:[#allocation2 + $0x140] sm:$0xff]
  %v3265 = vld [vmem:[#allocation2 + $0x150] sm:$0xff]
  %v3266 = vld [vmem:[#allocation2 + $0x158] sm:$0xff]
  %v3267 = vld [vmem:[#allocation2 + $0x168] sm:$0xff]
  %v3268 = vld [vmem:[#allocation2 + $0x170] sm:$0xff]
  %v3269 = vld [vmem:[#allocation2 + $0x1b0] sm:$0xff]
  %v3270 = vld [vmem:[#allocation2 + $0x1b8] sm:$0xff]
  %v3271 = vld [vmem:[#allocation2 + $0x1c8] sm:$0xff]
  %v3272 = vld [vmem:[#allocation2 + $0x1d0] sm:$0xff]
  %v3273 = vld [vmem:[#allocation2 + $0x1e0] sm:$0xff]
  %v3274 = vld [vmem:[#allocation2 + $0x1e8] sm:$0xff]
  %v3275 = vld [vmem:[#allocation2 + $0x1f8] sm:$0xff]
  %v3276 = vld [vmem:[#allocation2 + $0x200] sm:$0xff]
  %v3277 = vld [vmem:[#allocation2 + $0x210] sm:$0xff]
  %v3278 = vld [vmem:[#allocation2 + $0x218] sm:$0xff]
  %v3279 = vld [vmem:[#allocation2 + $0x228] sm:$0xff]
  %v3280 = vld [vmem:[#allocation2 + $0x230] sm:$0xff]
  %v3281 = vld [vmem:[#allocation2 + $0x240] sm:$0xff]
  %v3282 = vld [vmem:[#allocation2 + $0x248] sm:$0xff]
  %v3283 = vld [vmem:[#allocation2 + $0x258] sm:$0xff]
  %v3284 = vld [vmem:[#allocation2 + $0x260] sm:$0xff]
  %v3285 = vld [vmem:[#allocation2 + $0x270] sm:$0xff]
  %v3286 = vld [vmem:[#allocation2 + $0x278] sm:$0xff]
  %v3287 = vld [vmem:[#allocation2 + $0x288] sm:$0xff]
  %v3288 = vld [vmem:[#allocation2 + $0x290] sm:$0xff]
  %v3289 = vld [vmem:[#allocation2 + $0x2a0] sm:$0xff]
  %v3290 = vld [vmem:[#allocation2 + $0x2a8] sm:$0xff]
  %v3291 = vld [vmem:[#allocation2 + $0x2b8] sm:$0xff]
  %v3292 = vld [vmem:[#allocation2 + $0x2c0] sm:$0xff]
  %v3293 = vld [vmem:[#allocation2 + $0x2d0] sm:$0xff]
  %v3294 = vld [vmem:[#allocation2 + $0x2d8] sm:$0xff]
  %v3295 = vld [vmem:[#allocation2 + $0x2e8] sm:$0xff]
  %v3296 = vld [vmem:[#allocation2 + $0x2f0] sm:$0xff]
  %v3297 = vld [vmem:[#allocation2 + $0x300] sm:$0xff]
  %v3298 = vld [vmem:[#allocation2 + $0x308] sm:$0xff]
  %v3299 = vld [vmem:[#allocation2 + $0x318] sm:$0xff]
  %v3300 = vld [vmem:[#allocation2 + $0x320] sm:$0xff]
  %v3301 = vpack.c.bf16 %v3238, %v3237
  %v3302 = vpack.c.bf16 %v3240, %v3239
  %v3303 = vpack.c.bf16 %v3242, %v3241
  %v3304 = vpack.c.bf16 %v3244, %v3243
  %v3305 = vpack.c.bf16 %v3246, %v3245
  %v3306 = vpack.c.bf16 %v3248, %v3247
  %v3307 = vpack.c.bf16 %v3250, %v3249
  %v3308 = vpack.c.bf16 %v3252, %v3251
  %v3309 = vpack.c.bf16 %v3254, %v3253
  %v3310 = vpack.c.bf16 %v3256, %v3255
  %v3311 = vpack.c.bf16 %v3258, %v3257
  %v3312 = vpack.c.bf16 %v3260, %v3259
  %v3313 = vpack.c.bf16 %v3262, %v3261
  %v3314 = vpack.c.bf16 %v3264, %v3263
  %v3315 = vpack.c.bf16 %v3266, %v3265
  %v3316 = vpack.c.bf16 %v3268, %v3267
  %v3317 = vpack.c.bf16 %v3270, %v3269
  %v3318 = vpack.c.bf16 %v3272, %v3271
  %v3319 = vpack.c.bf16 %v3274, %v3273
  %v3320 = vpack.c.bf16 %v3276, %v3275
  %v3321 = vpack.c.bf16 %v3278, %v3277
  %v3322 = vpack.c.bf16 %v3280, %v3279
  %v3323 = vpack.c.bf16 %v3282, %v3281
  %v3324 = vpack.c.bf16 %v3284, %v3283
  %v3325 = vpack.c.bf16 %v3286, %v3285
  %v3326 = vpack.c.bf16 %v3288, %v3287
  %v3327 = vpack.c.bf16 %v3290, %v3289
  %v3328 = vpack.c.bf16 %v3292, %v3291
  %v3329 = vpack.c.bf16 %v3294, %v3293
  %v3330 = vpack.c.bf16 %v3296, %v3295
  %v3331 = vpack.c.bf16 %v3298, %v3297
  %v3332 = vpack.c.bf16 %v3300, %v3299
  %v3365 = vunpack.c.l.b16 %v3301
  %v3366 = vunpack.c.h.b16 %v3301
  %v3367 = vunpack.c.l.b16 %v3302
  %v3368 = vunpack.c.h.b16 %v3302
  %v3369 = vunpack.c.l.b16 %v3303
  %v3370 = vunpack.c.h.b16 %v3303
  %v3371 = vunpack.c.l.b16 %v3304
  %v3372 = vunpack.c.h.b16 %v3304
  %v3373 = vunpack.c.l.b16 %v3305
  %v3374 = vunpack.c.h.b16 %v3305
  %v3375 = vunpack.c.l.b16 %v3306
  %v3376 = vunpack.c.h.b16 %v3306
  %v3377 = vunpack.c.l.b16 %v3307
  %v3378 = vunpack.c.h.b16 %v3307
  %v3379 = vunpack.c.l.b16 %v3308
  %v3380 = vunpack.c.h.b16 %v3308
  %v3381 = vunpack.c.l.b16 %v3309
  %v3382 = vunpack.c.h.b16 %v3309
  %v3383 = vunpack.c.l.b16 %v3310
  %v3384 = vunpack.c.h.b16 %v3310
  %v3385 = vunpack.c.l.b16 %v3311
  %v3386 = vunpack.c.h.b16 %v3311
  %v3387 = vunpack.c.l.b16 %v3312
  %v3388 = vunpack.c.h.b16 %v3312
  %v3389 = vunpack.c.l.b16 %v3313
  %v3390 = vunpack.c.h.b16 %v3313
  %v3391 = vunpack.c.l.b16 %v3314
  %v3392 = vunpack.c.h.b16 %v3314
  %v3393 = vunpack.c.l.b16 %v3315
  %v3394 = vunpack.c.h.b16 %v3315
  %v3395 = vunpack.c.l.b16 %v3316
  %v3396 = vunpack.c.h.b16 %v3316
  %v3397 = vunpack.c.l.b16 %v3317
  %v3398 = vunpack.c.h.b16 %v3317
  %v3399 = vunpack.c.l.b16 %v3318
  %v3400 = vunpack.c.h.b16 %v3318
  %v3401 = vunpack.c.l.b16 %v3319
  %v3402 = vunpack.c.h.b16 %v3319
  %v3403 = vunpack.c.l.b16 %v3320
  %v3404 = vunpack.c.h.b16 %v3320
  %v3405 = vunpack.c.l.b16 %v3321
  %v3406 = vunpack.c.h.b16 %v3321
  %v3407 = vunpack.c.l.b16 %v3322
  %v3408 = vunpack.c.h.b16 %v3322
  %v3409 = vunpack.c.l.b16 %v3323
  %v3410 = vunpack.c.h.b16 %v3323
  %v3411 = vunpack.c.l.b16 %v3324
  %v3412 = vunpack.c.h.b16 %v3324
  %v3413 = vunpack.c.l.b16 %v3325
  %v3414 = vunpack.c.h.b16 %v3325
  %v3415 = vunpack.c.l.b16 %v3326
  %v3416 = vunpack.c.h.b16 %v3326
  %v3417 = vunpack.c.l.b16 %v3327
  %v3418 = vunpack.c.h.b16 %v3327
  %v3419 = vunpack.c.l.b16 %v3328
  %v3420 = vunpack.c.h.b16 %v3328
  %v3421 = vunpack.c.l.b16 %v3329
  %v3422 = vunpack.c.h.b16 %v3329
  %v3423 = vunpack.c.l.b16 %v3330
  %v3424 = vunpack.c.h.b16 %v3330
  %v3425 = vunpack.c.l.b16 %v3331
  %v3426 = vunpack.c.h.b16 %v3331
  %v3427 = vunpack.c.l.b16 %v3332
  %v3428 = vunpack.c.h.b16 %v3332
  %v3429 = vpack.c.b16 %v3365, %v3365
  %v3430 = vpack.c.b16 %v3366, %v3366
  %v3431 = vpack.c.b16 %v3367, %v3367
  %v3432 = vpack.c.b16 %v3368, %v3368
  %v3433 = vpack.c.b16 %v3369, %v3369
  %v3434 = vpack.c.b16 %v3370, %v3370
  %v3435 = vpack.c.b16 %v3371, %v3371
  %v3436 = vpack.c.b16 %v3372, %v3372
  %v3437 = vpack.c.b16 %v3373, %v3373
  %v3438 = vpack.c.b16 %v3374, %v3374
  %v3439 = vpack.c.b16 %v3375, %v3375
  %v3440 = vpack.c.b16 %v3376, %v3376
  %v3441 = vpack.c.b16 %v3377, %v3377
  %v3442 = vpack.c.b16 %v3378, %v3378
  %v3443 = vpack.c.b16 %v3379, %v3379
  %v3444 = vpack.c.b16 %v3380, %v3380
  %v3445 = vpack.c.b16 %v3381, %v3381
  %v3446 = vpack.c.b16 %v3382, %v3382
  %v3447 = vpack.c.b16 %v3383, %v3383
  %v3448 = vpack.c.b16 %v3384, %v3384
  %v3449 = vpack.c.b16 %v3385, %v3385
  %v3450 = vpack.c.b16 %v3386, %v3386
  %v3451 = vpack.c.b16 %v3387, %v3387
  %v3452 = vpack.c.b16 %v3388, %v3388
  %v3453 = vpack.c.b16 %v3389, %v3389
  %v3454 = vpack.c.b16 %v3390, %v3390
  %v3455 = vpack.c.b16 %v3391, %v3391
  %v3456 = vpack.c.b16 %v3392, %v3392
  %v3457 = vpack.c.b16 %v3393, %v3393
  %v3458 = vpack.c.b16 %v3394, %v3394
  %v3459 = vpack.c.b16 %v3395, %v3395
  %v3460 = vpack.c.b16 %v3396, %v3396
  %v3461 = vpack.c.b16 %v3397, %v3397
  %v3462 = vpack.c.b16 %v3398, %v3398
  %v3463 = vpack.c.b16 %v3399, %v3399
  %v3464 = vpack.c.b16 %v3400, %v3400
  %v3465 = vpack.c.b16 %v3401, %v3401
  %v3466 = vpack.c.b16 %v3402, %v3402
  %v3467 = vpack.c.b16 %v3403, %v3403
  %v3468 = vpack.c.b16 %v3404, %v3404
  %v3469 = vpack.c.b16 %v3405, %v3405
  %v3470 = vpack.c.b16 %v3406, %v3406
  %v3471 = vpack.c.b16 %v3407, %v3407
  %v3472 = vpack.c.b16 %v3408, %v3408
  %v3473 = vpack.c.b16 %v3409, %v3409
  %v3474 = vpack.c.b16 %v3410, %v3410
  %v3475 = vpack.c.b16 %v3411, %v3411
  %v3476 = vpack.c.b16 %v3412, %v3412
  %v3477 = vpack.c.b16 %v3413, %v3413
  %v3478 = vpack.c.b16 %v3414, %v3414
  %v3479 = vpack.c.b16 %v3415, %v3415
  %v3480 = vpack.c.b16 %v3416, %v3416
  %v3481 = vpack.c.b16 %v3417, %v3417
  %v3482 = vpack.c.b16 %v3418, %v3418
  %v3483 = vpack.c.b16 %v3419, %v3419
  %v3484 = vpack.c.b16 %v3420, %v3420
  %v3485 = vpack.c.b16 %v3421, %v3421
  %v3486 = vpack.c.b16 %v3422, %v3422
  %v3487 = vpack.c.b16 %v3423, %v3423
  %v3488 = vpack.c.b16 %v3424, %v3424
  %v3489 = vpack.c.b16 %v3425, %v3425
  %v3490 = vpack.c.b16 %v3426, %v3426
  %v3491 = vpack.c.b16 %v3427, %v3427
  %v3492 = vpack.c.b16 %v3428, %v3428
  %vm3557 = vcmask 257024
  %3558 = vst.msk [vmem:[#allocation3] sm:$0xf] %vm3557, %v3429
  %3559 = vst.msk [vmem:[#allocation3 + $0xc] sm:$0xf] %vm3557, %v3430
  %3560 = vst.msk [vmem:[#allocation3 + $0x18] sm:$0xf] %vm3557, %v3431
  %3561 = vst.msk [vmem:[#allocation3 + $0x24] sm:$0xf] %vm3557, %v3432
  %3562 = vst.msk [vmem:[#allocation3 + $0x30] sm:$0xf] %vm3557, %v3433
  %3563 = vst.msk [vmem:[#allocation3 + $0x3c] sm:$0xf] %vm3557, %v3434
  %3564 = vst.msk [vmem:[#allocation3 + $0x48] sm:$0xf] %vm3557, %v3435
  %3565 = vst.msk [vmem:[#allocation3 + $0x54] sm:$0xf] %vm3557, %v3436
  %3566 = vst.msk [vmem:[#allocation3 + $0x60] sm:$0xf] %vm3557, %v3437
  %3567 = vst.msk [vmem:[#allocation3 + $0x6c] sm:$0xf] %vm3557, %v3438
  %3568 = vst.msk [vmem:[#allocation3 + $0x78] sm:$0xf] %vm3557, %v3439
  %3569 = vst.msk [vmem:[#allocation3 + $0x84] sm:$0xf] %vm3557, %v3440
  %3570 = vst.msk [vmem:[#allocation3 + $0x90] sm:$0xf] %vm3557, %v3441
  %3571 = vst.msk [vmem:[#allocation3 + $0x9c] sm:$0xf] %vm3557, %v3442
  %3572 = vst.msk [vmem:[#allocation3 + $0xa8] sm:$0xf] %vm3557, %v3443
  %3573 = vst.msk [vmem:[#allocation3 + $0xb4] sm:$0xf] %vm3557, %v3444
  %3574 = vst.msk [vmem:[#allocation3 + $0xc0] sm:$0xf] %vm3557, %v3445
  %3575 = vst.msk [vmem:[#allocation3 + $0xcc] sm:$0xf] %vm3557, %v3446
  %3576 = vst.msk [vmem:[#allocation3 + $0xd8] sm:$0xf] %vm3557, %v3447
  %3577 = vst.msk [vmem:[#allocation3 + $0xe4] sm:$0xf] %vm3557, %v3448
  %3578 = vst.msk [vmem:[#allocation3 + $0xf0] sm:$0xf] %vm3557, %v3449
  %3579 = vst.msk [vmem:[#allocation3 + $0xfc] sm:$0xf] %vm3557, %v3450
  %3580 = vst.msk [vmem:[#allocation3 + $0x108] sm:$0xf] %vm3557, %v3451
  %3581 = vst.msk [vmem:[#allocation3 + $0x114] sm:$0xf] %vm3557, %v3452
  %3582 = vst.msk [vmem:[#allocation3 + $0x120] sm:$0xf] %vm3557, %v3453
  %3583 = vst.msk [vmem:[#allocation3 + $0x12c] sm:$0xf] %vm3557, %v3454
  %3584 = vst.msk [vmem:[#allocation3 + $0x138] sm:$0xf] %vm3557, %v3455
  %3585 = vst.msk [vmem:[#allocation3 + $0x144] sm:$0xf] %vm3557, %v3456
  %3586 = vst.msk [vmem:[#allocation3 + $0x150] sm:$0xf] %vm3557, %v3457
  %3587 = vst.msk [vmem:[#allocation3 + $0x15c] sm:$0xf] %vm3557, %v3458
  %3588 = vst.msk [vmem:[#allocation3 + $0x168] sm:$0xf] %vm3557, %v3459
  %3589 = vst.msk [vmem:[#allocation3 + $0x174] sm:$0xf] %vm3557, %v3460
  %3590 = vst.msk [vmem:[#allocation3 + $0x180] sm:$0xf] %vm3557, %v3461
  %3591 = vst.msk [vmem:[#allocation3 + $0x18c] sm:$0xf] %vm3557, %v3462
  %3592 = vst.msk [vmem:[#allocation3 + $0x198] sm:$0xf] %vm3557, %v3463
  %3593 = vst.msk [vmem:[#allocation3 + $0x1a4] sm:$0xf] %vm3557, %v3464
  %3594 = vst.msk [vmem:[#allocation3 + $0x1b0] sm:$0xf] %vm3557, %v3465
  %3595 = vst.msk [vmem:[#allocation3 + $0x1bc] sm:$0xf] %vm3557, %v3466
  %3596 = vst.msk [vmem:[#allocation3 + $0x1c8] sm:$0xf] %vm3557, %v3467
  %3597 = vst.msk [vmem:[#allocation3 + $0x1d4] sm:$0xf] %vm3557, %v3468
  %3598 = vst.msk [vmem:[#allocation3 + $0x1e0] sm:$0xf] %vm3557, %v3469
  %3599 = vst.msk [vmem:[#allocation3 + $0x1ec] sm:$0xf] %vm3557, %v3470
  %3600 = vst.msk [vmem:[#allocation3 + $0x1f8] sm:$0xf] %vm3557, %v3471
  %3601 = vst.msk [vmem:[#allocation3 + $0x204] sm:$0xf] %vm3557, %v3472
  %3602 = vst.msk [vmem:[#allocation3 + $0x210] sm:$0xf] %vm3557, %v3473
  %3603 = vst.msk [vmem:[#allocation3 + $0x21c] sm:$0xf] %vm3557, %v3474
  %3604 = vst.msk [vmem:[#allocation3 + $0x228] sm:$0xf] %vm3557, %v3475
  %3605 = vst.msk [vmem:[#allocation3 + $0x234] sm:$0xf] %vm3557, %v3476
  %3606 = vst.msk [vmem:[#allocation3 + $0x240] sm:$0xf] %vm3557, %v3477
  %3607 = vst.msk [vmem:[#allocation3 + $0x24c] sm:$0xf] %vm3557, %v3478
  %3608 = vst.msk [vmem:[#allocation3 + $0x258] sm:$0xf] %vm3557, %v3479
  %3609 = vst.msk [vmem:[#allocation3 + $0x264] sm:$0xf] %vm3557, %v3480
  %3610 = vst.msk [vmem:[#allocation3 + $0x270] sm:$0xf] %vm3557, %v3481
  %3611 = vst.msk [vmem:[#allocation3 + $0x27c] sm:$0xf] %vm3557, %v3482
  %3612 = vst.msk [vmem:[#allocation3 + $0x288] sm:$0xf] %vm3557, %v3483
  %3613 = vst.msk [vmem:[#allocation3 + $0x294] sm:$0xf] %vm3557, %v3484
  %3614 = vst.msk [vmem:[#allocation3 + $0x2a0] sm:$0xf] %vm3557, %v3485
  %3615 = vst.msk [vmem:[#allocation3 + $0x2ac] sm:$0xf] %vm3557, %v3486
  %3616 = vst.msk [vmem:[#allocation3 + $0x2b8] sm:$0xf] %vm3557, %v3487
  %3617 = vst.msk [vmem:[#allocation3 + $0x2c4] sm:$0xf] %vm3557, %v3488
  %3618 = vst.msk [vmem:[#allocation3 + $0x2d0] sm:$0xf] %vm3557, %v3489
  %3619 = vst.msk [vmem:[#allocation3 + $0x2dc] sm:$0xf] %vm3557, %v3490
  %3620 = vst.msk [vmem:[#allocation3 + $0x2e8] sm:$0xf] %vm3557, %v3491
  %3621 = vst.msk [vmem:[#allocation3 + $0x2f4] sm:$0xf] %vm3557, %v3492
  %v3622 = vld [vmem:[#allocation2 + $0x1] sm:$0xff]
  %v3623 = vld [vmem:[#allocation2 + $0x9] sm:$0xff]
  %v3624 = vld [vmem:[#allocation2 + $0x19] sm:$0xff]
  %v3625 = vld [vmem:[#allocation2 + $0x21] sm:$0xff]
  %v3626 = vld [vmem:[#allocation2 + $0x31] sm:$0xff]
  %v3627 = vld [vmem:[#allocation2 + $0x39] sm:$0xff]
  %v3628 = vld [vmem:[#allocation2 + $0x49] sm:$0xff]
  %v3629 = vld [vmem:[#allocation2 + $0x51] sm:$0xff]
  %v3630 = vld [vmem:[#allocation2 + $0x61] sm:$0xff]
  %v3631 = vld [vmem:[#allocation2 + $0x69] sm:$0xff]
  %v3632 = vld [vmem:[#allocation2 + $0x79] sm:$0xff]
  %v3633 = vld [vmem:[#allocation2 + $0x81] sm:$0xff]
  %v3634 = vld [vmem:[#allocation2 + $0x91] sm:$0xff]
  %v3635 = vld [vmem:[#allocation2 + $0x99] sm:$0xff]
  %v3636 = vld [vmem:[#allocation2 + $0xa9] sm:$0xff]
  %v3637 = vld [vmem:[#allocation2 + $0xb1] sm:$0xff]
  %v3638 = vld [vmem:[#allocation2 + $0xc1] sm:$0xff]
  %v3639 = vld [vmem:[#allocation2 + $0xc9] sm:$0xff]
  %v3640 = vld [vmem:[#allocation2 + $0xd9] sm:$0xff]
  %v3641 = vld [vmem:[#allocation2 + $0xe1] sm:$0xff]
  %v3642 = vld [vmem:[#allocation2 + $0xf1] sm:$0xff]
  %v3643 = vld [vmem:[#allocation2 + $0xf9] sm:$0xff]
  %v3644 = vld [vmem:[#allocation2 + $0x109] sm:$0xff]
  %v3645 = vld [vmem:[#allocation2 + $0x111] sm:$0xff]
  %v3646 = vld [vmem:[#allocation2 + $0x121] sm:$0xff]
  %v3647 = vld [vmem:[#allocation2 + $0x129] sm:$0xff]
  %v3648 = vld [vmem:[#allocation2 + $0x139] sm:$0xff]
  %v3649 = vld [vmem:[#allocation2 + $0x141] sm:$0xff]
  %v3650 = vld [vmem:[#allocation2 + $0x151] sm:$0xff]
  %v3651 = vld [vmem:[#allocation2 + $0x159] sm:$0xff]
  %v3652 = vld [vmem:[#allocation2 + $0x169] sm:$0xff]
  %v3653 = vld [vmem:[#allocation2 + $0x171] sm:$0xff]
  %v3654 = vld [vmem:[#allocation2 + $0x1b1] sm:$0xff]
  %v3655 = vld [vmem:[#allocation2 + $0x1b9] sm:$0xff]
  %v3656 = vld [vmem:[#allocation2 + $0x1c9] sm:$0xff]
  %v3657 = vld [vmem:[#allocation2 + $0x1d1] sm:$0xff]
  %v3658 = vld [vmem:[#allocation2 + $0x1e1] sm:$0xff]
  %v3659 = vld [vmem:[#allocation2 + $0x1e9] sm:$0xff]
  %v3660 = vld [vmem:[#allocation2 + $0x1f9] sm:$0xff]
  %v3661 = vld [vmem:[#allocation2 + $0x201] sm:$0xff]
  %v3662 = vld [vmem:[#allocation2 + $0x211] sm:$0xff]
  %v3663 = vld [vmem:[#allocation2 + $0x219] sm:$0xff]
  %v3664 = vld [vmem:[#allocation2 + $0x229] sm:$0xff]
  %v3665 = vld [vmem:[#allocation2 + $0x231] sm:$0xff]
  %v3666 = vld [vmem:[#allocation2 + $0x241] sm:$0xff]
  %v3667 = vld [vmem:[#allocation2 + $0x249] sm:$0xff]
  %v3668 = vld [vmem:[#allocation2 + $0x259] sm:$0xff]
  %v3669 = vld [vmem:[#allocation2 + $0x261] sm:$0xff]
  %v3670 = vld [vmem:[#allocation2 + $0x271] sm:$0xff]
  %v3671 = vld [vmem:[#allocation2 + $0x279] sm:$0xff]
  %v3672 = vld [vmem:[#allocation2 + $0x289] sm:$0xff]
  %v3673 = vld [vmem:[#allocation2 + $0x291] sm:$0xff]
  %v3674 = vld [vmem:[#allocation2 + $0x2a1] sm:$0xff]
  %v3675 = vld [vmem:[#allocation2 + $0x2a9] sm:$0xff]
  %v3676 = vld [vmem:[#allocation2 + $0x2b9] sm:$0xff]
  %v3677 = vld [vmem:[#allocation2 + $0x2c1] sm:$0xff]
  %v3678 = vld [vmem:[#allocation2 + $0x2d1] sm:$0xff]
  %v3679 = vld [vmem:[#allocation2 + $0x2d9] sm:$0xff]
  %v3680 = vld [vmem:[#allocation2 + $0x2e9] sm:$0xff]
  %v3681 = vld [vmem:[#allocation2 + $0x2f1] sm:$0xff]
  %v3682 = vld [vmem:[#allocation2 + $0x301] sm:$0xff]
  %v3683 = vld [vmem:[#allocation2 + $0x309] sm:$0xff]
  %v3684 = vld [vmem:[#allocation2 + $0x319] sm:$0xff]
  %v3685 = vld [vmem:[#allocation2 + $0x321] sm:$0xff]
  %v3686 = vpack.c.bf16 %v3623, %v3622
  %v3687 = vpack.c.bf16 %v3625, %v3624
  %v3688 = vpack.c.bf16 %v3627, %v3626
  %v3689 = vpack.c.bf16 %v3629, %v3628
  %v3690 = vpack.c.bf16 %v3631, %v3630
  %v3691 = vpack.c.bf16 %v3633, %v3632
  %v3692 = vpack.c.bf16 %v3635, %v3634
  %v3693 = vpack.c.bf16 %v3637, %v3636
  %v3694 = vpack.c.bf16 %v3639, %v3638
  %v3695 = vpack.c.bf16 %v3641, %v3640
  %v3696 = vpack.c.bf16 %v3643, %v3642
  %v3697 = vpack.c.bf16 %v3645, %v3644
  %v3698 = vpack.c.bf16 %v3647, %v3646
  %v3699 = vpack.c.bf16 %v3649, %v3648
  %v3700 = vpack.c.bf16 %v3651, %v3650
  %v3701 = vpack.c.bf16 %v3653, %v3652
  %v3702 = vpack.c.bf16 %v3655, %v3654
  %v3703 = vpack.c.bf16 %v3657, %v3656
  %v3704 = vpack.c.bf16 %v3659, %v3658
  %v3705 = vpack.c.bf16 %v3661, %v3660
  %v3706 = vpack.c.bf16 %v3663, %v3662
  %v3707 = vpack.c.bf16 %v3665, %v3664
  %v3708 = vpack.c.bf16 %v3667, %v3666
  %v3709 = vpack.c.bf16 %v3669, %v3668
  %v3710 = vpack.c.bf16 %v3671, %v3670
  %v3711 = vpack.c.bf16 %v3673, %v3672
  %v3712 = vpack.c.bf16 %v3675, %v3674
  %v3713 = vpack.c.bf16 %v3677, %v3676
  %v3714 = vpack.c.bf16 %v3679, %v3678
  %v3715 = vpack.c.bf16 %v3681, %v3680
  %v3716 = vpack.c.bf16 %v3683, %v3682
  %v3717 = vpack.c.bf16 %v3685, %v3684
  %v3750 = vunpack.c.l.b16 %v3686
  %v3751 = vunpack.c.h.b16 %v3686
  %v3752 = vunpack.c.l.b16 %v3687
  %v3753 = vunpack.c.h.b16 %v3687
  %v3754 = vunpack.c.l.b16 %v3688
  %v3755 = vunpack.c.h.b16 %v3688
  %v3756 = vunpack.c.l.b16 %v3689
  %v3757 = vunpack.c.h.b16 %v3689
  %v3758 = vunpack.c.l.b16 %v3690
  %v3759 = vunpack.c.h.b16 %v3690
  %v3760 = vunpack.c.l.b16 %v3691
  %v3761 = vunpack.c.h.b16 %v3691
  %v3762 = vunpack.c.l.b16 %v3692
  %v3763 = vunpack.c.h.b16 %v3692
  %v3764 = vunpack.c.l.b16 %v3693
  %v3765 = vunpack.c.h.b16 %v3693
  %v3766 = vunpack.c.l.b16 %v3694
  %v3767 = vunpack.c.h.b16 %v3694
  %v3768 = vunpack.c.l.b16 %v3695
  %v3769 = vunpack.c.h.b16 %v3695
  %v3770 = vunpack.c.l.b16 %v3696
  %v3771 = vunpack.c.h.b16 %v3696
  %v3772 = vunpack.c.l.b16 %v3697
  %v3773 = vunpack.c.h.b16 %v3697
  %v3774 = vunpack.c.l.b16 %v3698
  %v3775 = vunpack.c.h.b16 %v3698
  %v3776 = vunpack.c.l.b16 %v3699
  %v3777 = vunpack.c.h.b16 %v3699
  %v3778 = vunpack.c.l.b16 %v3700
  %v3779 = vunpack.c.h.b16 %v3700
  %v3780 = vunpack.c.l.b16 %v3701
  %v3781 = vunpack.c.h.b16 %v3701
  %v3782 = vunpack.c.l.b16 %v3702
  %v3783 = vunpack.c.h.b16 %v3702
  %v3784 = vunpack.c.l.b16 %v3703
  %v3785 = vunpack.c.h.b16 %v3703
  %v3786 = vunpack.c.l.b16 %v3704
  %v3787 = vunpack.c.h.b16 %v3704
  %v3788 = vunpack.c.l.b16 %v3705
  %v3789 = vunpack.c.h.b16 %v3705
  %v3790 = vunpack.c.l.b16 %v3706
  %v3791 = vunpack.c.h.b16 %v3706
  %v3792 = vunpack.c.l.b16 %v3707
  %v3793 = vunpack.c.h.b16 %v3707
  %v3794 = vunpack.c.l.b16 %v3708
  %v3795 = vunpack.c.h.b16 %v3708
  %v3796 = vunpack.c.l.b16 %v3709
  %v3797 = vunpack.c.h.b16 %v3709
  %v3798 = vunpack.c.l.b16 %v3710
  %v3799 = vunpack.c.h.b16 %v3710
  %v3800 = vunpack.c.l.b16 %v3711
  %v3801 = vunpack.c.h.b16 %v3711
  %v3802 = vunpack.c.l.b16 %v3712
  %v3803 = vunpack.c.h.b16 %v3712
  %v3804 = vunpack.c.l.b16 %v3713
  %v3805 = vunpack.c.h.b16 %v3713
  %v3806 = vunpack.c.l.b16 %v3714
  %v3807 = vunpack.c.h.b16 %v3714
  %v3808 = vunpack.c.l.b16 %v3715
  %v3809 = vunpack.c.h.b16 %v3715
  %v3810 = vunpack.c.l.b16 %v3716
  %v3811 = vunpack.c.h.b16 %v3716
  %v3812 = vunpack.c.l.b16 %v3717
  %v3813 = vunpack.c.h.b16 %v3717
  %v3814 = vpack.c.b16 %v3750, %v3750
  %v3815 = vpack.c.b16 %v3751, %v3751
  %v3816 = vpack.c.b16 %v3752, %v3752
  %v3817 = vpack.c.b16 %v3753, %v3753
  %v3818 = vpack.c.b16 %v3754, %v3754
  %v3819 = vpack.c.b16 %v3755, %v3755
  %v3820 = vpack.c.b16 %v3756, %v3756
  %v3821 = vpack.c.b16 %v3757, %v3757
  %v3822 = vpack.c.b16 %v3758, %v3758
  %v3823 = vpack.c.b16 %v3759, %v3759
  %v3824 = vpack.c.b16 %v3760, %v3760
  %v3825 = vpack.c.b16 %v3761, %v3761
  %v3826 = vpack.c.b16 %v3762, %v3762
  %v3827 = vpack.c.b16 %v3763, %v3763
  %v3828 = vpack.c.b16 %v3764, %v3764
  %v3829 = vpack.c.b16 %v3765, %v3765
  %v3830 = vpack.c.b16 %v3766, %v3766
  %v3831 = vpack.c.b16 %v3767, %v3767
  %v3832 = vpack.c.b16 %v3768, %v3768
  %v3833 = vpack.c.b16 %v3769, %v3769
  %v3834 = vpack.c.b16 %v3770, %v3770
  %v3835 = vpack.c.b16 %v3771, %v3771
  %v3836 = vpack.c.b16 %v3772, %v3772
  %v3837 = vpack.c.b16 %v3773, %v3773
  %v3838 = vpack.c.b16 %v3774, %v3774
  %v3839 = vpack.c.b16 %v3775, %v3775
  %v3840 = vpack.c.b16 %v3776, %v3776
  %v3841 = vpack.c.b16 %v3777, %v3777
  %v3842 = vpack.c.b16 %v3778, %v3778
  %v3843 = vpack.c.b16 %v3779, %v3779
  %v3844 = vpack.c.b16 %v3780, %v3780
  %v3845 = vpack.c.b16 %v3781, %v3781
  %v3846 = vpack.c.b16 %v3782, %v3782
  %v3847 = vpack.c.b16 %v3783, %v3783
  %v3848 = vpack.c.b16 %v3784, %v3784
  %v3849 = vpack.c.b16 %v3785, %v3785
  %v3850 = vpack.c.b16 %v3786, %v3786
  %v3851 = vpack.c.b16 %v3787, %v3787
  %v3852 = vpack.c.b16 %v3788, %v3788
  %v3853 = vpack.c.b16 %v3789, %v3789
  %v3854 = vpack.c.b16 %v3790, %v3790
  %v3855 = vpack.c.b16 %v3791, %v3791
  %v3856 = vpack.c.b16 %v3792, %v3792
  %v3857 = vpack.c.b16 %v3793, %v3793
  %v3858 = vpack.c.b16 %v3794, %v3794
  %v3859 = vpack.c.b16 %v3795, %v3795
  %v3860 = vpack.c.b16 %v3796, %v3796
  %v3861 = vpack.c.b16 %v3797, %v3797
  %v3862 = vpack.c.b16 %v3798, %v3798
  %v3863 = vpack.c.b16 %v3799, %v3799
  %v3864 = vpack.c.b16 %v3800, %v3800
  %v3865 = vpack.c.b16 %v3801, %v3801
  %v3866 = vpack.c.b16 %v3802, %v3802
  %v3867 = vpack.c.b16 %v3803, %v3803
  %v3868 = vpack.c.b16 %v3804, %v3804
  %v3869 = vpack.c.b16 %v3805, %v3805
  %v3870 = vpack.c.b16 %v3806, %v3806
  %v3871 = vpack.c.b16 %v3807, %v3807
  %v3872 = vpack.c.b16 %v3808, %v3808
  %v3873 = vpack.c.b16 %v3809, %v3809
  %v3874 = vpack.c.b16 %v3810, %v3810
  %v3875 = vpack.c.b16 %v3811, %v3811
  %v3876 = vpack.c.b16 %v3812, %v3812
  %v3877 = vpack.c.b16 %v3813, %v3813
  %3878 = vrot.lane.b32.xlu0 %v3814, 32
  %v3879 = vpop.permute.xlu0 %3878
  %3880 = vrot.lane.b32.xlu0 %v3815, 32
  %v3881 = vpop.permute.xlu0 %3880
  %3882 = vrot.lane.b32.xlu0 %v3816, 32
  %v3883 = vpop.permute.xlu0 %3882
  %3884 = vrot.lane.b32.xlu0 %v3817, 32
  %v3885 = vpop.permute.xlu0 %3884
  %3886 = vrot.lane.b32.xlu0 %v3818, 32
  %v3887 = vpop.permute.xlu0 %3886
  %3888 = vrot.lane.b32.xlu0 %v3819, 32
  %v3889 = vpop.permute.xlu0 %3888
  %3890 = vrot.lane.b32.xlu0 %v3820, 32
  %v3891 = vpop.permute.xlu0 %3890
  %3892 = vrot.lane.b32.xlu0 %v3821, 32
  %v3893 = vpop.permute.xlu0 %3892
  %3894 = vrot.lane.b32.xlu0 %v3822, 32
  %v3895 = vpop.permute.xlu0 %3894
  %3896 = vrot.lane.b32.xlu0 %v3823, 32
  %v3897 = vpop.permute.xlu0 %3896
  %3898 = vrot.lane.b32.xlu0 %v3824, 32
  %v3899 = vpop.permute.xlu0 %3898
  %3900 = vrot.lane.b32.xlu0 %v3825, 32
  %v3901 = vpop.permute.xlu0 %3900
  %3902 = vrot.lane.b32.xlu0 %v3826, 32
  %v3903 = vpop.permute.xlu0 %3902
  %3904 = vrot.lane.b32.xlu0 %v3827, 32
  %v3905 = vpop.permute.xlu0 %3904
  %3906 = vrot.lane.b32.xlu0 %v3828, 32
  %v3907 = vpop.permute.xlu0 %3906
  %3908 = vrot.lane.b32.xlu0 %v3829, 32
  %v3909 = vpop.permute.xlu0 %3908
  %3910 = vrot.lane.b32.xlu0 %v3830, 32
  %v3911 = vpop.permute.xlu0 %3910
  %3912 = vrot.lane.b32.xlu0 %v3831, 32
  %v3913 = vpop.permute.xlu0 %3912
  %3914 = vrot.lane.b32.xlu0 %v3832, 32
  %v3915 = vpop.permute.xlu0 %3914
  %3916 = vrot.lane.b32.xlu0 %v3833, 32
  %v3917 = vpop.permute.xlu0 %3916
  %3918 = vrot.lane.b32.xlu0 %v3834, 32
  %v3919 = vpop.permute.xlu0 %3918
  %3920 = vrot.lane.b32.xlu0 %v3835, 32
  %v3921 = vpop.permute.xlu0 %3920
  %3922 = vrot.lane.b32.xlu0 %v3836, 32
  %v3923 = vpop.permute.xlu0 %3922
  %3924 = vrot.lane.b32.xlu0 %v3837, 32
  %v3925 = vpop.permute.xlu0 %3924
  %3926 = vrot.lane.b32.xlu0 %v3838, 32
  %v3927 = vpop.permute.xlu0 %3926
  %3928 = vrot.lane.b32.xlu0 %v3839, 32
  %v3929 = vpop.permute.xlu0 %3928
  %3930 = vrot.lane.b32.xlu0 %v3840, 32
  %v3931 = vpop.permute.xlu0 %3930
  %3932 = vrot.lane.b32.xlu0 %v3841, 32
  %v3933 = vpop.permute.xlu0 %3932
  %3934 = vrot.lane.b32.xlu0 %v3842, 32
  %v3935 = vpop.permute.xlu0 %3934
  %3936 = vrot.lane.b32.xlu0 %v3843, 32
  %v3937 = vpop.permute.xlu0 %3936
  %3938 = vrot.lane.b32.xlu0 %v3844, 32
  %v3939 = vpop.permute.xlu0 %3938
  %3940 = vrot.lane.b32.xlu0 %v3845, 32
  %v3941 = vpop.permute.xlu0 %3940
  %3942 = vrot.lane.b32.xlu0 %v3846, 32
  %v3943 = vpop.permute.xlu0 %3942
  %3944 = vrot.lane.b32.xlu0 %v3847, 32
  %v3945 = vpop.permute.xlu0 %3944
  %3946 = vrot.lane.b32.xlu0 %v3848, 32
  %v3947 = vpop.permute.xlu0 %3946
  %3948 = vrot.lane.b32.xlu0 %v3849, 32
  %v3949 = vpop.permute.xlu0 %3948
  %3950 = vrot.lane.b32.xlu0 %v3850, 32
  %v3951 = vpop.permute.xlu0 %3950
  %3952 = vrot.lane.b32.xlu0 %v3851, 32
  %v3953 = vpop.permute.xlu0 %3952
  %3954 = vrot.lane.b32.xlu0 %v3852, 32
  %v3955 = vpop.permute.xlu0 %3954
  %3956 = vrot.lane.b32.xlu0 %v3853, 32
  %v3957 = vpop.permute.xlu0 %3956
  %3958 = vrot.lane.b32.xlu0 %v3854, 32
  %v3959 = vpop.permute.xlu0 %3958
  %3960 = vrot.lane.b32.xlu0 %v3855, 32
  %v3961 = vpop.permute.xlu0 %3960
  %3962 = vrot.lane.b32.xlu0 %v3856, 32
  %v3963 = vpop.permute.xlu0 %3962
  %3964 = vrot.lane.b32.xlu0 %v3857, 32
  %v3965 = vpop.permute.xlu0 %3964
  %3966 = vrot.lane.b32.xlu0 %v3858, 32
  %v3967 = vpop.permute.xlu0 %3966
  %3968 = vrot.lane.b32.xlu0 %v3859, 32
  %v3969 = vpop.permute.xlu0 %3968
  %3970 = vrot.lane.b32.xlu0 %v3860, 32
  %v3971 = vpop.permute.xlu0 %3970
  %3972 = vrot.lane.b32.xlu0 %v3861, 32
  %v3973 = vpop.permute.xlu0 %3972
  %3974 = vrot.lane.b32.xlu0 %v3862, 32
  %v3975 = vpop.permute.xlu0 %3974
  %3976 = vrot.lane.b32.xlu0 %v3863, 32
  %v3977 = vpop.permute.xlu0 %3976
  %3978 = vrot.lane.b32.xlu0 %v3864, 32
  %v3979 = vpop.permute.xlu0 %3978
  %3980 = vrot.lane.b32.xlu0 %v3865, 32
  %v3981 = vpop.permute.xlu0 %3980
  %3982 = vrot.lane.b32.xlu0 %v3866, 32
  %v3983 = vpop.permute.xlu0 %3982
  %3984 = vrot.lane.b32.xlu0 %v3867, 32
  %v3985 = vpop.permute.xlu0 %3984
  %3986 = vrot.lane.b32.xlu0 %v3868, 32
  %v3987 = vpop.permute.xlu0 %3986
  %3988 = vrot.lane.b32.xlu0 %v3869, 32
  %v3989 = vpop.permute.xlu0 %3988
  %3990 = vrot.lane.b32.xlu0 %v3870, 32
  %v3991 = vpop.permute.xlu0 %3990
  %3992 = vrot.lane.b32.xlu0 %v3871, 32
  %v3993 = vpop.permute.xlu0 %3992
  %3994 = vrot.lane.b32.xlu0 %v3872, 32
  %v3995 = vpop.permute.xlu0 %3994
  %3996 = vrot.lane.b32.xlu0 %v3873, 32
  %v3997 = vpop.permute.xlu0 %3996
  %3998 = vrot.lane.b32.xlu0 %v3874, 32
  %v3999 = vpop.permute.xlu0 %3998
  %4000 = vrot.lane.b32.xlu0 %v3875, 32
  %v4001 = vpop.permute.xlu0 %4000
  %4002 = vrot.lane.b32.xlu0 %v3876, 32
  %v4003 = vpop.permute.xlu0 %4002
  %4004 = vrot.lane.b32.xlu0 %v3877, 32
  %v4005 = vpop.permute.xlu0 %4004
  %vm4070 = vcmask 519424
  %4071 = vst.msk [vmem:[#allocation3] sm:$0xf] %vm4070, %v3879
  %4072 = vst.msk [vmem:[#allocation3 + $0xc] sm:$0xf] %vm4070, %v3881
  %4073 = vst.msk [vmem:[#allocation3 + $0x18] sm:$0xf] %vm4070, %v3883
  %4074 = vst.msk [vmem:[#allocation3 + $0x24] sm:$0xf] %vm4070, %v3885
  %4075 = vst.msk [vmem:[#allocation3 + $0x30] sm:$0xf] %vm4070, %v3887
  %4076 = vst.msk [vmem:[#allocation3 + $0x3c] sm:$0xf] %vm4070, %v3889
  %4077 = vst.msk [vmem:[#allocation3 + $0x48] sm:$0xf] %vm4070, %v3891
  %4078 = vst.msk [vmem:[#allocation3 + $0x54] sm:$0xf] %vm4070, %v3893
  %4079 = vst.msk [vmem:[#allocation3 + $0x60] sm:$0xf] %vm4070, %v3895
  %4080 = vst.msk [vmem:[#allocation3 + $0x6c] sm:$0xf] %vm4070, %v3897
  %4081 = vst.msk [vmem:[#allocation3 + $0x78] sm:$0xf] %vm4070, %v3899
  %4082 = vst.msk [vmem:[#allocation3 + $0x84] sm:$0xf] %vm4070, %v3901
  %4083 = vst.msk [vmem:[#allocation3 + $0x90] sm:$0xf] %vm4070, %v3903
  %4084 = vst.msk [vmem:[#allocation3 + $0x9c] sm:$0xf] %vm4070, %v3905
  %4085 = vst.msk [vmem:[#allocation3 + $0xa8] sm:$0xf] %vm4070, %v3907
  %4086 = vst.msk [vmem:[#allocation3 + $0xb4] sm:$0xf] %vm4070, %v3909
  %4087 = vst.msk [vmem:[#allocation3 + $0xc0] sm:$0xf] %vm4070, %v3911
  %4088 = vst.msk [vmem:[#allocation3 + $0xcc] sm:$0xf] %vm4070, %v3913
  %4089 = vst.msk [vmem:[#allocation3 + $0xd8] sm:$0xf] %vm4070, %v3915
  %4090 = vst.msk [vmem:[#allocation3 + $0xe4] sm:$0xf] %vm4070, %v3917
  %4091 = vst.msk [vmem:[#allocation3 + $0xf0] sm:$0xf] %vm4070, %v3919
  %4092 = vst.msk [vmem:[#allocation3 + $0xfc] sm:$0xf] %vm4070, %v3921
  %4093 = vst.msk [vmem:[#allocation3 + $0x108] sm:$0xf] %vm4070, %v3923
  %4094 = vst.msk [vmem:[#allocation3 + $0x114] sm:$0xf] %vm4070, %v3925
  %4095 = vst.msk [vmem:[#allocation3 + $0x120] sm:$0xf] %vm4070, %v3927
  %4096 = vst.msk [vmem:[#allocation3 + $0x12c] sm:$0xf] %vm4070, %v3929
  %4097 = vst.msk [vmem:[#allocation3 + $0x138] sm:$0xf] %vm4070, %v3931
  %4098 = vst.msk [vmem:[#allocation3 + $0x144] sm:$0xf] %vm4070, %v3933
  %4099 = vst.msk [vmem:[#allocation3 + $0x150] sm:$0xf] %vm4070, %v3935
  %4100 = vst.msk [vmem:[#allocation3 + $0x15c] sm:$0xf] %vm4070, %v3937
  %4101 = vst.msk [vmem:[#allocation3 + $0x168] sm:$0xf] %vm4070, %v3939
  %4102 = vst.msk [vmem:[#allocation3 + $0x174] sm:$0xf] %vm4070, %v3941
  %4103 = vst.msk [vmem:[#allocation3 + $0x180] sm:$0xf] %vm4070, %v3943
  %4104 = vst.msk [vmem:[#allocation3 + $0x18c] sm:$0xf] %vm4070, %v3945
  %4105 = vst.msk [vmem:[#allocation3 + $0x198] sm:$0xf] %vm4070, %v3947
  %4106 = vst.msk [vmem:[#allocation3 + $0x1a4] sm:$0xf] %vm4070, %v3949
  %4107 = vst.msk [vmem:[#allocation3 + $0x1b0] sm:$0xf] %vm4070, %v3951
  %4108 = vst.msk [vmem:[#allocation3 + $0x1bc] sm:$0xf] %vm4070, %v3953
  %4109 = vst.msk [vmem:[#allocation3 + $0x1c8] sm:$0xf] %vm4070, %v3955
  %4110 = vst.msk [vmem:[#allocation3 + $0x1d4] sm:$0xf] %vm4070, %v3957
  %4111 = vst.msk [vmem:[#allocation3 + $0x1e0] sm:$0xf] %vm4070, %v3959
  %4112 = vst.msk [vmem:[#allocation3 + $0x1ec] sm:$0xf] %vm4070, %v3961
  %4113 = vst.msk [vmem:[#allocation3 + $0x1f8] sm:$0xf] %vm4070, %v3963
  %4114 = vst.msk [vmem:[#allocation3 + $0x204] sm:$0xf] %vm4070, %v3965
  %4115 = vst.msk [vmem:[#allocation3 + $0x210] sm:$0xf] %vm4070, %v3967
  %4116 = vst.msk [vmem:[#allocation3 + $0x21c] sm:$0xf] %vm4070, %v3969
  %4117 = vst.msk [vmem:[#allocation3 + $0x228] sm:$0xf] %vm4070, %v3971
  %4118 = vst.msk [vmem:[#allocation3 + $0x234] sm:$0xf] %vm4070, %v3973
  %4119 = vst.msk [vmem:[#allocation3 + $0x240] sm:$0xf] %vm4070, %v3975
  %4120 = vst.msk [vmem:[#allocation3 + $0x24c] sm:$0xf] %vm4070, %v3977
  %4121 = vst.msk [vmem:[#allocation3 + $0x258] sm:$0xf] %vm4070, %v3979
  %4122 = vst.msk [vmem:[#allocation3 + $0x264] sm:$0xf] %vm4070, %v3981
  %4123 = vst.msk [vmem:[#allocation3 + $0x270] sm:$0xf] %vm4070, %v3983
  %4124 = vst.msk [vmem:[#allocation3 + $0x27c] sm:$0xf] %vm4070, %v3985
  %4125 = vst.msk [vmem:[#allocation3 + $0x288] sm:$0xf] %vm4070, %v3987
  %4126 = vst.msk [vmem:[#allocation3 + $0x294] sm:$0xf] %vm4070, %v3989
  %4127 = vst.msk [vmem:[#allocation3 + $0x2a0] sm:$0xf] %vm4070, %v3991
  %4128 = vst.msk [vmem:[#allocation3 + $0x2ac] sm:$0xf] %vm4070, %v3993
  %4129 = vst.msk [vmem:[#allocation3 + $0x2b8] sm:$0xf] %vm4070, %v3995
  %4130 = vst.msk [vmem:[#allocation3 + $0x2c4] sm:$0xf] %vm4070, %v3997
  %4131 = vst.msk [vmem:[#allocation3 + $0x2d0] sm:$0xf] %vm4070, %v3999
  %4132 = vst.msk [vmem:[#allocation3 + $0x2dc] sm:$0xf] %vm4070, %v4001
  %4133 = vst.msk [vmem:[#allocation3 + $0x2e8] sm:$0xf] %vm4070, %v4003
  %4134 = vst.msk [vmem:[#allocation3 + $0x2f4] sm:$0xf] %vm4070, %v4005
  %v4135 = vld [vmem:[#allocation2 + $0x2] sm:$0xff]
  %v4136 = vld [vmem:[#allocation2 + $0xa] sm:$0xff]
  %v4137 = vld [vmem:[#allocation2 + $0x1a] sm:$0xff]
  %v4138 = vld [vmem:[#allocation2 + $0x22] sm:$0xff]
  %v4139 = vld [vmem:[#allocation2 + $0x32] sm:$0xff]
  %v4140 = vld [vmem:[#allocation2 + $0x3a] sm:$0xff]
  %v4141 = vld [vmem:[#allocation2 + $0x4a] sm:$0xff]
  %v4142 = vld [vmem:[#allocation2 + $0x52] sm:$0xff]
  %v4143 = vld [vmem:[#allocation2 + $0x62] sm:$0xff]
  %v4144 = vld [vmem:[#allocation2 + $0x6a] sm:$0xff]
  %v4145 = vld [vmem:[#allocation2 + $0x7a] sm:$0xff]
  %v4146 = vld [vmem:[#allocation2 + $0x82] sm:$0xff]
  %v4147 = vld [vmem:[#allocation2 + $0x92] sm:$0xff]
  %v4148 = vld [vmem:[#allocation2 + $0x9a] sm:$0xff]
  %v4149 = vld [vmem:[#allocation2 + $0xaa] sm:$0xff]
  %v4150 = vld [vmem:[#allocation2 + $0xb2] sm:$0xff]
  %v4151 = vld [vmem:[#allocation2 + $0xc2] sm:$0xff]
  %v4152 = vld [vmem:[#allocation2 + $0xca] sm:$0xff]
  %v4153 = vld [vmem:[#allocation2 + $0xda] sm:$0xff]
  %v4154 = vld [vmem:[#allocation2 + $0xe2] sm:$0xff]
  %v4155 = vld [vmem:[#allocation2 + $0xf2] sm:$0xff]
  %v4156 = vld [vmem:[#allocation2 + $0xfa] sm:$0xff]
  %v4157 = vld [vmem:[#allocation2 + $0x10a] sm:$0xff]
  %v4158 = vld [vmem:[#allocation2 + $0x112] sm:$0xff]
  %v4159 = vld [vmem:[#allocation2 + $0x122] sm:$0xff]
  %v4160 = vld [vmem:[#allocation2 + $0x12a] sm:$0xff]
  %v4161 = vld [vmem:[#allocation2 + $0x13a] sm:$0xff]
  %v4162 = vld [vmem:[#allocation2 + $0x142] sm:$0xff]
  %v4163 = vld [vmem:[#allocation2 + $0x152] sm:$0xff]
  %v4164 = vld [vmem:[#allocation2 + $0x15a] sm:$0xff]
  %v4165 = vld [vmem:[#allocation2 + $0x16a] sm:$0xff]
  %v4166 = vld [vmem:[#allocation2 + $0x172] sm:$0xff]
  %v4167 = vld [vmem:[#allocation2 + $0x1b2] sm:$0xff]
  %v4168 = vld [vmem:[#allocation2 + $0x1ba] sm:$0xff]
  %v4169 = vld [vmem:[#allocation2 + $0x1ca] sm:$0xff]
  %v4170 = vld [vmem:[#allocation2 + $0x1d2] sm:$0xff]
  %v4171 = vld [vmem:[#allocation2 + $0x1e2] sm:$0xff]
  %v4172 = vld [vmem:[#allocation2 + $0x1ea] sm:$0xff]
  %v4173 = vld [vmem:[#allocation2 + $0x1fa] sm:$0xff]
  %v4174 = vld [vmem:[#allocation2 + $0x202] sm:$0xff]
  %v4175 = vld [vmem:[#allocation2 + $0x212] sm:$0xff]
  %v4176 = vld [vmem:[#allocation2 + $0x21a] sm:$0xff]
  %v4177 = vld [vmem:[#allocation2 + $0x22a] sm:$0xff]
  %v4178 = vld [vmem:[#allocation2 + $0x232] sm:$0xff]
  %v4179 = vld [vmem:[#allocation2 + $0x242] sm:$0xff]
  %v4180 = vld [vmem:[#allocation2 + $0x24a] sm:$0xff]
  %v4181 = vld [vmem:[#allocation2 + $0x25a] sm:$0xff]
  %v4182 = vld [vmem:[#allocation2 + $0x262] sm:$0xff]
  %v4183 = vld [vmem:[#allocation2 + $0x272] sm:$0xff]
  %v4184 = vld [vmem:[#allocation2 + $0x27a] sm:$0xff]
  %v4185 = vld [vmem:[#allocation2 + $0x28a] sm:$0xff]
  %v4186 = vld [vmem:[#allocation2 + $0x292] sm:$0xff]
  %v4187 = vld [vmem:[#allocation2 + $0x2a2] sm:$0xff]
  %v4188 = vld [vmem:[#allocation2 + $0x2aa] sm:$0xff]
  %v4189 = vld [vmem:[#allocation2 + $0x2ba] sm:$0xff]
  %v4190 = vld [vmem:[#allocation2 + $0x2c2] sm:$0xff]
  %v4191 = vld [vmem:[#allocation2 + $0x2d2] sm:$0xff]
  %v4192 = vld [vmem:[#allocation2 + $0x2da] sm:$0xff]
  %v4193 = vld [vmem:[#allocation2 + $0x2ea] sm:$0xff]
  %v4194 = vld [vmem:[#allocation2 + $0x2f2] sm:$0xff]
  %v4195 = vld [vmem:[#allocation2 + $0x302] sm:$0xff]
  %v4196 = vld [vmem:[#allocation2 + $0x30a] sm:$0xff]
  %v4197 = vld [vmem:[#allocation2 + $0x31a] sm:$0xff]
  %v4198 = vld [vmem:[#allocation2 + $0x322] sm:$0xff]
  %v4199 = vpack.c.bf16 %v4136, %v4135
  %v4200 = vpack.c.bf16 %v4138, %v4137
  %v4201 = vpack.c.bf16 %v4140, %v4139
  %v4202 = vpack.c.bf16 %v4142, %v4141
  %v4203 = vpack.c.bf16 %v4144, %v4143
  %v4204 = vpack.c.bf16 %v4146, %v4145
  %v4205 = vpack.c.bf16 %v4148, %v4147
  %v4206 = vpack.c.bf16 %v4150, %v4149
  %v4207 = vpack.c.bf16 %v4152, %v4151
  %v4208 = vpack.c.bf16 %v4154, %v4153
  %v4209 = vpack.c.bf16 %v4156, %v4155
  %v4210 = vpack.c.bf16 %v4158, %v4157
  %v4211 = vpack.c.bf16 %v4160, %v4159
  %v4212 = vpack.c.bf16 %v4162, %v4161
  %v4213 = vpack.c.bf16 %v4164, %v4163
  %v4214 = vpack.c.bf16 %v4166, %v4165
  %v4215 = vpack.c.bf16 %v4168, %v4167
  %v4216 = vpack.c.bf16 %v4170, %v4169
  %v4217 = vpack.c.bf16 %v4172, %v4171
  %v4218 = vpack.c.bf16 %v4174, %v4173
  %v4219 = vpack.c.bf16 %v4176, %v4175
  %v4220 = vpack.c.bf16 %v4178, %v4177
  %v4221 = vpack.c.bf16 %v4180, %v4179
  %v4222 = vpack.c.bf16 %v4182, %v4181
  %v4223 = vpack.c.bf16 %v4184, %v4183
  %v4224 = vpack.c.bf16 %v4186, %v4185
  %v4225 = vpack.c.bf16 %v4188, %v4187
  %v4226 = vpack.c.bf16 %v4190, %v4189
  %v4227 = vpack.c.bf16 %v4192, %v4191
  %v4228 = vpack.c.bf16 %v4194, %v4193
  %v4229 = vpack.c.bf16 %v4196, %v4195
  %v4230 = vpack.c.bf16 %v4198, %v4197
  %v4263 = vunpack.c.l.b16 %v4199
  %v4264 = vunpack.c.h.b16 %v4199
  %v4265 = vunpack.c.l.b16 %v4200
  %v4266 = vunpack.c.h.b16 %v4200
  %v4267 = vunpack.c.l.b16 %v4201
  %v4268 = vunpack.c.h.b16 %v4201
  %v4269 = vunpack.c.l.b16 %v4202
  %v4270 = vunpack.c.h.b16 %v4202
  %v4271 = vunpack.c.l.b16 %v4203
  %v4272 = vunpack.c.h.b16 %v4203
  %v4273 = vunpack.c.l.b16 %v4204
  %v4274 = vunpack.c.h.b16 %v4204
  %v4275 = vunpack.c.l.b16 %v4205
  %v4276 = vunpack.c.h.b16 %v4205
  %v4277 = vunpack.c.l.b16 %v4206
  %v4278 = vunpack.c.h.b16 %v4206
  %v4279 = vunpack.c.l.b16 %v4207
  %v4280 = vunpack.c.h.b16 %v4207
  %v4281 = vunpack.c.l.b16 %v4208
  %v4282 = vunpack.c.h.b16 %v4208
  %v4283 = vunpack.c.l.b16 %v4209
  %v4284 = vunpack.c.h.b16 %v4209
  %v4285 = vunpack.c.l.b16 %v4210
  %v4286 = vunpack.c.h.b16 %v4210
  %v4287 = vunpack.c.l.b16 %v4211
  %v4288 = vunpack.c.h.b16 %v4211
  %v4289 = vunpack.c.l.b16 %v4212
  %v4290 = vunpack.c.h.b16 %v4212
  %v4291 = vunpack.c.l.b16 %v4213
  %v4292 = vunpack.c.h.b16 %v4213
  %v4293 = vunpack.c.l.b16 %v4214
  %v4294 = vunpack.c.h.b16 %v4214
  %v4295 = vunpack.c.l.b16 %v4215
  %v4296 = vunpack.c.h.b16 %v4215
  %v4297 = vunpack.c.l.b16 %v4216
  %v4298 = vunpack.c.h.b16 %v4216
  %v4299 = vunpack.c.l.b16 %v4217
  %v4300 = vunpack.c.h.b16 %v4217
  %v4301 = vunpack.c.l.b16 %v4218
  %v4302 = vunpack.c.h.b16 %v4218
  %v4303 = vunpack.c.l.b16 %v4219
  %v4304 = vunpack.c.h.b16 %v4219
  %v4305 = vunpack.c.l.b16 %v4220
  %v4306 = vunpack.c.h.b16 %v4220
  %v4307 = vunpack.c.l.b16 %v4221
  %v4308 = vunpack.c.h.b16 %v4221
  %v4309 = vunpack.c.l.b16 %v4222
  %v4310 = vunpack.c.h.b16 %v4222
  %v4311 = vunpack.c.l.b16 %v4223
  %v4312 = vunpack.c.h.b16 %v4223
  %v4313 = vunpack.c.l.b16 %v4224
  %v4314 = vunpack.c.h.b16 %v4224
  %v4315 = vunpack.c.l.b16 %v4225
  %v4316 = vunpack.c.h.b16 %v4225
  %v4317 = vunpack.c.l.b16 %v4226
  %v4318 = vunpack.c.h.b16 %v4226
  %v4319 = vunpack.c.l.b16 %v4227
  %v4320 = vunpack.c.h.b16 %v4227
  %v4321 = vunpack.c.l.b16 %v4228
  %v4322 = vunpack.c.h.b16 %v4228
  %v4323 = vunpack.c.l.b16 %v4229
  %v4324 = vunpack.c.h.b16 %v4229
  %v4325 = vunpack.c.l.b16 %v4230
  %v4326 = vunpack.c.h.b16 %v4230
  %v4327 = vpack.c.b16 %v4263, %v4263
  %v4328 = vpack.c.b16 %v4264, %v4264
  %v4329 = vpack.c.b16 %v4265, %v4265
  %v4330 = vpack.c.b16 %v4266, %v4266
  %v4331 = vpack.c.b16 %v4267, %v4267
  %v4332 = vpack.c.b16 %v4268, %v4268
  %v4333 = vpack.c.b16 %v4269, %v4269
  %v4334 = vpack.c.b16 %v4270, %v4270
  %v4335 = vpack.c.b16 %v4271, %v4271
  %v4336 = vpack.c.b16 %v4272, %v4272
  %v4337 = vpack.c.b16 %v4273, %v4273
  %v4338 = vpack.c.b16 %v4274, %v4274
  %v4339 = vpack.c.b16 %v4275, %v4275
  %v4340 = vpack.c.b16 %v4276, %v4276
  %v4341 = vpack.c.b16 %v4277, %v4277
  %v4342 = vpack.c.b16 %v4278, %v4278
  %v4343 = vpack.c.b16 %v4279, %v4279
  %v4344 = vpack.c.b16 %v4280, %v4280
  %v4345 = vpack.c.b16 %v4281, %v4281
  %v4346 = vpack.c.b16 %v4282, %v4282
  %v4347 = vpack.c.b16 %v4283, %v4283
  %v4348 = vpack.c.b16 %v4284, %v4284
  %v4349 = vpack.c.b16 %v4285, %v4285
  %v4350 = vpack.c.b16 %v4286, %v4286
  %v4351 = vpack.c.b16 %v4287, %v4287
  %v4352 = vpack.c.b16 %v4288, %v4288
  %v4353 = vpack.c.b16 %v4289, %v4289
  %v4354 = vpack.c.b16 %v4290, %v4290
  %v4355 = vpack.c.b16 %v4291, %v4291
  %v4356 = vpack.c.b16 %v4292, %v4292
  %v4357 = vpack.c.b16 %v4293, %v4293
  %v4358 = vpack.c.b16 %v4294, %v4294
  %v4359 = vpack.c.b16 %v4295, %v4295
  %v4360 = vpack.c.b16 %v4296, %v4296
  %v4361 = vpack.c.b16 %v4297, %v4297
  %v4362 = vpack.c.b16 %v4298, %v4298
  %v4363 = vpack.c.b16 %v4299, %v4299
  %v4364 = vpack.c.b16 %v4300, %v4300
  %v4365 = vpack.c.b16 %v4301, %v4301
  %v4366 = vpack.c.b16 %v4302, %v4302
  %v4367 = vpack.c.b16 %v4303, %v4303
  %v4368 = vpack.c.b16 %v4304, %v4304
  %v4369 = vpack.c.b16 %v4305, %v4305
  %v4370 = vpack.c.b16 %v4306, %v4306
  %v4371 = vpack.c.b16 %v4307, %v4307
  %v4372 = vpack.c.b16 %v4308, %v4308
  %v4373 = vpack.c.b16 %v4309, %v4309
  %v4374 = vpack.c.b16 %v4310, %v4310
  %v4375 = vpack.c.b16 %v4311, %v4311
  %v4376 = vpack.c.b16 %v4312, %v4312
  %v4377 = vpack.c.b16 %v4313, %v4313
  %v4378 = vpack.c.b16 %v4314, %v4314
  %v4379 = vpack.c.b16 %v4315, %v4315
  %v4380 = vpack.c.b16 %v4316, %v4316
  %v4381 = vpack.c.b16 %v4317, %v4317
  %v4382 = vpack.c.b16 %v4318, %v4318
  %v4383 = vpack.c.b16 %v4319, %v4319
  %v4384 = vpack.c.b16 %v4320, %v4320
  %v4385 = vpack.c.b16 %v4321, %v4321
  %v4386 = vpack.c.b16 %v4322, %v4322
  %v4387 = vpack.c.b16 %v4323, %v4323
  %v4388 = vpack.c.b16 %v4324, %v4324
  %v4389 = vpack.c.b16 %v4325, %v4325
  %v4390 = vpack.c.b16 %v4326, %v4326
  %4391 = vrot.lane.b32.xlu0 %v4327, 64
  %v4392 = vpop.permute.xlu0 %4391
  %4393 = vrot.lane.b32.xlu0 %v4328, 64
  %v4394 = vpop.permute.xlu0 %4393
  %4395 = vrot.lane.b32.xlu0 %v4329, 64
  %v4396 = vpop.permute.xlu0 %4395
  %4397 = vrot.lane.b32.xlu0 %v4330, 64
  %v4398 = vpop.permute.xlu0 %4397
  %4399 = vrot.lane.b32.xlu0 %v4331, 64
  %v4400 = vpop.permute.xlu0 %4399
  %4401 = vrot.lane.b32.xlu0 %v4332, 64
  %v4402 = vpop.permute.xlu0 %4401
  %4403 = vrot.lane.b32.xlu0 %v4333, 64
  %v4404 = vpop.permute.xlu0 %4403
  %4405 = vrot.lane.b32.xlu0 %v4334, 64
  %v4406 = vpop.permute.xlu0 %4405
  %4407 = vrot.lane.b32.xlu0 %v4335, 64
  %v4408 = vpop.permute.xlu0 %4407
  %4409 = vrot.lane.b32.xlu0 %v4336, 64
  %v4410 = vpop.permute.xlu0 %4409
  %4411 = vrot.lane.b32.xlu0 %v4337, 64
  %v4412 = vpop.permute.xlu0 %4411
  %4413 = vrot.lane.b32.xlu0 %v4338, 64
  %v4414 = vpop.permute.xlu0 %4413
  %4415 = vrot.lane.b32.xlu0 %v4339, 64
  %v4416 = vpop.permute.xlu0 %4415
  %4417 = vrot.lane.b32.xlu0 %v4340, 64
  %v4418 = vpop.permute.xlu0 %4417
  %4419 = vrot.lane.b32.xlu0 %v4341, 64
  %v4420 = vpop.permute.xlu0 %4419
  %4421 = vrot.lane.b32.xlu0 %v4342, 64
  %v4422 = vpop.permute.xlu0 %4421
  %4423 = vrot.lane.b32.xlu0 %v4343, 64
  %v4424 = vpop.permute.xlu0 %4423
  %4425 = vrot.lane.b32.xlu0 %v4344, 64
  %v4426 = vpop.permute.xlu0 %4425
  %4427 = vrot.lane.b32.xlu0 %v4345, 64
  %v4428 = vpop.permute.xlu0 %4427
  %4429 = vrot.lane.b32.xlu0 %v4346, 64
  %v4430 = vpop.permute.xlu0 %4429
  %4431 = vrot.lane.b32.xlu0 %v4347, 64
  %v4432 = vpop.permute.xlu0 %4431
  %4433 = vrot.lane.b32.xlu0 %v4348, 64
  %v4434 = vpop.permute.xlu0 %4433
  %4435 = vrot.lane.b32.xlu0 %v4349, 64
  %v4436 = vpop.permute.xlu0 %4435
  %4437 = vrot.lane.b32.xlu0 %v4350, 64
  %v4438 = vpop.permute.xlu0 %4437
  %4439 = vrot.lane.b32.xlu0 %v4351, 64
  %v4440 = vpop.permute.xlu0 %4439
  %4441 = vrot.lane.b32.xlu0 %v4352, 64
  %v4442 = vpop.permute.xlu0 %4441
  %4443 = vrot.lane.b32.xlu0 %v4353, 64
  %v4444 = vpop.permute.xlu0 %4443
  %4445 = vrot.lane.b32.xlu0 %v4354, 64
  %v4446 = vpop.permute.xlu0 %4445
  %4447 = vrot.lane.b32.xlu0 %v4355, 64
  %v4448 = vpop.permute.xlu0 %4447
  %4449 = vrot.lane.b32.xlu0 %v4356, 64
  %v4450 = vpop.permute.xlu0 %4449
  %4451 = vrot.lane.b32.xlu0 %v4357, 64
  %v4452 = vpop.permute.xlu0 %4451
  %4453 = vrot.lane.b32.xlu0 %v4358, 64
  %v4454 = vpop.permute.xlu0 %4453
  %4455 = vrot.lane.b32.xlu0 %v4359, 64
  %v4456 = vpop.permute.xlu0 %4455
  %4457 = vrot.lane.b32.xlu0 %v4360, 64
  %v4458 = vpop.permute.xlu0 %4457
  %4459 = vrot.lane.b32.xlu0 %v4361, 64
  %v4460 = vpop.permute.xlu0 %4459
  %4461 = vrot.lane.b32.xlu0 %v4362, 64
  %v4462 = vpop.permute.xlu0 %4461
  %4463 = vrot.lane.b32.xlu0 %v4363, 64
  %v4464 = vpop.permute.xlu0 %4463
  %4465 = vrot.lane.b32.xlu0 %v4364, 64
  %v4466 = vpop.permute.xlu0 %4465
  %4467 = vrot.lane.b32.xlu0 %v4365, 64
  %v4468 = vpop.permute.xlu0 %4467
  %4469 = vrot.lane.b32.xlu0 %v4366, 64
  %v4470 = vpop.permute.xlu0 %4469
  %4471 = vrot.lane.b32.xlu0 %v4367, 64
  %v4472 = vpop.permute.xlu0 %4471
  %4473 = vrot.lane.b32.xlu0 %v4368, 64
  %v4474 = vpop.permute.xlu0 %4473
  %4475 = vrot.lane.b32.xlu0 %v4369, 64
  %v4476 = vpop.permute.xlu0 %4475
  %4477 = vrot.lane.b32.xlu0 %v4370, 64
  %v4478 = vpop.permute.xlu0 %4477
  %4479 = vrot.lane.b32.xlu0 %v4371, 64
  %v4480 = vpop.permute.xlu0 %4479
  %4481 = vrot.lane.b32.xlu0 %v4372, 64
  %v4482 = vpop.permute.xlu0 %4481
  %4483 = vrot.lane.b32.xlu0 %v4373, 64
  %v4484 = vpop.permute.xlu0 %4483
  %4485 = vrot.lane.b32.xlu0 %v4374, 64
  %v4486 = vpop.permute.xlu0 %4485
  %4487 = vrot.lane.b32.xlu0 %v4375, 64
  %v4488 = vpop.permute.xlu0 %4487
  %4489 = vrot.lane.b32.xlu0 %v4376, 64
  %v4490 = vpop.permute.xlu0 %4489
  %4491 = vrot.lane.b32.xlu0 %v4377, 64
  %v4492 = vpop.permute.xlu0 %4491
  %4493 = vrot.lane.b32.xlu0 %v4378, 64
  %v4494 = vpop.permute.xlu0 %4493
  %4495 = vrot.lane.b32.xlu0 %v4379, 64
  %v4496 = vpop.permute.xlu0 %4495
  %4497 = vrot.lane.b32.xlu0 %v4380, 64
  %v4498 = vpop.permute.xlu0 %4497
  %4499 = vrot.lane.b32.xlu0 %v4381, 64
  %v4500 = vpop.permute.xlu0 %4499
  %4501 = vrot.lane.b32.xlu0 %v4382, 64
  %v4502 = vpop.permute.xlu0 %4501
  %4503 = vrot.lane.b32.xlu0 %v4383, 64
  %v4504 = vpop.permute.xlu0 %4503
  %4505 = vrot.lane.b32.xlu0 %v4384, 64
  %v4506 = vpop.permute.xlu0 %4505
  %4507 = vrot.lane.b32.xlu0 %v4385, 64
  %v4508 = vpop.permute.xlu0 %4507
  %4509 = vrot.lane.b32.xlu0 %v4386, 64
  %v4510 = vpop.permute.xlu0 %4509
  %4511 = vrot.lane.b32.xlu0 %v4387, 64
  %v4512 = vpop.permute.xlu0 %4511
  %4513 = vrot.lane.b32.xlu0 %v4388, 64
  %v4514 = vpop.permute.xlu0 %4513
  %4515 = vrot.lane.b32.xlu0 %v4389, 64
  %v4516 = vpop.permute.xlu0 %4515
  %4517 = vrot.lane.b32.xlu0 %v4390, 64
  %v4518 = vpop.permute.xlu0 %4517
  %vm4583 = vcmask 781824
  %4584 = vst.msk [vmem:[#allocation3] sm:$0xf] %vm4583, %v4392
  %4585 = vst.msk [vmem:[#allocation3 + $0xc] sm:$0xf] %vm4583, %v4394
  %4586 = vst.msk [vmem:[#allocation3 + $0x18] sm:$0xf] %vm4583, %v4396
  %4587 = vst.msk [vmem:[#allocation3 + $0x24] sm:$0xf] %vm4583, %v4398
  %4588 = vst.msk [vmem:[#allocation3 + $0x30] sm:$0xf] %vm4583, %v4400
  %4589 = vst.msk [vmem:[#allocation3 + $0x3c] sm:$0xf] %vm4583, %v4402
  %4590 = vst.msk [vmem:[#allocation3 + $0x48] sm:$0xf] %vm4583, %v4404
  %4591 = vst.msk [vmem:[#allocation3 + $0x54] sm:$0xf] %vm4583, %v4406
  %4592 = vst.msk [vmem:[#allocation3 + $0x60] sm:$0xf] %vm4583, %v4408
  %4593 = vst.msk [vmem:[#allocation3 + $0x6c] sm:$0xf] %vm4583, %v4410
  %4594 = vst.msk [vmem:[#allocation3 + $0x78] sm:$0xf] %vm4583, %v4412
  %4595 = vst.msk [vmem:[#allocation3 + $0x84] sm:$0xf] %vm4583, %v4414
  %4596 = vst.msk [vmem:[#allocation3 + $0x90] sm:$0xf] %vm4583, %v4416
  %4597 = vst.msk [vmem:[#allocation3 + $0x9c] sm:$0xf] %vm4583, %v4418
  %4598 = vst.msk [vmem:[#allocation3 + $0xa8] sm:$0xf] %vm4583, %v4420
  %4599 = vst.msk [vmem:[#allocation3 + $0xb4] sm:$0xf] %vm4583, %v4422
  %4600 = vst.msk [vmem:[#allocation3 + $0xc0] sm:$0xf] %vm4583, %v4424
  %4601 = vst.msk [vmem:[#allocation3 + $0xcc] sm:$0xf] %vm4583, %v4426
  %4602 = vst.msk [vmem:[#allocation3 + $0xd8] sm:$0xf] %vm4583, %v4428
  %4603 = vst.msk [vmem:[#allocation3 + $0xe4] sm:$0xf] %vm4583, %v4430
  %4604 = vst.msk [vmem:[#allocation3 + $0xf0] sm:$0xf] %vm4583, %v4432
  %4605 = vst.msk [vmem:[#allocation3 + $0xfc] sm:$0xf] %vm4583, %v4434
  %4606 = vst.msk [vmem:[#allocation3 + $0x108] sm:$0xf] %vm4583, %v4436
  %4607 = vst.msk [vmem:[#allocation3 + $0x114] sm:$0xf] %vm4583, %v4438
  %4608 = vst.msk [vmem:[#allocation3 + $0x120] sm:$0xf] %vm4583, %v4440
  %4609 = vst.msk [vmem:[#allocation3 + $0x12c] sm:$0xf] %vm4583, %v4442
  %4610 = vst.msk [vmem:[#allocation3 + $0x138] sm:$0xf] %vm4583, %v4444
  %4611 = vst.msk [vmem:[#allocation3 + $0x144] sm:$0xf] %vm4583, %v4446
  %4612 = vst.msk [vmem:[#allocation3 + $0x150] sm:$0xf] %vm4583, %v4448
  %4613 = vst.msk [vmem:[#allocation3 + $0x15c] sm:$0xf] %vm4583, %v4450
  %4614 = vst.msk [vmem:[#allocation3 + $0x168] sm:$0xf] %vm4583, %v4452
  %4615 = vst.msk [vmem:[#allocation3 + $0x174] sm:$0xf] %vm4583, %v4454
  %4616 = vst.msk [vmem:[#allocation3 + $0x180] sm:$0xf] %vm4583, %v4456
  %4617 = vst.msk [vmem:[#allocation3 + $0x18c] sm:$0xf] %vm4583, %v4458
  %4618 = vst.msk [vmem:[#allocation3 + $0x198] sm:$0xf] %vm4583, %v4460
  %4619 = vst.msk [vmem:[#allocation3 + $0x1a4] sm:$0xf] %vm4583, %v4462
  %4620 = vst.msk [vmem:[#allocation3 + $0x1b0] sm:$0xf] %vm4583, %v4464
  %4621 = vst.msk [vmem:[#allocation3 + $0x1bc] sm:$0xf] %vm4583, %v4466
  %4622 = vst.msk [vmem:[#allocation3 + $0x1c8] sm:$0xf] %vm4583, %v4468
  %4623 = vst.msk [vmem:[#allocation3 + $0x1d4] sm:$0xf] %vm4583, %v4470
  %4624 = vst.msk [vmem:[#allocation3 + $0x1e0] sm:$0xf] %vm4583, %v4472
  %4625 = vst.msk [vmem:[#allocation3 + $0x1ec] sm:$0xf] %vm4583, %v4474
  %4626 = vst.msk [vmem:[#allocation3 + $0x1f8] sm:$0xf] %vm4583, %v4476
  %4627 = vst.msk [vmem:[#allocation3 + $0x204] sm:$0xf] %vm4583, %v4478
  %4628 = vst.msk [vmem:[#allocation3 + $0x210] sm:$0xf] %vm4583, %v4480
  %4629 = vst.msk [vmem:[#allocation3 + $0x21c] sm:$0xf] %vm4583, %v4482
  %4630 = vst.msk [vmem:[#allocation3 + $0x228] sm:$0xf] %vm4583, %v4484
  %4631 = vst.msk [vmem:[#allocation3 + $0x234] sm:$0xf] %vm4583, %v4486
  %4632 = vst.msk [vmem:[#allocation3 + $0x240] sm:$0xf] %vm4583, %v4488
  %4633 = vst.msk [vmem:[#allocation3 + $0x24c] sm:$0xf] %vm4583, %v4490
  %4634 = vst.msk [vmem:[#allocation3 + $0x258] sm:$0xf] %vm4583, %v4492
  %4635 = vst.msk [vmem:[#allocation3 + $0x264] sm:$0xf] %vm4583, %v4494
  %4636 = vst.msk [vmem:[#allocation3 + $0x270] sm:$0xf] %vm4583, %v4496
  %4637 = vst.msk [vmem:[#allocation3 + $0x27c] sm:$0xf] %vm4583, %v4498
  %4638 = vst.msk [vmem:[#allocation3 + $0x288] sm:$0xf] %vm4583, %v4500
  %4639 = vst.msk [vmem:[#allocation3 + $0x294] sm:$0xf] %vm4583, %v4502
  %4640 = vst.msk [vmem:[#allocation3 + $0x2a0] sm:$0xf] %vm4583, %v4504
  %4641 = vst.msk [vmem:[#allocation3 + $0x2ac] sm:$0xf] %vm4583, %v4506
  %4642 = vst.msk [vmem:[#allocation3 + $0x2b8] sm:$0xf] %vm4583, %v4508
  %4643 = vst.msk [vmem:[#allocation3 + $0x2c4] sm:$0xf] %vm4583, %v4510
  %4644 = vst.msk [vmem:[#allocation3 + $0x2d0] sm:$0xf] %vm4583, %v4512
  %4645 = vst.msk [vmem:[#allocation3 + $0x2dc] sm:$0xf] %vm4583, %v4514
  %4646 = vst.msk [vmem:[#allocation3 + $0x2e8] sm:$0xf] %vm4583, %v4516
  %4647 = vst.msk [vmem:[#allocation3 + $0x2f4] sm:$0xf] %vm4583, %v4518
  %v4648 = vld [vmem:[%s3172] sm:$0xff]
  %v4649 = vld [vmem:[%s3172 + $0x8] sm:$0xff]
  %v4650 = vld [vmem:[%s3172 + $0x18] sm:$0xff]
  %v4651 = vld [vmem:[%s3172 + $0x20] sm:$0xff]
  %v4652 = vld [vmem:[%s3172 + $0x30] sm:$0xff]
  %v4653 = vld [vmem:[%s3172 + $0x38] sm:$0xff]
  %v4654 = vld [vmem:[%s3172 + $0x48] sm:$0xff]
  %v4655 = vld [vmem:[%s3172 + $0x50] sm:$0xff]
  %v4656 = vld [vmem:[%s3172 + $0x60] sm:$0xff]
  %v4657 = vld [vmem:[%s3172 + $0x68] sm:$0xff]
  %v4658 = vld [vmem:[%s3172 + $0x78] sm:$0xff]
  %v4659 = vld [vmem:[%s3172 + $0x80] sm:$0xff]
  %v4660 = vld [vmem:[%s3172 + $0x90] sm:$0xff]
  %v4661 = vld [vmem:[%s3172 + $0x98] sm:$0xff]
  %v4662 = vld [vmem:[%s3172 + $0xa8] sm:$0xff]
  %v4663 = vld [vmem:[%s3172 + $0xb0] sm:$0xff]
  %v4664 = vld [vmem:[%s3172 + $0xc0] sm:$0xff]
  %v4665 = vld [vmem:[%s3172 + $0xc8] sm:$0xff]
  %v4666 = vld [vmem:[%s3172 + $0xd8] sm:$0xff]
  %v4667 = vld [vmem:[%s3172 + $0xe0] sm:$0xff]
  %v4668 = vld [vmem:[%s3172 + $0xf0] sm:$0xff]
  %v4669 = vld [vmem:[%s3172 + $0xf8] sm:$0xff]
  %v4670 = vld [vmem:[%s3172 + $0x108] sm:$0xff]
  %v4671 = vld [vmem:[%s3172 + $0x110] sm:$0xff]
  %v4672 = vld [vmem:[%s3172 + $0x120] sm:$0xff]
  %v4673 = vld [vmem:[%s3172 + $0x128] sm:$0xff]
  %v4674 = vld [vmem:[%s3172 + $0x138] sm:$0xff]
  %v4675 = vld [vmem:[%s3172 + $0x140] sm:$0xff]
  %v4676 = vld [vmem:[%s3172 + $0x150] sm:$0xff]
  %v4677 = vld [vmem:[%s3172 + $0x158] sm:$0xff]
  %v4678 = vld [vmem:[%s3172 + $0x168] sm:$0xff]
  %v4679 = vld [vmem:[%s3172 + $0x170] sm:$0xff]
  %v4680 = vld [vmem:[%s3172 + $0x1b0] sm:$0xff]
  %v4681 = vld [vmem:[%s3172 + $0x1b8] sm:$0xff]
  %v4682 = vld [vmem:[%s3172 + $0x1c8] sm:$0xff]
  %v4683 = vld [vmem:[%s3172 + $0x1d0] sm:$0xff]
  %v4684 = vld [vmem:[%s3172 + $0x1e0] sm:$0xff]
  %v4685 = vld [vmem:[%s3172 + $0x1e8] sm:$0xff]
  %v4686 = vld [vmem:[%s3172 + $0x1f8] sm:$0xff]
  %v4687 = vld [vmem:[%s3172 + $0x200] sm:$0xff]
  %v4688 = vld [vmem:[%s3172 + $0x210] sm:$0xff]
  %v4689 = vld [vmem:[%s3172 + $0x218] sm:$0xff]
  %v4690 = vld [vmem:[%s3172 + $0x228] sm:$0xff]
  %v4691 = vld [vmem:[%s3172 + $0x230] sm:$0xff]
  %v4692 = vld [vmem:[%s3172 + $0x240] sm:$0xff]
  %v4693 = vld [vmem:[%s3172 + $0x248] sm:$0xff]
  %v4694 = vld [vmem:[%s3172 + $0x258] sm:$0xff]
  %v4695 = vld [vmem:[%s3172 + $0x260] sm:$0xff]
  %v4696 = vld [vmem:[%s3172 + $0x270] sm:$0xff]
  %v4697 = vld [vmem:[%s3172 + $0x278] sm:$0xff]
  %v4698 = vld [vmem:[%s3172 + $0x288] sm:$0xff]
  %v4699 = vld [vmem:[%s3172 + $0x290] sm:$0xff]
  %v4700 = vld [vmem:[%s3172 + $0x2a0] sm:$0xff]
  %v4701 = vld [vmem:[%s3172 + $0x2a8] sm:$0xff]
  %v4702 = vld [vmem:[%s3172 + $0x2b8] sm:$0xff]
  %v4703 = vld [vmem:[%s3172 + $0x2c0] sm:$0xff]
  %v4704 = vld [vmem:[%s3172 + $0x2d0] sm:$0xff]
  %v4705 = vld [vmem:[%s3172 + $0x2d8] sm:$0xff]
  %v4706 = vld [vmem:[%s3172 + $0x2e8] sm:$0xff]
  %v4707 = vld [vmem:[%s3172 + $0x2f0] sm:$0xff]
  %v4708 = vld [vmem:[%s3172 + $0x300] sm:$0xff]
  %v4709 = vld [vmem:[%s3172 + $0x308] sm:$0xff]
  %v4710 = vld [vmem:[%s3172 + $0x318] sm:$0xff]
  %v4711 = vld [vmem:[%s3172 + $0x320] sm:$0xff]
  %v4712 = vpack.c.bf16 %v4649, %v4648
  %v4713 = vpack.c.bf16 %v4651, %v4650
  %v4714 = vpack.c.bf16 %v4653, %v4652
  %v4715 = vpack.c.bf16 %v4655, %v4654
  %v4716 = vpack.c.bf16 %v4657, %v4656
  %v4717 = vpack.c.bf16 %v4659, %v4658
  %v4718 = vpack.c.bf16 %v4661, %v4660
  %v4719 = vpack.c.bf16 %v4663, %v4662
  %v4720 = vpack.c.bf16 %v4665, %v4664
  %v4721 = vpack.c.bf16 %v4667, %v4666
  %v4722 = vpack.c.bf16 %v4669, %v4668
  %v4723 = vpack.c.bf16 %v4671, %v4670
  %v4724 = vpack.c.bf16 %v4673, %v4672
  %v4725 = vpack.c.bf16 %v4675, %v4674
  %v4726 = vpack.c.bf16 %v4677, %v4676
  %v4727 = vpack.c.bf16 %v4679, %v4678
  %v4728 = vpack.c.bf16 %v4681, %v4680
  %v4729 = vpack.c.bf16 %v4683, %v4682
  %v4730 = vpack.c.bf16 %v4685, %v4684
  %v4731 = vpack.c.bf16 %v4687, %v4686
  %v4732 = vpack.c.bf16 %v4689, %v4688
  %v4733 = vpack.c.bf16 %v4691, %v4690
  %v4734 = vpack.c.bf16 %v4693, %v4692
  %v4735 = vpack.c.bf16 %v4695, %v4694
  %v4736 = vpack.c.bf16 %v4697, %v4696
  %v4737 = vpack.c.bf16 %v4699, %v4698
  %v4738 = vpack.c.bf16 %v4701, %v4700
  %v4739 = vpack.c.bf16 %v4703, %v4702
  %v4740 = vpack.c.bf16 %v4705, %v4704
  %v4741 = vpack.c.bf16 %v4707, %v4706
  %v4742 = vpack.c.bf16 %v4709, %v4708
  %v4743 = vpack.c.bf16 %v4711, %v4710
  %v4776 = vunpack.c.l.b16 %v4712
  %v4777 = vunpack.c.h.b16 %v4712
  %v4778 = vunpack.c.l.b16 %v4713
  %v4779 = vunpack.c.h.b16 %v4713
  %v4780 = vunpack.c.l.b16 %v4714
  %v4781 = vunpack.c.h.b16 %v4714
  %v4782 = vunpack.c.l.b16 %v4715
  %v4783 = vunpack.c.h.b16 %v4715
  %v4784 = vunpack.c.l.b16 %v4716
  %v4785 = vunpack.c.h.b16 %v4716
  %v4786 = vunpack.c.l.b16 %v4717
  %v4787 = vunpack.c.h.b16 %v4717
  %v4788 = vunpack.c.l.b16 %v4718
  %v4789 = vunpack.c.h.b16 %v4718
  %v4790 = vunpack.c.l.b16 %v4719
  %v4791 = vunpack.c.h.b16 %v4719
  %v4792 = vunpack.c.l.b16 %v4720
  %v4793 = vunpack.c.h.b16 %v4720
  %v4794 = vunpack.c.l.b16 %v4721
  %v4795 = vunpack.c.h.b16 %v4721
  %v4796 = vunpack.c.l.b16 %v4722
  %v4797 = vunpack.c.h.b16 %v4722
  %v4798 = vunpack.c.l.b16 %v4723
  %v4799 = vunpack.c.h.b16 %v4723
  %v4800 = vunpack.c.l.b16 %v4724
  %v4801 = vunpack.c.h.b16 %v4724
  %v4802 = vunpack.c.l.b16 %v4725
  %v4803 = vunpack.c.h.b16 %v4725
  %v4804 = vunpack.c.l.b16 %v4726
  %v4805 = vunpack.c.h.b16 %v4726
  %v4806 = vunpack.c.l.b16 %v4727
  %v4807 = vunpack.c.h.b16 %v4727
  %v4808 = vunpack.c.l.b16 %v4728
  %v4809 = vunpack.c.h.b16 %v4728
  %v4810 = vunpack.c.l.b16 %v4729
  %v4811 = vunpack.c.h.b16 %v4729
  %v4812 = vunpack.c.l.b16 %v4730
  %v4813 = vunpack.c.h.b16 %v4730
  %v4814 = vunpack.c.l.b16 %v4731
  %v4815 = vunpack.c.h.b16 %v4731
  %v4816 = vunpack.c.l.b16 %v4732
  %v4817 = vunpack.c.h.b16 %v4732
  %v4818 = vunpack.c.l.b16 %v4733
  %v4819 = vunpack.c.h.b16 %v4733
  %v4820 = vunpack.c.l.b16 %v4734
  %v4821 = vunpack.c.h.b16 %v4734
  %v4822 = vunpack.c.l.b16 %v4735
  %v4823 = vunpack.c.h.b16 %v4735
  %v4824 = vunpack.c.l.b16 %v4736
  %v4825 = vunpack.c.h.b16 %v4736
  %v4826 = vunpack.c.l.b16 %v4737
  %v4827 = vunpack.c.h.b16 %v4737
  %v4828 = vunpack.c.l.b16 %v4738
  %v4829 = vunpack.c.h.b16 %v4738
  %v4830 = vunpack.c.l.b16 %v4739
  %v4831 = vunpack.c.h.b16 %v4739
  %v4832 = vunpack.c.l.b16 %v4740
  %v4833 = vunpack.c.h.b16 %v4740
  %v4834 = vunpack.c.l.b16 %v4741
  %v4835 = vunpack.c.h.b16 %v4741
  %v4836 = vunpack.c.l.b16 %v4742
  %v4837 = vunpack.c.h.b16 %v4742
  %v4838 = vunpack.c.l.b16 %v4743
  %v4839 = vunpack.c.h.b16 %v4743
  %v4840 = vpack.c.b16 %v4776, %v4776
  %v4841 = vpack.c.b16 %v4777, %v4777
  %v4842 = vpack.c.b16 %v4778, %v4778
  %v4843 = vpack.c.b16 %v4779, %v4779
  %v4844 = vpack.c.b16 %v4780, %v4780
  %v4845 = vpack.c.b16 %v4781, %v4781
  %v4846 = vpack.c.b16 %v4782, %v4782
  %v4847 = vpack.c.b16 %v4783, %v4783
  %v4848 = vpack.c.b16 %v4784, %v4784
  %v4849 = vpack.c.b16 %v4785, %v4785
  %v4850 = vpack.c.b16 %v4786, %v4786
  %v4851 = vpack.c.b16 %v4787, %v4787
  %v4852 = vpack.c.b16 %v4788, %v4788
  %v4853 = vpack.c.b16 %v4789, %v4789
  %v4854 = vpack.c.b16 %v4790, %v4790
  %v4855 = vpack.c.b16 %v4791, %v4791
  %v4856 = vpack.c.b16 %v4792, %v4792
  %v4857 = vpack.c.b16 %v4793, %v4793
  %v4858 = vpack.c.b16 %v4794, %v4794
  %v4859 = vpack.c.b16 %v4795, %v4795
  %v4860 = vpack.c.b16 %v4796, %v4796
  %v4861 = vpack.c.b16 %v4797, %v4797
  %v4862 = vpack.c.b16 %v4798, %v4798
  %v4863 = vpack.c.b16 %v4799, %v4799
  %v4864 = vpack.c.b16 %v4800, %v4800
  %v4865 = vpack.c.b16 %v4801, %v4801
  %v4866 = vpack.c.b16 %v4802, %v4802
  %v4867 = vpack.c.b16 %v4803, %v4803
  %v4868 = vpack.c.b16 %v4804, %v4804
  %v4869 = vpack.c.b16 %v4805, %v4805
  %v4870 = vpack.c.b16 %v4806, %v4806
  %v4871 = vpack.c.b16 %v4807, %v4807
  %v4872 = vpack.c.b16 %v4808, %v4808
  %v4873 = vpack.c.b16 %v4809, %v4809
  %v4874 = vpack.c.b16 %v4810, %v4810
  %v4875 = vpack.c.b16 %v4811, %v4811
  %v4876 = vpack.c.b16 %v4812, %v4812
  %v4877 = vpack.c.b16 %v4813, %v4813
  %v4878 = vpack.c.b16 %v4814, %v4814
  %v4879 = vpack.c.b16 %v4815, %v4815
  %v4880 = vpack.c.b16 %v4816, %v4816
  %v4881 = vpack.c.b16 %v4817, %v4817
  %v4882 = vpack.c.b16 %v4818, %v4818
  %v4883 = vpack.c.b16 %v4819, %v4819
  %v4884 = vpack.c.b16 %v4820, %v4820
  %v4885 = vpack.c.b16 %v4821, %v4821
  %v4886 = vpack.c.b16 %v4822, %v4822
  %v4887 = vpack.c.b16 %v4823, %v4823
  %v4888 = vpack.c.b16 %v4824, %v4824
  %v4889 = vpack.c.b16 %v4825, %v4825
  %v4890 = vpack.c.b16 %v4826, %v4826
  %v4891 = vpack.c.b16 %v4827, %v4827
  %v4892 = vpack.c.b16 %v4828, %v4828
  %v4893 = vpack.c.b16 %v4829, %v4829
  %v4894 = vpack.c.b16 %v4830, %v4830
  %v4895 = vpack.c.b16 %v4831, %v4831
  %v4896 = vpack.c.b16 %v4832, %v4832
  %v4897 = vpack.c.b16 %v4833, %v4833
  %v4898 = vpack.c.b16 %v4834, %v4834
  %v4899 = vpack.c.b16 %v4835, %v4835
  %v4900 = vpack.c.b16 %v4836, %v4836
  %v4901 = vpack.c.b16 %v4837, %v4837
  %v4902 = vpack.c.b16 %v4838, %v4838
  %v4903 = vpack.c.b16 %v4839, %v4839
  %4904 = vrot.lane.b32.xlu0 %v4840, 96
  %v4905 = vpop.permute.xlu0 %4904
  %4906 = vrot.lane.b32.xlu0 %v4841, 96
  %v4907 = vpop.permute.xlu0 %4906
  %4908 = vrot.lane.b32.xlu0 %v4842, 96
  %v4909 = vpop.permute.xlu0 %4908
  %4910 = vrot.lane.b32.xlu0 %v4843, 96
  %v4911 = vpop.permute.xlu0 %4910
  %4912 = vrot.lane.b32.xlu0 %v4844, 96
  %v4913 = vpop.permute.xlu0 %4912
  %4914 = vrot.lane.b32.xlu0 %v4845, 96
  %v4915 = vpop.permute.xlu0 %4914
  %4916 = vrot.lane.b32.xlu0 %v4846, 96
  %v4917 = vpop.permute.xlu0 %4916
  %4918 = vrot.lane.b32.xlu0 %v4847, 96
  %v4919 = vpop.permute.xlu0 %4918
  %4920 = vrot.lane.b32.xlu0 %v4848, 96
  %v4921 = vpop.permute.xlu0 %4920
  %4922 = vrot.lane.b32.xlu0 %v4849, 96
  %v4923 = vpop.permute.xlu0 %4922
  %4924 = vrot.lane.b32.xlu0 %v4850, 96
  %v4925 = vpop.permute.xlu0 %4924
  %4926 = vrot.lane.b32.xlu0 %v4851, 96
  %v4927 = vpop.permute.xlu0 %4926
  %4928 = vrot.lane.b32.xlu0 %v4852, 96
  %v4929 = vpop.permute.xlu0 %4928
  %4930 = vrot.lane.b32.xlu0 %v4853, 96
  %v4931 = vpop.permute.xlu0 %4930
  %4932 = vrot.lane.b32.xlu0 %v4854, 96
  %v4933 = vpop.permute.xlu0 %4932
  %4934 = vrot.lane.b32.xlu0 %v4855, 96
  %v4935 = vpop.permute.xlu0 %4934
  %4936 = vrot.lane.b32.xlu0 %v4856, 96
  %v4937 = vpop.permute.xlu0 %4936
  %4938 = vrot.lane.b32.xlu0 %v4857, 96
  %v4939 = vpop.permute.xlu0 %4938
  %4940 = vrot.lane.b32.xlu0 %v4858, 96
  %v4941 = vpop.permute.xlu0 %4940
  %4942 = vrot.lane.b32.xlu0 %v4859, 96
  %v4943 = vpop.permute.xlu0 %4942
  %4944 = vrot.lane.b32.xlu0 %v4860, 96
  %v4945 = vpop.permute.xlu0 %4944
  %4946 = vrot.lane.b32.xlu0 %v4861, 96
  %v4947 = vpop.permute.xlu0 %4946
  %4948 = vrot.lane.b32.xlu0 %v4862, 96
  %v4949 = vpop.permute.xlu0 %4948
  %4950 = vrot.lane.b32.xlu0 %v4863, 96
  %v4951 = vpop.permute.xlu0 %4950
  %4952 = vrot.lane.b32.xlu0 %v4864, 96
  %v4953 = vpop.permute.xlu0 %4952
  %4954 = vrot.lane.b32.xlu0 %v4865, 96
  %v4955 = vpop.permute.xlu0 %4954
  %4956 = vrot.lane.b32.xlu0 %v4866, 96
  %v4957 = vpop.permute.xlu0 %4956
  %4958 = vrot.lane.b32.xlu0 %v4867, 96
  %v4959 = vpop.permute.xlu0 %4958
  %4960 = vrot.lane.b32.xlu0 %v4868, 96
  %v4961 = vpop.permute.xlu0 %4960
  %4962 = vrot.lane.b32.xlu0 %v4869, 96
  %v4963 = vpop.permute.xlu0 %4962
  %4964 = vrot.lane.b32.xlu0 %v4870, 96
  %v4965 = vpop.permute.xlu0 %4964
  %4966 = vrot.lane.b32.xlu0 %v4871, 96
  %v4967 = vpop.permute.xlu0 %4966
  %4968 = vrot.lane.b32.xlu0 %v4872, 96
  %v4969 = vpop.permute.xlu0 %4968
  %4970 = vrot.lane.b32.xlu0 %v4873, 96
  %v4971 = vpop.permute.xlu0 %4970
  %4972 = vrot.lane.b32.xlu0 %v4874, 96
  %v4973 = vpop.permute.xlu0 %4972
  %4974 = vrot.lane.b32.xlu0 %v4875, 96
  %v4975 = vpop.permute.xlu0 %4974
  %4976 = vrot.lane.b32.xlu0 %v4876, 96
  %v4977 = vpop.permute.xlu0 %4976
  %4978 = vrot.lane.b32.xlu0 %v4877, 96
  %v4979 = vpop.permute.xlu0 %4978
  %4980 = vrot.lane.b32.xlu0 %v4878, 96
  %v4981 = vpop.permute.xlu0 %4980
  %4982 = vrot.lane.b32.xlu0 %v4879, 96
  %v4983 = vpop.permute.xlu0 %4982
  %4984 = vrot.lane.b32.xlu0 %v4880, 96
  %v4985 = vpop.permute.xlu0 %4984
  %4986 = vrot.lane.b32.xlu0 %v4881, 96
  %v4987 = vpop.permute.xlu0 %4986
  %4988 = vrot.lane.b32.xlu0 %v4882, 96
  %v4989 = vpop.permute.xlu0 %4988
  %4990 = vrot.lane.b32.xlu0 %v4883, 96
  %v4991 = vpop.permute.xlu0 %4990
  %4992 = vrot.lane.b32.xlu0 %v4884, 96
  %v4993 = vpop.permute.xlu0 %4992
  %4994 = vrot.lane.b32.xlu0 %v4885, 96
  %v4995 = vpop.permute.xlu0 %4994
  %4996 = vrot.lane.b32.xlu0 %v4886, 96
  %v4997 = vpop.permute.xlu0 %4996
  %4998 = vrot.lane.b32.xlu0 %v4887, 96
  %v4999 = vpop.permute.xlu0 %4998
  %5000 = vrot.lane.b32.xlu0 %v4888, 96
  %v5001 = vpop.permute.xlu0 %5000
  %5002 = vrot.lane.b32.xlu0 %v4889, 96
  %v5003 = vpop.permute.xlu0 %5002
  %5004 = vrot.lane.b32.xlu0 %v4890, 96
  %v5005 = vpop.permute.xlu0 %5004
  %5006 = vrot.lane.b32.xlu0 %v4891, 96
  %v5007 = vpop.permute.xlu0 %5006
  %5008 = vrot.lane.b32.xlu0 %v4892, 96
  %v5009 = vpop.permute.xlu0 %5008
  %5010 = vrot.lane.b32.xlu0 %v4893, 96
  %v5011 = vpop.permute.xlu0 %5010
  %5012 = vrot.lane.b32.xlu0 %v4894, 96
  %v5013 = vpop.permute.xlu0 %5012
  %5014 = vrot.lane.b32.xlu0 %v4895, 96
  %v5015 = vpop.permute.xlu0 %5014
  %5016 = vrot.lane.b32.xlu0 %v4896, 96
  %v5017 = vpop.permute.xlu0 %5016
  %5018 = vrot.lane.b32.xlu0 %v4897, 96
  %v5019 = vpop.permute.xlu0 %5018
  %5020 = vrot.lane.b32.xlu0 %v4898, 96
  %v5021 = vpop.permute.xlu0 %5020
  %5022 = vrot.lane.b32.xlu0 %v4899, 96
  %v5023 = vpop.permute.xlu0 %5022
  %5024 = vrot.lane.b32.xlu0 %v4900, 96
  %v5025 = vpop.permute.xlu0 %5024
  %5026 = vrot.lane.b32.xlu0 %v4901, 96
  %v5027 = vpop.permute.xlu0 %5026
  %5028 = vrot.lane.b32.xlu0 %v4902, 96
  %v5029 = vpop.permute.xlu0 %5028
  %5030 = vrot.lane.b32.xlu0 %v4903, 96
  %v5031 = vpop.permute.xlu0 %5030
  %vm5096 = vcmask 1044224
  %5097 = vst.msk [vmem:[#allocation3] sm:$0xf] %vm5096, %v4905
  %5098 = vst.msk [vmem:[#allocation3 + $0xc] sm:$0xf] %vm5096, %v4907
  %5099 = vst.msk [vmem:[#allocation3 + $0x18] sm:$0xf] %vm5096, %v4909
  %5100 = vst.msk [vmem:[#allocation3 + $0x24] sm:$0xf] %vm5096, %v4911
  %5101 = vst.msk [vmem:[#allocation3 + $0x30] sm:$0xf] %vm5096, %v4913
  %5102 = vst.msk [vmem:[#allocation3 + $0x3c] sm:$0xf] %vm5096, %v4915
  %5103 = vst.msk [vmem:[#allocation3 + $0x48] sm:$0xf] %vm5096, %v4917
  %5104 = vst.msk [vmem:[#allocation3 + $0x54] sm:$0xf] %vm5096, %v4919
  %5105 = vst.msk [vmem:[#allocation3 + $0x60] sm:$0xf] %vm5096, %v4921
  %5106 = vst.msk [vmem:[#allocation3 + $0x6c] sm:$0xf] %vm5096, %v4923
  %5107 = vst.msk [vmem:[#allocation3 + $0x78] sm:$0xf] %vm5096, %v4925
  %5108 = vst.msk [vmem:[#allocation3 + $0x84] sm:$0xf] %vm5096, %v4927
  %5109 = vst.msk [vmem:[#allocation3 + $0x90] sm:$0xf] %vm5096, %v4929
  %5110 = vst.msk [vmem:[#allocation3 + $0x9c] sm:$0xf] %vm5096, %v4931
  %5111 = vst.msk [vmem:[#allocation3 + $0xa8] sm:$0xf] %vm5096, %v4933
  %5112 = vst.msk [vmem:[#allocation3 + $0xb4] sm:$0xf] %vm5096, %v4935
  %5113 = vst.msk [vmem:[#allocation3 + $0xc0] sm:$0xf] %vm5096, %v4937
  %5114 = vst.msk [vmem:[#allocation3 + $0xcc] sm:$0xf] %vm5096, %v4939
  %5115 = vst.msk [vmem:[#allocation3 + $0xd8] sm:$0xf] %vm5096, %v4941
  %5116 = vst.msk [vmem:[#allocation3 + $0xe4] sm:$0xf] %vm5096, %v4943
  %5117 = vst.msk [vmem:[#allocation3 + $0xf0] sm:$0xf] %vm5096, %v4945
  %5118 = vst.msk [vmem:[#allocation3 + $0xfc] sm:$0xf] %vm5096, %v4947
  %5119 = vst.msk [vmem:[#allocation3 + $0x108] sm:$0xf] %vm5096, %v4949
  %5120 = vst.msk [vmem:[#allocation3 + $0x114] sm:$0xf] %vm5096, %v4951
  %5121 = vst.msk [vmem:[#allocation3 + $0x120] sm:$0xf] %vm5096, %v4953
  %5122 = vst.msk [vmem:[#allocation3 + $0x12c] sm:$0xf] %vm5096, %v4955
  %5123 = vst.msk [vmem:[#allocation3 + $0x138] sm:$0xf] %vm5096, %v4957
  %5124 = vst.msk [vmem:[#allocation3 + $0x144] sm:$0xf] %vm5096, %v4959
  %5125 = vst.msk [vmem:[#allocation3 + $0x150] sm:$0xf] %vm5096, %v4961
  %5126 = vst.msk [vmem:[#allocation3 + $0x15c] sm:$0xf] %vm5096, %v4963
  %5127 = vst.msk [vmem:[#allocation3 + $0x168] sm:$0xf] %vm5096, %v4965
  %5128 = vst.msk [vmem:[#allocation3 + $0x174] sm:$0xf] %vm5096, %v4967
  %5129 = vst.msk [vmem:[#allocation3 + $0x180] sm:$0xf] %vm5096, %v4969
  %5130 = vst.msk [vmem:[#allocation3 + $0x18c] sm:$0xf] %vm5096, %v4971
  %5131 = vst.msk [vmem:[#allocation3 + $0x198] sm:$0xf] %vm5096, %v4973
  %5132 = vst.msk [vmem:[#allocation3 + $0x1a4] sm:$0xf] %vm5096, %v4975
  %5133 = vst.msk [vmem:[#allocation3 + $0x1b0] sm:$0xf] %vm5096, %v4977
  %5134 = vst.msk [vmem:[#allocation3 + $0x1bc] sm:$0xf] %vm5096, %v4979
  %5135 = vst.msk [vmem:[#allocation3 + $0x1c8] sm:$0xf] %vm5096, %v4981
  %5136 = vst.msk [vmem:[#allocation3 + $0x1d4] sm:$0xf] %vm5096, %v4983
  %5137 = vst.msk [vmem:[#allocation3 + $0x1e0] sm:$0xf] %vm5096, %v4985
  %5138 = vst.msk [vmem:[#allocation3 + $0x1ec] sm:$0xf] %vm5096, %v4987
  %5139 = vst.msk [vmem:[#allocation3 + $0x1f8] sm:$0xf] %vm5096, %v4989
  %5140 = vst.msk [vmem:[#allocation3 + $0x204] sm:$0xf] %vm5096, %v4991
  %5141 = vst.msk [vmem:[#allocation3 + $0x210] sm:$0xf] %vm5096, %v4993
  %5142 = vst.msk [vmem:[#allocation3 + $0x21c] sm:$0xf] %vm5096, %v4995
  %5143 = vst.msk [vmem:[#allocation3 + $0x228] sm:$0xf] %vm5096, %v4997
  %5144 = vst.msk [vmem:[#allocation3 + $0x234] sm:$0xf] %vm5096, %v4999
  %5145 = vst.msk [vmem:[#allocation3 + $0x240] sm:$0xf] %vm5096, %v5001
  %5146 = vst.msk [vmem:[#allocation3 + $0x24c] sm:$0xf] %vm5096, %v5003
  %5147 = vst.msk [vmem:[#allocation3 + $0x258] sm:$0xf] %vm5096, %v5005
  %5148 = vst.msk [vmem:[#allocation3 + $0x264] sm:$0xf] %vm5096, %v5007
  %5149 = vst.msk [vmem:[#allocation3 + $0x270] sm:$0xf] %vm5096, %v5009
  %5150 = vst.msk [vmem:[#allocation3 + $0x27c] sm:$0xf] %vm5096, %v5011
  %5151 = vst.msk [vmem:[#allocation3 + $0x288] sm:$0xf] %vm5096, %v5013
  %5152 = vst.msk [vmem:[#allocation3 + $0x294] sm:$0xf] %vm5096, %v5015
  %5153 = vst.msk [vmem:[#allocation3 + $0x2a0] sm:$0xf] %vm5096, %v5017
  %5154 = vst.msk [vmem:[#allocation3 + $0x2ac] sm:$0xf] %vm5096, %v5019
  %5155 = vst.msk [vmem:[#allocation3 + $0x2b8] sm:$0xf] %vm5096, %v5021
  %5156 = vst.msk [vmem:[#allocation3 + $0x2c4] sm:$0xf] %vm5096, %v5023
  %5157 = vst.msk [vmem:[#allocation3 + $0x2d0] sm:$0xf] %vm5096, %v5025
  %5158 = vst.msk [vmem:[#allocation3 + $0x2dc] sm:$0xf] %vm5096, %v5027
  %5159 = vst.msk [vmem:[#allocation3 + $0x2e8] sm:$0xf] %vm5096, %v5029
  %5160 = vst.msk [vmem:[#allocation3 + $0x2f4] sm:$0xf] %vm5096, %v5031
  %v5161 = vld [vmem:[%s3172 + $0x1] sm:$0xff]
  %v5162 = vld [vmem:[%s3172 + $0x9] sm:$0xff]
  %v5163 = vld [vmem:[%s3172 + $0x19] sm:$0xff]
  %v5164 = vld [vmem:[%s3172 + $0x21] sm:$0xff]
  %v5165 = vld [vmem:[%s3172 + $0x31] sm:$0xff]
  %v5166 = vld [vmem:[%s3172 + $0x39] sm:$0xff]
  %v5167 = vld [vmem:[%s3172 + $0x49] sm:$0xff]
  %v5168 = vld [vmem:[%s3172 + $0x51] sm:$0xff]
  %v5169 = vld [vmem:[%s3172 + $0x61] sm:$0xff]
  %v5170 = vld [vmem:[%s3172 + $0x69] sm:$0xff]
  %v5171 = vld [vmem:[%s3172 + $0x79] sm:$0xff]
  %v5172 = vld [vmem:[%s3172 + $0x81] sm:$0xff]
  %v5173 = vld [vmem:[%s3172 + $0x91] sm:$0xff]
  %v5174 = vld [vmem:[%s3172 + $0x99] sm:$0xff]
  %v5175 = vld [vmem:[%s3172 + $0xa9] sm:$0xff]
  %v5176 = vld [vmem:[%s3172 + $0xb1] sm:$0xff]
  %v5177 = vld [vmem:[%s3172 + $0xc1] sm:$0xff]
  %v5178 = vld [vmem:[%s3172 + $0xc9] sm:$0xff]
  %v5179 = vld [vmem:[%s3172 + $0xd9] sm:$0xff]
  %v5180 = vld [vmem:[%s3172 + $0xe1] sm:$0xff]
  %v5181 = vld [vmem:[%s3172 + $0xf1] sm:$0xff]
  %v5182 = vld [vmem:[%s3172 + $0xf9] sm:$0xff]
  %v5183 = vld [vmem:[%s3172 + $0x109] sm:$0xff]
  %v5184 = vld [vmem:[%s3172 + $0x111] sm:$0xff]
  %v5185 = vld [vmem:[%s3172 + $0x121] sm:$0xff]
  %v5186 = vld [vmem:[%s3172 + $0x129] sm:$0xff]
  %v5187 = vld [vmem:[%s3172 + $0x139] sm:$0xff]
  %v5188 = vld [vmem:[%s3172 + $0x141] sm:$0xff]
  %v5189 = vld [vmem:[%s3172 + $0x151] sm:$0xff]
  %v5190 = vld [vmem:[%s3172 + $0x159] sm:$0xff]
  %v5191 = vld [vmem:[%s3172 + $0x169] sm:$0xff]
  %v5192 = vld [vmem:[%s3172 + $0x171] sm:$0xff]
  %v5193 = vld [vmem:[%s3172 + $0x1b1] sm:$0xff]
  %v5194 = vld [vmem:[%s3172 + $0x1b9] sm:$0xff]
  %v5195 = vld [vmem:[%s3172 + $0x1c9] sm:$0xff]
  %v5196 = vld [vmem:[%s3172 + $0x1d1] sm:$0xff]
  %v5197 = vld [vmem:[%s3172 + $0x1e1] sm:$0xff]
  %v5198 = vld [vmem:[%s3172 + $0x1e9] sm:$0xff]
  %v5199 = vld [vmem:[%s3172 + $0x1f9] sm:$0xff]
  %v5200 = vld [vmem:[%s3172 + $0x201] sm:$0xff]
  %v5201 = vld [vmem:[%s3172 + $0x211] sm:$0xff]
  %v5202 = vld [vmem:[%s3172 + $0x219] sm:$0xff]
  %v5203 = vld [vmem:[%s3172 + $0x229] sm:$0xff]
  %v5204 = vld [vmem:[%s3172 + $0x231] sm:$0xff]
  %v5205 = vld [vmem:[%s3172 + $0x241] sm:$0xff]
  %v5206 = vld [vmem:[%s3172 + $0x249] sm:$0xff]
  %v5207 = vld [vmem:[%s3172 + $0x259] sm:$0xff]
  %v5208 = vld [vmem:[%s3172 + $0x261] sm:$0xff]
  %v5209 = vld [vmem:[%s3172 + $0x271] sm:$0xff]
  %v5210 = vld [vmem:[%s3172 + $0x279] sm:$0xff]
  %v5211 = vld [vmem:[%s3172 + $0x289] sm:$0xff]
  %v5212 = vld [vmem:[%s3172 + $0x291] sm:$0xff]
  %v5213 = vld [vmem:[%s3172 + $0x2a1] sm:$0xff]
  %v5214 = vld [vmem:[%s3172 + $0x2a9] sm:$0xff]
  %v5215 = vld [vmem:[%s3172 + $0x2b9] sm:$0xff]
  %v5216 = vld [vmem:[%s3172 + $0x2c1] sm:$0xff]
  %v5217 = vld [vmem:[%s3172 + $0x2d1] sm:$0xff]
  %v5218 = vld [vmem:[%s3172 + $0x2d9] sm:$0xff]
  %v5219 = vld [vmem:[%s3172 + $0x2e9] sm:$0xff]
  %v5220 = vld [vmem:[%s3172 + $0x2f1] sm:$0xff]
  %v5221 = vld [vmem:[%s3172 + $0x301] sm:$0xff]
  %v5222 = vld [vmem:[%s3172 + $0x309] sm:$0xff]
  %v5223 = vld [vmem:[%s3172 + $0x319] sm:$0xff]
  %v5224 = vld [vmem:[%s3172 + $0x321] sm:$0xff]
  %v5225 = vpack.c.bf16 %v5162, %v5161
  %v5226 = vpack.c.bf16 %v5164, %v5163
  %v5227 = vpack.c.bf16 %v5166, %v5165
  %v5228 = vpack.c.bf16 %v5168, %v5167
  %v5229 = vpack.c.bf16 %v5170, %v5169
  %v5230 = vpack.c.bf16 %v5172, %v5171
  %v5231 = vpack.c.bf16 %v5174, %v5173
  %v5232 = vpack.c.bf16 %v5176, %v5175
  %v5233 = vpack.c.bf16 %v5178, %v5177
  %v5234 = vpack.c.bf16 %v5180, %v5179
  %v5235 = vpack.c.bf16 %v5182, %v5181
  %v5236 = vpack.c.bf16 %v5184, %v5183
  %v5237 = vpack.c.bf16 %v5186, %v5185
  %v5238 = vpack.c.bf16 %v5188, %v5187
  %v5239 = vpack.c.bf16 %v5190, %v5189
  %v5240 = vpack.c.bf16 %v5192, %v5191
  %v5241 = vpack.c.bf16 %v5194, %v5193
  %v5242 = vpack.c.bf16 %v5196, %v5195
  %v5243 = vpack.c.bf16 %v5198, %v5197
  %v5244 = vpack.c.bf16 %v5200, %v5199
  %v5245 = vpack.c.bf16 %v5202, %v5201
  %v5246 = vpack.c.bf16 %v5204, %v5203
  %v5247 = vpack.c.bf16 %v5206, %v5205
  %v5248 = vpack.c.bf16 %v5208, %v5207
  %v5249 = vpack.c.bf16 %v5210, %v5209
  %v5250 = vpack.c.bf16 %v5212, %v5211
  %v5251 = vpack.c.bf16 %v5214, %v5213
  %v5252 = vpack.c.bf16 %v5216, %v5215
  %v5253 = vpack.c.bf16 %v5218, %v5217
  %v5254 = vpack.c.bf16 %v5220, %v5219
  %v5255 = vpack.c.bf16 %v5222, %v5221
  %v5256 = vpack.c.bf16 %v5224, %v5223
  %v5289 = vunpack.c.l.b16 %v5225
  %v5290 = vunpack.c.h.b16 %v5225
  %v5291 = vunpack.c.l.b16 %v5226
  %v5292 = vunpack.c.h.b16 %v5226
  %v5293 = vunpack.c.l.b16 %v5227
  %v5294 = vunpack.c.h.b16 %v5227
  %v5295 = vunpack.c.l.b16 %v5228
  %v5296 = vunpack.c.h.b16 %v5228
  %v5297 = vunpack.c.l.b16 %v5229
  %v5298 = vunpack.c.h.b16 %v5229
  %v5299 = vunpack.c.l.b16 %v5230
  %v5300 = vunpack.c.h.b16 %v5230
  %v5301 = vunpack.c.l.b16 %v5231
  %v5302 = vunpack.c.h.b16 %v5231
  %v5303 = vunpack.c.l.b16 %v5232
  %v5304 = vunpack.c.h.b16 %v5232
  %v5305 = vunpack.c.l.b16 %v5233
  %v5306 = vunpack.c.h.b16 %v5233
  %v5307 = vunpack.c.l.b16 %v5234
  %v5308 = vunpack.c.h.b16 %v5234
  %v5309 = vunpack.c.l.b16 %v5235
  %v5310 = vunpack.c.h.b16 %v5235
  %v5311 = vunpack.c.l.b16 %v5236
  %v5312 = vunpack.c.h.b16 %v5236
  %v5313 = vunpack.c.l.b16 %v5237
  %v5314 = vunpack.c.h.b16 %v5237
  %v5315 = vunpack.c.l.b16 %v5238
  %v5316 = vunpack.c.h.b16 %v5238
  %v5317 = vunpack.c.l.b16 %v5239
  %v5318 = vunpack.c.h.b16 %v5239
  %v5319 = vunpack.c.l.b16 %v5240
  %v5320 = vunpack.c.h.b16 %v5240
  %v5321 = vunpack.c.l.b16 %v5241
  %v5322 = vunpack.c.h.b16 %v5241
  %v5323 = vunpack.c.l.b16 %v5242
  %v5324 = vunpack.c.h.b16 %v5242
  %v5325 = vunpack.c.l.b16 %v5243
  %v5326 = vunpack.c.h.b16 %v5243
  %v5327 = vunpack.c.l.b16 %v5244
  %v5328 = vunpack.c.h.b16 %v5244
  %v5329 = vunpack.c.l.b16 %v5245
  %v5330 = vunpack.c.h.b16 %v5245
  %v5331 = vunpack.c.l.b16 %v5246
  %v5332 = vunpack.c.h.b16 %v5246
  %v5333 = vunpack.c.l.b16 %v5247
  %v5334 = vunpack.c.h.b16 %v5247
  %v5335 = vunpack.c.l.b16 %v5248
  %v5336 = vunpack.c.h.b16 %v5248
  %v5337 = vunpack.c.l.b16 %v5249
  %v5338 = vunpack.c.h.b16 %v5249
  %v5339 = vunpack.c.l.b16 %v5250
  %v5340 = vunpack.c.h.b16 %v5250
  %v5341 = vunpack.c.l.b16 %v5251
  %v5342 = vunpack.c.h.b16 %v5251
  %v5343 = vunpack.c.l.b16 %v5252
  %v5344 = vunpack.c.h.b16 %v5252
  %v5345 = vunpack.c.l.b16 %v5253
  %v5346 = vunpack.c.h.b16 %v5253
  %v5347 = vunpack.c.l.b16 %v5254
  %v5348 = vunpack.c.h.b16 %v5254
  %v5349 = vunpack.c.l.b16 %v5255
  %v5350 = vunpack.c.h.b16 %v5255
  %v5351 = vunpack.c.l.b16 %v5256
  %v5352 = vunpack.c.h.b16 %v5256
  %v5353 = vpack.c.b16 %v5289, %v5289
  %v5354 = vpack.c.b16 %v5290, %v5290
  %v5355 = vpack.c.b16 %v5291, %v5291
  %v5356 = vpack.c.b16 %v5292, %v5292
  %v5357 = vpack.c.b16 %v5293, %v5293
  %v5358 = vpack.c.b16 %v5294, %v5294
  %v5359 = vpack.c.b16 %v5295, %v5295
  %v5360 = vpack.c.b16 %v5296, %v5296
  %v5361 = vpack.c.b16 %v5297, %v5297
  %v5362 = vpack.c.b16 %v5298, %v5298
  %v5363 = vpack.c.b16 %v5299, %v5299
  %v5364 = vpack.c.b16 %v5300, %v5300
  %v5365 = vpack.c.b16 %v5301, %v5301
  %v5366 = vpack.c.b16 %v5302, %v5302
  %v5367 = vpack.c.b16 %v5303, %v5303
  %v5368 = vpack.c.b16 %v5304, %v5304
  %v5369 = vpack.c.b16 %v5305, %v5305
  %v5370 = vpack.c.b16 %v5306, %v5306
  %v5371 = vpack.c.b16 %v5307, %v5307
  %v5372 = vpack.c.b16 %v5308, %v5308
  %v5373 = vpack.c.b16 %v5309, %v5309
  %v5374 = vpack.c.b16 %v5310, %v5310
  %v5375 = vpack.c.b16 %v5311, %v5311
  %v5376 = vpack.c.b16 %v5312, %v5312
  %v5377 = vpack.c.b16 %v5313, %v5313
  %v5378 = vpack.c.b16 %v5314, %v5314
  %v5379 = vpack.c.b16 %v5315, %v5315
  %v5380 = vpack.c.b16 %v5316, %v5316
  %v5381 = vpack.c.b16 %v5317, %v5317
  %v5382 = vpack.c.b16 %v5318, %v5318
  %v5383 = vpack.c.b16 %v5319, %v5319
  %v5384 = vpack.c.b16 %v5320, %v5320
  %v5385 = vpack.c.b16 %v5321, %v5321
  %v5386 = vpack.c.b16 %v5322, %v5322
  %v5387 = vpack.c.b16 %v5323, %v5323
  %v5388 = vpack.c.b16 %v5324, %v5324
  %v5389 = vpack.c.b16 %v5325, %v5325
  %v5390 = vpack.c.b16 %v5326, %v5326
  %v5391 = vpack.c.b16 %v5327, %v5327
  %v5392 = vpack.c.b16 %v5328, %v5328
  %v5393 = vpack.c.b16 %v5329, %v5329
  %v5394 = vpack.c.b16 %v5330, %v5330
  %v5395 = vpack.c.b16 %v5331, %v5331
  %v5396 = vpack.c.b16 %v5332, %v5332
  %v5397 = vpack.c.b16 %v5333, %v5333
  %v5398 = vpack.c.b16 %v5334, %v5334
  %v5399 = vpack.c.b16 %v5335, %v5335
  %v5400 = vpack.c.b16 %v5336, %v5336
  %v5401 = vpack.c.b16 %v5337, %v5337
  %v5402 = vpack.c.b16 %v5338, %v5338
  %v5403 = vpack.c.b16 %v5339, %v5339
  %v5404 = vpack.c.b16 %v5340, %v5340
  %v5405 = vpack.c.b16 %v5341, %v5341
  %v5406 = vpack.c.b16 %v5342, %v5342
  %v5407 = vpack.c.b16 %v5343, %v5343
  %v5408 = vpack.c.b16 %v5344, %v5344
  %v5409 = vpack.c.b16 %v5345, %v5345
  %v5410 = vpack.c.b16 %v5346, %v5346
  %v5411 = vpack.c.b16 %v5347, %v5347
  %v5412 = vpack.c.b16 %v5348, %v5348
  %v5413 = vpack.c.b16 %v5349, %v5349
  %v5414 = vpack.c.b16 %v5350, %v5350
  %v5415 = vpack.c.b16 %v5351, %v5351
  %v5416 = vpack.c.b16 %v5352, %v5352
  %5481 = vst.msk [vmem:[#allocation3 + $0x4] sm:$0xf] %vm3557, %v5353
  %5482 = vst.msk [vmem:[#allocation3 + $0x10] sm:$0xf] %vm3557, %v5354
  %5483 = vst.msk [vmem:[#allocation3 + $0x1c] sm:$0xf] %vm3557, %v5355
  %5484 = vst.msk [vmem:[#allocation3 + $0x28] sm:$0xf] %vm3557, %v5356
  %5485 = vst.msk [vmem:[#allocation3 + $0x34] sm:$0xf] %vm3557, %v5357
  %5486 = vst.msk [vmem:[#allocation3 + $0x40] sm:$0xf] %vm3557, %v5358
  %5487 = vst.msk [vmem:[#allocation3 + $0x4c] sm:$0xf] %vm3557, %v5359
  %5488 = vst.msk [vmem:[#allocation3 + $0x58] sm:$0xf] %vm3557, %v5360
  %5489 = vst.msk [vmem:[#allocation3 + $0x64] sm:$0xf] %vm3557, %v5361
  %5490 = vst.msk [vmem:[#allocation3 + $0x70] sm:$0xf] %vm3557, %v5362
  %5491 = vst.msk [vmem:[#allocation3 + $0x7c] sm:$0xf] %vm3557, %v5363
  %5492 = vst.msk [vmem:[#allocation3 + $0x88] sm:$0xf] %vm3557, %v5364
  %5493 = vst.msk [vmem:[#allocation3 + $0x94] sm:$0xf] %vm3557, %v5365
  %5494 = vst.msk [vmem:[#allocation3 + $0xa0] sm:$0xf] %vm3557, %v5366
  %5495 = vst.msk [vmem:[#allocation3 + $0xac] sm:$0xf] %vm3557, %v5367
  %5496 = vst.msk [vmem:[#allocation3 + $0xb8] sm:$0xf] %vm3557, %v5368
  %5497 = vst.msk [vmem:[#allocation3 + $0xc4] sm:$0xf] %vm3557, %v5369
  %5498 = vst.msk [vmem:[#allocation3 + $0xd0] sm:$0xf] %vm3557, %v5370
  %5499 = vst.msk [vmem:[#allocation3 + $0xdc] sm:$0xf] %vm3557, %v5371
  %5500 = vst.msk [vmem:[#allocation3 + $0xe8] sm:$0xf] %vm3557, %v5372
  %5501 = vst.msk [vmem:[#allocation3 + $0xf4] sm:$0xf] %vm3557, %v5373
  %5502 = vst.msk [vmem:[#allocation3 + $0x100] sm:$0xf] %vm3557, %v5374
  %5503 = vst.msk [vmem:[#allocation3 + $0x10c] sm:$0xf] %vm3557, %v5375
  %5504 = vst.msk [vmem:[#allocation3 + $0x118] sm:$0xf] %vm3557, %v5376
  %5505 = vst.msk [vmem:[#allocation3 + $0x124] sm:$0xf] %vm3557, %v5377
  %5506 = vst.msk [vmem:[#allocation3 + $0x130] sm:$0xf] %vm3557, %v5378
  %5507 = vst.msk [vmem:[#allocation3 + $0x13c] sm:$0xf] %vm3557, %v5379
  %5508 = vst.msk [vmem:[#allocation3 + $0x148] sm:$0xf] %vm3557, %v5380
  %5509 = vst.msk [vmem:[#allocation3 + $0x154] sm:$0xf] %vm3557, %v5381
  %5510 = vst.msk [vmem:[#allocation3 + $0x160] sm:$0xf] %vm3557, %v5382
  %5511 = vst.msk [vmem:[#allocation3 + $0x16c] sm:$0xf] %vm3557, %v5383
  %5512 = vst.msk [vmem:[#allocation3 + $0x178] sm:$0xf] %vm3557, %v5384
  %5513 = vst.msk [vmem:[#allocation3 + $0x184] sm:$0xf] %vm3557, %v5385
  %5514 = vst.msk [vmem:[#allocation3 + $0x190] sm:$0xf] %vm3557, %v5386
  %5515 = vst.msk [vmem:[#allocation3 + $0x19c] sm:$0xf] %vm3557, %v5387
  %5516 = vst.msk [vmem:[#allocation3 + $0x1a8] sm:$0xf] %vm3557, %v5388
  %5517 = vst.msk [vmem:[#allocation3 + $0x1b4] sm:$0xf] %vm3557, %v5389
  %5518 = vst.msk [vmem:[#allocation3 + $0x1c0] sm:$0xf] %vm3557, %v5390
  %5519 = vst.msk [vmem:[#allocation3 + $0x1cc] sm:$0xf] %vm3557, %v5391
  %5520 = vst.msk [vmem:[#allocation3 + $0x1d8] sm:$0xf] %vm3557, %v5392
  %5521 = vst.msk [vmem:[#allocation3 + $0x1e4] sm:$0xf] %vm3557, %v5393
  %5522 = vst.msk [vmem:[#allocation3 + $0x1f0] sm:$0xf] %vm3557, %v5394
  %5523 = vst.msk [vmem:[#allocation3 + $0x1fc] sm:$0xf] %vm3557, %v5395
  %5524 = vst.msk [vmem:[#allocation3 + $0x208] sm:$0xf] %vm3557, %v5396
  %5525 = vst.msk [vmem:[#allocation3 + $0x214] sm:$0xf] %vm3557, %v5397
  %5526 = vst.msk [vmem:[#allocation3 + $0x220] sm:$0xf] %vm3557, %v5398
  %5527 = vst.msk [vmem:[#allocation3 + $0x22c] sm:$0xf] %vm3557, %v5399
  %5528 = vst.msk [vmem:[#allocation3 + $0x238] sm:$0xf] %vm3557, %v5400
  %5529 = vst.msk [vmem:[#allocation3 + $0x244] sm:$0xf] %vm3557, %v5401
  %5530 = vst.msk [vmem:[#allocation3 + $0x250] sm:$0xf] %vm3557, %v5402
  %5531 = vst.msk [vmem:[#allocation3 + $0x25c] sm:$0xf] %vm3557, %v5403
  %5532 = vst.msk [vmem:[#allocation3 + $0x268] sm:$0xf] %vm3557, %v5404
  %5533 = vst.msk [vmem:[#allocation3 + $0x274] sm:$0xf] %vm3557, %v5405
  %5534 = vst.msk [vmem:[#allocation3 + $0x280] sm:$0xf] %vm3557, %v5406
  %5535 = vst.msk [vmem:[#allocation3 + $0x28c] sm:$0xf] %vm3557, %v5407
  %5536 = vst.msk [vmem:[#allocation3 + $0x298] sm:$0xf] %vm3557, %v5408
  %5537 = vst.msk [vmem:[#allocation3 + $0x2a4] sm:$0xf] %vm3557, %v5409
  %5538 = vst.msk [vmem:[#allocation3 + $0x2b0] sm:$0xf] %vm3557, %v5410
  %5539 = vst.msk [vmem:[#allocation3 + $0x2bc] sm:$0xf] %vm3557, %v5411
  %5540 = vst.msk [vmem:[#allocation3 + $0x2c8] sm:$0xf] %vm3557, %v5412
  %5541 = vst.msk [vmem:[#allocation3 + $0x2d4] sm:$0xf] %vm3557, %v5413
  %5542 = vst.msk [vmem:[#allocation3 + $0x2e0] sm:$0xf] %vm3557, %v5414
  %5543 = vst.msk [vmem:[#allocation3 + $0x2ec] sm:$0xf] %vm3557, %v5415
  %5544 = vst.msk [vmem:[#allocation3 + $0x2f8] sm:$0xf] %vm3557, %v5416
  %v5545 = vld [vmem:[%s3172 + $0x2] sm:$0xff]
  %v5546 = vld [vmem:[%s3172 + $0xa] sm:$0xff]
  %v5547 = vld [vmem:[%s3172 + $0x1a] sm:$0xff]
  %v5548 = vld [vmem:[%s3172 + $0x22] sm:$0xff]
  %v5549 = vld [vmem:[%s3172 + $0x32] sm:$0xff]
  %v5550 = vld [vmem:[%s3172 + $0x3a] sm:$0xff]
  %v5551 = vld [vmem:[%s3172 + $0x4a] sm:$0xff]
  %v5552 = vld [vmem:[%s3172 + $0x52] sm:$0xff]
  %v5553 = vld [vmem:[%s3172 + $0x62] sm:$0xff]
  %v5554 = vld [vmem:[%s3172 + $0x6a] sm:$0xff]
  %v5555 = vld [vmem:[%s3172 + $0x7a] sm:$0xff]
  %v5556 = vld [vmem:[%s3172 + $0x82] sm:$0xff]
  %v5557 = vld [vmem:[%s3172 + $0x92] sm:$0xff]
  %v5558 = vld [vmem:[%s3172 + $0x9a] sm:$0xff]
  %v5559 = vld [vmem:[%s3172 + $0xaa] sm:$0xff]
  %v5560 = vld [vmem:[%s3172 + $0xb2] sm:$0xff]
  %v5561 = vld [vmem:[%s3172 + $0xc2] sm:$0xff]
  %v5562 = vld [vmem:[%s3172 + $0xca] sm:$0xff]
  %v5563 = vld [vmem:[%s3172 + $0xda] sm:$0xff]
  %v5564 = vld [vmem:[%s3172 + $0xe2] sm:$0xff]
  %v5565 = vld [vmem:[%s3172 + $0xf2] sm:$0xff]
  %v5566 = vld [vmem:[%s3172 + $0xfa] sm:$0xff]
  %v5567 = vld [vmem:[%s3172 + $0x10a] sm:$0xff]
  %v5568 = vld [vmem:[%s3172 + $0x112] sm:$0xff]
  %v5569 = vld [vmem:[%s3172 + $0x122] sm:$0xff]
  %v5570 = vld [vmem:[%s3172 + $0x12a] sm:$0xff]
  %v5571 = vld [vmem:[%s3172 + $0x13a] sm:$0xff]
  %v5572 = vld [vmem:[%s3172 + $0x142] sm:$0xff]
  %v5573 = vld [vmem:[%s3172 + $0x152] sm:$0xff]
  %v5574 = vld [vmem:[%s3172 + $0x15a] sm:$0xff]
  %v5575 = vld [vmem:[%s3172 + $0x16a] sm:$0xff]
  %v5576 = vld [vmem:[%s3172 + $0x172] sm:$0xff]
  %v5577 = vld [vmem:[%s3172 + $0x1b2] sm:$0xff]
  %v5578 = vld [vmem:[%s3172 + $0x1ba] sm:$0xff]
  %v5579 = vld [vmem:[%s3172 + $0x1ca] sm:$0xff]
  %v5580 = vld [vmem:[%s3172 + $0x1d2] sm:$0xff]
  %v5581 = vld [vmem:[%s3172 + $0x1e2] sm:$0xff]
  %v5582 = vld [vmem:[%s3172 + $0x1ea] sm:$0xff]
  %v5583 = vld [vmem:[%s3172 + $0x1fa] sm:$0xff]
  %v5584 = vld [vmem:[%s3172 + $0x202] sm:$0xff]
  %v5585 = vld [vmem:[%s3172 + $0x212] sm:$0xff]
  %v5586 = vld [vmem:[%s3172 + $0x21a] sm:$0xff]
  %v5587 = vld [vmem:[%s3172 + $0x22a] sm:$0xff]
  %v5588 = vld [vmem:[%s3172 + $0x232] sm:$0xff]
  %v5589 = vld [vmem:[%s3172 + $0x242] sm:$0xff]
  %v5590 = vld [vmem:[%s3172 + $0x24a] sm:$0xff]
  %v5591 = vld [vmem:[%s3172 + $0x25a] sm:$0xff]
  %v5592 = vld [vmem:[%s3172 + $0x262] sm:$0xff]
  %v5593 = vld [vmem:[%s3172 + $0x272] sm:$0xff]
  %v5594 = vld [vmem:[%s3172 + $0x27a] sm:$0xff]
  %v5595 = vld [vmem:[%s3172 + $0x28a] sm:$0xff]
  %v5596 = vld [vmem:[%s3172 + $0x292] sm:$0xff]
  %v5597 = vld [vmem:[%s3172 + $0x2a2] sm:$0xff]
  %v5598 = vld [vmem:[%s3172 + $0x2aa] sm:$0xff]
  %v5599 = vld [vmem:[%s3172 + $0x2ba] sm:$0xff]
  %v5600 = vld [vmem:[%s3172 + $0x2c2] sm:$0xff]
  %v5601 = vld [vmem:[%s3172 + $0x2d2] sm:$0xff]
  %v5602 = vld [vmem:[%s3172 + $0x2da] sm:$0xff]
  %v5603 = vld [vmem:[%s3172 + $0x2ea] sm:$0xff]
  %v5604 = vld [vmem:[%s3172 + $0x2f2] sm:$0xff]
  %v5605 = vld [vmem:[%s3172 + $0x302] sm:$0xff]
  %v5606 = vld [vmem:[%s3172 + $0x30a] sm:$0xff]
  %v5607 = vld [vmem:[%s3172 + $0x31a] sm:$0xff]
  %v5608 = vld [vmem:[%s3172 + $0x322] sm:$0xff]
  %v5609 = vpack.c.bf16 %v5546, %v5545
  %v5610 = vpack.c.bf16 %v5548, %v5547
  %v5611 = vpack.c.bf16 %v5550, %v5549
  %v5612 = vpack.c.bf16 %v5552, %v5551
  %v5613 = vpack.c.bf16 %v5554, %v5553
  %v5614 = vpack.c.bf16 %v5556, %v5555
  %v5615 = vpack.c.bf16 %v5558, %v5557
  %v5616 = vpack.c.bf16 %v5560, %v5559
  %v5617 = vpack.c.bf16 %v5562, %v5561
  %v5618 = vpack.c.bf16 %v5564, %v5563
  %v5619 = vpack.c.bf16 %v5566, %v5565
  %v5620 = vpack.c.bf16 %v5568, %v5567
  %v5621 = vpack.c.bf16 %v5570, %v5569
  %v5622 = vpack.c.bf16 %v5572, %v5571
  %v5623 = vpack.c.bf16 %v5574, %v5573
  %v5624 = vpack.c.bf16 %v5576, %v5575
  %v5625 = vpack.c.bf16 %v5578, %v5577
  %v5626 = vpack.c.bf16 %v5580, %v5579
  %v5627 = vpack.c.bf16 %v5582, %v5581
  %v5628 = vpack.c.bf16 %v5584, %v5583
  %v5629 = vpack.c.bf16 %v5586, %v5585
  %v5630 = vpack.c.bf16 %v5588, %v5587
  %v5631 = vpack.c.bf16 %v5590, %v5589
  %v5632 = vpack.c.bf16 %v5592, %v5591
  %v5633 = vpack.c.bf16 %v5594, %v5593
  %v5634 = vpack.c.bf16 %v5596, %v5595
  %v5635 = vpack.c.bf16 %v5598, %v5597
  %v5636 = vpack.c.bf16 %v5600, %v5599
  %v5637 = vpack.c.bf16 %v5602, %v5601
  %v5638 = vpack.c.bf16 %v5604, %v5603
  %v5639 = vpack.c.bf16 %v5606, %v5605
  %v5640 = vpack.c.bf16 %v5608, %v5607
  %v5673 = vunpack.c.l.b16 %v5609
  %v5674 = vunpack.c.h.b16 %v5609
  %v5675 = vunpack.c.l.b16 %v5610
  %v5676 = vunpack.c.h.b16 %v5610
  %v5677 = vunpack.c.l.b16 %v5611
  %v5678 = vunpack.c.h.b16 %v5611
  %v5679 = vunpack.c.l.b16 %v5612
  %v5680 = vunpack.c.h.b16 %v5612
  %v5681 = vunpack.c.l.b16 %v5613
  %v5682 = vunpack.c.h.b16 %v5613
  %v5683 = vunpack.c.l.b16 %v5614
  %v5684 = vunpack.c.h.b16 %v5614
  %v5685 = vunpack.c.l.b16 %v5615
  %v5686 = vunpack.c.h.b16 %v5615
  %v5687 = vunpack.c.l.b16 %v5616
  %v5688 = vunpack.c.h.b16 %v5616
  %v5689 = vunpack.c.l.b16 %v5617
  %v5690 = vunpack.c.h.b16 %v5617
  %v5691 = vunpack.c.l.b16 %v5618
  %v5692 = vunpack.c.h.b16 %v5618
  %v5693 = vunpack.c.l.b16 %v5619
  %v5694 = vunpack.c.h.b16 %v5619
  %v5695 = vunpack.c.l.b16 %v5620
  %v5696 = vunpack.c.h.b16 %v5620
  %v5697 = vunpack.c.l.b16 %v5621
  %v5698 = vunpack.c.h.b16 %v5621
  %v5699 = vunpack.c.l.b16 %v5622
  %v5700 = vunpack.c.h.b16 %v5622
  %v5701 = vunpack.c.l.b16 %v5623
  %v5702 = vunpack.c.h.b16 %v5623
  %v5703 = vunpack.c.l.b16 %v5624
  %v5704 = vunpack.c.h.b16 %v5624
  %v5705 = vunpack.c.l.b16 %v5625
  %v5706 = vunpack.c.h.b16 %v5625
  %v5707 = vunpack.c.l.b16 %v5626
  %v5708 = vunpack.c.h.b16 %v5626
  %v5709 = vunpack.c.l.b16 %v5627
  %v5710 = vunpack.c.h.b16 %v5627
  %v5711 = vunpack.c.l.b16 %v5628
  %v5712 = vunpack.c.h.b16 %v5628
  %v5713 = vunpack.c.l.b16 %v5629
  %v5714 = vunpack.c.h.b16 %v5629
  %v5715 = vunpack.c.l.b16 %v5630
  %v5716 = vunpack.c.h.b16 %v5630
  %v5717 = vunpack.c.l.b16 %v5631
  %v5718 = vunpack.c.h.b16 %v5631
  %v5719 = vunpack.c.l.b16 %v5632
  %v5720 = vunpack.c.h.b16 %v5632
  %v5721 = vunpack.c.l.b16 %v5633
  %v5722 = vunpack.c.h.b16 %v5633
  %v5723 = vunpack.c.l.b16 %v5634
  %v5724 = vunpack.c.h.b16 %v5634
  %v5725 = vunpack.c.l.b16 %v5635
  %v5726 = vunpack.c.h.b16 %v5635
  %v5727 = vunpack.c.l.b16 %v5636
  %v5728 = vunpack.c.h.b16 %v5636
  %v5729 = vunpack.c.l.b16 %v5637
  %v5730 = vunpack.c.h.b16 %v5637
  %v5731 = vunpack.c.l.b16 %v5638
  %v5732 = vunpack.c.h.b16 %v5638
  %v5733 = vunpack.c.l.b16 %v5639
  %v5734 = vunpack.c.h.b16 %v5639
  %v5735 = vunpack.c.l.b16 %v5640
  %v5736 = vunpack.c.h.b16 %v5640
  %v5737 = vpack.c.b16 %v5673, %v5673
  %v5738 = vpack.c.b16 %v5674, %v5674
  %v5739 = vpack.c.b16 %v5675, %v5675
  %v5740 = vpack.c.b16 %v5676, %v5676
  %v5741 = vpack.c.b16 %v5677, %v5677
  %v5742 = vpack.c.b16 %v5678, %v5678
  %v5743 = vpack.c.b16 %v5679, %v5679
  %v5744 = vpack.c.b16 %v5680, %v5680
  %v5745 = vpack.c.b16 %v5681, %v5681
  %v5746 = vpack.c.b16 %v5682, %v5682
  %v5747 = vpack.c.b16 %v5683, %v5683
  %v5748 = vpack.c.b16 %v5684, %v5684
  %v5749 = vpack.c.b16 %v5685, %v5685
  %v5750 = vpack.c.b16 %v5686, %v5686
  %v5751 = vpack.c.b16 %v5687, %v5687
  %v5752 = vpack.c.b16 %v5688, %v5688
  %v5753 = vpack.c.b16 %v5689, %v5689
  %v5754 = vpack.c.b16 %v5690, %v5690
  %v5755 = vpack.c.b16 %v5691, %v5691
  %v5756 = vpack.c.b16 %v5692, %v5692
  %v5757 = vpack.c.b16 %v5693, %v5693
  %v5758 = vpack.c.b16 %v5694, %v5694
  %v5759 = vpack.c.b16 %v5695, %v5695
  %v5760 = vpack.c.b16 %v5696, %v5696
  %v5761 = vpack.c.b16 %v5697, %v5697
  %v5762 = vpack.c.b16 %v5698, %v5698
  %v5763 = vpack.c.b16 %v5699, %v5699
  %v5764 = vpack.c.b16 %v5700, %v5700
  %v5765 = vpack.c.b16 %v5701, %v5701
  %v5766 = vpack.c.b16 %v5702, %v5702
  %v5767 = vpack.c.b16 %v5703, %v5703
  %v5768 = vpack.c.b16 %v5704, %v5704
  %v5769 = vpack.c.b16 %v5705, %v5705
  %v5770 = vpack.c.b16 %v5706, %v5706
  %v5771 = vpack.c.b16 %v5707, %v5707
  %v5772 = vpack.c.b16 %v5708, %v5708
  %v5773 = vpack.c.b16 %v5709, %v5709
  %v5774 = vpack.c.b16 %v5710, %v5710
  %v5775 = vpack.c.b16 %v5711, %v5711
  %v5776 = vpack.c.b16 %v5712, %v5712
  %v5777 = vpack.c.b16 %v5713, %v5713
  %v5778 = vpack.c.b16 %v5714, %v5714
  %v5779 = vpack.c.b16 %v5715, %v5715
  %v5780 = vpack.c.b16 %v5716, %v5716
  %v5781 = vpack.c.b16 %v5717, %v5717
  %v5782 = vpack.c.b16 %v5718, %v5718
  %v5783 = vpack.c.b16 %v5719, %v5719
  %v5784 = vpack.c.b16 %v5720, %v5720
  %v5785 = vpack.c.b16 %v5721, %v5721
  %v5786 = vpack.c.b16 %v5722, %v5722
  %v5787 = vpack.c.b16 %v5723, %v5723
  %v5788 = vpack.c.b16 %v5724, %v5724
  %v5789 = vpack.c.b16 %v5725, %v5725
  %v5790 = vpack.c.b16 %v5726, %v5726
  %v5791 = vpack.c.b16 %v5727, %v5727
  %v5792 = vpack.c.b16 %v5728, %v5728
  %v5793 = vpack.c.b16 %v5729, %v5729
  %v5794 = vpack.c.b16 %v5730, %v5730
  %v5795 = vpack.c.b16 %v5731, %v5731
  %v5796 = vpack.c.b16 %v5732, %v5732
  %v5797 = vpack.c.b16 %v5733, %v5733
  %v5798 = vpack.c.b16 %v5734, %v5734
  %v5799 = vpack.c.b16 %v5735, %v5735
  %v5800 = vpack.c.b16 %v5736, %v5736
  %5801 = vrot.lane.b32.xlu0 %v5737, 32
  %v5802 = vpop.permute.xlu0 %5801
  %5803 = vrot.lane.b32.xlu0 %v5738, 32
  %v5804 = vpop.permute.xlu0 %5803
  %5805 = vrot.lane.b32.xlu0 %v5739, 32
  %v5806 = vpop.permute.xlu0 %5805
  %5807 = vrot.lane.b32.xlu0 %v5740, 32
  %v5808 = vpop.permute.xlu0 %5807
  %5809 = vrot.lane.b32.xlu0 %v5741, 32
  %v5810 = vpop.permute.xlu0 %5809
  %5811 = vrot.lane.b32.xlu0 %v5742, 32
  %v5812 = vpop.permute.xlu0 %5811
  %5813 = vrot.lane.b32.xlu0 %v5743, 32
  %v5814 = vpop.permute.xlu0 %5813
  %5815 = vrot.lane.b32.xlu0 %v5744, 32
  %v5816 = vpop.permute.xlu0 %5815
  %5817 = vrot.lane.b32.xlu0 %v5745, 32
  %v5818 = vpop.permute.xlu0 %5817
  %5819 = vrot.lane.b32.xlu0 %v5746, 32
  %v5820 = vpop.permute.xlu0 %5819
  %5821 = vrot.lane.b32.xlu0 %v5747, 32
  %v5822 = vpop.permute.xlu0 %5821
  %5823 = vrot.lane.b32.xlu0 %v5748, 32
  %v5824 = vpop.permute.xlu0 %5823
  %5825 = vrot.lane.b32.xlu0 %v5749, 32
  %v5826 = vpop.permute.xlu0 %5825
  %5827 = vrot.lane.b32.xlu0 %v5750, 32
  %v5828 = vpop.permute.xlu0 %5827
  %5829 = vrot.lane.b32.xlu0 %v5751, 32
  %v5830 = vpop.permute.xlu0 %5829
  %5831 = vrot.lane.b32.xlu0 %v5752, 32
  %v5832 = vpop.permute.xlu0 %5831
  %5833 = vrot.lane.b32.xlu0 %v5753, 32
  %v5834 = vpop.permute.xlu0 %5833
  %5835 = vrot.lane.b32.xlu0 %v5754, 32
  %v5836 = vpop.permute.xlu0 %5835
  %5837 = vrot.lane.b32.xlu0 %v5755, 32
  %v5838 = vpop.permute.xlu0 %5837
  %5839 = vrot.lane.b32.xlu0 %v5756, 32
  %v5840 = vpop.permute.xlu0 %5839
  %5841 = vrot.lane.b32.xlu0 %v5757, 32
  %v5842 = vpop.permute.xlu0 %5841
  %5843 = vrot.lane.b32.xlu0 %v5758, 32
  %v5844 = vpop.permute.xlu0 %5843
  %5845 = vrot.lane.b32.xlu0 %v5759, 32
  %v5846 = vpop.permute.xlu0 %5845
  %5847 = vrot.lane.b32.xlu0 %v5760, 32
  %v5848 = vpop.permute.xlu0 %5847
  %5849 = vrot.lane.b32.xlu0 %v5761, 32
  %v5850 = vpop.permute.xlu0 %5849
  %5851 = vrot.lane.b32.xlu0 %v5762, 32
  %v5852 = vpop.permute.xlu0 %5851
  %5853 = vrot.lane.b32.xlu0 %v5763, 32
  %v5854 = vpop.permute.xlu0 %5853
  %5855 = vrot.lane.b32.xlu0 %v5764, 32
  %v5856 = vpop.permute.xlu0 %5855
  %5857 = vrot.lane.b32.xlu0 %v5765, 32
  %v5858 = vpop.permute.xlu0 %5857
  %5859 = vrot.lane.b32.xlu0 %v5766, 32
  %v5860 = vpop.permute.xlu0 %5859
  %5861 = vrot.lane.b32.xlu0 %v5767, 32
  %v5862 = vpop.permute.xlu0 %5861
  %5863 = vrot.lane.b32.xlu0 %v5768, 32
  %v5864 = vpop.permute.xlu0 %5863
  %5865 = vrot.lane.b32.xlu0 %v5769, 32
  %v5866 = vpop.permute.xlu0 %5865
  %5867 = vrot.lane.b32.xlu0 %v5770, 32
  %v5868 = vpop.permute.xlu0 %5867
  %5869 = vrot.lane.b32.xlu0 %v5771, 32
  %v5870 = vpop.permute.xlu0 %5869
  %5871 = vrot.lane.b32.xlu0 %v5772, 32
  %v5872 = vpop.permute.xlu0 %5871
  %5873 = vrot.lane.b32.xlu0 %v5773, 32
  %v5874 = vpop.permute.xlu0 %5873
  %5875 = vrot.lane.b32.xlu0 %v5774, 32
  %v5876 = vpop.permute.xlu0 %5875
  %5877 = vrot.lane.b32.xlu0 %v5775, 32
  %v5878 = vpop.permute.xlu0 %5877
  %5879 = vrot.lane.b32.xlu0 %v5776, 32
  %v5880 = vpop.permute.xlu0 %5879
  %5881 = vrot.lane.b32.xlu0 %v5777, 32
  %v5882 = vpop.permute.xlu0 %5881
  %5883 = vrot.lane.b32.xlu0 %v5778, 32
  %v5884 = vpop.permute.xlu0 %5883
  %5885 = vrot.lane.b32.xlu0 %v5779, 32
  %v5886 = vpop.permute.xlu0 %5885
  %5887 = vrot.lane.b32.xlu0 %v5780, 32
  %v5888 = vpop.permute.xlu0 %5887
  %5889 = vrot.lane.b32.xlu0 %v5781, 32
  %v5890 = vpop.permute.xlu0 %5889
  %5891 = vrot.lane.b32.xlu0 %v5782, 32
  %v5892 = vpop.permute.xlu0 %5891
  %5893 = vrot.lane.b32.xlu0 %v5783, 32
  %v5894 = vpop.permute.xlu0 %5893
  %5895 = vrot.lane.b32.xlu0 %v5784, 32
  %v5896 = vpop.permute.xlu0 %5895
  %5897 = vrot.lane.b32.xlu0 %v5785, 32
  %v5898 = vpop.permute.xlu0 %5897
  %5899 = vrot.lane.b32.xlu0 %v5786, 32
  %v5900 = vpop.permute.xlu0 %5899
  %5901 = vrot.lane.b32.xlu0 %v5787, 32
  %v5902 = vpop.permute.xlu0 %5901
  %5903 = vrot.lane.b32.xlu0 %v5788, 32
  %v5904 = vpop.permute.xlu0 %5903
  %5905 = vrot.lane.b32.xlu0 %v5789, 32
  %v5906 = vpop.permute.xlu0 %5905
  %5907 = vrot.lane.b32.xlu0 %v5790, 32
  %v5908 = vpop.permute.xlu0 %5907
  %5909 = vrot.lane.b32.xlu0 %v5791, 32
  %v5910 = vpop.permute.xlu0 %5909
  %5911 = vrot.lane.b32.xlu0 %v5792, 32
  %v5912 = vpop.permute.xlu0 %5911
  %5913 = vrot.lane.b32.xlu0 %v5793, 32
  %v5914 = vpop.permute.xlu0 %5913
  %5915 = vrot.lane.b32.xlu0 %v5794, 32
  %v5916 = vpop.permute.xlu0 %5915
  %5917 = vrot.lane.b32.xlu0 %v5795, 32
  %v5918 = vpop.permute.xlu0 %5917
  %5919 = vrot.lane.b32.xlu0 %v5796, 32
  %v5920 = vpop.permute.xlu0 %5919
  %5921 = vrot.lane.b32.xlu0 %v5797, 32
  %v5922 = vpop.permute.xlu0 %5921
  %5923 = vrot.lane.b32.xlu0 %v5798, 32
  %v5924 = vpop.permute.xlu0 %5923
  %5925 = vrot.lane.b32.xlu0 %v5799, 32
  %v5926 = vpop.permute.xlu0 %5925
  %5927 = vrot.lane.b32.xlu0 %v5800, 32
  %v5928 = vpop.permute.xlu0 %5927
  %5993 = vst.msk [vmem:[#allocation3 + $0x4] sm:$0xf] %vm4070, %v5802
  %5994 = vst.msk [vmem:[#allocation3 + $0x10] sm:$0xf] %vm4070, %v5804
  %5995 = vst.msk [vmem:[#allocation3 + $0x1c] sm:$0xf] %vm4070, %v5806
  %5996 = vst.msk [vmem:[#allocation3 + $0x28] sm:$0xf] %vm4070, %v5808
  %5997 = vst.msk [vmem:[#allocation3 + $0x34] sm:$0xf] %vm4070, %v5810
  %5998 = vst.msk [vmem:[#allocation3 + $0x40] sm:$0xf] %vm4070, %v5812
  %5999 = vst.msk [vmem:[#allocation3 + $0x4c] sm:$0xf] %vm4070, %v5814
  %6000 = vst.msk [vmem:[#allocation3 + $0x58] sm:$0xf] %vm4070, %v5816
  %6001 = vst.msk [vmem:[#allocation3 + $0x64] sm:$0xf] %vm4070, %v5818
  %6002 = vst.msk [vmem:[#allocation3 + $0x70] sm:$0xf] %vm4070, %v5820
  %6003 = vst.msk [vmem:[#allocation3 + $0x7c] sm:$0xf] %vm4070, %v5822
  %6004 = vst.msk [vmem:[#allocation3 + $0x88] sm:$0xf] %vm4070, %v5824
  %6005 = vst.msk [vmem:[#allocation3 + $0x94] sm:$0xf] %vm4070, %v5826
  %6006 = vst.msk [vmem:[#allocation3 + $0xa0] sm:$0xf] %vm4070, %v5828
  %6007 = vst.msk [vmem:[#allocation3 + $0xac] sm:$0xf] %vm4070, %v5830
  %6008 = vst.msk [vmem:[#allocation3 + $0xb8] sm:$0xf] %vm4070, %v5832
  %6009 = vst.msk [vmem:[#allocation3 + $0xc4] sm:$0xf] %vm4070, %v5834
  %6010 = vst.msk [vmem:[#allocation3 + $0xd0] sm:$0xf] %vm4070, %v5836
  %6011 = vst.msk [vmem:[#allocation3 + $0xdc] sm:$0xf] %vm4070, %v5838
  %6012 = vst.msk [vmem:[#allocation3 + $0xe8] sm:$0xf] %vm4070, %v5840
  %6013 = vst.msk [vmem:[#allocation3 + $0xf4] sm:$0xf] %vm4070, %v5842
  %6014 = vst.msk [vmem:[#allocation3 + $0x100] sm:$0xf] %vm4070, %v5844
  %6015 = vst.msk [vmem:[#allocation3 + $0x10c] sm:$0xf] %vm4070, %v5846
  %6016 = vst.msk [vmem:[#allocation3 + $0x118] sm:$0xf] %vm4070, %v5848
  %6017 = vst.msk [vmem:[#allocation3 + $0x124] sm:$0xf] %vm4070, %v5850
  %6018 = vst.msk [vmem:[#allocation3 + $0x130] sm:$0xf] %vm4070, %v5852
  %6019 = vst.msk [vmem:[#allocation3 + $0x13c] sm:$0xf] %vm4070, %v5854
  %6020 = vst.msk [vmem:[#allocation3 + $0x148] sm:$0xf] %vm4070, %v5856
  %6021 = vst.msk [vmem:[#allocation3 + $0x154] sm:$0xf] %vm4070, %v5858
  %6022 = vst.msk [vmem:[#allocation3 + $0x160] sm:$0xf] %vm4070, %v5860
  %6023 = vst.msk [vmem:[#allocation3 + $0x16c] sm:$0xf] %vm4070, %v5862
  %6024 = vst.msk [vmem:[#allocation3 + $0x178] sm:$0xf] %vm4070, %v5864
  %6025 = vst.msk [vmem:[#allocation3 + $0x184] sm:$0xf] %vm4070, %v5866
  %6026 = vst.msk [vmem:[#allocation3 + $0x190] sm:$0xf] %vm4070, %v5868
  %6027 = vst.msk [vmem:[#allocation3 + $0x19c] sm:$0xf] %vm4070, %v5870
  %6028 = vst.msk [vmem:[#allocation3 + $0x1a8] sm:$0xf] %vm4070, %v5872
  %6029 = vst.msk [vmem:[#allocation3 + $0x1b4] sm:$0xf] %vm4070, %v5874
  %6030 = vst.msk [vmem:[#allocation3 + $0x1c0] sm:$0xf] %vm4070, %v5876
  %6031 = vst.msk [vmem:[#allocation3 + $0x1cc] sm:$0xf] %vm4070, %v5878
  %6032 = vst.msk [vmem:[#allocation3 + $0x1d8] sm:$0xf] %vm4070, %v5880
  %6033 = vst.msk [vmem:[#allocation3 + $0x1e4] sm:$0xf] %vm4070, %v5882
  %6034 = vst.msk [vmem:[#allocation3 + $0x1f0] sm:$0xf] %vm4070, %v5884
  %6035 = vst.msk [vmem:[#allocation3 + $0x1fc] sm:$0xf] %vm4070, %v5886
  %6036 = vst.msk [vmem:[#allocation3 + $0x208] sm:$0xf] %vm4070, %v5888
  %6037 = vst.msk [vmem:[#allocation3 + $0x214] sm:$0xf] %vm4070, %v5890
  %6038 = vst.msk [vmem:[#allocation3 + $0x220] sm:$0xf] %vm4070, %v5892
  %6039 = vst.msk [vmem:[#allocation3 + $0x22c] sm:$0xf] %vm4070, %v5894
  %6040 = vst.msk [vmem:[#allocation3 + $0x238] sm:$0xf] %vm4070, %v5896
  %6041 = vst.msk [vmem:[#allocation3 + $0x244] sm:$0xf] %vm4070, %v5898
  %6042 = vst.msk [vmem:[#allocation3 + $0x250] sm:$0xf] %vm4070, %v5900
  %6043 = vst.msk [vmem:[#allocation3 + $0x25c] sm:$0xf] %vm4070, %v5902
  %6044 = vst.msk [vmem:[#allocation3 + $0x268] sm:$0xf] %vm4070, %v5904
  %6045 = vst.msk [vmem:[#allocation3 + $0x274] sm:$0xf] %vm4070, %v5906
  %6046 = vst.msk [vmem:[#allocation3 + $0x280] sm:$0xf] %vm4070, %v5908
  %6047 = vst.msk [vmem:[#allocation3 + $0x28c] sm:$0xf] %vm4070, %v5910
  %6048 = vst.msk [vmem:[#allocation3 + $0x298] sm:$0xf] %vm4070, %v5912
  %6049 = vst.msk [vmem:[#allocation3 + $0x2a4] sm:$0xf] %vm4070, %v5914
  %6050 = vst.msk [vmem:[#allocation3 + $0x2b0] sm:$0xf] %vm4070, %v5916
  %6051 = vst.msk [vmem:[#allocation3 + $0x2bc] sm:$0xf] %vm4070, %v5918
  %6052 = vst.msk [vmem:[#allocation3 + $0x2c8] sm:$0xf] %vm4070, %v5920
  %6053 = vst.msk [vmem:[#allocation3 + $0x2d4] sm:$0xf] %vm4070, %v5922
  %6054 = vst.msk [vmem:[#allocation3 + $0x2e0] sm:$0xf] %vm4070, %v5924
  %6055 = vst.msk [vmem:[#allocation3 + $0x2ec] sm:$0xf] %vm4070, %v5926
  %6056 = vst.msk [vmem:[#allocation3 + $0x2f8] sm:$0xf] %vm4070, %v5928
  %s6057 = scalar_lea.vmem [#allocation2], 48
  %v6058 = vld [vmem:[%s6057] sm:$0xff]
  %v6059 = vld [vmem:[%s6057 + $0x8] sm:$0xff]
  %v6060 = vld [vmem:[%s6057 + $0x18] sm:$0xff]
  %v6061 = vld [vmem:[%s6057 + $0x20] sm:$0xff]
  %v6062 = vld [vmem:[%s6057 + $0x30] sm:$0xff]
  %v6063 = vld [vmem:[%s6057 + $0x38] sm:$0xff]
  %v6064 = vld [vmem:[%s6057 + $0x48] sm:$0xff]
  %v6065 = vld [vmem:[%s6057 + $0x50] sm:$0xff]
  %v6066 = vld [vmem:[%s6057 + $0x60] sm:$0xff]
  %v6067 = vld [vmem:[%s6057 + $0x68] sm:$0xff]
  %v6068 = vld [vmem:[%s6057 + $0x78] sm:$0xff]
  %v6069 = vld [vmem:[%s6057 + $0x80] sm:$0xff]
  %v6070 = vld [vmem:[%s6057 + $0x90] sm:$0xff]
  %v6071 = vld [vmem:[%s6057 + $0x98] sm:$0xff]
  %v6072 = vld [vmem:[%s6057 + $0xa8] sm:$0xff]
  %v6073 = vld [vmem:[%s6057 + $0xb0] sm:$0xff]
  %v6074 = vld [vmem:[%s6057 + $0xc0] sm:$0xff]
  %v6075 = vld [vmem:[%s6057 + $0xc8] sm:$0xff]
  %v6076 = vld [vmem:[%s6057 + $0xd8] sm:$0xff]
  %v6077 = vld [vmem:[%s6057 + $0xe0] sm:$0xff]
  %v6078 = vld [vmem:[%s6057 + $0xf0] sm:$0xff]
  %v6079 = vld [vmem:[%s6057 + $0xf8] sm:$0xff]
  %v6080 = vld [vmem:[%s6057 + $0x108] sm:$0xff]
  %v6081 = vld [vmem:[%s6057 + $0x110] sm:$0xff]
  %v6082 = vld [vmem:[%s6057 + $0x120] sm:$0xff]
  %v6083 = vld [vmem:[%s6057 + $0x128] sm:$0xff]
  %v6084 = vld [vmem:[%s6057 + $0x138] sm:$0xff]
  %v6085 = vld [vmem:[%s6057 + $0x140] sm:$0xff]
  %v6086 = vld [vmem:[%s6057 + $0x150] sm:$0xff]
  %v6087 = vld [vmem:[%s6057 + $0x158] sm:$0xff]
  %v6088 = vld [vmem:[%s6057 + $0x168] sm:$0xff]
  %v6089 = vld [vmem:[%s6057 + $0x170] sm:$0xff]
  %v6090 = vld [vmem:[%s6057 + $0x1b0] sm:$0xff]
  %v6091 = vld [vmem:[%s6057 + $0x1b8] sm:$0xff]
  %v6092 = vld [vmem:[%s6057 + $0x1c8] sm:$0xff]
  %v6093 = vld [vmem:[%s6057 + $0x1d0] sm:$0xff]
  %v6094 = vld [vmem:[%s6057 + $0x1e0] sm:$0xff]
  %v6095 = vld [vmem:[%s6057 + $0x1e8] sm:$0xff]
  %v6096 = vld [vmem:[%s6057 + $0x1f8] sm:$0xff]
  %v6097 = vld [vmem:[%s6057 + $0x200] sm:$0xff]
  %v6098 = vld [vmem:[%s6057 + $0x210] sm:$0xff]
  %v6099 = vld [vmem:[%s6057 + $0x218] sm:$0xff]
  %v6100 = vld [vmem:[%s6057 + $0x228] sm:$0xff]
  %v6101 = vld [vmem:[%s6057 + $0x230] sm:$0xff]
  %v6102 = vld [vmem:[%s6057 + $0x240] sm:$0xff]
  %v6103 = vld [vmem:[%s6057 + $0x248] sm:$0xff]
  %v6104 = vld [vmem:[%s6057 + $0x258] sm:$0xff]
  %v6105 = vld [vmem:[%s6057 + $0x260] sm:$0xff]
  %v6106 = vld [vmem:[%s6057 + $0x270] sm:$0xff]
  %v6107 = vld [vmem:[%s6057 + $0x278] sm:$0xff]
  %v6108 = vld [vmem:[%s6057 + $0x288] sm:$0xff]
  %v6109 = vld [vmem:[%s6057 + $0x290] sm:$0xff]
  %v6110 = vld [vmem:[%s6057 + $0x2a0] sm:$0xff]
  %v6111 = vld [vmem:[%s6057 + $0x2a8] sm:$0xff]
  %v6112 = vld [vmem:[%s6057 + $0x2b8] sm:$0xff]
  %v6113 = vld [vmem:[%s6057 + $0x2c0] sm:$0xff]
  %v6114 = vld [vmem:[%s6057 + $0x2d0] sm:$0xff]
  %v6115 = vld [vmem:[%s6057 + $0x2d8] sm:$0xff]
  %v6116 = vld [vmem:[%s6057 + $0x2e8] sm:$0xff]
  %v6117 = vld [vmem:[%s6057 + $0x2f0] sm:$0xff]
  %v6118 = vld [vmem:[%s6057 + $0x300] sm:$0xff]
  %v6119 = vld [vmem:[%s6057 + $0x308] sm:$0xff]
  %v6120 = vld [vmem:[%s6057 + $0x318] sm:$0xff]
  %v6121 = vld [vmem:[%s6057 + $0x320] sm:$0xff]
  %v6122 = vpack.c.bf16 %v6059, %v6058
  %v6123 = vpack.c.bf16 %v6061, %v6060
  %v6124 = vpack.c.bf16 %v6063, %v6062
  %v6125 = vpack.c.bf16 %v6065, %v6064
  %v6126 = vpack.c.bf16 %v6067, %v6066
  %v6127 = vpack.c.bf16 %v6069, %v6068
  %v6128 = vpack.c.bf16 %v6071, %v6070
  %v6129 = vpack.c.bf16 %v6073, %v6072
  %v6130 = vpack.c.bf16 %v6075, %v6074
  %v6131 = vpack.c.bf16 %v6077, %v6076
  %v6132 = vpack.c.bf16 %v6079, %v6078
  %v6133 = vpack.c.bf16 %v6081, %v6080
  %v6134 = vpack.c.bf16 %v6083, %v6082
  %v6135 = vpack.c.bf16 %v6085, %v6084
  %v6136 = vpack.c.bf16 %v6087, %v6086
  %v6137 = vpack.c.bf16 %v6089, %v6088
  %v6138 = vpack.c.bf16 %v6091, %v6090
  %v6139 = vpack.c.bf16 %v6093, %v6092
  %v6140 = vpack.c.bf16 %v6095, %v6094
  %v6141 = vpack.c.bf16 %v6097, %v6096
  %v6142 = vpack.c.bf16 %v6099, %v6098
  %v6143 = vpack.c.bf16 %v6101, %v6100
  %v6144 = vpack.c.bf16 %v6103, %v6102
  %v6145 = vpack.c.bf16 %v6105, %v6104
  %v6146 = vpack.c.bf16 %v6107, %v6106
  %v6147 = vpack.c.bf16 %v6109, %v6108
  %v6148 = vpack.c.bf16 %v6111, %v6110
  %v6149 = vpack.c.bf16 %v6113, %v6112
  %v6150 = vpack.c.bf16 %v6115, %v6114
  %v6151 = vpack.c.bf16 %v6117, %v6116
  %v6152 = vpack.c.bf16 %v6119, %v6118
  %v6153 = vpack.c.bf16 %v6121, %v6120
  %v6186 = vunpack.c.l.b16 %v6122
  %v6187 = vunpack.c.h.b16 %v6122
  %v6188 = vunpack.c.l.b16 %v6123
  %v6189 = vunpack.c.h.b16 %v6123
  %v6190 = vunpack.c.l.b16 %v6124
  %v6191 = vunpack.c.h.b16 %v6124
  %v6192 = vunpack.c.l.b16 %v6125
  %v6193 = vunpack.c.h.b16 %v6125
  %v6194 = vunpack.c.l.b16 %v6126
  %v6195 = vunpack.c.h.b16 %v6126
  %v6196 = vunpack.c.l.b16 %v6127
  %v6197 = vunpack.c.h.b16 %v6127
  %v6198 = vunpack.c.l.b16 %v6128
  %v6199 = vunpack.c.h.b16 %v6128
  %v6200 = vunpack.c.l.b16 %v6129
  %v6201 = vunpack.c.h.b16 %v6129
  %v6202 = vunpack.c.l.b16 %v6130
  %v6203 = vunpack.c.h.b16 %v6130
  %v6204 = vunpack.c.l.b16 %v6131
  %v6205 = vunpack.c.h.b16 %v6131
  %v6206 = vunpack.c.l.b16 %v6132
  %v6207 = vunpack.c.h.b16 %v6132
  %v6208 = vunpack.c.l.b16 %v6133
  %v6209 = vunpack.c.h.b16 %v6133
  %v6210 = vunpack.c.l.b16 %v6134
  %v6211 = vunpack.c.h.b16 %v6134
  %v6212 = vunpack.c.l.b16 %v6135
  %v6213 = vunpack.c.h.b16 %v6135
  %v6214 = vunpack.c.l.b16 %v6136
  %v6215 = vunpack.c.h.b16 %v6136
  %v6216 = vunpack.c.l.b16 %v6137
  %v6217 = vunpack.c.h.b16 %v6137
  %v6218 = vunpack.c.l.b16 %v6138
  %v6219 = vunpack.c.h.b16 %v6138
  %v6220 = vunpack.c.l.b16 %v6139
  %v6221 = vunpack.c.h.b16 %v6139
  %v6222 = vunpack.c.l.b16 %v6140
  %v6223 = vunpack.c.h.b16 %v6140
  %v6224 = vunpack.c.l.b16 %v6141
  %v6225 = vunpack.c.h.b16 %v6141
  %v6226 = vunpack.c.l.b16 %v6142
  %v6227 = vunpack.c.h.b16 %v6142
  %v6228 = vunpack.c.l.b16 %v6143
  %v6229 = vunpack.c.h.b16 %v6143
  %v6230 = vunpack.c.l.b16 %v6144
  %v6231 = vunpack.c.h.b16 %v6144
  %v6232 = vunpack.c.l.b16 %v6145
  %v6233 = vunpack.c.h.b16 %v6145
  %v6234 = vunpack.c.l.b16 %v6146
  %v6235 = vunpack.c.h.b16 %v6146
  %v6236 = vunpack.c.l.b16 %v6147
  %v6237 = vunpack.c.h.b16 %v6147
  %v6238 = vunpack.c.l.b16 %v6148
  %v6239 = vunpack.c.h.b16 %v6148
  %v6240 = vunpack.c.l.b16 %v6149
  %v6241 = vunpack.c.h.b16 %v6149
  %v6242 = vunpack.c.l.b16 %v6150
  %v6243 = vunpack.c.h.b16 %v6150
  %v6244 = vunpack.c.l.b16 %v6151
  %v6245 = vunpack.c.h.b16 %v6151
  %v6246 = vunpack.c.l.b16 %v6152
  %v6247 = vunpack.c.h.b16 %v6152
  %v6248 = vunpack.c.l.b16 %v6153
  %v6249 = vunpack.c.h.b16 %v6153
  %v6250 = vpack.c.b16 %v6186, %v6186
  %v6251 = vpack.c.b16 %v6187, %v6187
  %v6252 = vpack.c.b16 %v6188, %v6188
  %v6253 = vpack.c.b16 %v6189, %v6189
  %v6254 = vpack.c.b16 %v6190, %v6190
  %v6255 = vpack.c.b16 %v6191, %v6191
  %v6256 = vpack.c.b16 %v6192, %v6192
  %v6257 = vpack.c.b16 %v6193, %v6193
  %v6258 = vpack.c.b16 %v6194, %v6194
  %v6259 = vpack.c.b16 %v6195, %v6195
  %v6260 = vpack.c.b16 %v6196, %v6196
  %v6261 = vpack.c.b16 %v6197, %v6197
  %v6262 = vpack.c.b16 %v6198, %v6198
  %v6263 = vpack.c.b16 %v6199, %v6199
  %v6264 = vpack.c.b16 %v6200, %v6200
  %v6265 = vpack.c.b16 %v6201, %v6201
  %v6266 = vpack.c.b16 %v6202, %v6202
  %v6267 = vpack.c.b16 %v6203, %v6203
  %v6268 = vpack.c.b16 %v6204, %v6204
  %v6269 = vpack.c.b16 %v6205, %v6205
  %v6270 = vpack.c.b16 %v6206, %v6206
  %v6271 = vpack.c.b16 %v6207, %v6207
  %v6272 = vpack.c.b16 %v6208, %v6208
  %v6273 = vpack.c.b16 %v6209, %v6209
  %v6274 = vpack.c.b16 %v6210, %v6210
  %v6275 = vpack.c.b16 %v6211, %v6211
  %v6276 = vpack.c.b16 %v6212, %v6212
  %v6277 = vpack.c.b16 %v6213, %v6213
  %v6278 = vpack.c.b16 %v6214, %v6214
  %v6279 = vpack.c.b16 %v6215, %v6215
  %v6280 = vpack.c.b16 %v6216, %v6216
  %v6281 = vpack.c.b16 %v6217, %v6217
  %v6282 = vpack.c.b16 %v6218, %v6218
  %v6283 = vpack.c.b16 %v6219, %v6219
  %v6284 = vpack.c.b16 %v6220, %v6220
  %v6285 = vpack.c.b16 %v6221, %v6221
  %v6286 = vpack.c.b16 %v6222, %v6222
  %v6287 = vpack.c.b16 %v6223, %v6223
  %v6288 = vpack.c.b16 %v6224, %v6224
  %v6289 = vpack.c.b16 %v6225, %v6225
  %v6290 = vpack.c.b16 %v6226, %v6226
  %v6291 = vpack.c.b16 %v6227, %v6227
  %v6292 = vpack.c.b16 %v6228, %v6228
  %v6293 = vpack.c.b16 %v6229, %v6229
  %v6294 = vpack.c.b16 %v6230, %v6230
  %v6295 = vpack.c.b16 %v6231, %v6231
  %v6296 = vpack.c.b16 %v6232, %v6232
  %v6297 = vpack.c.b16 %v6233, %v6233
  %v6298 = vpack.c.b16 %v6234, %v6234
  %v6299 = vpack.c.b16 %v6235, %v6235
  %v6300 = vpack.c.b16 %v6236, %v6236
  %v6301 = vpack.c.b16 %v6237, %v6237
  %v6302 = vpack.c.b16 %v6238, %v6238
  %v6303 = vpack.c.b16 %v6239, %v6239
  %v6304 = vpack.c.b16 %v6240, %v6240
  %v6305 = vpack.c.b16 %v6241, %v6241
  %v6306 = vpack.c.b16 %v6242, %v6242
  %v6307 = vpack.c.b16 %v6243, %v6243
  %v6308 = vpack.c.b16 %v6244, %v6244
  %v6309 = vpack.c.b16 %v6245, %v6245
  %v6310 = vpack.c.b16 %v6246, %v6246
  %v6311 = vpack.c.b16 %v6247, %v6247
  %v6312 = vpack.c.b16 %v6248, %v6248
  %v6313 = vpack.c.b16 %v6249, %v6249
  %6314 = vrot.lane.b32.xlu0 %v6250, 64
  %v6315 = vpop.permute.xlu0 %6314
  %6316 = vrot.lane.b32.xlu0 %v6251, 64
  %v6317 = vpop.permute.xlu0 %6316
  %6318 = vrot.lane.b32.xlu0 %v6252, 64
  %v6319 = vpop.permute.xlu0 %6318
  %6320 = vrot.lane.b32.xlu0 %v6253, 64
  %v6321 = vpop.permute.xlu0 %6320
  %6322 = vrot.lane.b32.xlu0 %v6254, 64
  %v6323 = vpop.permute.xlu0 %6322
  %6324 = vrot.lane.b32.xlu0 %v6255, 64
  %v6325 = vpop.permute.xlu0 %6324
  %6326 = vrot.lane.b32.xlu0 %v6256, 64
  %v6327 = vpop.permute.xlu0 %6326
  %6328 = vrot.lane.b32.xlu0 %v6257, 64
  %v6329 = vpop.permute.xlu0 %6328
  %6330 = vrot.lane.b32.xlu0 %v6258, 64
  %v6331 = vpop.permute.xlu0 %6330
  %6332 = vrot.lane.b32.xlu0 %v6259, 64
  %v6333 = vpop.permute.xlu0 %6332
  %6334 = vrot.lane.b32.xlu0 %v6260, 64
  %v6335 = vpop.permute.xlu0 %6334
  %6336 = vrot.lane.b32.xlu0 %v6261, 64
  %v6337 = vpop.permute.xlu0 %6336
  %6338 = vrot.lane.b32.xlu0 %v6262, 64
  %v6339 = vpop.permute.xlu0 %6338
  %6340 = vrot.lane.b32.xlu0 %v6263, 64
  %v6341 = vpop.permute.xlu0 %6340
  %6342 = vrot.lane.b32.xlu0 %v6264, 64
  %v6343 = vpop.permute.xlu0 %6342
  %6344 = vrot.lane.b32.xlu0 %v6265, 64
  %v6345 = vpop.permute.xlu0 %6344
  %6346 = vrot.lane.b32.xlu0 %v6266, 64
  %v6347 = vpop.permute.xlu0 %6346
  %6348 = vrot.lane.b32.xlu0 %v6267, 64
  %v6349 = vpop.permute.xlu0 %6348
  %6350 = vrot.lane.b32.xlu0 %v6268, 64
  %v6351 = vpop.permute.xlu0 %6350
  %6352 = vrot.lane.b32.xlu0 %v6269, 64
  %v6353 = vpop.permute.xlu0 %6352
  %6354 = vrot.lane.b32.xlu0 %v6270, 64
  %v6355 = vpop.permute.xlu0 %6354
  %6356 = vrot.lane.b32.xlu0 %v6271, 64
  %v6357 = vpop.permute.xlu0 %6356
  %6358 = vrot.lane.b32.xlu0 %v6272, 64
  %v6359 = vpop.permute.xlu0 %6358
  %6360 = vrot.lane.b32.xlu0 %v6273, 64
  %v6361 = vpop.permute.xlu0 %6360
  %6362 = vrot.lane.b32.xlu0 %v6274, 64
  %v6363 = vpop.permute.xlu0 %6362
  %6364 = vrot.lane.b32.xlu0 %v6275, 64
  %v6365 = vpop.permute.xlu0 %6364
  %6366 = vrot.lane.b32.xlu0 %v6276, 64
  %v6367 = vpop.permute.xlu0 %6366
  %6368 = vrot.lane.b32.xlu0 %v6277, 64
  %v6369 = vpop.permute.xlu0 %6368
  %6370 = vrot.lane.b32.xlu0 %v6278, 64
  %v6371 = vpop.permute.xlu0 %6370
  %6372 = vrot.lane.b32.xlu0 %v6279, 64
  %v6373 = vpop.permute.xlu0 %6372
  %6374 = vrot.lane.b32.xlu0 %v6280, 64
  %v6375 = vpop.permute.xlu0 %6374
  %6376 = vrot.lane.b32.xlu0 %v6281, 64
  %v6377 = vpop.permute.xlu0 %6376
  %6378 = vrot.lane.b32.xlu0 %v6282, 64
  %v6379 = vpop.permute.xlu0 %6378
  %6380 = vrot.lane.b32.xlu0 %v6283, 64
  %v6381 = vpop.permute.xlu0 %6380
  %6382 = vrot.lane.b32.xlu0 %v6284, 64
  %v6383 = vpop.permute.xlu0 %6382
  %6384 = vrot.lane.b32.xlu0 %v6285, 64
  %v6385 = vpop.permute.xlu0 %6384
  %6386 = vrot.lane.b32.xlu0 %v6286, 64
  %v6387 = vpop.permute.xlu0 %6386
  %6388 = vrot.lane.b32.xlu0 %v6287, 64
  %v6389 = vpop.permute.xlu0 %6388
  %6390 = vrot.lane.b32.xlu0 %v6288, 64
  %v6391 = vpop.permute.xlu0 %6390
  %6392 = vrot.lane.b32.xlu0 %v6289, 64
  %v6393 = vpop.permute.xlu0 %6392
  %6394 = vrot.lane.b32.xlu0 %v6290, 64
  %v6395 = vpop.permute.xlu0 %6394
  %6396 = vrot.lane.b32.xlu0 %v6291, 64
  %v6397 = vpop.permute.xlu0 %6396
  %6398 = vrot.lane.b32.xlu0 %v6292, 64
  %v6399 = vpop.permute.xlu0 %6398
  %6400 = vrot.lane.b32.xlu0 %v6293, 64
  %v6401 = vpop.permute.xlu0 %6400
  %6402 = vrot.lane.b32.xlu0 %v6294, 64
  %v6403 = vpop.permute.xlu0 %6402
  %6404 = vrot.lane.b32.xlu0 %v6295, 64
  %v6405 = vpop.permute.xlu0 %6404
  %6406 = vrot.lane.b32.xlu0 %v6296, 64
  %v6407 = vpop.permute.xlu0 %6406
  %6408 = vrot.lane.b32.xlu0 %v6297, 64
  %v6409 = vpop.permute.xlu0 %6408
  %6410 = vrot.lane.b32.xlu0 %v6298, 64
  %v6411 = vpop.permute.xlu0 %6410
  %6412 = vrot.lane.b32.xlu0 %v6299, 64
  %v6413 = vpop.permute.xlu0 %6412
  %6414 = vrot.lane.b32.xlu0 %v6300, 64
  %v6415 = vpop.permute.xlu0 %6414
  %6416 = vrot.lane.b32.xlu0 %v6301, 64
  %v6417 = vpop.permute.xlu0 %6416
  %6418 = vrot.lane.b32.xlu0 %v6302, 64
  %v6419 = vpop.permute.xlu0 %6418
  %6420 = vrot.lane.b32.xlu0 %v6303, 64
  %v6421 = vpop.permute.xlu0 %6420
  %6422 = vrot.lane.b32.xlu0 %v6304, 64
  %v6423 = vpop.permute.xlu0 %6422
  %6424 = vrot.lane.b32.xlu0 %v6305, 64
  %v6425 = vpop.permute.xlu0 %6424
  %6426 = vrot.lane.b32.xlu0 %v6306, 64
  %v6427 = vpop.permute.xlu0 %6426
  %6428 = vrot.lane.b32.xlu0 %v6307, 64
  %v6429 = vpop.permute.xlu0 %6428
  %6430 = vrot.lane.b32.xlu0 %v6308, 64
  %v6431 = vpop.permute.xlu0 %6430
  %6432 = vrot.lane.b32.xlu0 %v6309, 64
  %v6433 = vpop.permute.xlu0 %6432
  %6434 = vrot.lane.b32.xlu0 %v6310, 64
  %v6435 = vpop.permute.xlu0 %6434
  %6436 = vrot.lane.b32.xlu0 %v6311, 64
  %v6437 = vpop.permute.xlu0 %6436
  %6438 = vrot.lane.b32.xlu0 %v6312, 64
  %v6439 = vpop.permute.xlu0 %6438
  %6440 = vrot.lane.b32.xlu0 %v6313, 64
  %v6441 = vpop.permute.xlu0 %6440
  %6506 = vst.msk [vmem:[#allocation3 + $0x4] sm:$0xf] %vm4583, %v6315
  %6507 = vst.msk [vmem:[#allocation3 + $0x10] sm:$0xf] %vm4583, %v6317
  %6508 = vst.msk [vmem:[#allocation3 + $0x1c] sm:$0xf] %vm4583, %v6319
  %6509 = vst.msk [vmem:[#allocation3 + $0x28] sm:$0xf] %vm4583, %v6321
  %6510 = vst.msk [vmem:[#allocation3 + $0x34] sm:$0xf] %vm4583, %v6323
  %6511 = vst.msk [vmem:[#allocation3 + $0x40] sm:$0xf] %vm4583, %v6325
  %6512 = vst.msk [vmem:[#allocation3 + $0x4c] sm:$0xf] %vm4583, %v6327
  %6513 = vst.msk [vmem:[#allocation3 + $0x58] sm:$0xf] %vm4583, %v6329
  %6514 = vst.msk [vmem:[#allocation3 + $0x64] sm:$0xf] %vm4583, %v6331
  %6515 = vst.msk [vmem:[#allocation3 + $0x70] sm:$0xf] %vm4583, %v6333
  %6516 = vst.msk [vmem:[#allocation3 + $0x7c] sm:$0xf] %vm4583, %v6335
  %6517 = vst.msk [vmem:[#allocation3 + $0x88] sm:$0xf] %vm4583, %v6337
  %6518 = vst.msk [vmem:[#allocation3 + $0x94] sm:$0xf] %vm4583, %v6339
  %6519 = vst.msk [vmem:[#allocation3 + $0xa0] sm:$0xf] %vm4583, %v6341
  %6520 = vst.msk [vmem:[#allocation3 + $0xac] sm:$0xf] %vm4583, %v6343
  %6521 = vst.msk [vmem:[#allocation3 + $0xb8] sm:$0xf] %vm4583, %v6345
  %6522 = vst.msk [vmem:[#allocation3 + $0xc4] sm:$0xf] %vm4583, %v6347
  %6523 = vst.msk [vmem:[#allocation3 + $0xd0] sm:$0xf] %vm4583, %v6349
  %6524 = vst.msk [vmem:[#allocation3 + $0xdc] sm:$0xf] %vm4583, %v6351
  %6525 = vst.msk [vmem:[#allocation3 + $0xe8] sm:$0xf] %vm4583, %v6353
  %6526 = vst.msk [vmem:[#allocation3 + $0xf4] sm:$0xf] %vm4583, %v6355
  %6527 = vst.msk [vmem:[#allocation3 + $0x100] sm:$0xf] %vm4583, %v6357
  %6528 = vst.msk [vmem:[#allocation3 + $0x10c] sm:$0xf] %vm4583, %v6359
  %6529 = vst.msk [vmem:[#allocation3 + $0x118] sm:$0xf] %vm4583, %v6361
  %6530 = vst.msk [vmem:[#allocation3 + $0x124] sm:$0xf] %vm4583, %v6363
  %6531 = vst.msk [vmem:[#allocation3 + $0x130] sm:$0xf] %vm4583, %v6365
  %6532 = vst.msk [vmem:[#allocation3 + $0x13c] sm:$0xf] %vm4583, %v6367
  %6533 = vst.msk [vmem:[#allocation3 + $0x148] sm:$0xf] %vm4583, %v6369
  %6534 = vst.msk [vmem:[#allocation3 + $0x154] sm:$0xf] %vm4583, %v6371
  %6535 = vst.msk [vmem:[#allocation3 + $0x160] sm:$0xf] %vm4583, %v6373
  %6536 = vst.msk [vmem:[#allocation3 + $0x16c] sm:$0xf] %vm4583, %v6375
  %6537 = vst.msk [vmem:[#allocation3 + $0x178] sm:$0xf] %vm4583, %v6377
  %6538 = vst.msk [vmem:[#allocation3 + $0x184] sm:$0xf] %vm4583, %v6379
  %6539 = vst.msk [vmem:[#allocation3 + $0x190] sm:$0xf] %vm4583, %v6381
  %6540 = vst.msk [vmem:[#allocation3 + $0x19c] sm:$0xf] %vm4583, %v6383
  %6541 = vst.msk [vmem:[#allocation3 + $0x1a8] sm:$0xf] %vm4583, %v6385
  %6542 = vst.msk [vmem:[#allocation3 + $0x1b4] sm:$0xf] %vm4583, %v6387
  %6543 = vst.msk [vmem:[#allocation3 + $0x1c0] sm:$0xf] %vm4583, %v6389
  %6544 = vst.msk [vmem:[#allocation3 + $0x1cc] sm:$0xf] %vm4583, %v6391
  %6545 = vst.msk [vmem:[#allocation3 + $0x1d8] sm:$0xf] %vm4583, %v6393
  %6546 = vst.msk [vmem:[#allocation3 + $0x1e4] sm:$0xf] %vm4583, %v6395
  %6547 = vst.msk [vmem:[#allocation3 + $0x1f0] sm:$0xf] %vm4583, %v6397
  %6548 = vst.msk [vmem:[#allocation3 + $0x1fc] sm:$0xf] %vm4583, %v6399
  %6549 = vst.msk [vmem:[#allocation3 + $0x208] sm:$0xf] %vm4583, %v6401
  %6550 = vst.msk [vmem:[#allocation3 + $0x214] sm:$0xf] %vm4583, %v6403
  %6551 = vst.msk [vmem:[#allocation3 + $0x220] sm:$0xf] %vm4583, %v6405
  %6552 = vst.msk [vmem:[#allocation3 + $0x22c] sm:$0xf] %vm4583, %v6407
  %6553 = vst.msk [vmem:[#allocation3 + $0x238] sm:$0xf] %vm4583, %v6409
  %6554 = vst.msk [vmem:[#allocation3 + $0x244] sm:$0xf] %vm4583, %v6411
  %6555 = vst.msk [vmem:[#allocation3 + $0x250] sm:$0xf] %vm4583, %v6413
  %6556 = vst.msk [vmem:[#allocation3 + $0x25c] sm:$0xf] %vm4583, %v6415
  %6557 = vst.msk [vmem:[#allocation3 + $0x268] sm:$0xf] %vm4583, %v6417
  %6558 = vst.msk [vmem:[#allocation3 + $0x274] sm:$0xf] %vm4583, %v6419
  %6559 = vst.msk [vmem:[#allocation3 + $0x280] sm:$0xf] %vm4583, %v6421
  %6560 = vst.msk [vmem:[#allocation3 + $0x28c] sm:$0xf] %vm4583, %v6423
  %6561 = vst.msk [vmem:[#allocation3 + $0x298] sm:$0xf] %vm4583, %v6425
  %6562 = vst.msk [vmem:[#allocation3 + $0x2a4] sm:$0xf] %vm4583, %v6427
  %6563 = vst.msk [vmem:[#allocation3 + $0x2b0] sm:$0xf] %vm4583, %v6429
  %6564 = vst.msk [vmem:[#allocation3 + $0x2bc] sm:$0xf] %vm4583, %v6431
  %6565 = vst.msk [vmem:[#allocation3 + $0x2c8] sm:$0xf] %vm4583, %v6433
  %6566 = vst.msk [vmem:[#allocation3 + $0x2d4] sm:$0xf] %vm4583, %v6435
  %6567 = vst.msk [vmem:[#allocation3 + $0x2e0] sm:$0xf] %vm4583, %v6437
  %6568 = vst.msk [vmem:[#allocation3 + $0x2ec] sm:$0xf] %vm4583, %v6439
  %6569 = vst.msk [vmem:[#allocation3 + $0x2f8] sm:$0xf] %vm4583, %v6441
  %v6570 = vld [vmem:[%s6057 + $0x1] sm:$0xff]
  %v6571 = vld [vmem:[%s6057 + $0x9] sm:$0xff]
  %v6572 = vld [vmem:[%s6057 + $0x19] sm:$0xff]
  %v6573 = vld [vmem:[%s6057 + $0x21] sm:$0xff]
  %v6574 = vld [vmem:[%s6057 + $0x31] sm:$0xff]
  %v6575 = vld [vmem:[%s6057 + $0x39] sm:$0xff]
  %v6576 = vld [vmem:[%s6057 + $0x49] sm:$0xff]
  %v6577 = vld [vmem:[%s6057 + $0x51] sm:$0xff]
  %v6578 = vld [vmem:[%s6057 + $0x61] sm:$0xff]
  %v6579 = vld [vmem:[%s6057 + $0x69] sm:$0xff]
  %v6580 = vld [vmem:[%s6057 + $0x79] sm:$0xff]
  %v6581 = vld [vmem:[%s6057 + $0x81] sm:$0xff]
  %v6582 = vld [vmem:[%s6057 + $0x91] sm:$0xff]
  %v6583 = vld [vmem:[%s6057 + $0x99] sm:$0xff]
  %v6584 = vld [vmem:[%s6057 + $0xa9] sm:$0xff]
  %v6585 = vld [vmem:[%s6057 + $0xb1] sm:$0xff]
  %v6586 = vld [vmem:[%s6057 + $0xc1] sm:$0xff]
  %v6587 = vld [vmem:[%s6057 + $0xc9] sm:$0xff]
  %v6588 = vld [vmem:[%s6057 + $0xd9] sm:$0xff]
  %v6589 = vld [vmem:[%s6057 + $0xe1] sm:$0xff]
  %v6590 = vld [vmem:[%s6057 + $0xf1] sm:$0xff]
  %v6591 = vld [vmem:[%s6057 + $0xf9] sm:$0xff]
  %v6592 = vld [vmem:[%s6057 + $0x109] sm:$0xff]
  %v6593 = vld [vmem:[%s6057 + $0x111] sm:$0xff]
  %v6594 = vld [vmem:[%s6057 + $0x121] sm:$0xff]
  %v6595 = vld [vmem:[%s6057 + $0x129] sm:$0xff]
  %v6596 = vld [vmem:[%s6057 + $0x139] sm:$0xff]
  %v6597 = vld [vmem:[%s6057 + $0x141] sm:$0xff]
  %v6598 = vld [vmem:[%s6057 + $0x151] sm:$0xff]
  %v6599 = vld [vmem:[%s6057 + $0x159] sm:$0xff]
  %v6600 = vld [vmem:[%s6057 + $0x169] sm:$0xff]
  %v6601 = vld [vmem:[%s6057 + $0x171] sm:$0xff]
  %v6602 = vld [vmem:[%s6057 + $0x1b1] sm:$0xff]
  %v6603 = vld [vmem:[%s6057 + $0x1b9] sm:$0xff]
  %v6604 = vld [vmem:[%s6057 + $0x1c9] sm:$0xff]
  %v6605 = vld [vmem:[%s6057 + $0x1d1] sm:$0xff]
  %v6606 = vld [vmem:[%s6057 + $0x1e1] sm:$0xff]
  %v6607 = vld [vmem:[%s6057 + $0x1e9] sm:$0xff]
  %v6608 = vld [vmem:[%s6057 + $0x1f9] sm:$0xff]
  %v6609 = vld [vmem:[%s6057 + $0x201] sm:$0xff]
  %v6610 = vld [vmem:[%s6057 + $0x211] sm:$0xff]
  %v6611 = vld [vmem:[%s6057 + $0x219] sm:$0xff]
  %v6612 = vld [vmem:[%s6057 + $0x229] sm:$0xff]
  %v6613 = vld [vmem:[%s6057 + $0x231] sm:$0xff]
  %v6614 = vld [vmem:[%s6057 + $0x241] sm:$0xff]
  %v6615 = vld [vmem:[%s6057 + $0x249] sm:$0xff]
  %v6616 = vld [vmem:[%s6057 + $0x259] sm:$0xff]
  %v6617 = vld [vmem:[%s6057 + $0x261] sm:$0xff]
  %v6618 = vld [vmem:[%s6057 + $0x271] sm:$0xff]
  %v6619 = vld [vmem:[%s6057 + $0x279] sm:$0xff]
  %v6620 = vld [vmem:[%s6057 + $0x289] sm:$0xff]
  %v6621 = vld [vmem:[%s6057 + $0x291] sm:$0xff]
  %v6622 = vld [vmem:[%s6057 + $0x2a1] sm:$0xff]
  %v6623 = vld [vmem:[%s6057 + $0x2a9] sm:$0xff]
  %v6624 = vld [vmem:[%s6057 + $0x2b9] sm:$0xff]
  %v6625 = vld [vmem:[%s6057 + $0x2c1] sm:$0xff]
  %v6626 = vld [vmem:[%s6057 + $0x2d1] sm:$0xff]
  %v6627 = vld [vmem:[%s6057 + $0x2d9] sm:$0xff]
  %v6628 = vld [vmem:[%s6057 + $0x2e9] sm:$0xff]
  %v6629 = vld [vmem:[%s6057 + $0x2f1] sm:$0xff]
  %v6630 = vld [vmem:[%s6057 + $0x301] sm:$0xff]
  %v6631 = vld [vmem:[%s6057 + $0x309] sm:$0xff]
  %v6632 = vld [vmem:[%s6057 + $0x319] sm:$0xff]
  %v6633 = vld [vmem:[%s6057 + $0x321] sm:$0xff]
  %v6634 = vpack.c.bf16 %v6571, %v6570
  %v6635 = vpack.c.bf16 %v6573, %v6572
  %v6636 = vpack.c.bf16 %v6575, %v6574
  %v6637 = vpack.c.bf16 %v6577, %v6576
  %v6638 = vpack.c.bf16 %v6579, %v6578
  %v6639 = vpack.c.bf16 %v6581, %v6580
  %v6640 = vpack.c.bf16 %v6583, %v6582
  %v6641 = vpack.c.bf16 %v6585, %v6584
  %v6642 = vpack.c.bf16 %v6587, %v6586
  %v6643 = vpack.c.bf16 %v6589, %v6588
  %v6644 = vpack.c.bf16 %v6591, %v6590
  %v6645 = vpack.c.bf16 %v6593, %v6592
  %v6646 = vpack.c.bf16 %v6595, %v6594
  %v6647 = vpack.c.bf16 %v6597, %v6596
  %v6648 = vpack.c.bf16 %v6599, %v6598
  %v6649 = vpack.c.bf16 %v6601, %v6600
  %v6650 = vpack.c.bf16 %v6603, %v6602
  %v6651 = vpack.c.bf16 %v6605, %v6604
  %v6652 = vpack.c.bf16 %v6607, %v6606
  %v6653 = vpack.c.bf16 %v6609, %v6608
  %v6654 = vpack.c.bf16 %v6611, %v6610
  %v6655 = vpack.c.bf16 %v6613, %v6612
  %v6656 = vpack.c.bf16 %v6615, %v6614
  %v6657 = vpack.c.bf16 %v6617, %v6616
  %v6658 = vpack.c.bf16 %v6619, %v6618
  %v6659 = vpack.c.bf16 %v6621, %v6620
  %v6660 = vpack.c.bf16 %v6623, %v6622
  %v6661 = vpack.c.bf16 %v6625, %v6624
  %v6662 = vpack.c.bf16 %v6627, %v6626
  %v6663 = vpack.c.bf16 %v6629, %v6628
  %v6664 = vpack.c.bf16 %v6631, %v6630
  %v6665 = vpack.c.bf16 %v6633, %v6632
  %v6698 = vunpack.c.l.b16 %v6634
  %v6699 = vunpack.c.h.b16 %v6634
  %v6700 = vunpack.c.l.b16 %v6635
  %v6701 = vunpack.c.h.b16 %v6635
  %v6702 = vunpack.c.l.b16 %v6636
  %v6703 = vunpack.c.h.b16 %v6636
  %v6704 = vunpack.c.l.b16 %v6637
  %v6705 = vunpack.c.h.b16 %v6637
  %v6706 = vunpack.c.l.b16 %v6638
  %v6707 = vunpack.c.h.b16 %v6638
  %v6708 = vunpack.c.l.b16 %v6639
  %v6709 = vunpack.c.h.b16 %v6639
  %v6710 = vunpack.c.l.b16 %v6640
  %v6711 = vunpack.c.h.b16 %v6640
  %v6712 = vunpack.c.l.b16 %v6641
  %v6713 = vunpack.c.h.b16 %v6641
  %v6714 = vunpack.c.l.b16 %v6642
  %v6715 = vunpack.c.h.b16 %v6642
  %v6716 = vunpack.c.l.b16 %v6643
  %v6717 = vunpack.c.h.b16 %v6643
  %v6718 = vunpack.c.l.b16 %v6644
  %v6719 = vunpack.c.h.b16 %v6644
  %v6720 = vunpack.c.l.b16 %v6645
  %v6721 = vunpack.c.h.b16 %v6645
  %v6722 = vunpack.c.l.b16 %v6646
  %v6723 = vunpack.c.h.b16 %v6646
  %v6724 = vunpack.c.l.b16 %v6647
  %v6725 = vunpack.c.h.b16 %v6647
  %v6726 = vunpack.c.l.b16 %v6648
  %v6727 = vunpack.c.h.b16 %v6648
  %v6728 = vunpack.c.l.b16 %v6649
  %v6729 = vunpack.c.h.b16 %v6649
  %v6730 = vunpack.c.l.b16 %v6650
  %v6731 = vunpack.c.h.b16 %v6650
  %v6732 = vunpack.c.l.b16 %v6651
  %v6733 = vunpack.c.h.b16 %v6651
  %v6734 = vunpack.c.l.b16 %v6652
  %v6735 = vunpack.c.h.b16 %v6652
  %v6736 = vunpack.c.l.b16 %v6653
  %v6737 = vunpack.c.h.b16 %v6653
  %v6738 = vunpack.c.l.b16 %v6654
  %v6739 = vunpack.c.h.b16 %v6654
  %v6740 = vunpack.c.l.b16 %v6655
  %v6741 = vunpack.c.h.b16 %v6655
  %v6742 = vunpack.c.l.b16 %v6656
  %v6743 = vunpack.c.h.b16 %v6656
  %v6744 = vunpack.c.l.b16 %v6657
  %v6745 = vunpack.c.h.b16 %v6657
  %v6746 = vunpack.c.l.b16 %v6658
  %v6747 = vunpack.c.h.b16 %v6658
  %v6748 = vunpack.c.l.b16 %v6659
  %v6749 = vunpack.c.h.b16 %v6659
  %v6750 = vunpack.c.l.b16 %v6660
  %v6751 = vunpack.c.h.b16 %v6660
  %v6752 = vunpack.c.l.b16 %v6661
  %v6753 = vunpack.c.h.b16 %v6661
  %v6754 = vunpack.c.l.b16 %v6662
  %v6755 = vunpack.c.h.b16 %v6662
  %v6756 = vunpack.c.l.b16 %v6663
  %v6757 = vunpack.c.h.b16 %v6663
  %v6758 = vunpack.c.l.b16 %v6664
  %v6759 = vunpack.c.h.b16 %v6664
  %v6760 = vunpack.c.l.b16 %v6665
  %v6761 = vunpack.c.h.b16 %v6665
  %v6762 = vpack.c.b16 %v6698, %v6698
  %v6763 = vpack.c.b16 %v6699, %v6699
  %v6764 = vpack.c.b16 %v6700, %v6700
  %v6765 = vpack.c.b16 %v6701, %v6701
  %v6766 = vpack.c.b16 %v6702, %v6702
  %v6767 = vpack.c.b16 %v6703, %v6703
  %v6768 = vpack.c.b16 %v6704, %v6704
  %v6769 = vpack.c.b16 %v6705, %v6705
  %v6770 = vpack.c.b16 %v6706, %v6706
  %v6771 = vpack.c.b16 %v6707, %v6707
  %v6772 = vpack.c.b16 %v6708, %v6708
  %v6773 = vpack.c.b16 %v6709, %v6709
  %v6774 = vpack.c.b16 %v6710, %v6710
  %v6775 = vpack.c.b16 %v6711, %v6711
  %v6776 = vpack.c.b16 %v6712, %v6712
  %v6777 = vpack.c.b16 %v6713, %v6713
  %v6778 = vpack.c.b16 %v6714, %v6714
  %v6779 = vpack.c.b16 %v6715, %v6715
  %v6780 = vpack.c.b16 %v6716, %v6716
  %v6781 = vpack.c.b16 %v6717, %v6717
  %v6782 = vpack.c.b16 %v6718, %v6718
  %v6783 = vpack.c.b16 %v6719, %v6719
  %v6784 = vpack.c.b16 %v6720, %v6720
  %v6785 = vpack.c.b16 %v6721, %v6721
  %v6786 = vpack.c.b16 %v6722, %v6722
  %v6787 = vpack.c.b16 %v6723, %v6723
  %v6788 = vpack.c.b16 %v6724, %v6724
  %v6789 = vpack.c.b16 %v6725, %v6725
  %v6790 = vpack.c.b16 %v6726, %v6726
  %v6791 = vpack.c.b16 %v6727, %v6727
  %v6792 = vpack.c.b16 %v6728, %v6728
  %v6793 = vpack.c.b16 %v6729, %v6729
  %v6794 = vpack.c.b16 %v6730, %v6730
  %v6795 = vpack.c.b16 %v6731, %v6731
  %v6796 = vpack.c.b16 %v6732, %v6732
  %v6797 = vpack.c.b16 %v6733, %v6733
  %v6798 = vpack.c.b16 %v6734, %v6734
  %v6799 = vpack.c.b16 %v6735, %v6735
  %v6800 = vpack.c.b16 %v6736, %v6736
  %v6801 = vpack.c.b16 %v6737, %v6737
  %v6802 = vpack.c.b16 %v6738, %v6738
  %v6803 = vpack.c.b16 %v6739, %v6739
  %v6804 = vpack.c.b16 %v6740, %v6740
  %v6805 = vpack.c.b16 %v6741, %v6741
  %v6806 = vpack.c.b16 %v6742, %v6742
  %v6807 = vpack.c.b16 %v6743, %v6743
  %v6808 = vpack.c.b16 %v6744, %v6744
  %v6809 = vpack.c.b16 %v6745, %v6745
  %v6810 = vpack.c.b16 %v6746, %v6746
  %v6811 = vpack.c.b16 %v6747, %v6747
  %v6812 = vpack.c.b16 %v6748, %v6748
  %v6813 = vpack.c.b16 %v6749, %v6749
  %v6814 = vpack.c.b16 %v6750, %v6750
  %v6815 = vpack.c.b16 %v6751, %v6751
  %v6816 = vpack.c.b16 %v6752, %v6752
  %v6817 = vpack.c.b16 %v6753, %v6753
  %v6818 = vpack.c.b16 %v6754, %v6754
  %v6819 = vpack.c.b16 %v6755, %v6755
  %v6820 = vpack.c.b16 %v6756, %v6756
  %v6821 = vpack.c.b16 %v6757, %v6757
  %v6822 = vpack.c.b16 %v6758, %v6758
  %v6823 = vpack.c.b16 %v6759, %v6759
  %v6824 = vpack.c.b16 %v6760, %v6760
  %v6825 = vpack.c.b16 %v6761, %v6761
  %6826 = vrot.lane.b32.xlu0 %v6762, 96
  %v6827 = vpop.permute.xlu0 %6826
  %6828 = vrot.lane.b32.xlu0 %v6763, 96
  %v6829 = vpop.permute.xlu0 %6828
  %6830 = vrot.lane.b32.xlu0 %v6764, 96
  %v6831 = vpop.permute.xlu0 %6830
  %6832 = vrot.lane.b32.xlu0 %v6765, 96
  %v6833 = vpop.permute.xlu0 %6832
  %6834 = vrot.lane.b32.xlu0 %v6766, 96
  %v6835 = vpop.permute.xlu0 %6834
  %6836 = vrot.lane.b32.xlu0 %v6767, 96
  %v6837 = vpop.permute.xlu0 %6836
  %6838 = vrot.lane.b32.xlu0 %v6768, 96
  %v6839 = vpop.permute.xlu0 %6838
  %6840 = vrot.lane.b32.xlu0 %v6769, 96
  %v6841 = vpop.permute.xlu0 %6840
  %6842 = vrot.lane.b32.xlu0 %v6770, 96
  %v6843 = vpop.permute.xlu0 %6842
  %6844 = vrot.lane.b32.xlu0 %v6771, 96
  %v6845 = vpop.permute.xlu0 %6844
  %6846 = vrot.lane.b32.xlu0 %v6772, 96
  %v6847 = vpop.permute.xlu0 %6846
  %6848 = vrot.lane.b32.xlu0 %v6773, 96
  %v6849 = vpop.permute.xlu0 %6848
  %6850 = vrot.lane.b32.xlu0 %v6774, 96
  %v6851 = vpop.permute.xlu0 %6850
  %6852 = vrot.lane.b32.xlu0 %v6775, 96
  %v6853 = vpop.permute.xlu0 %6852
  %6854 = vrot.lane.b32.xlu0 %v6776, 96
  %v6855 = vpop.permute.xlu0 %6854
  %6856 = vrot.lane.b32.xlu0 %v6777, 96
  %v6857 = vpop.permute.xlu0 %6856
  %6858 = vrot.lane.b32.xlu0 %v6778, 96
  %v6859 = vpop.permute.xlu0 %6858
  %6860 = vrot.lane.b32.xlu0 %v6779, 96
  %v6861 = vpop.permute.xlu0 %6860
  %6862 = vrot.lane.b32.xlu0 %v6780, 96
  %v6863 = vpop.permute.xlu0 %6862
  %6864 = vrot.lane.b32.xlu0 %v6781, 96
  %v6865 = vpop.permute.xlu0 %6864
  %6866 = vrot.lane.b32.xlu0 %v6782, 96
  %v6867 = vpop.permute.xlu0 %6866
  %6868 = vrot.lane.b32.xlu0 %v6783, 96
  %v6869 = vpop.permute.xlu0 %6868
  %6870 = vrot.lane.b32.xlu0 %v6784, 96
  %v6871 = vpop.permute.xlu0 %6870
  %6872 = vrot.lane.b32.xlu0 %v6785, 96
  %v6873 = vpop.permute.xlu0 %6872
  %6874 = vrot.lane.b32.xlu0 %v6786, 96
  %v6875 = vpop.permute.xlu0 %6874
  %6876 = vrot.lane.b32.xlu0 %v6787, 96
  %v6877 = vpop.permute.xlu0 %6876
  %6878 = vrot.lane.b32.xlu0 %v6788, 96
  %v6879 = vpop.permute.xlu0 %6878
  %6880 = vrot.lane.b32.xlu0 %v6789, 96
  %v6881 = vpop.permute.xlu0 %6880
  %6882 = vrot.lane.b32.xlu0 %v6790, 96
  %v6883 = vpop.permute.xlu0 %6882
  %6884 = vrot.lane.b32.xlu0 %v6791, 96
  %v6885 = vpop.permute.xlu0 %6884
  %6886 = vrot.lane.b32.xlu0 %v6792, 96
  %v6887 = vpop.permute.xlu0 %6886
  %6888 = vrot.lane.b32.xlu0 %v6793, 96
  %v6889 = vpop.permute.xlu0 %6888
  %6890 = vrot.lane.b32.xlu0 %v6794, 96
  %v6891 = vpop.permute.xlu0 %6890
  %6892 = vrot.lane.b32.xlu0 %v6795, 96
  %v6893 = vpop.permute.xlu0 %6892
  %6894 = vrot.lane.b32.xlu0 %v6796, 96
  %v6895 = vpop.permute.xlu0 %6894
  %6896 = vrot.lane.b32.xlu0 %v6797, 96
  %v6897 = vpop.permute.xlu0 %6896
  %6898 = vrot.lane.b32.xlu0 %v6798, 96
  %v6899 = vpop.permute.xlu0 %6898
  %6900 = vrot.lane.b32.xlu0 %v6799, 96
  %v6901 = vpop.permute.xlu0 %6900
  %6902 = vrot.lane.b32.xlu0 %v6800, 96
  %v6903 = vpop.permute.xlu0 %6902
  %6904 = vrot.lane.b32.xlu0 %v6801, 96
  %v6905 = vpop.permute.xlu0 %6904
  %6906 = vrot.lane.b32.xlu0 %v6802, 96
  %v6907 = vpop.permute.xlu0 %6906
  %6908 = vrot.lane.b32.xlu0 %v6803, 96
  %v6909 = vpop.permute.xlu0 %6908
  %6910 = vrot.lane.b32.xlu0 %v6804, 96
  %v6911 = vpop.permute.xlu0 %6910
  %6912 = vrot.lane.b32.xlu0 %v6805, 96
  %v6913 = vpop.permute.xlu0 %6912
  %6914 = vrot.lane.b32.xlu0 %v6806, 96
  %v6915 = vpop.permute.xlu0 %6914
  %6916 = vrot.lane.b32.xlu0 %v6807, 96
  %v6917 = vpop.permute.xlu0 %6916
  %6918 = vrot.lane.b32.xlu0 %v6808, 96
  %v6919 = vpop.permute.xlu0 %6918
  %6920 = vrot.lane.b32.xlu0 %v6809, 96
  %v6921 = vpop.permute.xlu0 %6920
  %6922 = vrot.lane.b32.xlu0 %v6810, 96
  %v6923 = vpop.permute.xlu0 %6922
  %6924 = vrot.lane.b32.xlu0 %v6811, 96
  %v6925 = vpop.permute.xlu0 %6924
  %6926 = vrot.lane.b32.xlu0 %v6812, 96
  %v6927 = vpop.permute.xlu0 %6926
  %6928 = vrot.lane.b32.xlu0 %v6813, 96
  %v6929 = vpop.permute.xlu0 %6928
  %6930 = vrot.lane.b32.xlu0 %v6814, 96
  %v6931 = vpop.permute.xlu0 %6930
  %6932 = vrot.lane.b32.xlu0 %v6815, 96
  %v6933 = vpop.permute.xlu0 %6932
  %6934 = vrot.lane.b32.xlu0 %v6816, 96
  %v6935 = vpop.permute.xlu0 %6934
  %6936 = vrot.lane.b32.xlu0 %v6817, 96
  %v6937 = vpop.permute.xlu0 %6936
  %6938 = vrot.lane.b32.xlu0 %v6818, 96
  %v6939 = vpop.permute.xlu0 %6938
  %6940 = vrot.lane.b32.xlu0 %v6819, 96
  %v6941 = vpop.permute.xlu0 %6940
  %6942 = vrot.lane.b32.xlu0 %v6820, 96
  %v6943 = vpop.permute.xlu0 %6942
  %6944 = vrot.lane.b32.xlu0 %v6821, 96
  %v6945 = vpop.permute.xlu0 %6944
  %6946 = vrot.lane.b32.xlu0 %v6822, 96
  %v6947 = vpop.permute.xlu0 %6946
  %6948 = vrot.lane.b32.xlu0 %v6823, 96
  %v6949 = vpop.permute.xlu0 %6948
  %6950 = vrot.lane.b32.xlu0 %v6824, 96
  %v6951 = vpop.permute.xlu0 %6950
  %6952 = vrot.lane.b32.xlu0 %v6825, 96
  %v6953 = vpop.permute.xlu0 %6952
  %7018 = vst.msk [vmem:[#allocation3 + $0x4] sm:$0xf] %vm5096, %v6827
  %7019 = vst.msk [vmem:[#allocation3 + $0x10] sm:$0xf] %vm5096, %v6829
  %7020 = vst.msk [vmem:[#allocation3 + $0x1c] sm:$0xf] %vm5096, %v6831
  %7021 = vst.msk [vmem:[#allocation3 + $0x28] sm:$0xf] %vm5096, %v6833
  %7022 = vst.msk [vmem:[#allocation3 + $0x34] sm:$0xf] %vm5096, %v6835
  %7023 = vst.msk [vmem:[#allocation3 + $0x40] sm:$0xf] %vm5096, %v6837
  %7024 = vst.msk [vmem:[#allocation3 + $0x4c] sm:$0xf] %vm5096, %v6839
  %7025 = vst.msk [vmem:[#allocation3 + $0x58] sm:$0xf] %vm5096, %v6841
  %7026 = vst.msk [vmem:[#allocation3 + $0x64] sm:$0xf] %vm5096, %v6843
  %7027 = vst.msk [vmem:[#allocation3 + $0x70] sm:$0xf] %vm5096, %v6845
  %7028 = vst.msk [vmem:[#allocation3 + $0x7c] sm:$0xf] %vm5096, %v6847
  %7029 = vst.msk [vmem:[#allocation3 + $0x88] sm:$0xf] %vm5096, %v6849
  %7030 = vst.msk [vmem:[#allocation3 + $0x94] sm:$0xf] %vm5096, %v6851
  %7031 = vst.msk [vmem:[#allocation3 + $0xa0] sm:$0xf] %vm5096, %v6853
  %7032 = vst.msk [vmem:[#allocation3 + $0xac] sm:$0xf] %vm5096, %v6855
  %7033 = vst.msk [vmem:[#allocation3 + $0xb8] sm:$0xf] %vm5096, %v6857
  %7034 = vst.msk [vmem:[#allocation3 + $0xc4] sm:$0xf] %vm5096, %v6859
  %7035 = vst.msk [vmem:[#allocation3 + $0xd0] sm:$0xf] %vm5096, %v6861
  %7036 = vst.msk [vmem:[#allocation3 + $0xdc] sm:$0xf] %vm5096, %v6863
  %7037 = vst.msk [vmem:[#allocation3 + $0xe8] sm:$0xf] %vm5096, %v6865
  %7038 = vst.msk [vmem:[#allocation3 + $0xf4] sm:$0xf] %vm5096, %v6867
  %7039 = vst.msk [vmem:[#allocation3 + $0x100] sm:$0xf] %vm5096, %v6869
  %7040 = vst.msk [vmem:[#allocation3 + $0x10c] sm:$0xf] %vm5096, %v6871
  %7041 = vst.msk [vmem:[#allocation3 + $0x118] sm:$0xf] %vm5096, %v6873
  %7042 = vst.msk [vmem:[#allocation3 + $0x124] sm:$0xf] %vm5096, %v6875
  %7043 = vst.msk [vmem:[#allocation3 + $0x130] sm:$0xf] %vm5096, %v6877
  %7044 = vst.msk [vmem:[#allocation3 + $0x13c] sm:$0xf] %vm5096, %v6879
  %7045 = vst.msk [vmem:[#allocation3 + $0x148] sm:$0xf] %vm5096, %v6881
  %7046 = vst.msk [vmem:[#allocation3 + $0x154] sm:$0xf] %vm5096, %v6883
  %7047 = vst.msk [vmem:[#allocation3 + $0x160] sm:$0xf] %vm5096, %v6885
  %7048 = vst.msk [vmem:[#allocation3 + $0x16c] sm:$0xf] %vm5096, %v6887
  %7049 = vst.msk [vmem:[#allocation3 + $0x178] sm:$0xf] %vm5096, %v6889
  %7050 = vst.msk [vmem:[#allocation3 + $0x184] sm:$0xf] %vm5096, %v6891
  %7051 = vst.msk [vmem:[#allocation3 + $0x190] sm:$0xf] %vm5096, %v6893
  %7052 = vst.msk [vmem:[#allocation3 + $0x19c] sm:$0xf] %vm5096, %v6895
  %7053 = vst.msk [vmem:[#allocation3 + $0x1a8] sm:$0xf] %vm5096, %v6897
  %7054 = vst.msk [vmem:[#allocation3 + $0x1b4] sm:$0xf] %vm5096, %v6899
  %7055 = vst.msk [vmem:[#allocation3 + $0x1c0] sm:$0xf] %vm5096, %v6901
  %7056 = vst.msk [vmem:[#allocation3 + $0x1cc] sm:$0xf] %vm5096, %v6903
  %7057 = vst.msk [vmem:[#allocation3 + $0x1d8] sm:$0xf] %vm5096, %v6905
  %7058 = vst.msk [vmem:[#allocation3 + $0x1e4] sm:$0xf] %vm5096, %v6907
  %7059 = vst.msk [vmem:[#allocation3 + $0x1f0] sm:$0xf] %vm5096, %v6909
  %7060 = vst.msk [vmem:[#allocation3 + $0x1fc] sm:$0xf] %vm5096, %v6911
  %7061 = vst.msk [vmem:[#allocation3 + $0x208] sm:$0xf] %vm5096, %v6913
  %7062 = vst.msk [vmem:[#allocation3 + $0x214] sm:$0xf] %vm5096, %v6915
  %7063 = vst.msk [vmem:[#allocation3 + $0x220] sm:$0xf] %vm5096, %v6917
  %7064 = vst.msk [vmem:[#allocation3 + $0x22c] sm:$0xf] %vm5096, %v6919
  %7065 = vst.msk [vmem:[#allocation3 + $0x238] sm:$0xf] %vm5096, %v6921
  %7066 = vst.msk [vmem:[#allocation3 + $0x244] sm:$0xf] %vm5096, %v6923
  %7067 = vst.msk [vmem:[#allocation3 + $0x250] sm:$0xf] %vm5096, %v6925
  %7068 = vst.msk [vmem:[#allocation3 + $0x25c] sm:$0xf] %vm5096, %v6927
  %7069 = vst.msk [vmem:[#allocation3 + $0x268] sm:$0xf] %vm5096, %v6929
  %7070 = vst.msk [vmem:[#allocation3 + $0x274] sm:$0xf] %vm5096, %v6931
  %7071 = vst.msk [vmem:[#allocation3 + $0x280] sm:$0xf] %vm5096, %v6933
  %7072 = vst.msk [vmem:[#allocation3 + $0x28c] sm:$0xf] %vm5096, %v6935
  %7073 = vst.msk [vmem:[#allocation3 + $0x298] sm:$0xf] %vm5096, %v6937
  %7074 = vst.msk [vmem:[#allocation3 + $0x2a4] sm:$0xf] %vm5096, %v6939
  %7075 = vst.msk [vmem:[#allocation3 + $0x2b0] sm:$0xf] %vm5096, %v6941
  %7076 = vst.msk [vmem:[#allocation3 + $0x2bc] sm:$0xf] %vm5096, %v6943
  %7077 = vst.msk [vmem:[#allocation3 + $0x2c8] sm:$0xf] %vm5096, %v6945
  %7078 = vst.msk [vmem:[#allocation3 + $0x2d4] sm:$0xf] %vm5096, %v6947
  %7079 = vst.msk [vmem:[#allocation3 + $0x2e0] sm:$0xf] %vm5096, %v6949
  %7080 = vst.msk [vmem:[#allocation3 + $0x2ec] sm:$0xf] %vm5096, %v6951
  %7081 = vst.msk [vmem:[#allocation3 + $0x2f8] sm:$0xf] %vm5096, %v6953
  %v7082 = vld [vmem:[%s6057 + $0x2] sm:$0xff]
  %v7083 = vld [vmem:[%s6057 + $0xa] sm:$0xff]
  %v7084 = vld [vmem:[%s6057 + $0x1a] sm:$0xff]
  %v7085 = vld [vmem:[%s6057 + $0x22] sm:$0xff]
  %v7086 = vld [vmem:[%s6057 + $0x32] sm:$0xff]
  %v7087 = vld [vmem:[%s6057 + $0x3a] sm:$0xff]
  %v7088 = vld [vmem:[%s6057 + $0x4a] sm:$0xff]
  %v7089 = vld [vmem:[%s6057 + $0x52] sm:$0xff]
  %v7090 = vld [vmem:[%s6057 + $0x62] sm:$0xff]
  %v7091 = vld [vmem:[%s6057 + $0x6a] sm:$0xff]
  %v7092 = vld [vmem:[%s6057 + $0x7a] sm:$0xff]
  %v7093 = vld [vmem:[%s6057 + $0x82] sm:$0xff]
  %v7094 = vld [vmem:[%s6057 + $0x92] sm:$0xff]
  %v7095 = vld [vmem:[%s6057 + $0x9a] sm:$0xff]
  %v7096 = vld [vmem:[%s6057 + $0xaa] sm:$0xff]
  %v7097 = vld [vmem:[%s6057 + $0xb2] sm:$0xff]
  %v7098 = vld [vmem:[%s6057 + $0xc2] sm:$0xff]
  %v7099 = vld [vmem:[%s6057 + $0xca] sm:$0xff]
  %v7100 = vld [vmem:[%s6057 + $0xda] sm:$0xff]
  %v7101 = vld [vmem:[%s6057 + $0xe2] sm:$0xff]
  %v7102 = vld [vmem:[%s6057 + $0xf2] sm:$0xff]
  %v7103 = vld [vmem:[%s6057 + $0xfa] sm:$0xff]
  %v7104 = vld [vmem:[%s6057 + $0x10a] sm:$0xff]
  %v7105 = vld [vmem:[%s6057 + $0x112] sm:$0xff]
  %v7106 = vld [vmem:[%s6057 + $0x122] sm:$0xff]
  %v7107 = vld [vmem:[%s6057 + $0x12a] sm:$0xff]
  %v7108 = vld [vmem:[%s6057 + $0x13a] sm:$0xff]
  %v7109 = vld [vmem:[%s6057 + $0x142] sm:$0xff]
  %v7110 = vld [vmem:[%s6057 + $0x152] sm:$0xff]
  %v7111 = vld [vmem:[%s6057 + $0x15a] sm:$0xff]
  %v7112 = vld [vmem:[%s6057 + $0x16a] sm:$0xff]
  %v7113 = vld [vmem:[%s6057 + $0x172] sm:$0xff]
  %v7114 = vld [vmem:[%s6057 + $0x1b2] sm:$0xff]
  %v7115 = vld [vmem:[%s6057 + $0x1ba] sm:$0xff]
  %v7116 = vld [vmem:[%s6057 + $0x1ca] sm:$0xff]
  %v7117 = vld [vmem:[%s6057 + $0x1d2] sm:$0xff]
  %v7118 = vld [vmem:[%s6057 + $0x1e2] sm:$0xff]
  %v7119 = vld [vmem:[%s6057 + $0x1ea] sm:$0xff]
  %v7120 = vld [vmem:[%s6057 + $0x1fa] sm:$0xff]
  %v7121 = vld [vmem:[%s6057 + $0x202] sm:$0xff]
  %v7122 = vld [vmem:[%s6057 + $0x212] sm:$0xff]
  %v7123 = vld [vmem:[%s6057 + $0x21a] sm:$0xff]
  %v7124 = vld [vmem:[%s6057 + $0x22a] sm:$0xff]
  %v7125 = vld [vmem:[%s6057 + $0x232] sm:$0xff]
  %v7126 = vld [vmem:[%s6057 + $0x242] sm:$0xff]
  %v7127 = vld [vmem:[%s6057 + $0x24a] sm:$0xff]
  %v7128 = vld [vmem:[%s6057 + $0x25a] sm:$0xff]
  %v7129 = vld [vmem:[%s6057 + $0x262] sm:$0xff]
  %v7130 = vld [vmem:[%s6057 + $0x272] sm:$0xff]
  %v7131 = vld [vmem:[%s6057 + $0x27a] sm:$0xff]
  %v7132 = vld [vmem:[%s6057 + $0x28a] sm:$0xff]
  %v7133 = vld [vmem:[%s6057 + $0x292] sm:$0xff]
  %v7134 = vld [vmem:[%s6057 + $0x2a2] sm:$0xff]
  %v7135 = vld [vmem:[%s6057 + $0x2aa] sm:$0xff]
  %v7136 = vld [vmem:[%s6057 + $0x2ba] sm:$0xff]
  %v7137 = vld [vmem:[%s6057 + $0x2c2] sm:$0xff]
  %v7138 = vld [vmem:[%s6057 + $0x2d2] sm:$0xff]
  %v7139 = vld [vmem:[%s6057 + $0x2da] sm:$0xff]
  %v7140 = vld [vmem:[%s6057 + $0x2ea] sm:$0xff]
  %v7141 = vld [vmem:[%s6057 + $0x2f2] sm:$0xff]
  %v7142 = vld [vmem:[%s6057 + $0x302] sm:$0xff]
  %v7143 = vld [vmem:[%s6057 + $0x30a] sm:$0xff]
  %v7144 = vld [vmem:[%s6057 + $0x31a] sm:$0xff]
  %v7145 = vld [vmem:[%s6057 + $0x322] sm:$0xff]
  %v7146 = vpack.c.bf16 %v7083, %v7082
  %v7147 = vpack.c.bf16 %v7085, %v7084
  %v7148 = vpack.c.bf16 %v7087, %v7086
  %v7149 = vpack.c.bf16 %v7089, %v7088
  %v7150 = vpack.c.bf16 %v7091, %v7090
  %v7151 = vpack.c.bf16 %v7093, %v7092
  %v7152 = vpack.c.bf16 %v7095, %v7094
  %v7153 = vpack.c.bf16 %v7097, %v7096
  %v7154 = vpack.c.bf16 %v7099, %v7098
  %v7155 = vpack.c.bf16 %v7101, %v7100
  %v7156 = vpack.c.bf16 %v7103, %v7102
  %v7157 = vpack.c.bf16 %v7105, %v7104
  %v7158 = vpack.c.bf16 %v7107, %v7106
  %v7159 = vpack.c.bf16 %v7109, %v7108
  %v7160 = vpack.c.bf16 %v7111, %v7110
  %v7161 = vpack.c.bf16 %v7113, %v7112
  %v7162 = vpack.c.bf16 %v7115, %v7114
  %v7163 = vpack.c.bf16 %v7117, %v7116
  %v7164 = vpack.c.bf16 %v7119, %v7118
  %v7165 = vpack.c.bf16 %v7121, %v7120
  %v7166 = vpack.c.bf16 %v7123, %v7122
  %v7167 = vpack.c.bf16 %v7125, %v7124
  %v7168 = vpack.c.bf16 %v7127, %v7126
  %v7169 = vpack.c.bf16 %v7129, %v7128
  %v7170 = vpack.c.bf16 %v7131, %v7130
  %v7171 = vpack.c.bf16 %v7133, %v7132
  %v7172 = vpack.c.bf16 %v7135, %v7134
  %v7173 = vpack.c.bf16 %v7137, %v7136
  %v7174 = vpack.c.bf16 %v7139, %v7138
  %v7175 = vpack.c.bf16 %v7141, %v7140
  %v7176 = vpack.c.bf16 %v7143, %v7142
  %v7177 = vpack.c.bf16 %v7145, %v7144
  %v7210 = vunpack.c.l.b16 %v7146
  %v7211 = vunpack.c.h.b16 %v7146
  %v7212 = vunpack.c.l.b16 %v7147
  %v7213 = vunpack.c.h.b16 %v7147
  %v7214 = vunpack.c.l.b16 %v7148
  %v7215 = vunpack.c.h.b16 %v7148
  %v7216 = vunpack.c.l.b16 %v7149
  %v7217 = vunpack.c.h.b16 %v7149
  %v7218 = vunpack.c.l.b16 %v7150
  %v7219 = vunpack.c.h.b16 %v7150
  %v7220 = vunpack.c.l.b16 %v7151
  %v7221 = vunpack.c.h.b16 %v7151
  %v7222 = vunpack.c.l.b16 %v7152
  %v7223 = vunpack.c.h.b16 %v7152
  %v7224 = vunpack.c.l.b16 %v7153
  %v7225 = vunpack.c.h.b16 %v7153
  %v7226 = vunpack.c.l.b16 %v7154
  %v7227 = vunpack.c.h.b16 %v7154
  %v7228 = vunpack.c.l.b16 %v7155
  %v7229 = vunpack.c.h.b16 %v7155
  %v7230 = vunpack.c.l.b16 %v7156
  %v7231 = vunpack.c.h.b16 %v7156
  %v7232 = vunpack.c.l.b16 %v7157
  %v7233 = vunpack.c.h.b16 %v7157
  %v7234 = vunpack.c.l.b16 %v7158
  %v7235 = vunpack.c.h.b16 %v7158
  %v7236 = vunpack.c.l.b16 %v7159
  %v7237 = vunpack.c.h.b16 %v7159
  %v7238 = vunpack.c.l.b16 %v7160
  %v7239 = vunpack.c.h.b16 %v7160
  %v7240 = vunpack.c.l.b16 %v7161
  %v7241 = vunpack.c.h.b16 %v7161
  %v7242 = vunpack.c.l.b16 %v7162
  %v7243 = vunpack.c.h.b16 %v7162
  %v7244 = vunpack.c.l.b16 %v7163
  %v7245 = vunpack.c.h.b16 %v7163
  %v7246 = vunpack.c.l.b16 %v7164
  %v7247 = vunpack.c.h.b16 %v7164
  %v7248 = vunpack.c.l.b16 %v7165
  %v7249 = vunpack.c.h.b16 %v7165
  %v7250 = vunpack.c.l.b16 %v7166
  %v7251 = vunpack.c.h.b16 %v7166
  %v7252 = vunpack.c.l.b16 %v7167
  %v7253 = vunpack.c.h.b16 %v7167
  %v7254 = vunpack.c.l.b16 %v7168
  %v7255 = vunpack.c.h.b16 %v7168
  %v7256 = vunpack.c.l.b16 %v7169
  %v7257 = vunpack.c.h.b16 %v7169
  %v7258 = vunpack.c.l.b16 %v7170
  %v7259 = vunpack.c.h.b16 %v7170
  %v7260 = vunpack.c.l.b16 %v7171
  %v7261 = vunpack.c.h.b16 %v7171
  %v7262 = vunpack.c.l.b16 %v7172
  %v7263 = vunpack.c.h.b16 %v7172
  %v7264 = vunpack.c.l.b16 %v7173
  %v7265 = vunpack.c.h.b16 %v7173
  %v7266 = vunpack.c.l.b16 %v7174
  %v7267 = vunpack.c.h.b16 %v7174
  %v7268 = vunpack.c.l.b16 %v7175
  %v7269 = vunpack.c.h.b16 %v7175
  %v7270 = vunpack.c.l.b16 %v7176
  %v7271 = vunpack.c.h.b16 %v7176
  %v7272 = vunpack.c.l.b16 %v7177
  %v7273 = vunpack.c.h.b16 %v7177
  %v7274 = vpack.c.b16 %v7210, %v7210
  %v7275 = vpack.c.b16 %v7211, %v7211
  %v7276 = vpack.c.b16 %v7212, %v7212
  %v7277 = vpack.c.b16 %v7213, %v7213
  %v7278 = vpack.c.b16 %v7214, %v7214
  %v7279 = vpack.c.b16 %v7215, %v7215
  %v7280 = vpack.c.b16 %v7216, %v7216
  %v7281 = vpack.c.b16 %v7217, %v7217
  %v7282 = vpack.c.b16 %v7218, %v7218
  %v7283 = vpack.c.b16 %v7219, %v7219
  %v7284 = vpack.c.b16 %v7220, %v7220
  %v7285 = vpack.c.b16 %v7221, %v7221
  %v7286 = vpack.c.b16 %v7222, %v7222
  %v7287 = vpack.c.b16 %v7223, %v7223
  %v7288 = vpack.c.b16 %v7224, %v7224
  %v7289 = vpack.c.b16 %v7225, %v7225
  %v7290 = vpack.c.b16 %v7226, %v7226
  %v7291 = vpack.c.b16 %v7227, %v7227
  %v7292 = vpack.c.b16 %v7228, %v7228
  %v7293 = vpack.c.b16 %v7229, %v7229
  %v7294 = vpack.c.b16 %v7230, %v7230
  %v7295 = vpack.c.b16 %v7231, %v7231
  %v7296 = vpack.c.b16 %v7232, %v7232
  %v7297 = vpack.c.b16 %v7233, %v7233
  %v7298 = vpack.c.b16 %v7234, %v7234
  %v7299 = vpack.c.b16 %v7235, %v7235
  %v7300 = vpack.c.b16 %v7236, %v7236
  %v7301 = vpack.c.b16 %v7237, %v7237
  %v7302 = vpack.c.b16 %v7238, %v7238
  %v7303 = vpack.c.b16 %v7239, %v7239
  %v7304 = vpack.c.b16 %v7240, %v7240
  %v7305 = vpack.c.b16 %v7241, %v7241
  %v7306 = vpack.c.b16 %v7242, %v7242
  %v7307 = vpack.c.b16 %v7243, %v7243
  %v7308 = vpack.c.b16 %v7244, %v7244
  %v7309 = vpack.c.b16 %v7245, %v7245
  %v7310 = vpack.c.b16 %v7246, %v7246
  %v7311 = vpack.c.b16 %v7247, %v7247
  %v7312 = vpack.c.b16 %v7248, %v7248
  %v7313 = vpack.c.b16 %v7249, %v7249
  %v7314 = vpack.c.b16 %v7250, %v7250
  %v7315 = vpack.c.b16 %v7251, %v7251
  %v7316 = vpack.c.b16 %v7252, %v7252
  %v7317 = vpack.c.b16 %v7253, %v7253
  %v7318 = vpack.c.b16 %v7254, %v7254
  %v7319 = vpack.c.b16 %v7255, %v7255
  %v7320 = vpack.c.b16 %v7256, %v7256
  %v7321 = vpack.c.b16 %v7257, %v7257
  %v7322 = vpack.c.b16 %v7258, %v7258
  %v7323 = vpack.c.b16 %v7259, %v7259
  %v7324 = vpack.c.b16 %v7260, %v7260
  %v7325 = vpack.c.b16 %v7261, %v7261
  %v7326 = vpack.c.b16 %v7262, %v7262
  %v7327 = vpack.c.b16 %v7263, %v7263
  %v7328 = vpack.c.b16 %v7264, %v7264
  %v7329 = vpack.c.b16 %v7265, %v7265
  %v7330 = vpack.c.b16 %v7266, %v7266
  %v7331 = vpack.c.b16 %v7267, %v7267
  %v7332 = vpack.c.b16 %v7268, %v7268
  %v7333 = vpack.c.b16 %v7269, %v7269
  %v7334 = vpack.c.b16 %v7270, %v7270
  %v7335 = vpack.c.b16 %v7271, %v7271
  %v7336 = vpack.c.b16 %v7272, %v7272
  %v7337 = vpack.c.b16 %v7273, %v7273
  %7402 = vst.msk [vmem:[#allocation3 + $0x8] sm:$0xf] %vm3557, %v7274
  %7403 = vst.msk [vmem:[#allocation3 + $0x14] sm:$0xf] %vm3557, %v7275
  %7404 = vst.msk [vmem:[#allocation3 + $0x20] sm:$0xf] %vm3557, %v7276
  %7405 = vst.msk [vmem:[#allocation3 + $0x2c] sm:$0xf] %vm3557, %v7277
  %7406 = vst.msk [vmem:[#allocation3 + $0x38] sm:$0xf] %vm3557, %v7278
  %7407 = vst.msk [vmem:[#allocation3 + $0x44] sm:$0xf] %vm3557, %v7279
  %7408 = vst.msk [vmem:[#allocation3 + $0x50] sm:$0xf] %vm3557, %v7280
  %7409 = vst.msk [vmem:[#allocation3 + $0x5c] sm:$0xf] %vm3557, %v7281
  %7410 = vst.msk [vmem:[#allocation3 + $0x68] sm:$0xf] %vm3557, %v7282
  %7411 = vst.msk [vmem:[#allocation3 + $0x74] sm:$0xf] %vm3557, %v7283
  %7412 = vst.msk [vmem:[#allocation3 + $0x80] sm:$0xf] %vm3557, %v7284
  %7413 = vst.msk [vmem:[#allocation3 + $0x8c] sm:$0xf] %vm3557, %v7285
  %7414 = vst.msk [vmem:[#allocation3 + $0x98] sm:$0xf] %vm3557, %v7286
  %7415 = vst.msk [vmem:[#allocation3 + $0xa4] sm:$0xf] %vm3557, %v7287
  %7416 = vst.msk [vmem:[#allocation3 + $0xb0] sm:$0xf] %vm3557, %v7288
  %7417 = vst.msk [vmem:[#allocation3 + $0xbc] sm:$0xf] %vm3557, %v7289
  %7418 = vst.msk [vmem:[#allocation3 + $0xc8] sm:$0xf] %vm3557, %v7290
  %7419 = vst.msk [vmem:[#allocation3 + $0xd4] sm:$0xf] %vm3557, %v7291
  %7420 = vst.msk [vmem:[#allocation3 + $0xe0] sm:$0xf] %vm3557, %v7292
  %7421 = vst.msk [vmem:[#allocation3 + $0xec] sm:$0xf] %vm3557, %v7293
  %7422 = vst.msk [vmem:[#allocation3 + $0xf8] sm:$0xf] %vm3557, %v7294
  %7423 = vst.msk [vmem:[#allocation3 + $0x104] sm:$0xf] %vm3557, %v7295
  %7424 = vst.msk [vmem:[#allocation3 + $0x110] sm:$0xf] %vm3557, %v7296
  %7425 = vst.msk [vmem:[#allocation3 + $0x11c] sm:$0xf] %vm3557, %v7297
  %7426 = vst.msk [vmem:[#allocation3 + $0x128] sm:$0xf] %vm3557, %v7298
  %7427 = vst.msk [vmem:[#allocation3 + $0x134] sm:$0xf] %vm3557, %v7299
  %7428 = vst.msk [vmem:[#allocation3 + $0x140] sm:$0xf] %vm3557, %v7300
  %7429 = vst.msk [vmem:[#allocation3 + $0x14c] sm:$0xf] %vm3557, %v7301
  %7430 = vst.msk [vmem:[#allocation3 + $0x158] sm:$0xf] %vm3557, %v7302
  %7431 = vst.msk [vmem:[#allocation3 + $0x164] sm:$0xf] %vm3557, %v7303
  %7432 = vst.msk [vmem:[#allocation3 + $0x170] sm:$0xf] %vm3557, %v7304
  %7433 = vst.msk [vmem:[#allocation3 + $0x17c] sm:$0xf] %vm3557, %v7305
  %7434 = vst.msk [vmem:[#allocation3 + $0x188] sm:$0xf] %vm3557, %v7306
  %7435 = vst.msk [vmem:[#allocation3 + $0x194] sm:$0xf] %vm3557, %v7307
  %7436 = vst.msk [vmem:[#allocation3 + $0x1a0] sm:$0xf] %vm3557, %v7308
  %7437 = vst.msk [vmem:[#allocation3 + $0x1ac] sm:$0xf] %vm3557, %v7309
  %7438 = vst.msk [vmem:[#allocation3 + $0x1b8] sm:$0xf] %vm3557, %v7310
  %7439 = vst.msk [vmem:[#allocation3 + $0x1c4] sm:$0xf] %vm3557, %v7311
  %7440 = vst.msk [vmem:[#allocation3 + $0x1d0] sm:$0xf] %vm3557, %v7312
  %7441 = vst.msk [vmem:[#allocation3 + $0x1dc] sm:$0xf] %vm3557, %v7313
  %7442 = vst.msk [vmem:[#allocation3 + $0x1e8] sm:$0xf] %vm3557, %v7314
  %7443 = vst.msk [vmem:[#allocation3 + $0x1f4] sm:$0xf] %vm3557, %v7315
  %7444 = vst.msk [vmem:[#allocation3 + $0x200] sm:$0xf] %vm3557, %v7316
  %7445 = vst.msk [vmem:[#allocation3 + $0x20c] sm:$0xf] %vm3557, %v7317
  %7446 = vst.msk [vmem:[#allocation3 + $0x218] sm:$0xf] %vm3557, %v7318
  %7447 = vst.msk [vmem:[#allocation3 + $0x224] sm:$0xf] %vm3557, %v7319
  %7448 = vst.msk [vmem:[#allocation3 + $0x230] sm:$0xf] %vm3557, %v7320
  %7449 = vst.msk [vmem:[#allocation3 + $0x23c] sm:$0xf] %vm3557, %v7321
  %7450 = vst.msk [vmem:[#allocation3 + $0x248] sm:$0xf] %vm3557, %v7322
  %7451 = vst.msk [vmem:[#allocation3 + $0x254] sm:$0xf] %vm3557, %v7323
  %7452 = vst.msk [vmem:[#allocation3 + $0x260] sm:$0xf] %vm3557, %v7324
  %7453 = vst.msk [vmem:[#allocation3 + $0x26c] sm:$0xf] %vm3557, %v7325
  %7454 = vst.msk [vmem:[#allocation3 + $0x278] sm:$0xf] %vm3557, %v7326
  %7455 = vst.msk [vmem:[#allocation3 + $0x284] sm:$0xf] %vm3557, %v7327
  %7456 = vst.msk [vmem:[#allocation3 + $0x290] sm:$0xf] %vm3557, %v7328
  %7457 = vst.msk [vmem:[#allocation3 + $0x29c] sm:$0xf] %vm3557, %v7329
  %7458 = vst.msk [vmem:[#allocation3 + $0x2a8] sm:$0xf] %vm3557, %v7330
  %7459 = vst.msk [vmem:[#allocation3 + $0x2b4] sm:$0xf] %vm3557, %v7331
  %7460 = vst.msk [vmem:[#allocation3 + $0x2c0] sm:$0xf] %vm3557, %v7332
  %7461 = vst.msk [vmem:[#allocation3 + $0x2cc] sm:$0xf] %vm3557, %v7333
  %7462 = vst.msk [vmem:[#allocation3 + $0x2d8] sm:$0xf] %vm3557, %v7334
  %7463 = vst.msk [vmem:[#allocation3 + $0x2e4] sm:$0xf] %vm3557, %v7335
  %7464 = vst.msk [vmem:[#allocation3 + $0x2f0] sm:$0xf] %vm3557, %v7336
  %7465 = vst.msk [vmem:[#allocation3 + $0x2fc] sm:$0xf] %vm3557, %v7337
  %v7466 = vld [vmem:[#allocation3] sm:$0xff]
  %v7467 = vld [vmem:[#allocation3 + $0x8] sm:$0xf]
  %v7468 = vld [vmem:[#allocation3 + $0xc] sm:$0xff]
  %v7469 = vld [vmem:[#allocation3 + $0x14] sm:$0xf]
  %v7470 = vld [vmem:[#allocation3 + $0x18] sm:$0xff]
  %v7471 = vld [vmem:[#allocation3 + $0x20] sm:$0xf]
  %v7472 = vld [vmem:[#allocation3 + $0x24] sm:$0xff]
  %v7473 = vld [vmem:[#allocation3 + $0x2c] sm:$0xf]
  %v7474 = vld [vmem:[#allocation3 + $0x30] sm:$0xff]
  %v7475 = vld [vmem:[#allocation3 + $0x38] sm:$0xf]
  %v7476 = vld [vmem:[#allocation3 + $0x3c] sm:$0xff]
  %v7477 = vld [vmem:[#allocation3 + $0x44] sm:$0xf]
  %v7478 = vld [vmem:[#allocation3 + $0x48] sm:$0xff]
  %v7479 = vld [vmem:[#allocation3 + $0x50] sm:$0xf]
  %v7480 = vld [vmem:[#allocation3 + $0x54] sm:$0xff]
  %v7481 = vld [vmem:[#allocation3 + $0x5c] sm:$0xf]
  %v7482 = vld [vmem:[#allocation3 + $0x60] sm:$0xff]
  %v7483 = vld [vmem:[#allocation3 + $0x68] sm:$0xf]
  %v7484 = vld [vmem:[#allocation3 + $0x6c] sm:$0xff]
  %v7485 = vld [vmem:[#allocation3 + $0x74] sm:$0xf]
  %v7486 = vld [vmem:[#allocation3 + $0x78] sm:$0xff]
  %v7487 = vld [vmem:[#allocation3 + $0x80] sm:$0xf]
  %v7488 = vld [vmem:[#allocation3 + $0x84] sm:$0xff]
  %v7489 = vld [vmem:[#allocation3 + $0x8c] sm:$0xf]
  %v7490 = vld [vmem:[#allocation3 + $0x90] sm:$0xff]
  %v7491 = vld [vmem:[#allocation3 + $0x98] sm:$0xf]
  %v7492 = vld [vmem:[#allocation3 + $0x9c] sm:$0xff]
  %v7493 = vld [vmem:[#allocation3 + $0xa4] sm:$0xf]
  %v7494 = vld [vmem:[#allocation3 + $0xa8] sm:$0xff]
  %v7495 = vld [vmem:[#allocation3 + $0xb0] sm:$0xf]
  %v7496 = vld [vmem:[#allocation3 + $0xb4] sm:$0xff]
  %v7497 = vld [vmem:[#allocation3 + $0xbc] sm:$0xf]
  %v7498 = vld [vmem:[#allocation3 + $0xc0] sm:$0xff]
  %v7499 = vld [vmem:[#allocation3 + $0xc8] sm:$0xf]
  %v7500 = vld [vmem:[#allocation3 + $0xcc] sm:$0xff]
  %v7501 = vld [vmem:[#allocation3 + $0xd4] sm:$0xf]
  %v7502 = vld [vmem:[#allocation3 + $0xd8] sm:$0xff]
  %v7503 = vld [vmem:[#allocation3 + $0xe0] sm:$0xf]
  %v7504 = vld [vmem:[#allocation3 + $0xe4] sm:$0xff]
  %v7505 = vld [vmem:[#allocation3 + $0xec] sm:$0xf]
  %v7506 = vld [vmem:[#allocation3 + $0xf0] sm:$0xff]
  %v7507 = vld [vmem:[#allocation3 + $0xf8] sm:$0xf]
  %v7508 = vld [vmem:[#allocation3 + $0xfc] sm:$0xff]
  %v7509 = vld [vmem:[#allocation3 + $0x104] sm:$0xf]
  %v7510 = vld [vmem:[#allocation3 + $0x108] sm:$0xff]
  %v7511 = vld [vmem:[#allocation3 + $0x110] sm:$0xf]
  %v7512 = vld [vmem:[#allocation3 + $0x114] sm:$0xff]
  %v7513 = vld [vmem:[#allocation3 + $0x11c] sm:$0xf]
  %v7514 = vld [vmem:[#allocation3 + $0x120] sm:$0xff]
  %v7515 = vld [vmem:[#allocation3 + $0x128] sm:$0xf]
  %v7516 = vld [vmem:[#allocation3 + $0x12c] sm:$0xff]
  %v7517 = vld [vmem:[#allocation3 + $0x134] sm:$0xf]
  %v7518 = vld [vmem:[#allocation3 + $0x138] sm:$0xff]
  %v7519 = vld [vmem:[#allocation3 + $0x140] sm:$0xf]
  %v7520 = vld [vmem:[#allocation3 + $0x144] sm:$0xff]
  %v7521 = vld [vmem:[#allocation3 + $0x14c] sm:$0xf]
  %v7522 = vld [vmem:[#allocation3 + $0x150] sm:$0xff]
  %v7523 = vld [vmem:[#allocation3 + $0x158] sm:$0xf]
  %v7524 = vld [vmem:[#allocation3 + $0x15c] sm:$0xff]
  %v7525 = vld [vmem:[#allocation3 + $0x164] sm:$0xf]
  %v7526 = vld [vmem:[#allocation3 + $0x168] sm:$0xff]
  %v7527 = vld [vmem:[#allocation3 + $0x170] sm:$0xf]
  %v7528 = vld [vmem:[#allocation3 + $0x174] sm:$0xff]
  %v7529 = vld [vmem:[#allocation3 + $0x17c] sm:$0xf]
  %v7530 = vld [vmem:[#allocation3 + $0x180] sm:$0xff]
  %v7531 = vld [vmem:[#allocation3 + $0x188] sm:$0xf]
  %v7532 = vld [vmem:[#allocation3 + $0x18c] sm:$0xff]
  %v7533 = vld [vmem:[#allocation3 + $0x194] sm:$0xf]
  %v7534 = vld [vmem:[#allocation3 + $0x198] sm:$0xff]
  %v7535 = vld [vmem:[#allocation3 + $0x1a0] sm:$0xf]
  %v7536 = vld [vmem:[#allocation3 + $0x1a4] sm:$0xff]
  %v7537 = vld [vmem:[#allocation3 + $0x1ac] sm:$0xf]
  %v7538 = vld [vmem:[#allocation3 + $0x1b0] sm:$0xff]
  %v7539 = vld [vmem:[#allocation3 + $0x1b8] sm:$0xf]
  %v7540 = vld [vmem:[#allocation3 + $0x1bc] sm:$0xff]
  %v7541 = vld [vmem:[#allocation3 + $0x1c4] sm:$0xf]
  %v7542 = vld [vmem:[#allocation3 + $0x1c8] sm:$0xff]
  %v7543 = vld [vmem:[#allocation3 + $0x1d0] sm:$0xf]
  %v7544 = vld [vmem:[#allocation3 + $0x1d4] sm:$0xff]
  %v7545 = vld [vmem:[#allocation3 + $0x1dc] sm:$0xf]
  %v7546 = vld [vmem:[#allocation3 + $0x1e0] sm:$0xff]
  %v7547 = vld [vmem:[#allocation3 + $0x1e8] sm:$0xf]
  %v7548 = vld [vmem:[#allocation3 + $0x1ec] sm:$0xff]
  %v7549 = vld [vmem:[#allocation3 + $0x1f4] sm:$0xf]
  %v7550 = vld [vmem:[#allocation3 + $0x1f8] sm:$0xff]
  %v7551 = vld [vmem:[#allocation3 + $0x200] sm:$0xf]
  %v7552 = vld [vmem:[#allocation3 + $0x204] sm:$0xff]
  %v7553 = vld [vmem:[#allocation3 + $0x20c] sm:$0xf]
  %v7554 = vld [vmem:[#allocation3 + $0x210] sm:$0xff]
  %v7555 = vld [vmem:[#allocation3 + $0x218] sm:$0xf]
  %v7556 = vld [vmem:[#allocation3 + $0x21c] sm:$0xff]
  %v7557 = vld [vmem:[#allocation3 + $0x224] sm:$0xf]
  %v7558 = vld [vmem:[#allocation3 + $0x228] sm:$0xff]
  %v7559 = vld [vmem:[#allocation3 + $0x230] sm:$0xf]
  %v7560 = vld [vmem:[#allocation3 + $0x234] sm:$0xff]
  %v7561 = vld [vmem:[#allocation3 + $0x23c] sm:$0xf]
  %v7562 = vld [vmem:[#allocation3 + $0x240] sm:$0xff]
  %v7563 = vld [vmem:[#allocation3 + $0x248] sm:$0xf]
  %v7564 = vld [vmem:[#allocation3 + $0x24c] sm:$0xff]
  %v7565 = vld [vmem:[#allocation3 + $0x254] sm:$0xf]
  %v7566 = vld [vmem:[#allocation3 + $0x258] sm:$0xff]
  %v7567 = vld [vmem:[#allocation3 + $0x260] sm:$0xf]
  %v7568 = vld [vmem:[#allocation3 + $0x264] sm:$0xff]
  %v7569 = vld [vmem:[#allocation3 + $0x26c] sm:$0xf]
  %v7570 = vld [vmem:[#allocation3 + $0x270] sm:$0xff]
  %v7571 = vld [vmem:[#allocation3 + $0x278] sm:$0xf]
  %v7572 = vld [vmem:[#allocation3 + $0x27c] sm:$0xff]
  %v7573 = vld [vmem:[#allocation3 + $0x284] sm:$0xf]
  %v7574 = vld [vmem:[#allocation3 + $0x288] sm:$0xff]
  %v7575 = vld [vmem:[#allocation3 + $0x290] sm:$0xf]
  %v7576 = vld [vmem:[#allocation3 + $0x294] sm:$0xff]
  %v7577 = vld [vmem:[#allocation3 + $0x29c] sm:$0xf]
  %v7578 = vld [vmem:[#allocation3 + $0x2a0] sm:$0xff]
  %v7579 = vld [vmem:[#allocation3 + $0x2a8] sm:$0xf]
  %v7580 = vld [vmem:[#allocation3 + $0x2ac] sm:$0xff]
  %v7581 = vld [vmem:[#allocation3 + $0x2b4] sm:$0xf]
  %v7582 = vld [vmem:[#allocation3 + $0x2b8] sm:$0xff]
  %v7583 = vld [vmem:[#allocation3 + $0x2c0] sm:$0xf]
  %v7584 = vld [vmem:[#allocation3 + $0x2c4] sm:$0xff]
  %v7585 = vld [vmem:[#allocation3 + $0x2cc] sm:$0xf]
  %v7586 = vld [vmem:[#allocation3 + $0x2d0] sm:$0xff]
  %v7587 = vld [vmem:[#allocation3 + $0x2d8] sm:$0xf]
  %v7588 = vld [vmem:[#allocation3 + $0x2dc] sm:$0xff]
  %v7589 = vld [vmem:[#allocation3 + $0x2e4] sm:$0xf]
  %v7590 = vld [vmem:[#allocation3 + $0x2e8] sm:$0xff]
  %v7591 = vld [vmem:[#allocation3 + $0x2f0] sm:$0xf]
  %v7592 = vld [vmem:[#allocation3 + $0x2f4] sm:$0xff]
  %v7593 = vld [vmem:[#allocation3 + $0x2fc] sm:$0xf]
  %v7594 = vld [vmem:[%s3] sm:$0xf]
  %v7595 = vld [vmem:[%s3 + $0x4] sm:$0xf]
  %v7596 = vld [vmem:[%s3 + $0x8] sm:$0xf]
  %v7597 = vld [vmem:[%s3 + $0xc] sm:$0xf]
  %v7598 = vld [vmem:[%s3 + $0x10] sm:$0xf]
  %v7599 = vld [vmem:[%s3 + $0x14] sm:$0xf]
  %v7600 = vld [vmem:[%s3 + $0x18] sm:$0xf]
  %v7601 = vld [vmem:[%s3 + $0x1c] sm:$0xf]
  %v7602 = vld [vmem:[%s3 + $0x20] sm:$0xf]
  %v7603 = vld [vmem:[%s3 + $0x24] sm:$0xf]
  %v7604 = vld [vmem:[%s3 + $0x28] sm:$0xf]
  %v7605 = vld [vmem:[%s3 + $0x2c] sm:$0xf]
  %v7606 = vld [vmem:[%s3 + $0x30] sm:$0xf]
  %v7607 = vld [vmem:[%s3 + $0x34] sm:$0xf]
  %v7608 = vld [vmem:[%s3 + $0x38] sm:$0xf]
  %v7609 = vld [vmem:[%s3 + $0x3c] sm:$0xf]
  %v7610 = vld [vmem:[%s3 + $0x40] sm:$0xf]
  %v7611 = vld [vmem:[%s3 + $0x44] sm:$0xf]
  %v7612 = vld [vmem:[%s3 + $0x48] sm:$0xf]
  %v7613 = vld [vmem:[%s3 + $0x4c] sm:$0xf]
  %v7614 = vld [vmem:[%s3 + $0x50] sm:$0xf]
  %v7615 = vld [vmem:[%s3 + $0x54] sm:$0xf]
  %v7616 = vld [vmem:[%s3 + $0x58] sm:$0xf]
  %v7617 = vld [vmem:[%s3 + $0x5c] sm:$0xf]
  %v7618 = vld [vmem:[%s3 + $0x60] sm:$0xf]
  %v7619 = vld [vmem:[%s3 + $0x64] sm:$0xf]
  %v7620 = vld [vmem:[%s3 + $0x68] sm:$0xf]
  %v7621 = vld [vmem:[%s3 + $0x6c] sm:$0xf]
  %v7622 = vld [vmem:[%s3 + $0x70] sm:$0xf]
  %v7623 = vld [vmem:[%s3 + $0x74] sm:$0xf]
  %v7624 = vld [vmem:[%s3 + $0x78] sm:$0xf]
  %v7625 = vld [vmem:[%s3 + $0x7c] sm:$0xf]
  %v7626 = vld [vmem:[%s3 + $0x80] sm:$0xf]
  %v7627 = vld [vmem:[%s3 + $0x84] sm:$0xf]
  %v7628 = vld [vmem:[%s3 + $0x88] sm:$0xf]
  %v7629 = vld [vmem:[%s3 + $0x8c] sm:$0xf]
  %v7758 = vunpack.c.l.b16 %v7466
  %v7759 = vunpack.c.h.b16 %v7466
  %v7760 = vunpack.c.l.b16 %v7467
  %v7761 = vunpack.c.l.b16 %v7468
  %v7762 = vunpack.c.h.b16 %v7468
  %v7763 = vunpack.c.l.b16 %v7469
  %v7764 = vunpack.c.l.b16 %v7470
  %v7765 = vunpack.c.h.b16 %v7470
  %v7766 = vunpack.c.l.b16 %v7471
  %v7767 = vunpack.c.l.b16 %v7472
  %v7768 = vunpack.c.h.b16 %v7472
  %v7769 = vunpack.c.l.b16 %v7473
  %v7770 = vunpack.c.l.b16 %v7474
  %v7771 = vunpack.c.h.b16 %v7474
  %v7772 = vunpack.c.l.b16 %v7475
  %v7773 = vunpack.c.l.b16 %v7476
  %v7774 = vunpack.c.h.b16 %v7476
  %v7775 = vunpack.c.l.b16 %v7477
  %v7776 = vunpack.c.l.b16 %v7478
  %v7777 = vunpack.c.h.b16 %v7478
  %v7778 = vunpack.c.l.b16 %v7479
  %v7779 = vunpack.c.l.b16 %v7480
  %v7780 = vunpack.c.h.b16 %v7480
  %v7781 = vunpack.c.l.b16 %v7481
  %v7782 = vunpack.c.l.b16 %v7482
  %v7783 = vunpack.c.h.b16 %v7482
  %v7784 = vunpack.c.l.b16 %v7483
  %v7785 = vunpack.c.l.b16 %v7484
  %v7786 = vunpack.c.h.b16 %v7484
  %v7787 = vunpack.c.l.b16 %v7485
  %v7788 = vunpack.c.l.b16 %v7486
  %v7789 = vunpack.c.h.b16 %v7486
  %v7790 = vunpack.c.l.b16 %v7487
  %v7791 = vunpack.c.l.b16 %v7488
  %v7792 = vunpack.c.h.b16 %v7488
  %v7793 = vunpack.c.l.b16 %v7489
  %v7794 = vunpack.c.l.b16 %v7490
  %v7795 = vunpack.c.h.b16 %v7490
  %v7796 = vunpack.c.l.b16 %v7491
  %v7797 = vunpack.c.l.b16 %v7492
  %v7798 = vunpack.c.h.b16 %v7492
  %v7799 = vunpack.c.l.b16 %v7493
  %v7800 = vunpack.c.l.b16 %v7494
  %v7801 = vunpack.c.h.b16 %v7494
  %v7802 = vunpack.c.l.b16 %v7495
  %v7803 = vunpack.c.l.b16 %v7496
  %v7804 = vunpack.c.h.b16 %v7496
  %v7805 = vunpack.c.l.b16 %v7497
  %v7806 = vunpack.c.l.b16 %v7498
  %v7807 = vunpack.c.h.b16 %v7498
  %v7808 = vunpack.c.l.b16 %v7499
  %v7809 = vunpack.c.l.b16 %v7500
  %v7810 = vunpack.c.h.b16 %v7500
  %v7811 = vunpack.c.l.b16 %v7501
  %v7812 = vunpack.c.l.b16 %v7502
  %v7813 = vunpack.c.h.b16 %v7502
  %v7814 = vunpack.c.l.b16 %v7503
  %v7815 = vunpack.c.l.b16 %v7504
  %v7816 = vunpack.c.h.b16 %v7504
  %v7817 = vunpack.c.l.b16 %v7505
  %v7818 = vunpack.c.l.b16 %v7506
  %v7819 = vunpack.c.h.b16 %v7506
  %v7820 = vunpack.c.l.b16 %v7507
  %v7821 = vunpack.c.l.b16 %v7508
  %v7822 = vunpack.c.h.b16 %v7508
  %v7823 = vunpack.c.l.b16 %v7509
  %v7824 = vunpack.c.l.b16 %v7510
  %v7825 = vunpack.c.h.b16 %v7510
  %v7826 = vunpack.c.l.b16 %v7511
  %v7827 = vunpack.c.l.b16 %v7512
  %v7828 = vunpack.c.h.b16 %v7512
  %v7829 = vunpack.c.l.b16 %v7513
  %v7830 = vunpack.c.l.b16 %v7514
  %v7831 = vunpack.c.h.b16 %v7514
  %v7832 = vunpack.c.l.b16 %v7515
  %v7833 = vunpack.c.l.b16 %v7516
  %v7834 = vunpack.c.h.b16 %v7516
  %v7835 = vunpack.c.l.b16 %v7517
  %v7836 = vunpack.c.l.b16 %v7518
  %v7837 = vunpack.c.h.b16 %v7518
  %v7838 = vunpack.c.l.b16 %v7519
  %v7839 = vunpack.c.l.b16 %v7520
  %v7840 = vunpack.c.h.b16 %v7520
  %v7841 = vunpack.c.l.b16 %v7521
  %v7842 = vunpack.c.l.b16 %v7522
  %v7843 = vunpack.c.h.b16 %v7522
  %v7844 = vunpack.c.l.b16 %v7523
  %v7845 = vunpack.c.l.b16 %v7524
  %v7846 = vunpack.c.h.b16 %v7524
  %v7847 = vunpack.c.l.b16 %v7525
  %v7848 = vunpack.c.l.b16 %v7526
  %v7849 = vunpack.c.h.b16 %v7526
  %v7850 = vunpack.c.l.b16 %v7527
  %v7851 = vunpack.c.l.b16 %v7528
  %v7852 = vunpack.c.h.b16 %v7528
  %v7853 = vunpack.c.l.b16 %v7529
  %v7854 = vunpack.c.l.b16 %v7530
  %v7855 = vunpack.c.h.b16 %v7530
  %v7856 = vunpack.c.l.b16 %v7531
  %v7857 = vunpack.c.l.b16 %v7532
  %v7858 = vunpack.c.h.b16 %v7532
  %v7859 = vunpack.c.l.b16 %v7533
  %v7860 = vunpack.c.l.b16 %v7534
  %v7861 = vunpack.c.h.b16 %v7534
  %v7862 = vunpack.c.l.b16 %v7535
  %v7863 = vunpack.c.l.b16 %v7536
  %v7864 = vunpack.c.h.b16 %v7536
  %v7865 = vunpack.c.l.b16 %v7537
  %v7866 = vunpack.c.l.b16 %v7538
  %v7867 = vunpack.c.h.b16 %v7538
  %v7868 = vunpack.c.l.b16 %v7539
  %v7869 = vunpack.c.l.b16 %v7540
  %v7870 = vunpack.c.h.b16 %v7540
  %v7871 = vunpack.c.l.b16 %v7541
  %v7872 = vunpack.c.l.b16 %v7542
  %v7873 = vunpack.c.h.b16 %v7542
  %v7874 = vunpack.c.l.b16 %v7543
  %v7875 = vunpack.c.l.b16 %v7544
  %v7876 = vunpack.c.h.b16 %v7544
  %v7877 = vunpack.c.l.b16 %v7545
  %v7878 = vunpack.c.l.b16 %v7546
  %v7879 = vunpack.c.h.b16 %v7546
  %v7880 = vunpack.c.l.b16 %v7547
  %v7881 = vunpack.c.l.b16 %v7548
  %v7882 = vunpack.c.h.b16 %v7548
  %v7883 = vunpack.c.l.b16 %v7549
  %v7884 = vunpack.c.l.b16 %v7550
  %v7885 = vunpack.c.h.b16 %v7550
  %v7886 = vunpack.c.l.b16 %v7551
  %v7887 = vunpack.c.l.b16 %v7552
  %v7888 = vunpack.c.h.b16 %v7552
  %v7889 = vunpack.c.l.b16 %v7553
  %v7890 = vunpack.c.l.b16 %v7554
  %v7891 = vunpack.c.h.b16 %v7554
  %v7892 = vunpack.c.l.b16 %v7555
  %v7893 = vunpack.c.l.b16 %v7556
  %v7894 = vunpack.c.h.b16 %v7556
  %v7895 = vunpack.c.l.b16 %v7557
  %v7896 = vunpack.c.l.b16 %v7558
  %v7897 = vunpack.c.h.b16 %v7558
  %v7898 = vunpack.c.l.b16 %v7559
  %v7899 = vunpack.c.l.b16 %v7560
  %v7900 = vunpack.c.h.b16 %v7560
  %v7901 = vunpack.c.l.b16 %v7561
  %v7902 = vunpack.c.l.b16 %v7562
  %v7903 = vunpack.c.h.b16 %v7562
  %v7904 = vunpack.c.l.b16 %v7563
  %v7905 = vunpack.c.l.b16 %v7564
  %v7906 = vunpack.c.h.b16 %v7564
  %v7907 = vunpack.c.l.b16 %v7565
  %v7908 = vunpack.c.l.b16 %v7566
  %v7909 = vunpack.c.h.b16 %v7566
  %v7910 = vunpack.c.l.b16 %v7567
  %v7911 = vunpack.c.l.b16 %v7568
  %v7912 = vunpack.c.h.b16 %v7568
  %v7913 = vunpack.c.l.b16 %v7569
  %v7914 = vunpack.c.l.b16 %v7570
  %v7915 = vunpack.c.h.b16 %v7570
  %v7916 = vunpack.c.l.b16 %v7571
  %v7917 = vunpack.c.l.b16 %v7572
  %v7918 = vunpack.c.h.b16 %v7572
  %v7919 = vunpack.c.l.b16 %v7573
  %v7920 = vunpack.c.l.b16 %v7574
  %v7921 = vunpack.c.h.b16 %v7574
  %v7922 = vunpack.c.l.b16 %v7575
  %v7923 = vunpack.c.l.b16 %v7576
  %v7924 = vunpack.c.h.b16 %v7576
  %v7925 = vunpack.c.l.b16 %v7577
  %v7926 = vunpack.c.l.b16 %v7578
  %v7927 = vunpack.c.h.b16 %v7578
  %v7928 = vunpack.c.l.b16 %v7579
  %v7929 = vunpack.c.l.b16 %v7580
  %v7930 = vunpack.c.h.b16 %v7580
  %v7931 = vunpack.c.l.b16 %v7581
  %v7932 = vunpack.c.l.b16 %v7582
  %v7933 = vunpack.c.h.b16 %v7582
  %v7934 = vunpack.c.l.b16 %v7583
  %v7935 = vunpack.c.l.b16 %v7584
  %v7936 = vunpack.c.h.b16 %v7584
  %v7937 = vunpack.c.l.b16 %v7585
  %v7938 = vunpack.c.l.b16 %v7586
  %v7939 = vunpack.c.h.b16 %v7586
  %v7940 = vunpack.c.l.b16 %v7587
  %v7941 = vunpack.c.l.b16 %v7588
  %v7942 = vunpack.c.h.b16 %v7588
  %v7943 = vunpack.c.l.b16 %v7589
  %v7944 = vunpack.c.l.b16 %v7590
  %v7945 = vunpack.c.h.b16 %v7590
  %v7946 = vunpack.c.l.b16 %v7591
  %v7947 = vunpack.c.l.b16 %v7592
  %v7948 = vunpack.c.h.b16 %v7592
  %v7949 = vunpack.c.l.b16 %v7593
  %v7950 = vpack.c.b16 %v7761, %v7758
  %v7951 = vpack.c.b16 %v7762, %v7759
  %v7952 = vpack.c.b16 %v7763, %v7760
  %v7953 = vpack.c.b16 %v7767, %v7764
  %v7954 = vpack.c.b16 %v7768, %v7765
  %v7955 = vpack.c.b16 %v7769, %v7766
  %v7956 = vpack.c.b16 %v7773, %v7770
  %v7957 = vpack.c.b16 %v7774, %v7771
  %v7958 = vpack.c.b16 %v7775, %v7772
  %v7959 = vpack.c.b16 %v7779, %v7776
  %v7960 = vpack.c.b16 %v7780, %v7777
  %v7961 = vpack.c.b16 %v7781, %v7778
  %v7962 = vpack.c.b16 %v7785, %v7782
  %v7963 = vpack.c.b16 %v7786, %v7783
  %v7964 = vpack.c.b16 %v7787, %v7784
  %v7965 = vpack.c.b16 %v7791, %v7788
  %v7966 = vpack.c.b16 %v7792, %v7789
  %v7967 = vpack.c.b16 %v7793, %v7790
  %v7968 = vpack.c.b16 %v7797, %v7794
  %v7969 = vpack.c.b16 %v7798, %v7795
  %v7970 = vpack.c.b16 %v7799, %v7796
  %v7971 = vpack.c.b16 %v7803, %v7800
  %v7972 = vpack.c.b16 %v7804, %v7801
  %v7973 = vpack.c.b16 %v7805, %v7802
  %v7974 = vpack.c.b16 %v7809, %v7806
  %v7975 = vpack.c.b16 %v7810, %v7807
  %v7976 = vpack.c.b16 %v7811, %v7808
  %v7977 = vpack.c.b16 %v7815, %v7812
  %v7978 = vpack.c.b16 %v7816, %v7813
  %v7979 = vpack.c.b16 %v7817, %v7814
  %v7980 = vpack.c.b16 %v7821, %v7818
  %v7981 = vpack.c.b16 %v7822, %v7819
  %v7982 = vpack.c.b16 %v7823, %v7820
  %v7983 = vpack.c.b16 %v7827, %v7824
  %v7984 = vpack.c.b16 %v7828, %v7825
  %v7985 = vpack.c.b16 %v7829, %v7826
  %v7986 = vpack.c.b16 %v7833, %v7830
  %v7987 = vpack.c.b16 %v7834, %v7831
  %v7988 = vpack.c.b16 %v7835, %v7832
  %v7989 = vpack.c.b16 %v7839, %v7836
  %v7990 = vpack.c.b16 %v7840, %v7837
  %v7991 = vpack.c.b16 %v7841, %v7838
  %v7992 = vpack.c.b16 %v7845, %v7842
  %v7993 = vpack.c.b16 %v7846, %v7843
  %v7994 = vpack.c.b16 %v7847, %v7844
  %v7995 = vpack.c.b16 %v7851, %v7848
  %v7996 = vpack.c.b16 %v7852, %v7849
  %v7997 = vpack.c.b16 %v7853, %v7850
  %v7998 = vpack.c.b16 %v7857, %v7854
  %v7999 = vpack.c.b16 %v7858, %v7855
  %v8000 = vpack.c.b16 %v7859, %v7856
  %v8001 = vpack.c.b16 %v7863, %v7860
  %v8002 = vpack.c.b16 %v7864, %v7861
  %v8003 = vpack.c.b16 %v7865, %v7862
  %v8004 = vpack.c.b16 %v7869, %v7866
  %v8005 = vpack.c.b16 %v7870, %v7867
  %v8006 = vpack.c.b16 %v7871, %v7868
  %v8007 = vpack.c.b16 %v7875, %v7872
  %v8008 = vpack.c.b16 %v7876, %v7873
  %v8009 = vpack.c.b16 %v7877, %v7874
  %v8010 = vpack.c.b16 %v7881, %v7878
  %v8011 = vpack.c.b16 %v7882, %v7879
  %v8012 = vpack.c.b16 %v7883, %v7880
  %v8013 = vpack.c.b16 %v7887, %v7884
  %v8014 = vpack.c.b16 %v7888, %v7885
  %v8015 = vpack.c.b16 %v7889, %v7886
  %v8016 = vpack.c.b16 %v7893, %v7890
  %v8017 = vpack.c.b16 %v7894, %v7891
  %v8018 = vpack.c.b16 %v7895, %v7892
  %v8019 = vpack.c.b16 %v7899, %v7896
  %v8020 = vpack.c.b16 %v7900, %v7897
  %v8021 = vpack.c.b16 %v7901, %v7898
  %v8022 = vpack.c.b16 %v7905, %v7902
  %v8023 = vpack.c.b16 %v7906, %v7903
  %v8024 = vpack.c.b16 %v7907, %v7904
  %v8025 = vpack.c.b16 %v7911, %v7908
  %v8026 = vpack.c.b16 %v7912, %v7909
  %v8027 = vpack.c.b16 %v7913, %v7910
  %v8028 = vpack.c.b16 %v7917, %v7914
  %v8029 = vpack.c.b16 %v7918, %v7915
  %v8030 = vpack.c.b16 %v7919, %v7916
  %v8031 = vpack.c.b16 %v7923, %v7920
  %v8032 = vpack.c.b16 %v7924, %v7921
  %v8033 = vpack.c.b16 %v7925, %v7922
  %v8034 = vpack.c.b16 %v7929, %v7926
  %v8035 = vpack.c.b16 %v7930, %v7927
  %v8036 = vpack.c.b16 %v7931, %v7928
  %v8037 = vpack.c.b16 %v7935, %v7932
  %v8038 = vpack.c.b16 %v7936, %v7933
  %v8039 = vpack.c.b16 %v7937, %v7934
  %v8040 = vpack.c.b16 %v7941, %v7938
  %v8041 = vpack.c.b16 %v7942, %v7939
  %v8042 = vpack.c.b16 %v7943, %v7940
  %v8043 = vpack.c.b16 %v7947, %v7944
  %v8044 = vpack.c.b16 %v7948, %v7945
  %v8045 = vpack.c.b16 %v7949, %v7946
  %v8146 = vunpack.c.l.b16 %v7594
  %v8147 = vunpack.c.l.b16 %v7595
  %v8148 = vunpack.c.l.b16 %v7596
  %v8149 = vunpack.c.l.b16 %v7597
  %v8150 = vunpack.c.l.b16 %v7598
  %v8151 = vunpack.c.l.b16 %v7599
  %v8152 = vunpack.c.l.b16 %v7600
  %v8153 = vunpack.c.l.b16 %v7601
  %v8154 = vunpack.c.l.b16 %v7602
  %v8155 = vunpack.c.l.b16 %v7603
  %v8156 = vunpack.c.l.b16 %v7604
  %v8157 = vunpack.c.l.b16 %v7605
  %v8158 = vunpack.c.l.b16 %v7606
  %v8159 = vunpack.c.l.b16 %v7607
  %v8160 = vunpack.c.l.b16 %v7608
  %v8161 = vunpack.c.l.b16 %v7609
  %v8162 = vunpack.c.l.b16 %v7610
  %v8163 = vunpack.c.l.b16 %v7611
  %v8164 = vunpack.c.l.b16 %v7612
  %v8165 = vunpack.c.l.b16 %v7613
  %v8166 = vunpack.c.l.b16 %v7614
  %v8167 = vunpack.c.l.b16 %v7615
  %v8168 = vunpack.c.l.b16 %v7616
  %v8169 = vunpack.c.l.b16 %v7617
  %v8170 = vunpack.c.l.b16 %v7618
  %v8171 = vunpack.c.l.b16 %v7619
  %v8172 = vunpack.c.l.b16 %v7620
  %v8173 = vunpack.c.l.b16 %v7621
  %v8174 = vunpack.c.l.b16 %v7622
  %v8175 = vunpack.c.l.b16 %v7623
  %v8176 = vunpack.c.l.b16 %v7624
  %v8177 = vunpack.c.l.b16 %v7625
  %v8178 = vunpack.c.l.b16 %v7626
  %v8179 = vunpack.c.l.b16 %v7627
  %v8180 = vunpack.c.l.b16 %v7628
  %v8181 = vunpack.c.l.b16 %v7629
  %v8182 = vpack.c.b16 %v8147, %v8146
  %v8183 = vpack.c.b16 %v8149, %v8148
  %v8184 = vpack.c.b16 %v8151, %v8150
  %v8185 = vpack.c.b16 %v8153, %v8152
  %v8186 = vpack.c.b16 %v8155, %v8154
  %v8187 = vpack.c.b16 %v8157, %v8156
  %v8188 = vpack.c.b16 %v8159, %v8158
  %v8189 = vpack.c.b16 %v8161, %v8160
  %v8190 = vpack.c.b16 %v8163, %v8162
  %v8191 = vpack.c.b16 %v8165, %v8164
  %v8192 = vpack.c.b16 %v8167, %v8166
  %v8193 = vpack.c.b16 %v8169, %v8168
  %v8194 = vpack.c.b16 %v8171, %v8170
  %v8195 = vpack.c.b16 %v8173, %v8172
  %v8196 = vpack.c.b16 %v8175, %v8174
  %v8197 = vpack.c.b16 %v8177, %v8176
  %v8198 = vpack.c.b16 %v8179, %v8178
  %v8199 = vpack.c.b16 %v8181, %v8180
  %v8219 = vsel %vm933, %v7952, 0
  %v8222 = vsel %vm933, %v7955, 0
  %v8225 = vsel %vm933, %v7958, 0
  %v8228 = vsel %vm933, %v7961, 0
  %v8231 = vsel %vm933, %v7964, 0
  %v8234 = vsel %vm933, %v7967, 0
  %v8237 = vsel %vm933, %v7970, 0
  %v8240 = vsel %vm933, %v7973, 0
  %v8243 = vsel %vm933, %v7976, 0
  %v8246 = vsel %vm933, %v7979, 0
  %v8249 = vsel %vm933, %v7982, 0
  %v8252 = vsel %vm933, %v7985, 0
  %v8255 = vsel %vm933, %v7988, 0
  %v8258 = vsel %vm933, %v7991, 0
  %v8261 = vsel %vm933, %v7994, 0
  %v8264 = vsel %vm933, %v7997, 0
  %v8267 = vsel %vm933, %v8000, 0
  %v8270 = vsel %vm933, %v8003, 0
  %v8273 = vsel %vm933, %v8006, 0
  %v8276 = vsel %vm933, %v8009, 0
  %v8279 = vsel %vm933, %v8012, 0
  %v8282 = vsel %vm933, %v8015, 0
  %v8285 = vsel %vm933, %v8018, 0
  %v8288 = vsel %vm933, %v8021, 0
  %v8291 = vsel %vm933, %v8024, 0
  %v8294 = vsel %vm933, %v8027, 0
  %v8297 = vsel %vm933, %v8030, 0
  %v8300 = vsel %vm933, %v8033, 0
  %v8303 = vsel %vm933, %v8036, 0
  %v8306 = vsel %vm933, %v8039, 0
  %v8309 = vsel %vm933, %v8042, 0
  %v8312 = vsel %vm933, %v8045, 0
  %8314 = vmatprep.subr.bf16.mxu0 0
  %8315 = vmatpush1.bf16.msra.mxu0 %v8189
  %8316 = vmatprep.subr.bf16.mxu0 0
  %8317 = vmatpush1.bf16.msra.mxu0 %v8188
  %8318 = vmatprep.subr.bf16.mxu0 0
  %8319 = vmatpush1.bf16.msra.mxu0 %v8187
  %8320 = vmatprep.subr.bf16.mxu0 0
  %8321 = vmatpush1.bf16.msra.mxu0 %v8186
  %8322 = vmatprep.subr.bf16.mxu0 0
  %8323 = vmatpush1.bf16.msra.mxu0 %v8185
  %8324 = vmatprep.subr.bf16.mxu0 0
  %8325 = vmatpush1.bf16.msra.mxu0 %v8184
  %8326 = vmatprep.subr.bf16.mxu0 0
  %8327 = vmatpush1.bf16.msra.mxu0 %v8183
  %8328 = vmatprep.subr.bf16.mxu0 0
  %8329 = vmatpush1.bf16.msra.mxu0 %v8182
  %8330 = vmatprep.subr.bf16.mxu0 0
  %8331 = vmatpush2.bf16.msra.mxu0 %v8197
  %8332 = vmatprep.subr.bf16.mxu0 0
  %8333 = vmatpush2.bf16.msra.mxu0 %v8196
  %8334 = vmatprep.subr.bf16.mxu0 0
  %8335 = vmatpush2.bf16.msra.mxu0 %v8195
  %8336 = vmatprep.subr.bf16.mxu0 0
  %8337 = vmatpush2.bf16.msra.mxu0 %v8194
  %8338 = vmatprep.subr.bf16.mxu0 0
  %8339 = vmatpush2.bf16.msra.mxu0 %v8193
  %8340 = vmatprep.subr.bf16.mxu0 0
  %8341 = vmatpush2.bf16.msra.mxu0 %v8192
  %8342 = vmatprep.subr.bf16.mxu0 0
  %8343 = vmatpush2.bf16.msra.mxu0 %v8191
  %8344 = vmatprep.subr.bf16.mxu0 0
  %8345 = vmatpush2.bf16.msra.mxu0 %v8190
  %8346 = vmatprep.mubr.bf16.mxu0 %v7951
  %8347 = vmatmul.mubr.bf16.gmra.mxu0 %v7950
  %v8348 = vpop.f32.mrf.mxu0
  %v8349 = vadd.f32 0.0, %v8348
  %v8350 = vpop.f32.mrf.mxu0
  %v8351 = vpop.f32.mrf.mxu0
  %v8352 = vadd.f32 0.0, %v8351
  %v8353 = vpop.f32.mrf.mxu0
  %8354 = vmatprep.mubr.bf16.mxu0 %v7954
  %8355 = vmatmul.mubr.bf16.gmra.mxu0 %v7953
  %v8356 = vpop.f32.mrf.mxu0
  %v8357 = vadd.f32 0.0, %v8356
  %v8358 = vpop.f32.mrf.mxu0
  %v8359 = vpop.f32.mrf.mxu0
  %v8360 = vadd.f32 0.0, %v8359
  %v8361 = vpop.f32.mrf.mxu0
  %8362 = vmatprep.mubr.bf16.mxu0 %v7957
  %8363 = vmatmul.mubr.bf16.gmra.mxu0 %v7956
  %v8364 = vpop.f32.mrf.mxu0
  %v8365 = vadd.f32 0.0, %v8364
  %v8366 = vpop.f32.mrf.mxu0
  %v8367 = vpop.f32.mrf.mxu0
  %v8368 = vadd.f32 0.0, %v8367
  %v8369 = vpop.f32.mrf.mxu0
  %8370 = vmatprep.mubr.bf16.mxu0 %v7960
  %8371 = vmatmul.mubr.bf16.gmra.mxu0 %v7959
  %v8372 = vpop.f32.mrf.mxu0
  %v8373 = vadd.f32 0.0, %v8372
  %v8374 = vpop.f32.mrf.mxu0
  %v8375 = vpop.f32.mrf.mxu0
  %v8376 = vadd.f32 0.0, %v8375
  %v8377 = vpop.f32.mrf.mxu0
  %8378 = vmatprep.mubr.bf16.mxu0 %v7963
  %8379 = vmatmul.mubr.bf16.gmra.mxu0 %v7962
  %v8380 = vpop.f32.mrf.mxu0
  %v8381 = vadd.f32 0.0, %v8380
  %v8382 = vpop.f32.mrf.mxu0
  %v8383 = vpop.f32.mrf.mxu0
  %v8384 = vadd.f32 0.0, %v8383
  %v8385 = vpop.f32.mrf.mxu0
  %8386 = vmatprep.mubr.bf16.mxu0 %v7966
  %8387 = vmatmul.mubr.bf16.gmra.mxu0 %v7965
  %v8388 = vpop.f32.mrf.mxu0
  %v8389 = vadd.f32 0.0, %v8388
  %v8390 = vpop.f32.mrf.mxu0
  %v8391 = vpop.f32.mrf.mxu0
  %v8392 = vadd.f32 0.0, %v8391
  %v8393 = vpop.f32.mrf.mxu0
  %8394 = vmatprep.mubr.bf16.mxu0 %v7969
  %8395 = vmatmul.mubr.bf16.gmra.mxu0 %v7968
  %v8396 = vpop.f32.mrf.mxu0
  %v8397 = vadd.f32 0.0, %v8396
  %v8398 = vpop.f32.mrf.mxu0
  %v8399 = vpop.f32.mrf.mxu0
  %v8400 = vadd.f32 0.0, %v8399
  %v8401 = vpop.f32.mrf.mxu0
  %8402 = vmatprep.mubr.bf16.mxu0 %v7972
  %8403 = vmatmul.mubr.bf16.gmra.mxu0 %v7971
  %v8404 = vpop.f32.mrf.mxu0
  %v8405 = vadd.f32 0.0, %v8404
  %v8406 = vpop.f32.mrf.mxu0
  %v8407 = vpop.f32.mrf.mxu0
  %v8408 = vadd.f32 0.0, %v8407
  %v8409 = vpop.f32.mrf.mxu0
  %8410 = vmatprep.mubr.bf16.mxu0 %v7975
  %8411 = vmatmul.mubr.bf16.gmra.mxu0 %v7974
  %v8412 = vpop.f32.mrf.mxu0
  %v8413 = vadd.f32 0.0, %v8412
  %v8414 = vpop.f32.mrf.mxu0
  %v8415 = vpop.f32.mrf.mxu0
  %v8416 = vadd.f32 0.0, %v8415
  %v8417 = vpop.f32.mrf.mxu0
  %8418 = vmatprep.mubr.bf16.mxu0 %v7978
  %8419 = vmatmul.mubr.bf16.gmra.mxu0 %v7977
  %v8420 = vpop.f32.mrf.mxu0
  %v8421 = vadd.f32 0.0, %v8420
  %v8422 = vpop.f32.mrf.mxu0
  %v8423 = vpop.f32.mrf.mxu0
  %v8424 = vadd.f32 0.0, %v8423
  %v8425 = vpop.f32.mrf.mxu0
  %8426 = vmatprep.mubr.bf16.mxu0 %v7981
  %8427 = vmatmul.mubr.bf16.gmra.mxu0 %v7980
  %v8428 = vpop.f32.mrf.mxu0
  %v8429 = vadd.f32 0.0, %v8428
  %v8430 = vpop.f32.mrf.mxu0
  %v8431 = vpop.f32.mrf.mxu0
  %v8432 = vadd.f32 0.0, %v8431
  %v8433 = vpop.f32.mrf.mxu0
  %8434 = vmatprep.mubr.bf16.mxu0 %v7984
  %8435 = vmatmul.mubr.bf16.gmra.mxu0 %v7983
  %v8436 = vpop.f32.mrf.mxu0
  %v8437 = vadd.f32 0.0, %v8436
  %v8438 = vpop.f32.mrf.mxu0
  %v8439 = vpop.f32.mrf.mxu0
  %v8440 = vadd.f32 0.0, %v8439
  %v8441 = vpop.f32.mrf.mxu0
  %8442 = vmatprep.mubr.bf16.mxu0 %v7987
  %8443 = vmatmul.mubr.bf16.gmra.mxu0 %v7986
  %v8444 = vpop.f32.mrf.mxu0
  %v8445 = vadd.f32 0.0, %v8444
  %v8446 = vpop.f32.mrf.mxu0
  %v8447 = vpop.f32.mrf.mxu0
  %v8448 = vadd.f32 0.0, %v8447
  %v8449 = vpop.f32.mrf.mxu0
  %8450 = vmatprep.mubr.bf16.mxu0 %v7990
  %8451 = vmatmul.mubr.bf16.gmra.mxu0 %v7989
  %v8452 = vpop.f32.mrf.mxu0
  %v8453 = vadd.f32 0.0, %v8452
  %v8454 = vpop.f32.mrf.mxu0
  %v8455 = vpop.f32.mrf.mxu0
  %v8456 = vadd.f32 0.0, %v8455
  %v8457 = vpop.f32.mrf.mxu0
  %8458 = vmatprep.mubr.bf16.mxu0 %v7993
  %8459 = vmatmul.mubr.bf16.gmra.mxu0 %v7992
  %v8460 = vpop.f32.mrf.mxu0
  %v8461 = vadd.f32 0.0, %v8460
  %v8462 = vpop.f32.mrf.mxu0
  %v8463 = vpop.f32.mrf.mxu0
  %v8464 = vadd.f32 0.0, %v8463
  %v8465 = vpop.f32.mrf.mxu0
  %8466 = vmatprep.mubr.bf16.mxu0 %v7996
  %8467 = vmatmul.mubr.bf16.gmra.mxu0 %v7995
  %v8468 = vpop.f32.mrf.mxu0
  %v8469 = vadd.f32 0.0, %v8468
  %v8470 = vpop.f32.mrf.mxu0
  %v8471 = vpop.f32.mrf.mxu0
  %v8472 = vadd.f32 0.0, %v8471
  %v8473 = vpop.f32.mrf.mxu0
  %8474 = vmatprep.mubr.bf16.mxu0 %v7999
  %8475 = vmatmul.mubr.bf16.gmra.mxu0 %v7998
  %v8476 = vpop.f32.mrf.mxu0
  %v8477 = vadd.f32 0.0, %v8476
  %v8478 = vpop.f32.mrf.mxu0
  %v8479 = vpop.f32.mrf.mxu0
  %v8480 = vadd.f32 0.0, %v8479
  %v8481 = vpop.f32.mrf.mxu0
  %8482 = vmatprep.mubr.bf16.mxu0 %v8002
  %8483 = vmatmul.mubr.bf16.gmra.mxu0 %v8001
  %v8484 = vpop.f32.mrf.mxu0
  %v8485 = vadd.f32 0.0, %v8484
  %v8486 = vpop.f32.mrf.mxu0
  %v8487 = vpop.f32.mrf.mxu0
  %v8488 = vadd.f32 0.0, %v8487
  %v8489 = vpop.f32.mrf.mxu0
  %8490 = vmatprep.mubr.bf16.mxu0 %v8005
  %8491 = vmatmul.mubr.bf16.gmra.mxu0 %v8004
  %v8492 = vpop.f32.mrf.mxu0
  %v8493 = vadd.f32 0.0, %v8492
  %v8494 = vpop.f32.mrf.mxu0
  %v8495 = vpop.f32.mrf.mxu0
  %v8496 = vadd.f32 0.0, %v8495
  %v8497 = vpop.f32.mrf.mxu0
  %8498 = vmatprep.mubr.bf16.mxu0 %v8008
  %8499 = vmatmul.mubr.bf16.gmra.mxu0 %v8007
  %v8500 = vpop.f32.mrf.mxu0
  %v8501 = vadd.f32 0.0, %v8500
  %v8502 = vpop.f32.mrf.mxu0
  %v8503 = vpop.f32.mrf.mxu0
  %v8504 = vadd.f32 0.0, %v8503
  %v8505 = vpop.f32.mrf.mxu0
  %8506 = vmatprep.mubr.bf16.mxu0 %v8011
  %8507 = vmatmul.mubr.bf16.gmra.mxu0 %v8010
  %v8508 = vpop.f32.mrf.mxu0
  %v8509 = vadd.f32 0.0, %v8508
  %v8510 = vpop.f32.mrf.mxu0
  %v8511 = vpop.f32.mrf.mxu0
  %v8512 = vadd.f32 0.0, %v8511
  %v8513 = vpop.f32.mrf.mxu0
  %8514 = vmatprep.mubr.bf16.mxu0 %v8014
  %8515 = vmatmul.mubr.bf16.gmra.mxu0 %v8013
  %v8516 = vpop.f32.mrf.mxu0
  %v8517 = vadd.f32 0.0, %v8516
  %v8518 = vpop.f32.mrf.mxu0
  %v8519 = vpop.f32.mrf.mxu0
  %v8520 = vadd.f32 0.0, %v8519
  %v8521 = vpop.f32.mrf.mxu0
  %8522 = vmatprep.mubr.bf16.mxu0 %v8017
  %8523 = vmatmul.mubr.bf16.gmra.mxu0 %v8016
  %v8524 = vpop.f32.mrf.mxu0
  %v8525 = vadd.f32 0.0, %v8524
  %v8526 = vpop.f32.mrf.mxu0
  %v8527 = vpop.f32.mrf.mxu0
  %v8528 = vadd.f32 0.0, %v8527
  %v8529 = vpop.f32.mrf.mxu0
  %8530 = vmatprep.mubr.bf16.mxu0 %v8020
  %8531 = vmatmul.mubr.bf16.gmra.mxu0 %v8019
  %v8532 = vpop.f32.mrf.mxu0
  %v8533 = vadd.f32 0.0, %v8532
  %v8534 = vpop.f32.mrf.mxu0
  %v8535 = vpop.f32.mrf.mxu0
  %v8536 = vadd.f32 0.0, %v8535
  %v8537 = vpop.f32.mrf.mxu0
  %8538 = vmatprep.mubr.bf16.mxu0 %v8023
  %8539 = vmatmul.mubr.bf16.gmra.mxu0 %v8022
  %v8540 = vpop.f32.mrf.mxu0
  %v8541 = vadd.f32 0.0, %v8540
  %v8542 = vpop.f32.mrf.mxu0
  %v8543 = vpop.f32.mrf.mxu0
  %v8544 = vadd.f32 0.0, %v8543
  %v8545 = vpop.f32.mrf.mxu0
  %8546 = vmatprep.mubr.bf16.mxu0 %v8026
  %8547 = vmatmul.mubr.bf16.gmra.mxu0 %v8025
  %v8548 = vpop.f32.mrf.mxu0
  %v8549 = vadd.f32 0.0, %v8548
  %v8550 = vpop.f32.mrf.mxu0
  %v8551 = vpop.f32.mrf.mxu0
  %v8552 = vadd.f32 0.0, %v8551
  %v8553 = vpop.f32.mrf.mxu0
  %8554 = vmatprep.mubr.bf16.mxu0 %v8029
  %8555 = vmatmul.mubr.bf16.gmra.mxu0 %v8028
  %v8556 = vpop.f32.mrf.mxu0
  %v8557 = vadd.f32 0.0, %v8556
  %v8558 = vpop.f32.mrf.mxu0
  %v8559 = vpop.f32.mrf.mxu0
  %v8560 = vadd.f32 0.0, %v8559
  %v8561 = vpop.f32.mrf.mxu0
  %8562 = vmatprep.mubr.bf16.mxu0 %v8032
  %8563 = vmatmul.mubr.bf16.gmra.mxu0 %v8031
  %v8564 = vpop.f32.mrf.mxu0
  %v8565 = vadd.f32 0.0, %v8564
  %v8566 = vpop.f32.mrf.mxu0
  %v8567 = vpop.f32.mrf.mxu0
  %v8568 = vadd.f32 0.0, %v8567
  %v8569 = vpop.f32.mrf.mxu0
  %8570 = vmatprep.mubr.bf16.mxu0 %v8035
  %8571 = vmatmul.mubr.bf16.gmra.mxu0 %v8034
  %v8572 = vpop.f32.mrf.mxu0
  %v8573 = vadd.f32 0.0, %v8572
  %v8574 = vpop.f32.mrf.mxu0
  %v8575 = vpop.f32.mrf.mxu0
  %v8576 = vadd.f32 0.0, %v8575
  %v8577 = vpop.f32.mrf.mxu0
  %8578 = vmatprep.mubr.bf16.mxu0 %v8038
  %8579 = vmatmul.mubr.bf16.gmra.mxu0 %v8037
  %v8580 = vpop.f32.mrf.mxu0
  %v8581 = vadd.f32 0.0, %v8580
  %v8582 = vpop.f32.mrf.mxu0
  %v8583 = vpop.f32.mrf.mxu0
  %v8584 = vadd.f32 0.0, %v8583
  %v8585 = vpop.f32.mrf.mxu0
  %8586 = vmatprep.mubr.bf16.mxu0 %v8041
  %8587 = vmatmul.mubr.bf16.gmra.mxu0 %v8040
  %v8588 = vpop.f32.mrf.mxu0
  %v8589 = vadd.f32 0.0, %v8588
  %v8590 = vpop.f32.mrf.mxu0
  %v8591 = vpop.f32.mrf.mxu0
  %v8592 = vadd.f32 0.0, %v8591
  %v8593 = vpop.f32.mrf.mxu0
  %8594 = vmatprep.mubr.bf16.mxu0 %v8044
  %8595 = vmatmul.mubr.bf16.gmra.mxu0 %v8043
  %v8596 = vpop.f32.mrf.mxu0
  %v8597 = vadd.f32 0.0, %v8596
  %v8598 = vpop.f32.mrf.mxu0
  %v8599 = vpop.f32.mrf.mxu0
  %v8600 = vadd.f32 0.0, %v8599
  %v8601 = vpop.f32.mrf.mxu0
  %8602 = vdwg.mxu0
  %8603 = vmatprep.subr.bf16.mxu0 0
  %8604 = vmatpush1.bf16.msra.mxu0 0
  %8605 = vmatprep.subr.bf16.mxu0 0
  %8606 = vmatpush1.bf16.msra.mxu0 0
  %8607 = vmatprep.subr.bf16.mxu0 0
  %8608 = vmatpush1.bf16.msra.mxu0 0
  %8609 = vmatprep.subr.bf16.mxu0 0
  %8610 = vmatpush1.bf16.msra.mxu0 0
  %8611 = vmatprep.subr.bf16.mxu0 0
  %8612 = vmatpush1.bf16.msra.mxu0 0
  %8613 = vmatprep.subr.bf16.mxu0 0
  %8614 = vmatpush1.bf16.msra.mxu0 0
  %8615 = vmatprep.subr.bf16.mxu0 0
  %8616 = vmatpush1.bf16.msra.mxu0 %v8199
  %8617 = vmatprep.subr.bf16.mxu0 0
  %8618 = vmatpush1.bf16.msra.mxu0 %v8198
  %8619 = vmatprep.subr.bf16.mxu0 0
  %8620 = vmatpush2.bf16.msra.mxu0 0
  %8621 = vmatprep.subr.bf16.mxu0 0
  %8622 = vmatpush2.bf16.msra.mxu0 0
  %8623 = vmatprep.subr.bf16.mxu0 0
  %8624 = vmatpush2.bf16.msra.mxu0 0
  %8625 = vmatprep.subr.bf16.mxu0 0
  %8626 = vmatpush2.bf16.msra.mxu0 0
  %8627 = vmatprep.subr.bf16.mxu0 0
  %8628 = vmatpush2.bf16.msra.mxu0 0
  %8629 = vmatprep.subr.bf16.mxu0 0
  %8630 = vmatpush2.bf16.msra.mxu0 0
  %8631 = vmatprep.subr.bf16.mxu0 0
  %8632 = vmatpush2.bf16.msra.mxu0 0
  %8633 = vmatprep.subr.bf16.mxu0 0
  %8634 = vmatpush2.bf16.msra.mxu0 0
  %8635 = vmatprep.mubr.bf16.mxu0 0
  %8636 = vmatmul.mubr.bf16.gmra.mxu0 %v8219
  %v8637 = vpop.f32.mrf.mxu0
  %v8638 = vadd.f32 %v8349, %v8637
  %v8639 = vpop.f32.mrf.mxu0
  %v8640 = vpop.f32.mrf.mxu0
  %v8641 = vadd.f32 %v8352, %v8640
  %v8642 = vpop.f32.mrf.mxu0
  %8643 = vmatprep.mubr.bf16.mxu0 0
  %8644 = vmatmul.mubr.bf16.gmra.mxu0 %v8222
  %v8645 = vpop.f32.mrf.mxu0
  %v8646 = vadd.f32 %v8357, %v8645
  %v8647 = vpop.f32.mrf.mxu0
  %v8648 = vpop.f32.mrf.mxu0
  %v8649 = vadd.f32 %v8360, %v8648
  %v8650 = vpop.f32.mrf.mxu0
  %8651 = vmatprep.mubr.bf16.mxu0 0
  %8652 = vmatmul.mubr.bf16.gmra.mxu0 %v8225
  %v8653 = vpop.f32.mrf.mxu0
  %v8654 = vadd.f32 %v8365, %v8653
  %v8655 = vpop.f32.mrf.mxu0
  %v8656 = vpop.f32.mrf.mxu0
  %v8657 = vadd.f32 %v8368, %v8656
  %v8658 = vpop.f32.mrf.mxu0
  %8659 = vmatprep.mubr.bf16.mxu0 0
  %8660 = vmatmul.mubr.bf16.gmra.mxu0 %v8228
  %v8661 = vpop.f32.mrf.mxu0
  %v8662 = vadd.f32 %v8373, %v8661
  %v8663 = vpop.f32.mrf.mxu0
  %v8664 = vpop.f32.mrf.mxu0
  %v8665 = vadd.f32 %v8376, %v8664
  %v8666 = vpop.f32.mrf.mxu0
  %8667 = vmatprep.mubr.bf16.mxu0 0
  %8668 = vmatmul.mubr.bf16.gmra.mxu0 %v8231
  %v8669 = vpop.f32.mrf.mxu0
  %v8670 = vadd.f32 %v8381, %v8669
  %v8671 = vpop.f32.mrf.mxu0
  %v8672 = vpop.f32.mrf.mxu0
  %v8673 = vadd.f32 %v8384, %v8672
  %v8674 = vpop.f32.mrf.mxu0
  %8675 = vmatprep.mubr.bf16.mxu0 0
  %8676 = vmatmul.mubr.bf16.gmra.mxu0 %v8234
  %v8677 = vpop.f32.mrf.mxu0
  %v8678 = vadd.f32 %v8389, %v8677
  %v8679 = vpop.f32.mrf.mxu0
  %v8680 = vpop.f32.mrf.mxu0
  %v8681 = vadd.f32 %v8392, %v8680
  %v8682 = vpop.f32.mrf.mxu0
  %8683 = vmatprep.mubr.bf16.mxu0 0
  %8684 = vmatmul.mubr.bf16.gmra.mxu0 %v8237
  %v8685 = vpop.f32.mrf.mxu0
  %v8686 = vadd.f32 %v8397, %v8685
  %v8687 = vpop.f32.mrf.mxu0
  %v8688 = vpop.f32.mrf.mxu0
  %v8689 = vadd.f32 %v8400, %v8688
  %v8690 = vpop.f32.mrf.mxu0
  %8691 = vmatprep.mubr.bf16.mxu0 0
  %8692 = vmatmul.mubr.bf16.gmra.mxu0 %v8240
  %v8693 = vpop.f32.mrf.mxu0
  %v8694 = vadd.f32 %v8405, %v8693
  %v8695 = vpop.f32.mrf.mxu0
  %v8696 = vpop.f32.mrf.mxu0
  %v8697 = vadd.f32 %v8408, %v8696
  %v8698 = vpop.f32.mrf.mxu0
  %8699 = vmatprep.mubr.bf16.mxu0 0
  %8700 = vmatmul.mubr.bf16.gmra.mxu0 %v8243
  %v8701 = vpop.f32.mrf.mxu0
  %v8702 = vadd.f32 %v8413, %v8701
  %v8703 = vpop.f32.mrf.mxu0
  %v8704 = vpop.f32.mrf.mxu0
  %v8705 = vadd.f32 %v8416, %v8704
  %v8706 = vpop.f32.mrf.mxu0
  %8707 = vmatprep.mubr.bf16.mxu0 0
  %8708 = vmatmul.mubr.bf16.gmra.mxu0 %v8246
  %v8709 = vpop.f32.mrf.mxu0
  %v8710 = vadd.f32 %v8421, %v8709
  %v8711 = vpop.f32.mrf.mxu0
  %v8712 = vpop.f32.mrf.mxu0
  %v8713 = vadd.f32 %v8424, %v8712
  %v8714 = vpop.f32.mrf.mxu0
  %8715 = vmatprep.mubr.bf16.mxu0 0
  %8716 = vmatmul.mubr.bf16.gmra.mxu0 %v8249
  %v8717 = vpop.f32.mrf.mxu0
  %v8718 = vadd.f32 %v8429, %v8717
  %v8719 = vpop.f32.mrf.mxu0
  %v8720 = vpop.f32.mrf.mxu0
  %v8721 = vadd.f32 %v8432, %v8720
  %v8722 = vpop.f32.mrf.mxu0
  %8723 = vmatprep.mubr.bf16.mxu0 0
  %8724 = vmatmul.mubr.bf16.gmra.mxu0 %v8252
  %v8725 = vpop.f32.mrf.mxu0
  %v8726 = vadd.f32 %v8437, %v8725
  %v8727 = vpop.f32.mrf.mxu0
  %v8728 = vpop.f32.mrf.mxu0
  %v8729 = vadd.f32 %v8440, %v8728
  %v8730 = vpop.f32.mrf.mxu0
  %8731 = vmatprep.mubr.bf16.mxu0 0
  %8732 = vmatmul.mubr.bf16.gmra.mxu0 %v8255
  %v8733 = vpop.f32.mrf.mxu0
  %v8734 = vadd.f32 %v8445, %v8733
  %v8735 = vpop.f32.mrf.mxu0
  %v8736 = vpop.f32.mrf.mxu0
  %v8737 = vadd.f32 %v8448, %v8736
  %v8738 = vpop.f32.mrf.mxu0
  %8739 = vmatprep.mubr.bf16.mxu0 0
  %8740 = vmatmul.mubr.bf16.gmra.mxu0 %v8258
  %v8741 = vpop.f32.mrf.mxu0
  %v8742 = vadd.f32 %v8453, %v8741
  %v8743 = vpop.f32.mrf.mxu0
  %v8744 = vpop.f32.mrf.mxu0
  %v8745 = vadd.f32 %v8456, %v8744
  %v8746 = vpop.f32.mrf.mxu0
  %8747 = vmatprep.mubr.bf16.mxu0 0
  %8748 = vmatmul.mubr.bf16.gmra.mxu0 %v8261
  %v8749 = vpop.f32.mrf.mxu0
  %v8750 = vadd.f32 %v8461, %v8749
  %v8751 = vpop.f32.mrf.mxu0
  %v8752 = vpop.f32.mrf.mxu0
  %v8753 = vadd.f32 %v8464, %v8752
  %v8754 = vpop.f32.mrf.mxu0
  %8755 = vmatprep.mubr.bf16.mxu0 0
  %8756 = vmatmul.mubr.bf16.gmra.mxu0 %v8264
  %v8757 = vpop.f32.mrf.mxu0
  %v8758 = vadd.f32 %v8469, %v8757
  %v8759 = vpop.f32.mrf.mxu0
  %v8760 = vpop.f32.mrf.mxu0
  %v8761 = vadd.f32 %v8472, %v8760
  %v8762 = vpop.f32.mrf.mxu0
  %8763 = vmatprep.mubr.bf16.mxu0 0
  %8764 = vmatmul.mubr.bf16.gmra.mxu0 %v8267
  %v8765 = vpop.f32.mrf.mxu0
  %v8766 = vadd.f32 %v8477, %v8765
  %v8767 = vpop.f32.mrf.mxu0
  %v8768 = vpop.f32.mrf.mxu0
  %v8769 = vadd.f32 %v8480, %v8768
  %v8770 = vpop.f32.mrf.mxu0
  %8771 = vmatprep.mubr.bf16.mxu0 0
  %8772 = vmatmul.mubr.bf16.gmra.mxu0 %v8270
  %v8773 = vpop.f32.mrf.mxu0
  %v8774 = vadd.f32 %v8485, %v8773
  %v8775 = vpop.f32.mrf.mxu0
  %v8776 = vpop.f32.mrf.mxu0
  %v8777 = vadd.f32 %v8488, %v8776
  %v8778 = vpop.f32.mrf.mxu0
  %8779 = vmatprep.mubr.bf16.mxu0 0
  %8780 = vmatmul.mubr.bf16.gmra.mxu0 %v8273
  %v8781 = vpop.f32.mrf.mxu0
  %v8782 = vadd.f32 %v8493, %v8781
  %v8783 = vpop.f32.mrf.mxu0
  %v8784 = vpop.f32.mrf.mxu0
  %v8785 = vadd.f32 %v8496, %v8784
  %v8786 = vpop.f32.mrf.mxu0
  %8787 = vmatprep.mubr.bf16.mxu0 0
  %8788 = vmatmul.mubr.bf16.gmra.mxu0 %v8276
  %v8789 = vpop.f32.mrf.mxu0
  %v8790 = vadd.f32 %v8501, %v8789
  %v8791 = vpop.f32.mrf.mxu0
  %v8792 = vpop.f32.mrf.mxu0
  %v8793 = vadd.f32 %v8504, %v8792
  %v8794 = vpop.f32.mrf.mxu0
  %8795 = vmatprep.mubr.bf16.mxu0 0
  %8796 = vmatmul.mubr.bf16.gmra.mxu0 %v8279
  %v8797 = vpop.f32.mrf.mxu0
  %v8798 = vadd.f32 %v8509, %v8797
  %v8799 = vpop.f32.mrf.mxu0
  %v8800 = vpop.f32.mrf.mxu0
  %v8801 = vadd.f32 %v8512, %v8800
  %v8802 = vpop.f32.mrf.mxu0
  %8803 = vmatprep.mubr.bf16.mxu0 0
  %8804 = vmatmul.mubr.bf16.gmra.mxu0 %v8282
  %v8805 = vpop.f32.mrf.mxu0
  %v8806 = vadd.f32 %v8517, %v8805
  %v8807 = vpop.f32.mrf.mxu0
  %v8808 = vpop.f32.mrf.mxu0
  %v8809 = vadd.f32 %v8520, %v8808
  %v8810 = vpop.f32.mrf.mxu0
  %8811 = vmatprep.mubr.bf16.mxu0 0
  %8812 = vmatmul.mubr.bf16.gmra.mxu0 %v8285
  %v8813 = vpop.f32.mrf.mxu0
  %v8814 = vadd.f32 %v8525, %v8813
  %v8815 = vpop.f32.mrf.mxu0
  %v8816 = vpop.f32.mrf.mxu0
  %v8817 = vadd.f32 %v8528, %v8816
  %v8818 = vpop.f32.mrf.mxu0
  %8819 = vmatprep.mubr.bf16.mxu0 0
  %8820 = vmatmul.mubr.bf16.gmra.mxu0 %v8288
  %v8821 = vpop.f32.mrf.mxu0
  %v8822 = vadd.f32 %v8533, %v8821
  %v8823 = vpop.f32.mrf.mxu0
  %v8824 = vpop.f32.mrf.mxu0
  %v8825 = vadd.f32 %v8536, %v8824
  %v8826 = vpop.f32.mrf.mxu0
  %8827 = vmatprep.mubr.bf16.mxu0 0
  %8828 = vmatmul.mubr.bf16.gmra.mxu0 %v8291
  %v8829 = vpop.f32.mrf.mxu0
  %v8830 = vadd.f32 %v8541, %v8829
  %v8831 = vpop.f32.mrf.mxu0
  %v8832 = vpop.f32.mrf.mxu0
  %v8833 = vadd.f32 %v8544, %v8832
  %v8834 = vpop.f32.mrf.mxu0
  %8835 = vmatprep.mubr.bf16.mxu0 0
  %8836 = vmatmul.mubr.bf16.gmra.mxu0 %v8294
  %v8837 = vpop.f32.mrf.mxu0
  %v8838 = vadd.f32 %v8549, %v8837
  %v8839 = vpop.f32.mrf.mxu0
  %v8840 = vpop.f32.mrf.mxu0
  %v8841 = vadd.f32 %v8552, %v8840
  %v8842 = vpop.f32.mrf.mxu0
  %8843 = vmatprep.mubr.bf16.mxu0 0
  %8844 = vmatmul.mubr.bf16.gmra.mxu0 %v8297
  %v8845 = vpop.f32.mrf.mxu0
  %v8846 = vadd.f32 %v8557, %v8845
  %v8847 = vpop.f32.mrf.mxu0
  %v8848 = vpop.f32.mrf.mxu0
  %v8849 = vadd.f32 %v8560, %v8848
  %v8850 = vpop.f32.mrf.mxu0
  %8851 = vmatprep.mubr.bf16.mxu0 0
  %8852 = vmatmul.mubr.bf16.gmra.mxu0 %v8300
  %v8853 = vpop.f32.mrf.mxu0
  %v8854 = vadd.f32 %v8565, %v8853
  %v8855 = vpop.f32.mrf.mxu0
  %v8856 = vpop.f32.mrf.mxu0
  %v8857 = vadd.f32 %v8568, %v8856
  %v8858 = vpop.f32.mrf.mxu0
  %8859 = vmatprep.mubr.bf16.mxu0 0
  %8860 = vmatmul.mubr.bf16.gmra.mxu0 %v8303
  %v8861 = vpop.f32.mrf.mxu0
  %v8862 = vadd.f32 %v8573, %v8861
  %v8863 = vpop.f32.mrf.mxu0
  %v8864 = vpop.f32.mrf.mxu0
  %v8865 = vadd.f32 %v8576, %v8864
  %v8866 = vpop.f32.mrf.mxu0
  %8867 = vmatprep.mubr.bf16.mxu0 0
  %8868 = vmatmul.mubr.bf16.gmra.mxu0 %v8306
  %v8869 = vpop.f32.mrf.mxu0
  %v8870 = vadd.f32 %v8581, %v8869
  %v8871 = vpop.f32.mrf.mxu0
  %v8872 = vpop.f32.mrf.mxu0
  %v8873 = vadd.f32 %v8584, %v8872
  %v8874 = vpop.f32.mrf.mxu0
  %8875 = vmatprep.mubr.bf16.mxu0 0
  %8876 = vmatmul.mubr.bf16.gmra.mxu0 %v8309
  %v8877 = vpop.f32.mrf.mxu0
  %v8878 = vadd.f32 %v8589, %v8877
  %v8879 = vpop.f32.mrf.mxu0
  %v8880 = vpop.f32.mrf.mxu0
  %v8881 = vadd.f32 %v8592, %v8880
  %v8882 = vpop.f32.mrf.mxu0
  %8883 = vmatprep.mubr.bf16.mxu0 0
  %8884 = vmatmul.mubr.bf16.gmra.mxu0 %v8312
  %v8885 = vpop.f32.mrf.mxu0
  %v8886 = vadd.f32 %v8597, %v8885
  %v8887 = vpop.f32.mrf.mxu0
  %v8888 = vpop.f32.mrf.mxu0
  %v8889 = vadd.f32 %v8600, %v8888
  %v8890 = vpop.f32.mrf.mxu0
  %8891 = vdwg.mxu0
  %v8892 = vmax.f32 %v8638, %v8646
  %v8893 = vmax.f32 %v8641, %v8649
  %v8894 = vmax.f32 %v8654, %v8662
  %v8895 = vmax.f32 %v8657, %v8665
  %v8896 = vmax.f32 %v8670, %v8678
  %v8897 = vmax.f32 %v8673, %v8681
  %v8898 = vmax.f32 %v8686, %v8694
  %v8899 = vmax.f32 %v8689, %v8697
  %v8900 = vmax.f32 %v8702, %v8710
  %v8901 = vmax.f32 %v8705, %v8713
  %v8902 = vmax.f32 %v8718, %v8726
  %v8903 = vmax.f32 %v8721, %v8729
  %v8904 = vmax.f32 %v8734, %v8742
  %v8905 = vmax.f32 %v8737, %v8745
  %v8906 = vmax.f32 %v8750, %v8758
  %v8907 = vmax.f32 %v8753, %v8761
  %v8908 = vmax.f32 %v8766, %v8774
  %v8909 = vmax.f32 %v8769, %v8777
  %v8910 = vmax.f32 %v8782, %v8790
  %v8911 = vmax.f32 %v8785, %v8793
  %v8912 = vmax.f32 %v8798, %v8806
  %v8913 = vmax.f32 %v8801, %v8809
  %v8914 = vmax.f32 %v8814, %v8822
  %v8915 = vmax.f32 %v8817, %v8825
  %v8916 = vmax.f32 %v8830, %v8838
  %v8917 = vmax.f32 %v8833, %v8841
  %v8918 = vmax.f32 %v8846, %v8854
  %v8919 = vmax.f32 %v8849, %v8857
  %v8920 = vmax.f32 %v8862, %v8870
  %v8921 = vmax.f32 %v8865, %v8873
  %v8922 = vmax.f32 %v8878, %v8886
  %v8923 = vmax.f32 %v8881, %v8889
  %vm8924 = vcmask 523264
  %8925 = vst.msk [vmem:[#allocation5] sm:$0xff] %vm8924, %v8892
  %8926 = vst.msk [vmem:[#allocation5 + $0x8] sm:$0xff] %vm8924, %v8893
  %8927 = vst.msk [vmem:[#allocation5 + $0x10] sm:$0xff] %vm8924, %v8894
  %8928 = vst.msk [vmem:[#allocation5 + $0x18] sm:$0xff] %vm8924, %v8895
  %8929 = vst.msk [vmem:[#allocation5 + $0x20] sm:$0xff] %vm8924, %v8896
  %8930 = vst.msk [vmem:[#allocation5 + $0x28] sm:$0xff] %vm8924, %v8897
  %8931 = vst.msk [vmem:[#allocation5 + $0x30] sm:$0xff] %vm8924, %v8898
  %8932 = vst.msk [vmem:[#allocation5 + $0x38] sm:$0xff] %vm8924, %v8899
  %8933 = vst.msk [vmem:[#allocation5 + $0x40] sm:$0xff] %vm8924, %v8900
  %8934 = vst.msk [vmem:[#allocation5 + $0x48] sm:$0xff] %vm8924, %v8901
  %8935 = vst.msk [vmem:[#allocation5 + $0x50] sm:$0xff] %vm8924, %v8902
  %8936 = vst.msk [vmem:[#allocation5 + $0x58] sm:$0xff] %vm8924, %v8903
  %8937 = vst.msk [vmem:[#allocation5 + $0x60] sm:$0xff] %vm8924, %v8904
  %8938 = vst.msk [vmem:[#allocation5 + $0x68] sm:$0xff] %vm8924, %v8905
  %8939 = vst.msk [vmem:[#allocation5 + $0x70] sm:$0xff] %vm8924, %v8906
  %8940 = vst.msk [vmem:[#allocation5 + $0x78] sm:$0xff] %vm8924, %v8907
  %8941 = vst.msk [vmem:[#allocation5 + $0x80] sm:$0xff] %vm8924, %v8908
  %8942 = vst.msk [vmem:[#allocation5 + $0x88] sm:$0xff] %vm8924, %v8909
  %8943 = vst.msk [vmem:[#allocation5 + $0x90] sm:$0xff] %vm8924, %v8910
  %8944 = vst.msk [vmem:[#allocation5 + $0x98] sm:$0xff] %vm8924, %v8911
  %8945 = vst.msk [vmem:[#allocation5 + $0xa0] sm:$0xff] %vm8924, %v8912
  %8946 = vst.msk [vmem:[#allocation5 + $0xa8] sm:$0xff] %vm8924, %v8913
  %8947 = vst.msk [vmem:[#allocation5 + $0xb0] sm:$0xff] %vm8924, %v8914
  %8948 = vst.msk [vmem:[#allocation5 + $0xb8] sm:$0xff] %vm8924, %v8915
  %8949 = vst.msk [vmem:[#allocation5 + $0xc0] sm:$0xff] %vm8924, %v8916
  %8950 = vst.msk [vmem:[#allocation5 + $0xc8] sm:$0xff] %vm8924, %v8917
  %8951 = vst.msk [vmem:[#allocation5 + $0xd0] sm:$0xff] %vm8924, %v8918
  %8952 = vst.msk [vmem:[#allocation5 + $0xd8] sm:$0xff] %vm8924, %v8919
  %8953 = vst.msk [vmem:[#allocation5 + $0xe0] sm:$0xff] %vm8924, %v8920
  %8954 = vst.msk [vmem:[#allocation5 + $0xe8] sm:$0xff] %vm8924, %v8921
  %8955 = vst.msk [vmem:[#allocation5 + $0xf0] sm:$0xff] %vm8924, %v8922
  %8956 = vst.msk [vmem:[#allocation5 + $0xf8] sm:$0xff] %vm8924, %v8923
  %v8957 = vld [vmem:[#allocation5] ss:$2 sm:$0xff]
  %s8958 = scalar_lea.vmem [#allocation5], 16
  %v8959 = vld [vmem:[%s8958] ss:$2 sm:$0xff]
  %s8960 = scalar_lea.vmem [#allocation5], 32
  %v8961 = vld [vmem:[%s8960] ss:$2 sm:$0xff]
  %s8962 = scalar_lea.vmem [#allocation5], 48
  %v8963 = vld [vmem:[%s8962] ss:$2 sm:$0xff]
  %s8964 = scalar_lea.vmem [#allocation5], 64
  %v8965 = vld [vmem:[%s8964] ss:$2 sm:$0xff]
  %s8966 = scalar_lea.vmem [#allocation5], 80
  %v8967 = vld [vmem:[%s8966] ss:$2 sm:$0xff]
  %s8968 = scalar_lea.vmem [#allocation5], 96
  %v8969 = vld [vmem:[%s8968] ss:$2 sm:$0xff]
  %s8970 = scalar_lea.vmem [#allocation5], 112
  %v8971 = vld [vmem:[%s8970] ss:$2 sm:$0xff]
  %s8972 = scalar_lea.vmem [#allocation5], 128
  %v8973 = vld [vmem:[%s8972] ss:$2 sm:$0xff]
  %s8974 = scalar_lea.vmem [#allocation5], 144
  %v8975 = vld [vmem:[%s8974] ss:$2 sm:$0xff]
  %s8976 = scalar_lea.vmem [#allocation5], 160
  %v8977 = vld [vmem:[%s8976] ss:$2 sm:$0xff]
  %s8978 = scalar_lea.vmem [#allocation5], 176
  %v8979 = vld [vmem:[%s8978] ss:$2 sm:$0xff]
  %s8980 = scalar_lea.vmem [#allocation5], 192
  %v8981 = vld [vmem:[%s8980] ss:$2 sm:$0xff]
  %s8982 = scalar_lea.vmem [#allocation5], 208
  %v8983 = vld [vmem:[%s8982] ss:$2 sm:$0xff]
  %s8984 = scalar_lea.vmem [#allocation5], 224
  %v8985 = vld [vmem:[%s8984] ss:$2 sm:$0xff]
  %s8986 = scalar_lea.vmem [#allocation5], 240
  %v8987 = vld [vmem:[%s8986] ss:$2 sm:$0xff]
  %s8988 = scalar_lea.vmem [#allocation5], 1
  %v8989 = vld [vmem:[%s8988] ss:$2 sm:$0xff]
  %s8990 = scalar_lea.vmem [#allocation5], 17
  %v8991 = vld [vmem:[%s8990] ss:$2 sm:$0xff]
  %s8992 = scalar_lea.vmem [#allocation5], 33
  %v8993 = vld [vmem:[%s8992] ss:$2 sm:$0xff]
  %s8994 = scalar_lea.vmem [#allocation5], 49
  %v8995 = vld [vmem:[%s8994] ss:$2 sm:$0xff]
  %s8996 = scalar_lea.vmem [#allocation5], 65
  %v8997 = vld [vmem:[%s8996] ss:$2 sm:$0xff]
  %s8998 = scalar_lea.vmem [#allocation5], 81
  %v8999 = vld [vmem:[%s8998] ss:$2 sm:$0xff]
  %s9000 = scalar_lea.vmem [#allocation5], 97
  %v9001 = vld [vmem:[%s9000] ss:$2 sm:$0xff]
  %s9002 = scalar_lea.vmem [#allocation5], 113
  %v9003 = vld [vmem:[%s9002] ss:$2 sm:$0xff]
  %s9004 = scalar_lea.vmem [#allocation5], 129
  %v9005 = vld [vmem:[%s9004] ss:$2 sm:$0xff]
  %s9006 = scalar_lea.vmem [#allocation5], 145
  %v9007 = vld [vmem:[%s9006] ss:$2 sm:$0xff]
  %s9008 = scalar_lea.vmem [#allocation5], 161
  %v9009 = vld [vmem:[%s9008] ss:$2 sm:$0xff]
  %s9010 = scalar_lea.vmem [#allocation5], 177
  %v9011 = vld [vmem:[%s9010] ss:$2 sm:$0xff]
  %s9012 = scalar_lea.vmem [#allocation5], 193
  %v9013 = vld [vmem:[%s9012] ss:$2 sm:$0xff]
  %s9014 = scalar_lea.vmem [#allocation5], 209
  %v9015 = vld [vmem:[%s9014] ss:$2 sm:$0xff]
  %s9016 = scalar_lea.vmem [#allocation5], 225
  %v9017 = vld [vmem:[%s9016] ss:$2 sm:$0xff]
  %s9018 = scalar_lea.vmem [#allocation5], 241
  %v9019 = vld [vmem:[%s9018] ss:$2 sm:$0xff]
  %v9020 = vmax.f32 %v8957, %v8989
  %v9021 = vmax.f32 %v8959, %v8991
  %v9022 = vmax.f32 %v8961, %v8993
  %v9023 = vmax.f32 %v8963, %v8995
  %v9024 = vmax.f32 %v8965, %v8997
  %v9025 = vmax.f32 %v8967, %v8999
  %v9026 = vmax.f32 %v8969, %v9001
  %v9027 = vmax.f32 %v8971, %v9003
  %v9028 = vmax.f32 %v8973, %v9005
  %v9029 = vmax.f32 %v8975, %v9007
  %v9030 = vmax.f32 %v8977, %v9009
  %v9031 = vmax.f32 %v8979, %v9011
  %v9032 = vmax.f32 %v8981, %v9013
  %v9033 = vmax.f32 %v8983, %v9015
  %v9034 = vmax.f32 %v8985, %v9017
  %v9035 = vmax.f32 %v8987, %v9019
  %v9036 = vld [vmem:[%s4] sm:$0x1]
  %v9038 = vlaneseq
  %v9039 = vshrl.u32 %v9038, 7
  %v9040 = vsub.s32 0, %v9039
  %v9041 = vrot.slane %v9036, %v9040
  %v9043 = vadd.f32 %v9020, %v9041
  %v9044 = vadd.f32 %v9021, %v9041
  %v9045 = vadd.f32 %v9022, %v9041
  %v9046 = vadd.f32 %v9023, %v9041
  %v9047 = vadd.f32 %v9024, %v9041
  %v9048 = vadd.f32 %v9025, %v9041
  %v9049 = vadd.f32 %v9026, %v9041
  %v9050 = vadd.f32 %v9027, %v9041
  %v9051 = vadd.f32 %v9028, %v9041
  %v9052 = vadd.f32 %v9029, %v9041
  %v9053 = vadd.f32 %v9030, %v9041
  %v9054 = vadd.f32 %v9031, %v9041
  %v9055 = vadd.f32 %v9032, %v9041
  %v9056 = vadd.f32 %v9033, %v9041
  %v9057 = vadd.f32 %v9034, %v9041
  %v9058 = vadd.f32 %v9035, %v9041
  %v9059 = vmax.f32 %v9043, 0.0
  %v9060 = vmax.f32 %v9044, 0.0
  %v9061 = vmax.f32 %v9045, 0.0
  %v9062 = vmax.f32 %v9046, 0.0
  %v9063 = vmax.f32 %v9047, 0.0
  %v9064 = vmax.f32 %v9048, 0.0
  %v9065 = vmax.f32 %v9049, 0.0
  %v9066 = vmax.f32 %v9050, 0.0
  %v9067 = vmax.f32 %v9051, 0.0
  %v9068 = vmax.f32 %v9052, 0.0
  %v9069 = vmax.f32 %v9053, 0.0
  %v9070 = vmax.f32 %v9054, 0.0
  %v9071 = vmax.f32 %v9055, 0.0
  %v9072 = vmax.f32 %v9056, 0.0
  %v9073 = vmax.f32 %v9057, 0.0
  %v9074 = vmax.f32 %v9058, 0.0
  %v9075 = vpack.c.bf16 %v9059, %v9059
  %v9076 = vpack.c.bf16 %v9060, %v9060
  %v9077 = vpack.c.bf16 %v9061, %v9061
  %v9078 = vpack.c.bf16 %v9062, %v9062
  %v9079 = vpack.c.bf16 %v9063, %v9063
  %v9080 = vpack.c.bf16 %v9064, %v9064
  %v9081 = vpack.c.bf16 %v9065, %v9065
  %v9082 = vpack.c.bf16 %v9066, %v9066
  %v9083 = vpack.c.bf16 %v9067, %v9067
  %v9084 = vpack.c.bf16 %v9068, %v9068
  %v9085 = vpack.c.bf16 %v9069, %v9069
  %v9086 = vpack.c.bf16 %v9070, %v9070
  %v9087 = vpack.c.bf16 %v9071, %v9071
  %v9088 = vpack.c.bf16 %v9072, %v9072
  %v9089 = vpack.c.bf16 %v9073, %v9073
  %v9090 = vpack.c.bf16 %v9074, %v9074
  %vm9091 = vcmask 519168
  %9092 = vst.msk [vmem:[%s5] sm:$0xf] %vm9091, %v9075
  %9093 = vst.msk [vmem:[%s5 + $0x4] sm:$0xf] %vm9091, %v9076
  %9094 = vst.msk [vmem:[%s5 + $0x8] sm:$0xf] %vm9091, %v9077
  %9095 = vst.msk [vmem:[%s5 + $0xc] sm:$0xf] %vm9091, %v9078
  %9096 = vst.msk [vmem:[%s5 + $0x10] sm:$0xf] %vm9091, %v9079
  %9097 = vst.msk [vmem:[%s5 + $0x14] sm:$0xf] %vm9091, %v9080
  %9098 = vst.msk [vmem:[%s5 + $0x18] sm:$0xf] %vm9091, %v9081
  %9099 = vst.msk [vmem:[%s5 + $0x1c] sm:$0xf] %vm9091, %v9082
  %9100 = vst.msk [vmem:[%s5 + $0x20] sm:$0xf] %vm9091, %v9083
  %9101 = vst.msk [vmem:[%s5 + $0x24] sm:$0xf] %vm9091, %v9084
  %9102 = vst.msk [vmem:[%s5 + $0x28] sm:$0xf] %vm9091, %v9085
  %9103 = vst.msk [vmem:[%s5 + $0x2c] sm:$0xf] %vm9091, %v9086
  %9104 = vst.msk [vmem:[%s5 + $0x30] sm:$0xf] %vm9091, %v9087
  %9105 = vst.msk [vmem:[%s5 + $0x34] sm:$0xf] %vm9091, %v9088
  %9106 = vst.msk [vmem:[%s5 + $0x38] sm:$0xf] %vm9091, %v9089
  %9107 = vst.msk [vmem:[%s5 + $0x3c] sm:$0xf] %vm9091, %v9090
  // Predicated region
  $region22: #{net_forward.2} parent=0 // pred_check
    _
  $region23: #{net_forward.2} parent=0 // pred_check_branch
    %9109 = sbr.rel (0) target = $region25
  $region24: #{net_forward.2} parent=0 // pred_region
    _
  $region25: #{net_forward.2} parent=0 // pred_fallthru
    _
  // Predicated region
  $region26: #{net_forward.2} parent=0 // pred_check
    _
  $region27: #{net_forward.2} parent=0 // pred_check_branch
    %9111 = sbr.rel (0) target = $region29
  $region28: #{net_forward.2} parent=0 // pred_region
    _
  $region29: #{net_forward.2} parent=0 // pred_fallthru
    _

</llo_original>
